<compile_context>
chip_gen: v7x
topology: tpu7x:2x2x1
jax: 0.10.0
libtpu: 0.0.40
codegen_flags: <defaults>
</compile_context>

<pallas_src>
import functools
from typing import NamedTuple

import jax
import jax.numpy as jnp
from jax.experimental import pallas as pl
from jax.experimental.pallas import tpu as pltpu

# Compatibility shim for the compiler-params class name.
_CompilerParams = getattr(pltpu, "CompilerParams", None)
if _CompilerParams is None:  # pragma: no cover - older JAX naming
    _CompilerParams = getattr(pltpu, "TPUCompilerParams")

_VMEM_LIMIT = 32 * 1024 * 1024
_TM = 128  # row-tile for the in-kernel convolutions


# ----------------------------------------------------------------------------
# Static shape bookkeeping for the conv stack (all Python ints at trace time).
# ----------------------------------------------------------------------------
class _StackDims(NamedTuple):
    H1: int   # conv1 out height (exact, via im2col)
    W1: int   # stored map width through conv1/conv2 (== conv1 out width)
    H2: int   # conv2 out height
    WV2: int  # conv2 valid width
    PH1: int  # pool1 out height
    PW1: int  # stored map width through conv3/conv4 (pool1 stored width)
    WVP1: int
    H3: int
    WV3: int
    H4: int
    WV4: int
    PH2: int  # pool2 out height
    PW2: int  # pool2 stored width
    WVP2: int  # pool2 valid width


def _stack_dims(H, W):
    H1, W1 = H - 2, W - 2
    H2, WV2 = H1 - 2, W1 - 2
    PH1, PW1, WVP1 = H2 // 2, W1 // 2, WV2 // 2
    H3, WV3 = PH1 - 2, WVP1 - 2
    H4, WV4 = H3 - 2, WV3 - 2
    PH2, PW2, WVP2 = H4 // 2, PW1 // 2, WV4 // 2
    # Non-degenerate sizes for every stage.
    assert H >= 7 and W >= 7 and H2 >= 2 and WV2 >= 2
    assert PH1 >= 3 and WVP1 >= 3 and H4 >= 2 and WV4 >= 2
    assert PH2 >= 1 and WVP2 >= 1
    # Garbage-safety invariant (perf review): valid widths never exceed stored
    # widths, so (a) any conv/pool window producing a *valid* output column
    # only reads *valid* source columns, and (b) the KW-1 uncomputed tail rows
    # of each conv map hold only wrap-around (garbage) columns, which are
    # cropped before the flatten and can never win a max into a kept column.
    assert WV2 <= W1 and WVP1 <= PW1 and WV3 <= PW1 and WV4 <= PW1
    assert WVP2 <= PW2
    return _StackDims(H1, W1, H2, WV2, PH1, PW1, WVP1, H3, WV3, H4, WV4,
                      PH2, PW2, WVP2)


# ----------------------------------------------------------------------------
# In-kernel building blocks (operate on VMEM scratch refs, flattened
# channels-last maps: row = h * Wst + w, lanes = channels).
# ----------------------------------------------------------------------------
def _conv3x3_relu(src, w_ref, b_ref, dst, Hin, Wst):
    """Direct 3x3 valid conv + bias + ReLU via shifted matmuls, M-tiled."""
    Cout = w_ref.shape[-1]
    Mout = (Hin - 2) * Wst
    Mv = Mout - 2  # keeps every src slice exactly in bounds
    for m0 in range(0, Mv, _TM):
        tm = min(_TM, Mv - m0)
        acc = jnp.zeros((tm, Cout), jnp.float32)
        for i in range(3):
            for j in range(3):
                off = m0 + i * Wst + j
                acc = acc + jnp.dot(src[off:off + tm, :], w_ref[i * 3 + j],
                                    preferred_element_type=jnp.float32)
        acc = jnp.maximum(acc + b_ref[...], 0.0)
        dst[m0:m0 + tm, :] = acc.astype(dst.dtype)
    # The last KW-1 rows hold only wrap-around (garbage) columns of the final
    # output row; zero-fill so every byte downstream is defined and finite.
    if Mout > Mv:
        dst[Mv:Mout, :] = jnp.zeros((Mout - Mv, Cout), dst.dtype)


def _maxpool2x2(src, dst, Hin, Wst):
    """2x2 / stride-2 max pool, entirely on the VMEM-resident map."""
    PH, PW = Hin // 2, Wst // 2
    for ph in range(PH):
        r0 = (2 * ph) * Wst
        r1 = r0 + Wst
        m = jnp.maximum(
            jnp.maximum(src[pl.ds(r0, PW, stride=2), :],
                        src[pl.ds(r0 + 1, PW, stride=2), :]),
            jnp.maximum(src[pl.ds(r1, PW, stride=2), :],
                        src[pl.ds(r1 + 1, PW, stride=2), :]))
        dst[ph * PW:(ph + 1) * PW, :] = m.astype(dst.dtype)


# ----------------------------------------------------------------------------
# The fused per-image kernel.
# ----------------------------------------------------------------------------
def _cnn_fused_kernel(x_ref,
                      c1w, c1b, c2w, c2b, c3w, c3b, c4w, c4b,
                      l1w, l1b, l2w, l2b,
                      yo_ref, y_ref,
                      a1, a2, p1, a3, a4, p2, *, d):
    # --- conv1: one K=32 im2col matmul, computed ONCE (reference y1 == y2) ---
    M1 = d.H1 * d.W1
    for m0 in range(0, M1, _TM):
        tm = min(_TM, M1 - m0)
        acc = jnp.dot(x_ref[m0:m0 + tm, :], c1w[...],
                      preferred_element_type=jnp.float32)
        a1[m0:m0 + tm, :] = jnp.maximum(acc + c1b[...], 0.0).astype(a1.dtype)

    # --- conv2 (cat folded into weights) ... pool2, all VMEM-resident ---
    _conv3x3_relu(a1, c2w, c2b, a2, d.H1, d.W1)
    _maxpool2x2(a2, p1, d.H2, d.W1)
    _conv3x3_relu(p1, c3w, c3b, a3, d.PH1, d.PW1)
    _conv3x3_relu(a3, c4w, c4b, a4, d.H3, d.PW1)
    _maxpool2x2(a4, p2, d.H4, d.PW1)

    # --- flatten (valid region only) + linear1 + ReLU + linear2 ---
    # PyTorch's NCHW flatten order is folded into l1w's per-(h, w) blocks at
    # prep time; the LHS is broadcast to 8 rows so the MXU never sees M=1.
    Dh = l1b.shape[-1]
    acc = jnp.zeros((8, Dh), jnp.float32)
    for hh in range(d.PH2):
        for ww in range(d.WVP2):
            blk = hh * d.WVP2 + ww
            lhs = jnp.broadcast_to(p2[pl.ds(hh * d.PW2 + ww, 1), :],
                                   (8, p2.shape[-1]))
            acc = acc + jnp.dot(lhs, l1w[blk],
                                preferred_element_type=jnp.float32)
    hdn = jnp.maximum(acc + l1b[...], 0.0)          # (8, Dh), rows identical
    y_ref[...] = hdn[0:1, :].astype(y_ref.dtype)
    out = jnp.dot(hdn.astype(l2w.dtype), l2w[...],
                  preferred_element_type=jnp.float32) + l2b[...]
    yo_ref[...] = out[0:1, :].astype(yo_ref.dtype)


# ----------------------------------------------------------------------------
# Forward pass (mirrors CNN.forward; returns (yo, y)).
# ----------------------------------------------------------------------------
def cnn_forward(q, x_nchw):
    N, C, H, W = x_nchw.shape
    assert C == 3, "CNN.conv1 expects 3 input channels"
    d = _stack_dims(H, W)
    M1 = d.H1 * d.W1
    Dh = q["l1_b"].shape[-1]

    # im2col for conv1 only (K = 3*3*3 = 27 -> padded to 32): trivial on a
    # 3-channel input and turns conv1 into a single lane-dense matmul.
    xh = jnp.transpose(x_nchw, (0, 2, 3, 1))                       # (N, H, W, 3)
    pats = [xh[:, i:i + d.H1, j:j + d.W1, :]
            for i in range(3) for j in range(3)]
    xi = jnp.concatenate(pats, axis=-1)                            # (N,H1,W1,27)
    xi = jnp.pad(xi, ((0, 0), (0, 0), (0, 0), (0, 32 - 27)))
    xi = xi.reshape(N, M1, 32).astype(jnp.bfloat16)

    kernel = functools.partial(_cnn_fused_kernel, d=d)
    yo_pad, y_hid = pl.pallas_call(
        kernel,
        out_shape=(jax.ShapeDtypeStruct((N, 1, 128), jnp.float32),
                   jax.ShapeDtypeStruct((N, 1, Dh), jnp.float32)),
        grid=(N,),
        in_specs=[
            pl.BlockSpec((None, M1, 32), lambda n: (n, 0, 0)),      # im2col(x)
            pl.BlockSpec((32, 32), lambda n: (0, 0)),               # conv1 w
            pl.BlockSpec((1, 32), lambda n: (0, 0)),                # conv1 b
            pl.BlockSpec((9, 32, 32), lambda n: (0, 0, 0)),         # conv2 w
            pl.BlockSpec((1, 32), lambda n: (0, 0)),                # conv2 b
            pl.BlockSpec((9, 32, 64), lambda n: (0, 0, 0)),         # conv3 w
            pl.BlockSpec((1, 64), lambda n: (0, 0)),                # conv3 b
            pl.BlockSpec((9, 64, 64), lambda n: (0, 0, 0)),         # conv4 w
            pl.BlockSpec((1, 64), lambda n: (0, 0)),                # conv4 b
            pl.BlockSpec(q["l1_w"].shape, lambda n: (0, 0, 0)),     # linear1 w
            pl.BlockSpec((1, Dh), lambda n: (0, 0)),                # linear1 b
            pl.BlockSpec(q["l2_w"].shape, lambda n: (0, 0)),        # linear2 w
            pl.BlockSpec((1, 128), lambda n: (0, 0)),               # linear2 b
        ],
        out_specs=(pl.BlockSpec((None, 1, 128), lambda n: (n, 0, 0)),
                   pl.BlockSpec((None, 1, Dh), lambda n: (n, 0, 0))),
        scratch_shapes=[
            pltpu.VMEM((M1, 32), jnp.bfloat16),                     # a1 conv1
            pltpu.VMEM((d.H2 * d.W1, 32), jnp.float32),             # a2 conv2
            pltpu.VMEM((d.PH1 * d.PW1, 32), jnp.bfloat16),          # p1 pool1
            pltpu.VMEM((d.H3 * d.PW1, 64), jnp.bfloat16),           # a3 conv3
            pltpu.VMEM((d.H4 * d.PW1, 64), jnp.float32),            # a4 conv4
            pltpu.VMEM((d.PH2 * d.PW2, 64), jnp.bfloat16),          # p2 pool2
        ],
        compiler_params=_CompilerParams(
            dimension_semantics=("parallel",),
            vmem_limit_bytes=_VMEM_LIMIT),
    )(xi, q["c1_w"], q["c1_b"], q["c2_w"], q["c2_b"], q["c3_w"], q["c3_b"],
      q["c4_w"], q["c4_b"], q["l1_w"], q["l1_b"], q["l2_w"], q["l2_b"])

    yo = yo_pad.reshape(N, 128)[:, :10]
    y = y_hid.reshape(N, Dh)
    return yo, y


# ----------------------------------------------------------------------------
# Parameter init (PyTorch-default-style uniform bounds) + one-time kernel prep.
# ----------------------------------------------------------------------------
def _uniform(key, shape, bound):
    return jax.random.uniform(key, shape, jnp.float32, -bound, bound)


def init_params(key, flat_dim):
    ks = jax.random.split(key, 12)

    def conv(kw_, kb_, cout, cin):
        bound = 1.0 / (cin * 9) ** 0.5
        return (_uniform(kw_, (cout, cin, 3, 3), bound),
                _uniform(kb_, (cout,), bound))

    def lin(kw_, kb_, fout, fin):
        bound = 1.0 / fin ** 0.5
        return (_uniform(kw_, (fout, fin), bound),
                _uniform(kb_, (fout,), bound))

    p = {}
    p["conv1_w"], p["conv1_b"] = conv(ks[0], ks[1], 32, 3)
    p["conv2_w"], p["conv2_b"] = conv(ks[2], ks[3], 32, 64)   # see TODO at top
    p["conv3_w"], p["conv3_b"] = conv(ks[4], ks[5], 64, 32)
    p["conv4_w"], p["conv4_b"] = conv(ks[6], ks[7], 64, 64)
    p["linear1_w"], p["linear1_b"] = lin(ks[8], ks[9], 512, flat_dim)  # see TODO
    p["linear2_w"], p["linear2_b"] = lin(ks[10], ks[11], 10, 512)
    return p


def prepare_params(p, H, W):
    """One-time re-layout: fold conv2's cat, im2col-ify conv1, cast MXU operands
    to bf16, fold the NCHW flatten permutation into linear1, transpose/pad the
    linears.  Runs once, outside the forward pass."""
    d = _stack_dims(H, W)
    q = {}

    # conv1: (32,3,3,3) -> (27,32) im2col weight, K padded to 32.
    w1c = jnp.transpose(p["conv1_w"], (2, 3, 1, 0)).reshape(27, 32)
    q["c1_w"] = jnp.pad(w1c, ((0, 5), (0, 0))).astype(jnp.bfloat16)
    q["c1_b"] = p["conv1_b"].reshape(1, -1).astype(jnp.float32)

    # conv2(cat(y1, y1)) == conv2 with folded weights (y1 == y2 in the ref).
    w2_fold = p["conv2_w"][:, :32] + p["conv2_w"][:, 32:]

    def conv_prep(w, b):
        co, ci, kh, kw = w.shape
        wk = jnp.transpose(w, (2, 3, 1, 0)).reshape(kh * kw, ci, co)
        return wk.astype(jnp.bfloat16), b.reshape(1, co).astype(jnp.float32)

    q["c2_w"], q["c2_b"] = conv_prep(w2_fold, p["conv2_b"])
    q["c3_w"], q["c3_b"] = conv_prep(p["conv3_w"], p["conv3_b"])
    q["c4_w"], q["c4_b"] = conv_prep(p["conv4_w"], p["conv4_b"])

    # linear1: fold PyTorch's (C,H,W) flatten order into per-(h,w) 64-row
    # blocks so the kernel consumes the pooled NHWC layout directly.
    Dh, flat = p["linear1_w"].shape
    assert flat == 64 * d.PH2 * d.WVP2
    w1r = p["linear1_w"].reshape(Dh, 64, d.PH2, d.WVP2)            # [o,c,h,w]
    q["l1_w"] = jnp.transpose(w1r, (2, 3, 1, 0)).reshape(
        d.PH2 * d.WVP2, 64, Dh).astype(jnp.bfloat16)
    q["l1_b"] = p["linear1_b"].reshape(1, Dh).astype(jnp.float32)

    l2t = jnp.transpose(p["linear2_w"])                            # (Dh, 10)
    q["l2_w"] = jnp.pad(l2t, ((0, 0), (0, 128 - l2t.shape[1]))
                        ).astype(jnp.bfloat16)
    q["l2_b"] = jnp.pad(p["linear2_b"], (0, 128 - 10)
                        ).reshape(1, 128).astype(jnp.float32)
    return q


if __name__ == "__main__":
    key = jax.random.PRNGKey(0)
    k_x, k_p = jax.random.split(key)

    # Small input consistent with the conv stack: (N=2, C=3, H=W=20)
    # -> conv-stack output (2, 64, 2, 2) -> flatten 256 features.
    N, C, H, W = 2, 3, 20, 20
    x = jax.random.normal(k_x, (N, C, H, W), jnp.float32)

    dims = _stack_dims(H, W)
    flat_dim = 64 * dims.PH2 * dims.WVP2

    params = init_params(k_p, flat_dim)
    kparams = prepare_params(params, H, W)

    fwd = jax.jit(cnn_forward)
    yo, y = fwd(kparams, x)
    jax.block_until_ready((yo, y))

    assert yo.shape == (N, 10) and y.shape == (N, 512)
    assert yo.dtype == jnp.float32 and y.dtype == jnp.float32
    assert bool(jnp.isfinite(yo).all()) and bool(jnp.isfinite(y).all())
    print("KERNEL_OK")
</pallas_src>

<mosaic_0001>
module attributes {stable_mosaic.version = 11 : i64} {
  func.func @_cnn_fused_kernel(%arg0: i32, %arg1: memref<1x324x32xbf16, #tpu.memory_space<vmem>>, %arg2: memref<32x32xbf16, #tpu.memory_space<vmem>>, %arg3: memref<1x32xf32, #tpu.memory_space<vmem>>, %arg4: memref<9x32x32xbf16, #tpu.memory_space<vmem>>, %arg5: memref<1x32xf32, #tpu.memory_space<vmem>>, %arg6: memref<9x32x64xbf16, #tpu.memory_space<vmem>>, %arg7: memref<1x64xf32, #tpu.memory_space<vmem>>, %arg8: memref<9x64x64xbf16, #tpu.memory_space<vmem>>, %arg9: memref<1x64xf32, #tpu.memory_space<vmem>>, %arg10: memref<4x64x512xbf16, #tpu.memory_space<vmem>>, %arg11: memref<1x512xf32, #tpu.memory_space<vmem>>, %arg12: memref<512x128xbf16, #tpu.memory_space<vmem>>, %arg13: memref<1x128xf32, #tpu.memory_space<vmem>>, %arg14: memref<1x1x128xf32, #tpu.memory_space<vmem>>, %arg15: memref<1x1x512xf32, #tpu.memory_space<vmem>>, %arg16: memref<324x32xbf16, #tpu.memory_space<vmem>>, %arg17: memref<288x32xf32, #tpu.memory_space<vmem>>, %arg18: memref<72x32xbf16, #tpu.memory_space<vmem>>, %arg19: memref<54x64xbf16, #tpu.memory_space<vmem>>, %arg20: memref<36x64xf32, #tpu.memory_space<vmem>>, %arg21: memref<8x64xbf16, #tpu.memory_space<vmem>>) attributes {dimension_semantics = [#tpu.dimension_semantics<parallel>], iteration_bounds = array<i64: 2>, scalar_prefetch = 0 : i64, scratch_operands = 6 : i64, tpu.core_type = #tpu.core_type<tc>, window_params = [{transform_indices = @transform_0, window_bounds = array<i64: 1, 324, 32>}, {pipeline_mode = #tpu.pipeline_mode<synchronous>, transform_indices = @transform_1, window_bounds = array<i64: 32, 32>}, {pipeline_mode = #tpu.pipeline_mode<synchronous>, transform_indices = @transform_2, window_bounds = array<i64: 1, 32>}, {pipeline_mode = #tpu.pipeline_mode<synchronous>, transform_indices = @transform_3, window_bounds = array<i64: 9, 32, 32>}, {pipeline_mode = #tpu.pipeline_mode<synchronous>, transform_indices = @transform_4, window_bounds = array<i64: 1, 32>}, {pipeline_mode = #tpu.pipeline_mode<synchronous>, transform_indices = @transform_5, window_bounds = array<i64: 9, 32, 64>}, {pipeline_mode = #tpu.pipeline_mode<synchronous>, transform_indices = @transform_6, window_bounds = array<i64: 1, 64>}, {pipeline_mode = #tpu.pipeline_mode<synchronous>, transform_indices = @transform_7, window_bounds = array<i64: 9, 64, 64>}, {pipeline_mode = #tpu.pipeline_mode<synchronous>, transform_indices = @transform_8, window_bounds = array<i64: 1, 64>}, {pipeline_mode = #tpu.pipeline_mode<synchronous>, transform_indices = @transform_9, window_bounds = array<i64: 4, 64, 512>}, {pipeline_mode = #tpu.pipeline_mode<synchronous>, transform_indices = @transform_10, window_bounds = array<i64: 1, 512>}, {pipeline_mode = #tpu.pipeline_mode<synchronous>, transform_indices = @transform_11, window_bounds = array<i64: 512, 128>}, {pipeline_mode = #tpu.pipeline_mode<synchronous>, transform_indices = @transform_12, window_bounds = array<i64: 1, 128>}, {transform_indices = @transform_13, window_bounds = array<i64: 1, 1, 128>}, {transform_indices = @transform_14, window_bounds = array<i64: 1, 1, 512>}]} {
    %c0 = arith.constant 0 : index
    %c0_0 = arith.constant 0 : index
    %c0_1 = arith.constant 0 : index
    %0 = vector.load %arg1[%c0, %c0_0, %c0_1] : memref<1x324x32xbf16, #tpu.memory_space<vmem>>, vector<1x128x32xbf16>
    %1 = vector.shape_cast %0 : vector<1x128x32xbf16> to vector<128x32xbf16>
    %c0_2 = arith.constant 0 : index
    %c0_3 = arith.constant 0 : index
    %2 = vector.load %arg2[%c0_2, %c0_3] : memref<32x32xbf16, #tpu.memory_space<vmem>>, vector<32x32xbf16>
    %cst = arith.constant dense<0.000000e+00> : vector<128x32xf32>
    %3 = tpu.matmul %1, %2, %cst {dimension_numbers = #tpu.dot_dimension_numbers<[1], [0], [0], [1], [0, 0, 1, 1], [], []>} : vector<128x32xbf16>, vector<32x32xbf16>, vector<128x32xf32> -> vector<128x32xf32>
    %c0_4 = arith.constant 0 : index
    %c0_5 = arith.constant 0 : index
    %4 = vector.load %arg3[%c0_4, %c0_5] : memref<1x32xf32, #tpu.memory_space<vmem>>, vector<1x32xf32>
    %5 = vector.broadcast %4 : vector<1x32xf32> to vector<128x32xf32>
    %6 = arith.addf %3, %5 : vector<128x32xf32>
    %cst_6 = arith.constant 0.000000e+00 : f32
    %7 = vector.broadcast %cst_6 : f32 to vector<128x32xf32>
    %8 = arith.maximumf %6, %7 : vector<128x32xf32>
    %9 = arith.truncf %8 : vector<128x32xf32> to vector<128x32xbf16>
    %c0_7 = arith.constant 0 : index
    %c0_8 = arith.constant 0 : index
    %10 = vector.load %arg16[%c0_7, %c0_8] : memref<324x32xbf16, #tpu.memory_space<vmem>>, vector<128x32xbf16>
    tpu.vector_store %arg16[%c0_7, %c0_8], %9 {strides = array<i32>} : memref<324x32xbf16, #tpu.memory_space<vmem>>, vector<128x32xbf16>,
    %c0_9 = arith.constant 0 : index
    %c128 = arith.constant 128 : index
    %c0_10 = arith.constant 0 : index
    %11 = vector.load %arg1[%c0_9, %c128, %c0_10] : memref<1x324x32xbf16, #tpu.memory_space<vmem>>, vector<1x128x32xbf16>
    %12 = vector.shape_cast %11 : vector<1x128x32xbf16> to vector<128x32xbf16>
    %c0_11 = arith.constant 0 : index
    %c0_12 = arith.constant 0 : index
    %13 = vector.load %arg2[%c0_11, %c0_12] : memref<32x32xbf16, #tpu.memory_space<vmem>>, vector<32x32xbf16>
    %cst_13 = arith.constant dense<0.000000e+00> : vector<128x32xf32>
    %14 = tpu.matmul %12, %13, %cst_13 {dimension_numbers = #tpu.dot_dimension_numbers<[1], [0], [0], [1], [0, 0, 1, 1], [], []>} : vector<128x32xbf16>, vector<32x32xbf16>, vector<128x32xf32> -> vector<128x32xf32>
    %c0_14 = arith.constant 0 : index
    %c0_15 = arith.constant 0 : index
    %15 = vector.load %arg3[%c0_14, %c0_15] : memref<1x32xf32, #tpu.memory_space<vmem>>, vector<1x32xf32>
    %16 = vector.broadcast %15 : vector<1x32xf32> to vector<128x32xf32>
    %17 = arith.addf %14, %16 : vector<128x32xf32>
    %cst_16 = arith.constant 0.000000e+00 : f32
    %18 = vector.broadcast %cst_16 : f32 to vector<128x32xf32>
    %19 = arith.maximumf %17, %18 : vector<128x32xf32>
    %20 = arith.truncf %19 : vector<128x32xf32> to vector<128x32xbf16>
    %c128_17 = arith.constant 128 : index
    %c0_18 = arith.constant 0 : index
    %21 = vector.load %arg16[%c128_17, %c0_18] : memref<324x32xbf16, #tpu.memory_space<vmem>>, vector<128x32xbf16>
    tpu.vector_store %arg16[%c128_17, %c0_18], %20 {strides = array<i32>} : memref<324x32xbf16, #tpu.memory_space<vmem>>, vector<128x32xbf16>,
    %c0_19 = arith.constant 0 : index
    %c256 = arith.constant 256 : index
    %c0_20 = arith.constant 0 : index
    %22 = vector.load %arg1[%c0_19, %c256, %c0_20] : memref<1x324x32xbf16, #tpu.memory_space<vmem>>, vector<1x68x32xbf16>
    %23 = vector.shape_cast %22 : vector<1x68x32xbf16> to vector<68x32xbf16>
    %c0_21 = arith.constant 0 : index
    %c0_22 = arith.constant 0 : index
    %24 = vector.load %arg2[%c0_21, %c0_22] : memref<32x32xbf16, #tpu.memory_space<vmem>>, vector<32x32xbf16>
    %cst_23 = arith.constant dense<0.000000e+00> : vector<68x32xf32>
    %25 = tpu.matmul %23, %24, %cst_23 {dimension_numbers = #tpu.dot_dimension_numbers<[1], [0], [0], [1], [0, 0, 1, 1], [], []>} : vector<68x32xbf16>, vector<32x32xbf16>, vector<68x32xf32> -> vector<68x32xf32>
    %c0_24 = arith.constant 0 : index
    %c0_25 = arith.constant 0 : index
    %26 = vector.load %arg3[%c0_24, %c0_25] : memref<1x32xf32, #tpu.memory_space<vmem>>, vector<1x32xf32>
    %27 = vector.broadcast %26 : vector<1x32xf32> to vector<68x32xf32>
    %28 = arith.addf %25, %27 : vector<68x32xf32>
    %cst_26 = arith.constant 0.000000e+00 : f32
    %29 = vector.broadcast %cst_26 : f32 to vector<68x32xf32>
    %30 = arith.maximumf %28, %29 : vector<68x32xf32>
    %31 = arith.truncf %30 : vector<68x32xf32> to vector<68x32xbf16>
    %c256_27 = arith.constant 256 : index
    %c0_28 = arith.constant 0 : index
    %32 = vector.load %arg16[%c256_27, %c0_28] : memref<324x32xbf16, #tpu.memory_space<vmem>>, vector<68x32xbf16>
    tpu.vector_store %arg16[%c256_27, %c0_28], %31 {strides = array<i32>} : memref<324x32xbf16, #tpu.memory_space<vmem>>, vector<68x32xbf16>,
    %cst_29 = arith.constant 0.000000e+00 : f32
    %33 = vector.broadcast %cst_29 : f32 to vector<128x32xf32>
    %c0_30 = arith.constant 0 : index
    %c0_31 = arith.constant 0 : index
    %34 = vector.load %arg16[%c0_30, %c0_31] : memref<324x32xbf16, #tpu.memory_space<vmem>>, vector<128x32xbf16>
    %c0_32 = arith.constant 0 : index
    %c0_33 = arith.constant 0 : index
    %c0_34 = arith.constant 0 : index
    %35 = vector.load %arg4[%c0_32, %c0_33, %c0_34] : memref<9x32x32xbf16, #tpu.memory_space<vmem>>, vector<1x32x32xbf16>
    %36 = vector.shape_cast %35 : vector<1x32x32xbf16> to vector<32x32xbf16>
    %cst_35 = arith.constant dense<0.000000e+00> : vector<128x32xf32>
    %37 = tpu.matmul %34, %36, %cst_35 {dimension_numbers = #tpu.dot_dimension_numbers<[1], [0], [0], [1], [0, 0, 1, 1], [], []>} : vector<128x32xbf16>, vector<32x32xbf16>, vector<128x32xf32> -> vector<128x32xf32>
    %38 = arith.addf %33, %37 : vector<128x32xf32>
    %c1 = arith.constant 1 : index
    %c0_36 = arith.constant 0 : index
    %39 = vector.load %arg16[%c1, %c0_36] : memref<324x32xbf16, #tpu.memory_space<vmem>>, vector<128x32xbf16>
    %c1_37 = arith.constant 1 : index
    %c0_38 = arith.constant 0 : index
    %c0_39 = arith.constant 0 : index
    %40 = vector.load %arg4[%c1_37, %c0_38, %c0_39] : memref<9x32x32xbf16, #tpu.memory_space<vmem>>, vector<1x32x32xbf16>
    %41 = vector.shape_cast %40 : vector<1x32x32xbf16> to vector<32x32xbf16>
    %cst_40 = arith.constant dense<0.000000e+00> : vector<128x32xf32>
    %42 = tpu.matmul %39, %41, %cst_40 {dimension_numbers = #tpu.dot_dimension_numbers<[1], [0], [0], [1], [0, 0, 1, 1], [], []>} : vector<128x32xbf16>, vector<32x32xbf16>, vector<128x32xf32> -> vector<128x32xf32>
    %43 = arith.addf %38, %42 : vector<128x32xf32>
    %c2 = arith.constant 2 : index
    %c0_41 = arith.constant 0 : index
    %44 = vector.load %arg16[%c2, %c0_41] : memref<324x32xbf16, #tpu.memory_space<vmem>>, vector<128x32xbf16>
    %c2_42 = arith.constant 2 : index
    %c0_43 = arith.constant 0 : index
    %c0_44 = arith.constant 0 : index
    %45 = vector.load %arg4[%c2_42, %c0_43, %c0_44] : memref<9x32x32xbf16, #tpu.memory_space<vmem>>, vector<1x32x32xbf16>
    %46 = vector.shape_cast %45 : vector<1x32x32xbf16> to vector<32x32xbf16>
    %cst_45 = arith.constant dense<0.000000e+00> : vector<128x32xf32>
    %47 = tpu.matmul %44, %46, %cst_45 {dimension_numbers = #tpu.dot_dimension_numbers<[1], [0], [0], [1], [0, 0, 1, 1], [], []>} : vector<128x32xbf16>, vector<32x32xbf16>, vector<128x32xf32> -> vector<128x32xf32>
    %48 = arith.addf %43, %47 : vector<128x32xf32>
    %c18 = arith.constant 18 : index
    %c0_46 = arith.constant 0 : index
    %49 = vector.load %arg16[%c18, %c0_46] : memref<324x32xbf16, #tpu.memory_space<vmem>>, vector<128x32xbf16>
    %c3 = arith.constant 3 : index
    %c0_47 = arith.constant 0 : index
    %c0_48 = arith.constant 0 : index
    %50 = vector.load %arg4[%c3, %c0_47, %c0_48] : memref<9x32x32xbf16, #tpu.memory_space<vmem>>, vector<1x32x32xbf16>
    %51 = vector.shape_cast %50 : vector<1x32x32xbf16> to vector<32x32xbf16>
    %cst_49 = arith.constant dense<0.000000e+00> : vector<128x32xf32>
    %52 = tpu.matmul %49, %51, %cst_49 {dimension_numbers = #tpu.dot_dimension_numbers<[1], [0], [0], [1], [0, 0, 1, 1], [], []>} : vector<128x32xbf16>, vector<32x32xbf16>, vector<128x32xf32> -> vector<128x32xf32>
    %53 = arith.addf %48, %52 : vector<128x32xf32>
    %c19 = arith.constant 19 : index
    %c0_50 = arith.constant 0 : index
    %54 = vector.load %arg16[%c19, %c0_50] : memref<324x32xbf16, #tpu.memory_space<vmem>>, vector<128x32xbf16>
    %c4 = arith.constant 4 : index
    %c0_51 = arith.constant 0 : index
    %c0_52 = arith.constant 0 : index
    %55 = vector.load %arg4[%c4, %c0_51, %c0_52] : memref<9x32x32xbf16, #tpu.memory_space<vmem>>, vector<1x32x32xbf16>
    %56 = vector.shape_cast %55 : vector<1x32x32xbf16> to vector<32x32xbf16>
    %cst_53 = arith.constant dense<0.000000e+00> : vector<128x32xf32>
    %57 = tpu.matmul %54, %56, %cst_53 {dimension_numbers = #tpu.dot_dimension_numbers<[1], [0], [0], [1], [0, 0, 1, 1], [], []>} : vector<128x32xbf16>, vector<32x32xbf16>, vector<128x32xf32> -> vector<128x32xf32>
    %58 = arith.addf %53, %57 : vector<128x32xf32>
    %c20 = arith.constant 20 : index
    %c0_54 = arith.constant 0 : index
    %59 = vector.load %arg16[%c20, %c0_54] : memref<324x32xbf16, #tpu.memory_space<vmem>>, vector<128x32xbf16>
    %c5 = arith.constant 5 : index
    %c0_55 = arith.constant 0 : index
    %c0_56 = arith.constant 0 : index
    %60 = vector.load %arg4[%c5, %c0_55, %c0_56] : memref<9x32x32xbf16, #tpu.memory_space<vmem>>, vector<1x32x32xbf16>
    %61 = vector.shape_cast %60 : vector<1x32x32xbf16> to vector<32x32xbf16>
    %cst_57 = arith.constant dense<0.000000e+00> : vector<128x32xf32>
    %62 = tpu.matmul %59, %61, %cst_57 {dimension_numbers = #tpu.dot_dimension_numbers<[1], [0], [0], [1], [0, 0, 1, 1], [], []>} : vector<128x32xbf16>, vector<32x32xbf16>, vector<128x32xf32> -> vector<128x32xf32>
    %63 = arith.addf %58, %62 : vector<128x32xf32>
    %c36 = arith.constant 36 : index
    %c0_58 = arith.constant 0 : index
    %64 = vector.load %arg16[%c36, %c0_58] : memref<324x32xbf16, #tpu.memory_space<vmem>>, vector<128x32xbf16>
    %c6 = arith.constant 6 : index
    %c0_59 = arith.constant 0 : index
    %c0_60 = arith.constant 0 : index
    %65 = vector.load %arg4[%c6, %c0_59, %c0_60] : memref<9x32x32xbf16, #tpu.memory_space<vmem>>, vector<1x32x32xbf16>
    %66 = vector.shape_cast %65 : vector<1x32x32xbf16> to vector<32x32xbf16>
    %cst_61 = arith.constant dense<0.000000e+00> : vector<128x32xf32>
    %67 = tpu.matmul %64, %66, %cst_61 {dimension_numbers = #tpu.dot_dimension_numbers<[1], [0], [0], [1], [0, 0, 1, 1], [], []>} : vector<128x32xbf16>, vector<32x32xbf16>, vector<128x32xf32> -> vector<128x32xf32>
    %68 = arith.addf %63, %67 : vector<128x32xf32>
    %c37 = arith.constant 37 : index
    %c0_62 = arith.constant 0 : index
    %69 = vector.load %arg16[%c37, %c0_62] : memref<324x32xbf16, #tpu.memory_space<vmem>>, vector<128x32xbf16>
    %c7 = arith.constant 7 : index
    %c0_63 = arith.constant 0 : index
    %c0_64 = arith.constant 0 : index
    %70 = vector.load %arg4[%c7, %c0_63, %c0_64] : memref<9x32x32xbf16, #tpu.memory_space<vmem>>, vector<1x32x32xbf16>
    %71 = vector.shape_cast %70 : vector<1x32x32xbf16> to vector<32x32xbf16>
    %cst_65 = arith.constant dense<0.000000e+00> : vector<128x32xf32>
    %72 = tpu.matmul %69, %71, %cst_65 {dimension_numbers = #tpu.dot_dimension_numbers<[1], [0], [0], [1], [0, 0, 1, 1], [], []>} : vector<128x32xbf16>, vector<32x32xbf16>, vector<128x32xf32> -> vector<128x32xf32>
    %73 = arith.addf %68, %72 : vector<128x32xf32>
    %c38 = arith.constant 38 : index
    %c0_66 = arith.constant 0 : index
    %74 = vector.load %arg16[%c38, %c0_66] : memref<324x32xbf16, #tpu.memory_space<vmem>>, vector<128x32xbf16>
    %c8 = arith.constant 8 : index
    %c0_67 = arith.constant 0 : index
    %c0_68 = arith.constant 0 : index
    %75 = vector.load %arg4[%c8, %c0_67, %c0_68] : memref<9x32x32xbf16, #tpu.memory_space<vmem>>, vector<1x32x32xbf16>
    %76 = vector.shape_cast %75 : vector<1x32x32xbf16> to vector<32x32xbf16>
    %cst_69 = arith.constant dense<0.000000e+00> : vector<128x32xf32>
    %77 = tpu.matmul %74, %76, %cst_69 {dimension_numbers = #tpu.dot_dimension_numbers<[1], [0], [0], [1], [0, 0, 1, 1], [], []>} : vector<128x32xbf16>, vector<32x32xbf16>, vector<128x32xf32> -> vector<128x32xf32>
    %78 = arith.addf %73, %77 : vector<128x32xf32>
    %c0_70 = arith.constant 0 : index
    %c0_71 = arith.constant 0 : index
    %79 = vector.load %arg5[%c0_70, %c0_71] : memref<1x32xf32, #tpu.memory_space<vmem>>, vector<1x32xf32>
    %80 = vector.broadcast %79 : vector<1x32xf32> to vector<128x32xf32>
    %81 = arith.addf %78, %80 : vector<128x32xf32>
    %cst_72 = arith.constant 0.000000e+00 : f32
    %82 = vector.broadcast %cst_72 : f32 to vector<128x32xf32>
    %83 = arith.maximumf %81, %82 : vector<128x32xf32>
    %c0_73 = arith.constant 0 : index
    %c0_74 = arith.constant 0 : index
    %84 = vector.load %arg17[%c0_73, %c0_74] : memref<288x32xf32, #tpu.memory_space<vmem>>, vector<128x32xf32>
    tpu.vector_store %arg17[%c0_73, %c0_74], %83 {strides = array<i32>} : memref<288x32xf32, #tpu.memory_space<vmem>>, vector<128x32xf32>,
    %cst_75 = arith.constant 0.000000e+00 : f32
    %85 = vector.broadcast %cst_75 : f32 to vector<128x32xf32>
    %c128_76 = arith.constant 128 : index
    %c0_77 = arith.constant 0 : index
    %86 = vector.load %arg16[%c128_76, %c0_77] : memref<324x32xbf16, #tpu.memory_space<vmem>>, vector<128x32xbf16>
    %c0_78 = arith.constant 0 : index
    %c0_79 = arith.constant 0 : index
    %c0_80 = arith.constant 0 : index
    %87 = vector.load %arg4[%c0_78, %c0_79, %c0_80] : memref<9x32x32xbf16, #tpu.memory_space<vmem>>, vector<1x32x32xbf16>
    %88 = vector.shape_cast %87 : vector<1x32x32xbf16> to vector<32x32xbf16>
    %cst_81 = arith.constant dense<0.000000e+00> : vector<128x32xf32>
    %89 = tpu.matmul %86, %88, %cst_81 {dimension_numbers = #tpu.dot_dimension_numbers<[1], [0], [0], [1], [0, 0, 1, 1], [], []>} : vector<128x32xbf16>, vector<32x32xbf16>, vector<128x32xf32> -> vector<128x32xf32>
    %90 = arith.addf %85, %89 : vector<128x32xf32>
    %c129 = arith.constant 129 : index
    %c0_82 = arith.constant 0 : index
    %91 = vector.load %arg16[%c129, %c0_82] : memref<324x32xbf16, #tpu.memory_space<vmem>>, vector<128x32xbf16>
    %c1_83 = arith.constant 1 : index
    %c0_84 = arith.constant 0 : index
    %c0_85 = arith.constant 0 : index
    %92 = vector.load %arg4[%c1_83, %c0_84, %c0_85] : memref<9x32x32xbf16, #tpu.memory_space<vmem>>, vector<1x32x32xbf16>
    %93 = vector.shape_cast %92 : vector<1x32x32xbf16> to vector<32x32xbf16>
    %cst_86 = arith.constant dense<0.000000e+00> : vector<128x32xf32>
    %94 = tpu.matmul %91, %93, %cst_86 {dimension_numbers = #tpu.dot_dimension_numbers<[1], [0], [0], [1], [0, 0, 1, 1], [], []>} : vector<128x32xbf16>, vector<32x32xbf16>, vector<128x32xf32> -> vector<128x32xf32>
    %95 = arith.addf %90, %94 : vector<128x32xf32>
    %c130 = arith.constant 130 : index
    %c0_87 = arith.constant 0 : index
    %96 = vector.load %arg16[%c130, %c0_87] : memref<324x32xbf16, #tpu.memory_space<vmem>>, vector<128x32xbf16>
    %c2_88 = arith.constant 2 : index
    %c0_89 = arith.constant 0 : index
    %c0_90 = arith.constant 0 : index
    %97 = vector.load %arg4[%c2_88, %c0_89, %c0_90] : memref<9x32x32xbf16, #tpu.memory_space<vmem>>, vector<1x32x32xbf16>
    %98 = vector.shape_cast %97 : vector<1x32x32xbf16> to vector<32x32xbf16>
    %cst_91 = arith.constant dense<0.000000e+00> : vector<128x32xf32>
    %99 = tpu.matmul %96, %98, %cst_91 {dimension_numbers = #tpu.dot_dimension_numbers<[1], [0], [0], [1], [0, 0, 1, 1], [], []>} : vector<128x32xbf16>, vector<32x32xbf16>, vector<128x32xf32> -> vector<128x32xf32>
    %100 = arith.addf %95, %99 : vector<128x32xf32>
    %c146 = arith.constant 146 : index
    %c0_92 = arith.constant 0 : index
    %101 = vector.load %arg16[%c146, %c0_92] : memref<324x32xbf16, #tpu.memory_space<vmem>>, vector<128x32xbf16>
    %c3_93 = arith.constant 3 : index
    %c0_94 = arith.constant 0 : index
    %c0_95 = arith.constant 0 : index
    %102 = vector.load %arg4[%c3_93, %c0_94, %c0_95] : memref<9x32x32xbf16, #tpu.memory_space<vmem>>, vector<1x32x32xbf16>
    %103 = vector.shape_cast %102 : vector<1x32x32xbf16> to vector<32x32xbf16>
    %cst_96 = arith.constant dense<0.000000e+00> : vector<128x32xf32>
    %104 = tpu.matmul %101, %103, %cst_96 {dimension_numbers = #tpu.dot_dimension_numbers<[1], [0], [0], [1], [0, 0, 1, 1], [], []>} : vector<128x32xbf16>, vector<32x32xbf16>, vector<128x32xf32> -> vector<128x32xf32>
    %105 = arith.addf %100, %104 : vector<128x32xf32>
    %c147 = arith.constant 147 : index
    %c0_97 = arith.constant 0 : index
    %106 = vector.load %arg16[%c147, %c0_97] : memref<324x32xbf16, #tpu.memory_space<vmem>>, vector<128x32xbf16>
    %c4_98 = arith.constant 4 : index
    %c0_99 = arith.constant 0 : index
    %c0_100 = arith.constant 0 : index
    %107 = vector.load %arg4[%c4_98, %c0_99, %c0_100] : memref<9x32x32xbf16, #tpu.memory_space<vmem>>, vector<1x32x32xbf16>
    %108 = vector.shape_cast %107 : vector<1x32x32xbf16> to vector<32x32xbf16>
    %cst_101 = arith.constant dense<0.000000e+00> : vector<128x32xf32>
    %109 = tpu.matmul %106, %108, %cst_101 {dimension_numbers = #tpu.dot_dimension_numbers<[1], [0], [0], [1], [0, 0, 1, 1], [], []>} : vector<128x32xbf16>, vector<32x32xbf16>, vector<128x32xf32> -> vector<128x32xf32>
    %110 = arith.addf %105, %109 : vector<128x32xf32>
    %c148 = arith.constant 148 : index
    %c0_102 = arith.constant 0 : index
    %111 = vector.load %arg16[%c148, %c0_102] : memref<324x32xbf16, #tpu.memory_space<vmem>>, vector<128x32xbf16>
    %c5_103 = arith.constant 5 : index
    %c0_104 = arith.constant 0 : index
    %c0_105 = arith.constant 0 : index
    %112 = vector.load %arg4[%c5_103, %c0_104, %c0_105] : memref<9x32x32xbf16, #tpu.memory_space<vmem>>, vector<1x32x32xbf16>
    %113 = vector.shape_cast %112 : vector<1x32x32xbf16> to vector<32x32xbf16>
    %cst_106 = arith.constant dense<0.000000e+00> : vector<128x32xf32>
    %114 = tpu.matmul %111, %113, %cst_106 {dimension_numbers = #tpu.dot_dimension_numbers<[1], [0], [0], [1], [0, 0, 1, 1], [], []>} : vector<128x32xbf16>, vector<32x32xbf16>, vector<128x32xf32> -> vector<128x32xf32>
    %115 = arith.addf %110, %114 : vector<128x32xf32>
    %c164 = arith.constant 164 : index
    %c0_107 = arith.constant 0 : index
    %116 = vector.load %arg16[%c164, %c0_107] : memref<324x32xbf16, #tpu.memory_space<vmem>>, vector<128x32xbf16>
    %c6_108 = arith.constant 6 : index
    %c0_109 = arith.constant 0 : index
    %c0_110 = arith.constant 0 : index
    %117 = vector.load %arg4[%c6_108, %c0_109, %c0_110] : memref<9x32x32xbf16, #tpu.memory_space<vmem>>, vector<1x32x32xbf16>
    %118 = vector.shape_cast %117 : vector<1x32x32xbf16> to vector<32x32xbf16>
    %cst_111 = arith.constant dense<0.000000e+00> : vector<128x32xf32>
    %119 = tpu.matmul %116, %118, %cst_111 {dimension_numbers = #tpu.dot_dimension_numbers<[1], [0], [0], [1], [0, 0, 1, 1], [], []>} : vector<128x32xbf16>, vector<32x32xbf16>, vector<128x32xf32> -> vector<128x32xf32>
    %120 = arith.addf %115, %119 : vector<128x32xf32>
    %c165 = arith.constant 165 : index
    %c0_112 = arith.constant 0 : index
    %121 = vector.load %arg16[%c165, %c0_112] : memref<324x32xbf16, #tpu.memory_space<vmem>>, vector<128x32xbf16>
    %c7_113 = arith.constant 7 : index
    %c0_114 = arith.constant 0 : index
    %c0_115 = arith.constant 0 : index
    %122 = vector.load %arg4[%c7_113, %c0_114, %c0_115] : memref<9x32x32xbf16, #tpu.memory_space<vmem>>, vector<1x32x32xbf16>
    %123 = vector.shape_cast %122 : vector<1x32x32xbf16> to vector<32x32xbf16>
    %cst_116 = arith.constant dense<0.000000e+00> : vector<128x32xf32>
    %124 = tpu.matmul %121, %123, %cst_116 {dimension_numbers = #tpu.dot_dimension_numbers<[1], [0], [0], [1], [0, 0, 1, 1], [], []>} : vector<128x32xbf16>, vector<32x32xbf16>, vector<128x32xf32> -> vector<128x32xf32>
    %125 = arith.addf %120, %124 : vector<128x32xf32>
    %c166 = arith.constant 166 : index
    %c0_117 = arith.constant 0 : index
    %126 = vector.load %arg16[%c166, %c0_117] : memref<324x32xbf16, #tpu.memory_space<vmem>>, vector<128x32xbf16>
    %c8_118 = arith.constant 8 : index
    %c0_119 = arith.constant 0 : index
    %c0_120 = arith.constant 0 : index
    %127 = vector.load %arg4[%c8_118, %c0_119, %c0_120] : memref<9x32x32xbf16, #tpu.memory_space<vmem>>, vector<1x32x32xbf16>
    %128 = vector.shape_cast %127 : vector<1x32x32xbf16> to vector<32x32xbf16>
    %cst_121 = arith.constant dense<0.000000e+00> : vector<128x32xf32>
    %129 = tpu.matmul %126, %128, %cst_121 {dimension_numbers = #tpu.dot_dimension_numbers<[1], [0], [0], [1], [0, 0, 1, 1], [], []>} : vector<128x32xbf16>, vector<32x32xbf16>, vector<128x32xf32> -> vector<128x32xf32>
    %130 = arith.addf %125, %129 : vector<128x32xf32>
    %c0_122 = arith.constant 0 : index
    %c0_123 = arith.constant 0 : index
    %131 = vector.load %arg5[%c0_122, %c0_123] : memref<1x32xf32, #tpu.memory_space<vmem>>, vector<1x32xf32>
    %132 = vector.broadcast %131 : vector<1x32xf32> to vector<128x32xf32>
    %133 = arith.addf %130, %132 : vector<128x32xf32>
    %cst_124 = arith.constant 0.000000e+00 : f32
    %134 = vector.broadcast %cst_124 : f32 to vector<128x32xf32>
    %135 = arith.maximumf %133, %134 : vector<128x32xf32>
    %c128_125 = arith.constant 128 : index
    %c0_126 = arith.constant 0 : index
    %136 = vector.load %arg17[%c128_125, %c0_126] : memref<288x32xf32, #tpu.memory_space<vmem>>, vector<128x32xf32>
    tpu.vector_store %arg17[%c128_125, %c0_126], %135 {strides = array<i32>} : memref<288x32xf32, #tpu.memory_space<vmem>>, vector<128x32xf32>,
    %cst_127 = arith.constant 0.000000e+00 : f32
    %137 = vector.broadcast %cst_127 : f32 to vector<30x32xf32>
    %c256_128 = arith.constant 256 : index
    %c0_129 = arith.constant 0 : index
    %138 = vector.load %arg16[%c256_128, %c0_129] : memref<324x32xbf16, #tpu.memory_space<vmem>>, vector<30x32xbf16>
    %c0_130 = arith.constant 0 : index
    %c0_131 = arith.constant 0 : index
    %c0_132 = arith.constant 0 : index
    %139 = vector.load %arg4[%c0_130, %c0_131, %c0_132] : memref<9x32x32xbf16, #tpu.memory_space<vmem>>, vector<1x32x32xbf16>
    %140 = vector.shape_cast %139 : vector<1x32x32xbf16> to vector<32x32xbf16>
    %cst_133 = arith.constant dense<0.000000e+00> : vector<30x32xf32>
    %141 = tpu.matmul %138, %140, %cst_133 {dimension_numbers = #tpu.dot_dimension_numbers<[1], [0], [0], [1], [0, 0, 1, 1], [], []>} : vector<30x32xbf16>, vector<32x32xbf16>, vector<30x32xf32> -> vector<30x32xf32>
    %142 = arith.addf %137, %141 : vector<30x32xf32>
    %c257 = arith.constant 257 : index
    %c0_134 = arith.constant 0 : index
    %143 = vector.load %arg16[%c257, %c0_134] : memref<324x32xbf16, #tpu.memory_space<vmem>>, vector<30x32xbf16>
    %c1_135 = arith.constant 1 : index
    %c0_136 = arith.constant 0 : index
    %c0_137 = arith.constant 0 : index
    %144 = vector.load %arg4[%c1_135, %c0_136, %c0_137] : memref<9x32x32xbf16, #tpu.memory_space<vmem>>, vector<1x32x32xbf16>
    %145 = vector.shape_cast %144 : vector<1x32x32xbf16> to vector<32x32xbf16>
    %cst_138 = arith.constant dense<0.000000e+00> : vector<30x32xf32>
    %146 = tpu.matmul %143, %145, %cst_138 {dimension_numbers = #tpu.dot_dimension_numbers<[1], [0], [0], [1], [0, 0, 1, 1], [], []>} : vector<30x32xbf16>, vector<32x32xbf16>, vector<30x32xf32> -> vector<30x32xf32>
    %147 = arith.addf %142, %146 : vector<30x32xf32>
    %c258 = arith.constant 258 : index
    %c0_139 = arith.constant 0 : index
    %148 = vector.load %arg16[%c258, %c0_139] : memref<324x32xbf16, #tpu.memory_space<vmem>>, vector<30x32xbf16>
    %c2_140 = arith.constant 2 : index
    %c0_141 = arith.constant 0 : index
    %c0_142 = arith.constant 0 : index
    %149 = vector.load %arg4[%c2_140, %c0_141, %c0_142] : memref<9x32x32xbf16, #tpu.memory_space<vmem>>, vector<1x32x32xbf16>
    %150 = vector.shape_cast %149 : vector<1x32x32xbf16> to vector<32x32xbf16>
    %cst_143 = arith.constant dense<0.000000e+00> : vector<30x32xf32>
    %151 = tpu.matmul %148, %150, %cst_143 {dimension_numbers = #tpu.dot_dimension_numbers<[1], [0], [0], [1], [0, 0, 1, 1], [], []>} : vector<30x32xbf16>, vector<32x32xbf16>, vector<30x32xf32> -> vector<30x32xf32>
    %152 = arith.addf %147, %151 : vector<30x32xf32>
    %c274 = arith.constant 274 : index
    %c0_144 = arith.constant 0 : index
    %153 = vector.load %arg16[%c274, %c0_144] : memref<324x32xbf16, #tpu.memory_space<vmem>>, vector<30x32xbf16>
    %c3_145 = arith.constant 3 : index
    %c0_146 = arith.constant 0 : index
    %c0_147 = arith.constant 0 : index
    %154 = vector.load %arg4[%c3_145, %c0_146, %c0_147] : memref<9x32x32xbf16, #tpu.memory_space<vmem>>, vector<1x32x32xbf16>
    %155 = vector.shape_cast %154 : vector<1x32x32xbf16> to vector<32x32xbf16>
    %cst_148 = arith.constant dense<0.000000e+00> : vector<30x32xf32>
    %156 = tpu.matmul %153, %155, %cst_148 {dimension_numbers = #tpu.dot_dimension_numbers<[1], [0], [0], [1], [0, 0, 1, 1], [], []>} : vector<30x32xbf16>, vector<32x32xbf16>, vector<30x32xf32> -> vector<30x32xf32>
    %157 = arith.addf %152, %156 : vector<30x32xf32>
    %c275 = arith.constant 275 : index
    %c0_149 = arith.constant 0 : index
    %158 = vector.load %arg16[%c275, %c0_149] : memref<324x32xbf16, #tpu.memory_space<vmem>>, vector<30x32xbf16>
    %c4_150 = arith.constant 4 : index
    %c0_151 = arith.constant 0 : index
    %c0_152 = arith.constant 0 : index
    %159 = vector.load %arg4[%c4_150, %c0_151, %c0_152] : memref<9x32x32xbf16, #tpu.memory_space<vmem>>, vector<1x32x32xbf16>
    %160 = vector.shape_cast %159 : vector<1x32x32xbf16> to vector<32x32xbf16>
    %cst_153 = arith.constant dense<0.000000e+00> : vector<30x32xf32>
    %161 = tpu.matmul %158, %160, %cst_153 {dimension_numbers = #tpu.dot_dimension_numbers<[1], [0], [0], [1], [0, 0, 1, 1], [], []>} : vector<30x32xbf16>, vector<32x32xbf16>, vector<30x32xf32> -> vector<30x32xf32>
    %162 = arith.addf %157, %161 : vector<30x32xf32>
    %c276 = arith.constant 276 : index
    %c0_154 = arith.constant 0 : index
    %163 = vector.load %arg16[%c276, %c0_154] : memref<324x32xbf16, #tpu.memory_space<vmem>>, vector<30x32xbf16>
    %c5_155 = arith.constant 5 : index
    %c0_156 = arith.constant 0 : index
    %c0_157 = arith.constant 0 : index
    %164 = vector.load %arg4[%c5_155, %c0_156, %c0_157] : memref<9x32x32xbf16, #tpu.memory_space<vmem>>, vector<1x32x32xbf16>
    %165 = vector.shape_cast %164 : vector<1x32x32xbf16> to vector<32x32xbf16>
    %cst_158 = arith.constant dense<0.000000e+00> : vector<30x32xf32>
    %166 = tpu.matmul %163, %165, %cst_158 {dimension_numbers = #tpu.dot_dimension_numbers<[1], [0], [0], [1], [0, 0, 1, 1], [], []>} : vector<30x32xbf16>, vector<32x32xbf16>, vector<30x32xf32> -> vector<30x32xf32>
    %167 = arith.addf %162, %166 : vector<30x32xf32>
    %c292 = arith.constant 292 : index
    %c0_159 = arith.constant 0 : index
    %168 = vector.load %arg16[%c292, %c0_159] : memref<324x32xbf16, #tpu.memory_space<vmem>>, vector<30x32xbf16>
    %c6_160 = arith.constant 6 : index
    %c0_161 = arith.constant 0 : index
    %c0_162 = arith.constant 0 : index
    %169 = vector.load %arg4[%c6_160, %c0_161, %c0_162] : memref<9x32x32xbf16, #tpu.memory_space<vmem>>, vector<1x32x32xbf16>
    %170 = vector.shape_cast %169 : vector<1x32x32xbf16> to vector<32x32xbf16>
    %cst_163 = arith.constant dense<0.000000e+00> : vector<30x32xf32>
    %171 = tpu.matmul %168, %170, %cst_163 {dimension_numbers = #tpu.dot_dimension_numbers<[1], [0], [0], [1], [0, 0, 1, 1], [], []>} : vector<30x32xbf16>, vector<32x32xbf16>, vector<30x32xf32> -> vector<30x32xf32>
    %172 = arith.addf %167, %171 : vector<30x32xf32>
    %c293 = arith.constant 293 : index
    %c0_164 = arith.constant 0 : index
    %173 = vector.load %arg16[%c293, %c0_164] : memref<324x32xbf16, #tpu.memory_space<vmem>>, vector<30x32xbf16>
    %c7_165 = arith.constant 7 : index
    %c0_166 = arith.constant 0 : index
    %c0_167 = arith.constant 0 : index
    %174 = vector.load %arg4[%c7_165, %c0_166, %c0_167] : memref<9x32x32xbf16, #tpu.memory_space<vmem>>, vector<1x32x32xbf16>
    %175 = vector.shape_cast %174 : vector<1x32x32xbf16> to vector<32x32xbf16>
    %cst_168 = arith.constant dense<0.000000e+00> : vector<30x32xf32>
    %176 = tpu.matmul %173, %175, %cst_168 {dimension_numbers = #tpu.dot_dimension_numbers<[1], [0], [0], [1], [0, 0, 1, 1], [], []>} : vector<30x32xbf16>, vector<32x32xbf16>, vector<30x32xf32> -> vector<30x32xf32>
    %177 = arith.addf %172, %176 : vector<30x32xf32>
    %c294 = arith.constant 294 : index
    %c0_169 = arith.constant 0 : index
    %178 = vector.load %arg16[%c294, %c0_169] : memref<324x32xbf16, #tpu.memory_space<vmem>>, vector<30x32xbf16>
    %c8_170 = arith.constant 8 : index
    %c0_171 = arith.constant 0 : index
    %c0_172 = arith.constant 0 : index
    %179 = vector.load %arg4[%c8_170, %c0_171, %c0_172] : memref<9x32x32xbf16, #tpu.memory_space<vmem>>, vector<1x32x32xbf16>
    %180 = vector.shape_cast %179 : vector<1x32x32xbf16> to vector<32x32xbf16>
    %cst_173 = arith.constant dense<0.000000e+00> : vector<30x32xf32>
    %181 = tpu.matmul %178, %180, %cst_173 {dimension_numbers = #tpu.dot_dimension_numbers<[1], [0], [0], [1], [0, 0, 1, 1], [], []>} : vector<30x32xbf16>, vector<32x32xbf16>, vector<30x32xf32> -> vector<30x32xf32>
    %182 = arith.addf %177, %181 : vector<30x32xf32>
    %c0_174 = arith.constant 0 : index
    %c0_175 = arith.constant 0 : index
    %183 = vector.load %arg5[%c0_174, %c0_175] : memref<1x32xf32, #tpu.memory_space<vmem>>, vector<1x32xf32>
    %184 = vector.broadcast %183 : vector<1x32xf32> to vector<30x32xf32>
    %185 = arith.addf %182, %184 : vector<30x32xf32>
    %cst_176 = arith.constant 0.000000e+00 : f32
    %186 = vector.broadcast %cst_176 : f32 to vector<30x32xf32>
    %187 = arith.maximumf %185, %186 : vector<30x32xf32>
    %c256_177 = arith.constant 256 : index
    %c0_178 = arith.constant 0 : index
    %188 = vector.load %arg17[%c256_177, %c0_178] : memref<288x32xf32, #tpu.memory_space<vmem>>, vector<30x32xf32>
    tpu.vector_store %arg17[%c256_177, %c0_178], %187 {strides = array<i32>} : memref<288x32xf32, #tpu.memory_space<vmem>>, vector<30x32xf32>,
    %cst_179 = arith.constant 0.000000e+00 : f32
    %189 = vector.broadcast %cst_179 : f32 to vector<2x32xf32>
    %c286 = arith.constant 286 : index
    %c0_180 = arith.constant 0 : index
    %190 = vector.load %arg17[%c286, %c0_180] : memref<288x32xf32, #tpu.memory_space<vmem>>, vector<2x32xf32>
    tpu.vector_store %arg17[%c286, %c0_180], %189 {strides = array<i32>} : memref<288x32xf32, #tpu.memory_space<vmem>>, vector<2x32xf32>,
    %c0_181 = arith.constant 0 : index
    %c0_182 = arith.constant 0 : index
    %191 = tpu.strided_load %arg17[%c0_181, %c0_182] {strides = array<i32: 2, 1>} : memref<288x32xf32, #tpu.memory_space<vmem>>, vector<9x32xf32>
    %c1_183 = arith.constant 1 : index
    %c0_184 = arith.constant 0 : index
    %192 = tpu.strided_load %arg17[%c1_183, %c0_184] {strides = array<i32: 2, 1>} : memref<288x32xf32, #tpu.memory_space<vmem>>, vector<9x32xf32>
    %193 = arith.maximumf %191, %192 : vector<9x32xf32>
    %c18_185 = arith.constant 18 : index
    %c0_186 = arith.constant 0 : index
    %194 = tpu.strided_load %arg17[%c18_185, %c0_186] {strides = array<i32: 2, 1>} : memref<288x32xf32, #tpu.memory_space<vmem>>, vector<9x32xf32>
    %c19_187 = arith.constant 19 : index
    %c0_188 = arith.constant 0 : index
    %195 = tpu.strided_load %arg17[%c19_187, %c0_188] {strides = array<i32: 2, 1>} : memref<288x32xf32, #tpu.memory_space<vmem>>, vector<9x32xf32>
    %196 = arith.maximumf %194, %195 : vector<9x32xf32>
    %197 = arith.maximumf %193, %196 : vector<9x32xf32>
    %198 = arith.truncf %197 : vector<9x32xf32> to vector<9x32xbf16>
    %c0_189 = arith.constant 0 : index
    %c0_190 = arith.constant 0 : index
    %199 = vector.load %arg18[%c0_189, %c0_190] : memref<72x32xbf16, #tpu.memory_space<vmem>>, vector<9x32xbf16>
    tpu.vector_store %arg18[%c0_189, %c0_190], %198 {strides = array<i32>} : memref<72x32xbf16, #tpu.memory_space<vmem>>, vector<9x32xbf16>,
    %c36_191 = arith.constant 36 : index
    %c0_192 = arith.constant 0 : index
    %200 = tpu.strided_load %arg17[%c36_191, %c0_192] {strides = array<i32: 2, 1>} : memref<288x32xf32, #tpu.memory_space<vmem>>, vector<9x32xf32>
    %c37_193 = arith.constant 37 : index
    %c0_194 = arith.constant 0 : index
    %201 = tpu.strided_load %arg17[%c37_193, %c0_194] {strides = array<i32: 2, 1>} : memref<288x32xf32, #tpu.memory_space<vmem>>, vector<9x32xf32>
    %202 = arith.maximumf %200, %201 : vector<9x32xf32>
    %c54 = arith.constant 54 : index
    %c0_195 = arith.constant 0 : index
    %203 = tpu.strided_load %arg17[%c54, %c0_195] {strides = array<i32: 2, 1>} : memref<288x32xf32, #tpu.memory_space<vmem>>, vector<9x32xf32>
    %c55 = arith.constant 55 : index
    %c0_196 = arith.constant 0 : index
    %204 = tpu.strided_load %arg17[%c55, %c0_196] {strides = array<i32: 2, 1>} : memref<288x32xf32, #tpu.memory_space<vmem>>, vector<9x32xf32>
    %205 = arith.maximumf %203, %204 : vector<9x32xf32>
    %206 = arith.maximumf %202, %205 : vector<9x32xf32>
    %207 = arith.truncf %206 : vector<9x32xf32> to vector<9x32xbf16>
    %c9 = arith.constant 9 : index
    %c0_197 = arith.constant 0 : index
    %208 = vector.load %arg18[%c9, %c0_197] : memref<72x32xbf16, #tpu.memory_space<vmem>>, vector<9x32xbf16>
    tpu.vector_store %arg18[%c9, %c0_197], %207 {strides = array<i32>} : memref<72x32xbf16, #tpu.memory_space<vmem>>, vector<9x32xbf16>,
    %c72 = arith.constant 72 : index
    %c0_198 = arith.constant 0 : index
    %209 = tpu.strided_load %arg17[%c72, %c0_198] {strides = array<i32: 2, 1>} : memref<288x32xf32, #tpu.memory_space<vmem>>, vector<9x32xf32>
    %c73 = arith.constant 73 : index
    %c0_199 = arith.constant 0 : index
    %210 = tpu.strided_load %arg17[%c73, %c0_199] {strides = array<i32: 2, 1>} : memref<288x32xf32, #tpu.memory_space<vmem>>, vector<9x32xf32>
    %211 = arith.maximumf %209, %210 : vector<9x32xf32>
    %c90 = arith.constant 90 : index
    %c0_200 = arith.constant 0 : index
    %212 = tpu.strided_load %arg17[%c90, %c0_200] {strides = array<i32: 2, 1>} : memref<288x32xf32, #tpu.memory_space<vmem>>, vector<9x32xf32>
    %c91 = arith.constant 91 : index
    %c0_201 = arith.constant 0 : index
    %213 = tpu.strided_load %arg17[%c91, %c0_201] {strides = array<i32: 2, 1>} : memref<288x32xf32, #tpu.memory_space<vmem>>, vector<9x32xf32>
    %214 = arith.maximumf %212, %213 : vector<9x32xf32>
    %215 = arith.maximumf %211, %214 : vector<9x32xf32>
    %216 = arith.truncf %215 : vector<9x32xf32> to vector<9x32xbf16>
    %c18_202 = arith.constant 18 : index
    %c0_203 = arith.constant 0 : index
    %217 = vector.load %arg18[%c18_202, %c0_203] : memref<72x32xbf16, #tpu.memory_space<vmem>>, vector<9x32xbf16>
    tpu.vector_store %arg18[%c18_202, %c0_203], %216 {strides = array<i32>} : memref<72x32xbf16, #tpu.memory_space<vmem>>, vector<9x32xbf16>,
    %c108 = arith.constant 108 : index
    %c0_204 = arith.constant 0 : index
    %218 = tpu.strided_load %arg17[%c108, %c0_204] {strides = array<i32: 2, 1>} : memref<288x32xf32, #tpu.memory_space<vmem>>, vector<9x32xf32>
    %c109 = arith.constant 109 : index
    %c0_205 = arith.constant 0 : index
    %219 = tpu.strided_load %arg17[%c109, %c0_205] {strides = array<i32: 2, 1>} : memref<288x32xf32, #tpu.memory_space<vmem>>, vector<9x32xf32>
    %220 = arith.maximumf %218, %219 : vector<9x32xf32>
    %c126 = arith.constant 126 : index
    %c0_206 = arith.constant 0 : index
    %221 = tpu.strided_load %arg17[%c126, %c0_206] {strides = array<i32: 2, 1>} : memref<288x32xf32, #tpu.memory_space<vmem>>, vector<9x32xf32>
    %c127 = arith.constant 127 : index
    %c0_207 = arith.constant 0 : index
    %222 = tpu.strided_load %arg17[%c127, %c0_207] {strides = array<i32: 2, 1>} : memref<288x32xf32, #tpu.memory_space<vmem>>, vector<9x32xf32>
    %223 = arith.maximumf %221, %222 : vector<9x32xf32>
    %224 = arith.maximumf %220, %223 : vector<9x32xf32>
    %225 = arith.truncf %224 : vector<9x32xf32> to vector<9x32xbf16>
    %c27 = arith.constant 27 : index
    %c0_208 = arith.constant 0 : index
    %226 = vector.load %arg18[%c27, %c0_208] : memref<72x32xbf16, #tpu.memory_space<vmem>>, vector<9x32xbf16>
    tpu.vector_store %arg18[%c27, %c0_208], %225 {strides = array<i32>} : memref<72x32xbf16, #tpu.memory_space<vmem>>, vector<9x32xbf16>,
    %c144 = arith.constant 144 : index
    %c0_209 = arith.constant 0 : index
    %227 = tpu.strided_load %arg17[%c144, %c0_209] {strides = array<i32: 2, 1>} : memref<288x32xf32, #tpu.memory_space<vmem>>, vector<9x32xf32>
    %c145 = arith.constant 145 : index
    %c0_210 = arith.constant 0 : index
    %228 = tpu.strided_load %arg17[%c145, %c0_210] {strides = array<i32: 2, 1>} : memref<288x32xf32, #tpu.memory_space<vmem>>, vector<9x32xf32>
    %229 = arith.maximumf %227, %228 : vector<9x32xf32>
    %c162 = arith.constant 162 : index
    %c0_211 = arith.constant 0 : index
    %230 = tpu.strided_load %arg17[%c162, %c0_211] {strides = array<i32: 2, 1>} : memref<288x32xf32, #tpu.memory_space<vmem>>, vector<9x32xf32>
    %c163 = arith.constant 163 : index
    %c0_212 = arith.constant 0 : index
    %231 = tpu.strided_load %arg17[%c163, %c0_212] {strides = array<i32: 2, 1>} : memref<288x32xf32, #tpu.memory_space<vmem>>, vector<9x32xf32>
    %232 = arith.maximumf %230, %231 : vector<9x32xf32>
    %233 = arith.maximumf %229, %232 : vector<9x32xf32>
    %234 = arith.truncf %233 : vector<9x32xf32> to vector<9x32xbf16>
    %c36_213 = arith.constant 36 : index
    %c0_214 = arith.constant 0 : index
    %235 = vector.load %arg18[%c36_213, %c0_214] : memref<72x32xbf16, #tpu.memory_space<vmem>>, vector<9x32xbf16>
    tpu.vector_store %arg18[%c36_213, %c0_214], %234 {strides = array<i32>} : memref<72x32xbf16, #tpu.memory_space<vmem>>, vector<9x32xbf16>,
    %c180 = arith.constant 180 : index
    %c0_215 = arith.constant 0 : index
    %236 = tpu.strided_load %arg17[%c180, %c0_215] {strides = array<i32: 2, 1>} : memref<288x32xf32, #tpu.memory_space<vmem>>, vector<9x32xf32>
    %c181 = arith.constant 181 : index
    %c0_216 = arith.constant 0 : index
    %237 = tpu.strided_load %arg17[%c181, %c0_216] {strides = array<i32: 2, 1>} : memref<288x32xf32, #tpu.memory_space<vmem>>, vector<9x32xf32>
    %238 = arith.maximumf %236, %237 : vector<9x32xf32>
    %c198 = arith.constant 198 : index
    %c0_217 = arith.constant 0 : index
    %239 = tpu.strided_load %arg17[%c198, %c0_217] {strides = array<i32: 2, 1>} : memref<288x32xf32, #tpu.memory_space<vmem>>, vector<9x32xf32>
    %c199 = arith.constant 199 : index
    %c0_218 = arith.constant 0 : index
    %240 = tpu.strided_load %arg17[%c199, %c0_218] {strides = array<i32: 2, 1>} : memref<288x32xf32, #tpu.memory_space<vmem>>, vector<9x32xf32>
    %241 = arith.maximumf %239, %240 : vector<9x32xf32>
    %242 = arith.maximumf %238, %241 : vector<9x32xf32>
    %243 = arith.truncf %242 : vector<9x32xf32> to vector<9x32xbf16>
    %c45 = arith.constant 45 : index
    %c0_219 = arith.constant 0 : index
    %244 = vector.load %arg18[%c45, %c0_219] : memref<72x32xbf16, #tpu.memory_space<vmem>>, vector<9x32xbf16>
    tpu.vector_store %arg18[%c45, %c0_219], %243 {strides = array<i32>} : memref<72x32xbf16, #tpu.memory_space<vmem>>, vector<9x32xbf16>,
    %c216 = arith.constant 216 : index
    %c0_220 = arith.constant 0 : index
    %245 = tpu.strided_load %arg17[%c216, %c0_220] {strides = array<i32: 2, 1>} : memref<288x32xf32, #tpu.memory_space<vmem>>, vector<9x32xf32>
    %c217 = arith.constant 217 : index
    %c0_221 = arith.constant 0 : index
    %246 = tpu.strided_load %arg17[%c217, %c0_221] {strides = array<i32: 2, 1>} : memref<288x32xf32, #tpu.memory_space<vmem>>, vector<9x32xf32>
    %247 = arith.maximumf %245, %246 : vector<9x32xf32>
    %c234 = arith.constant 234 : index
    %c0_222 = arith.constant 0 : index
    %248 = tpu.strided_load %arg17[%c234, %c0_222] {strides = array<i32: 2, 1>} : memref<288x32xf32, #tpu.memory_space<vmem>>, vector<9x32xf32>
    %c235 = arith.constant 235 : index
    %c0_223 = arith.constant 0 : index
    %249 = tpu.strided_load %arg17[%c235, %c0_223] {strides = array<i32: 2, 1>} : memref<288x32xf32, #tpu.memory_space<vmem>>, vector<9x32xf32>
    %250 = arith.maximumf %248, %249 : vector<9x32xf32>
    %251 = arith.maximumf %247, %250 : vector<9x32xf32>
    %252 = arith.truncf %251 : vector<9x32xf32> to vector<9x32xbf16>
    %c54_224 = arith.constant 54 : index
    %c0_225 = arith.constant 0 : index
    %253 = vector.load %arg18[%c54_224, %c0_225] : memref<72x32xbf16, #tpu.memory_space<vmem>>, vector<9x32xbf16>
    tpu.vector_store %arg18[%c54_224, %c0_225], %252 {strides = array<i32>} : memref<72x32xbf16, #tpu.memory_space<vmem>>, vector<9x32xbf16>,
    %c252 = arith.constant 252 : index
    %c0_226 = arith.constant 0 : index
    %254 = tpu.strided_load %arg17[%c252, %c0_226] {strides = array<i32: 2, 1>} : memref<288x32xf32, #tpu.memory_space<vmem>>, vector<9x32xf32>
    %c253 = arith.constant 253 : index
    %c0_227 = arith.constant 0 : index
    %255 = tpu.strided_load %arg17[%c253, %c0_227] {strides = array<i32: 2, 1>} : memref<288x32xf32, #tpu.memory_space<vmem>>, vector<9x32xf32>
    %256 = arith.maximumf %254, %255 : vector<9x32xf32>
    %c270 = arith.constant 270 : index
    %c0_228 = arith.constant 0 : index
    %257 = tpu.strided_load %arg17[%c270, %c0_228] {strides = array<i32: 2, 1>} : memref<288x32xf32, #tpu.memory_space<vmem>>, vector<9x32xf32>
    %c271 = arith.constant 271 : index
    %c0_229 = arith.constant 0 : index
    %258 = tpu.strided_load %arg17[%c271, %c0_229] {strides = array<i32: 2, 1>} : memref<288x32xf32, #tpu.memory_space<vmem>>, vector<9x32xf32>
    %259 = arith.maximumf %257, %258 : vector<9x32xf32>
    %260 = arith.maximumf %256, %259 : vector<9x32xf32>
    %261 = arith.truncf %260 : vector<9x32xf32> to vector<9x32xbf16>
    %c63 = arith.constant 63 : index
    %c0_230 = arith.constant 0 : index
    %262 = vector.load %arg18[%c63, %c0_230] : memref<72x32xbf16, #tpu.memory_space<vmem>>, vector<9x32xbf16>
    tpu.vector_store %arg18[%c63, %c0_230], %261 {strides = array<i32>} : memref<72x32xbf16, #tpu.memory_space<vmem>>, vector<9x32xbf16>,
    %cst_231 = arith.constant 0.000000e+00 : f32
    %263 = vector.broadcast %cst_231 : f32 to vector<52x64xf32>
    %c0_232 = arith.constant 0 : index
    %c0_233 = arith.constant 0 : index
    %264 = vector.load %arg18[%c0_232, %c0_233] : memref<72x32xbf16, #tpu.memory_space<vmem>>, vector<52x32xbf16>
    %c0_234 = arith.constant 0 : index
    %c0_235 = arith.constant 0 : index
    %c0_236 = arith.constant 0 : index
    %265 = vector.load %arg6[%c0_234, %c0_235, %c0_236] : memref<9x32x64xbf16, #tpu.memory_space<vmem>>, vector<1x32x64xbf16>
    %266 = vector.shape_cast %265 : vector<1x32x64xbf16> to vector<32x64xbf16>
    %cst_237 = arith.constant dense<0.000000e+00> : vector<52x64xf32>
    %267 = tpu.matmul %264, %266, %cst_237 {dimension_numbers = #tpu.dot_dimension_numbers<[1], [0], [0], [1], [0, 0, 1, 1], [], []>} : vector<52x32xbf16>, vector<32x64xbf16>, vector<52x64xf32> -> vector<52x64xf32>
    %268 = arith.addf %263, %267 : vector<52x64xf32>
    %c1_238 = arith.constant 1 : index
    %c0_239 = arith.constant 0 : index
    %269 = vector.load %arg18[%c1_238, %c0_239] : memref<72x32xbf16, #tpu.memory_space<vmem>>, vector<52x32xbf16>
    %c1_240 = arith.constant 1 : index
    %c0_241 = arith.constant 0 : index
    %c0_242 = arith.constant 0 : index
    %270 = vector.load %arg6[%c1_240, %c0_241, %c0_242] : memref<9x32x64xbf16, #tpu.memory_space<vmem>>, vector<1x32x64xbf16>
    %271 = vector.shape_cast %270 : vector<1x32x64xbf16> to vector<32x64xbf16>
    %cst_243 = arith.constant dense<0.000000e+00> : vector<52x64xf32>
    %272 = tpu.matmul %269, %271, %cst_243 {dimension_numbers = #tpu.dot_dimension_numbers<[1], [0], [0], [1], [0, 0, 1, 1], [], []>} : vector<52x32xbf16>, vector<32x64xbf16>, vector<52x64xf32> -> vector<52x64xf32>
    %273 = arith.addf %268, %272 : vector<52x64xf32>
    %c2_244 = arith.constant 2 : index
    %c0_245 = arith.constant 0 : index
    %274 = vector.load %arg18[%c2_244, %c0_245] : memref<72x32xbf16, #tpu.memory_space<vmem>>, vector<52x32xbf16>
    %c2_246 = arith.constant 2 : index
    %c0_247 = arith.constant 0 : index
    %c0_248 = arith.constant 0 : index
    %275 = vector.load %arg6[%c2_246, %c0_247, %c0_248] : memref<9x32x64xbf16, #tpu.memory_space<vmem>>, vector<1x32x64xbf16>
    %276 = vector.shape_cast %275 : vector<1x32x64xbf16> to vector<32x64xbf16>
    %cst_249 = arith.constant dense<0.000000e+00> : vector<52x64xf32>
    %277 = tpu.matmul %274, %276, %cst_249 {dimension_numbers = #tpu.dot_dimension_numbers<[1], [0], [0], [1], [0, 0, 1, 1], [], []>} : vector<52x32xbf16>, vector<32x64xbf16>, vector<52x64xf32> -> vector<52x64xf32>
    %278 = arith.addf %273, %277 : vector<52x64xf32>
    %c9_250 = arith.constant 9 : index
    %c0_251 = arith.constant 0 : index
    %279 = vector.load %arg18[%c9_250, %c0_251] : memref<72x32xbf16, #tpu.memory_space<vmem>>, vector<52x32xbf16>
    %c3_252 = arith.constant 3 : index
    %c0_253 = arith.constant 0 : index
    %c0_254 = arith.constant 0 : index
    %280 = vector.load %arg6[%c3_252, %c0_253, %c0_254] : memref<9x32x64xbf16, #tpu.memory_space<vmem>>, vector<1x32x64xbf16>
    %281 = vector.shape_cast %280 : vector<1x32x64xbf16> to vector<32x64xbf16>
    %cst_255 = arith.constant dense<0.000000e+00> : vector<52x64xf32>
    %282 = tpu.matmul %279, %281, %cst_255 {dimension_numbers = #tpu.dot_dimension_numbers<[1], [0], [0], [1], [0, 0, 1, 1], [], []>} : vector<52x32xbf16>, vector<32x64xbf16>, vector<52x64xf32> -> vector<52x64xf32>
    %283 = arith.addf %278, %282 : vector<52x64xf32>
    %c10 = arith.constant 10 : index
    %c0_256 = arith.constant 0 : index
    %284 = vector.load %arg18[%c10, %c0_256] : memref<72x32xbf16, #tpu.memory_space<vmem>>, vector<52x32xbf16>
    %c4_257 = arith.constant 4 : index
    %c0_258 = arith.constant 0 : index
    %c0_259 = arith.constant 0 : index
    %285 = vector.load %arg6[%c4_257, %c0_258, %c0_259] : memref<9x32x64xbf16, #tpu.memory_space<vmem>>, vector<1x32x64xbf16>
    %286 = vector.shape_cast %285 : vector<1x32x64xbf16> to vector<32x64xbf16>
    %cst_260 = arith.constant dense<0.000000e+00> : vector<52x64xf32>
    %287 = tpu.matmul %284, %286, %cst_260 {dimension_numbers = #tpu.dot_dimension_numbers<[1], [0], [0], [1], [0, 0, 1, 1], [], []>} : vector<52x32xbf16>, vector<32x64xbf16>, vector<52x64xf32> -> vector<52x64xf32>
    %288 = arith.addf %283, %287 : vector<52x64xf32>
    %c11 = arith.constant 11 : index
    %c0_261 = arith.constant 0 : index
    %289 = vector.load %arg18[%c11, %c0_261] : memref<72x32xbf16, #tpu.memory_space<vmem>>, vector<52x32xbf16>
    %c5_262 = arith.constant 5 : index
    %c0_263 = arith.constant 0 : index
    %c0_264 = arith.constant 0 : index
    %290 = vector.load %arg6[%c5_262, %c0_263, %c0_264] : memref<9x32x64xbf16, #tpu.memory_space<vmem>>, vector<1x32x64xbf16>
    %291 = vector.shape_cast %290 : vector<1x32x64xbf16> to vector<32x64xbf16>
    %cst_265 = arith.constant dense<0.000000e+00> : vector<52x64xf32>
    %292 = tpu.matmul %289, %291, %cst_265 {dimension_numbers = #tpu.dot_dimension_numbers<[1], [0], [0], [1], [0, 0, 1, 1], [], []>} : vector<52x32xbf16>, vector<32x64xbf16>, vector<52x64xf32> -> vector<52x64xf32>
    %293 = arith.addf %288, %292 : vector<52x64xf32>
    %c18_266 = arith.constant 18 : index
    %c0_267 = arith.constant 0 : index
    %294 = vector.load %arg18[%c18_266, %c0_267] : memref<72x32xbf16, #tpu.memory_space<vmem>>, vector<52x32xbf16>
    %c6_268 = arith.constant 6 : index
    %c0_269 = arith.constant 0 : index
    %c0_270 = arith.constant 0 : index
    %295 = vector.load %arg6[%c6_268, %c0_269, %c0_270] : memref<9x32x64xbf16, #tpu.memory_space<vmem>>, vector<1x32x64xbf16>
    %296 = vector.shape_cast %295 : vector<1x32x64xbf16> to vector<32x64xbf16>
    %cst_271 = arith.constant dense<0.000000e+00> : vector<52x64xf32>
    %297 = tpu.matmul %294, %296, %cst_271 {dimension_numbers = #tpu.dot_dimension_numbers<[1], [0], [0], [1], [0, 0, 1, 1], [], []>} : vector<52x32xbf16>, vector<32x64xbf16>, vector<52x64xf32> -> vector<52x64xf32>
    %298 = arith.addf %293, %297 : vector<52x64xf32>
    %c19_272 = arith.constant 19 : index
    %c0_273 = arith.constant 0 : index
    %299 = vector.load %arg18[%c19_272, %c0_273] : memref<72x32xbf16, #tpu.memory_space<vmem>>, vector<52x32xbf16>
    %c7_274 = arith.constant 7 : index
    %c0_275 = arith.constant 0 : index
    %c0_276 = arith.constant 0 : index
    %300 = vector.load %arg6[%c7_274, %c0_275, %c0_276] : memref<9x32x64xbf16, #tpu.memory_space<vmem>>, vector<1x32x64xbf16>
    %301 = vector.shape_cast %300 : vector<1x32x64xbf16> to vector<32x64xbf16>
    %cst_277 = arith.constant dense<0.000000e+00> : vector<52x64xf32>
    %302 = tpu.matmul %299, %301, %cst_277 {dimension_numbers = #tpu.dot_dimension_numbers<[1], [0], [0], [1], [0, 0, 1, 1], [], []>} : vector<52x32xbf16>, vector<32x64xbf16>, vector<52x64xf32> -> vector<52x64xf32>
    %303 = arith.addf %298, %302 : vector<52x64xf32>
    %c20_278 = arith.constant 20 : index
    %c0_279 = arith.constant 0 : index
    %304 = vector.load %arg18[%c20_278, %c0_279] : memref<72x32xbf16, #tpu.memory_space<vmem>>, vector<52x32xbf16>
    %c8_280 = arith.constant 8 : index
    %c0_281 = arith.constant 0 : index
    %c0_282 = arith.constant 0 : index
    %305 = vector.load %arg6[%c8_280, %c0_281, %c0_282] : memref<9x32x64xbf16, #tpu.memory_space<vmem>>, vector<1x32x64xbf16>
    %306 = vector.shape_cast %305 : vector<1x32x64xbf16> to vector<32x64xbf16>
    %cst_283 = arith.constant dense<0.000000e+00> : vector<52x64xf32>
    %307 = tpu.matmul %304, %306, %cst_283 {dimension_numbers = #tpu.dot_dimension_numbers<[1], [0], [0], [1], [0, 0, 1, 1], [], []>} : vector<52x32xbf16>, vector<32x64xbf16>, vector<52x64xf32> -> vector<52x64xf32>
    %308 = arith.addf %303, %307 : vector<52x64xf32>
    %c0_284 = arith.constant 0 : index
    %c0_285 = arith.constant 0 : index
    %309 = vector.load %arg7[%c0_284, %c0_285] : memref<1x64xf32, #tpu.memory_space<vmem>>, vector<1x64xf32>
    %310 = vector.broadcast %309 : vector<1x64xf32> to vector<52x64xf32>
    %311 = arith.addf %308, %310 : vector<52x64xf32>
    %cst_286 = arith.constant 0.000000e+00 : f32
    %312 = vector.broadcast %cst_286 : f32 to vector<52x64xf32>
    %313 = arith.maximumf %311, %312 : vector<52x64xf32>
    %314 = arith.truncf %313 : vector<52x64xf32> to vector<52x64xbf16>
    %c0_287 = arith.constant 0 : index
    %c0_288 = arith.constant 0 : index
    %315 = vector.load %arg19[%c0_287, %c0_288] : memref<54x64xbf16, #tpu.memory_space<vmem>>, vector<52x64xbf16>
    tpu.vector_store %arg19[%c0_287, %c0_288], %314 {strides = array<i32>} : memref<54x64xbf16, #tpu.memory_space<vmem>>, vector<52x64xbf16>,
    %cst_289 = arith.constant 0.000000e+00 : bf16
    %316 = vector.broadcast %cst_289 : bf16 to vector<2x64xbf16>
    %c52 = arith.constant 52 : index
    %c0_290 = arith.constant 0 : index
    %317 = vector.load %arg19[%c52, %c0_290] : memref<54x64xbf16, #tpu.memory_space<vmem>>, vector<2x64xbf16>
    tpu.vector_store %arg19[%c52, %c0_290], %316 {strides = array<i32>} : memref<54x64xbf16, #tpu.memory_space<vmem>>, vector<2x64xbf16>,
    %cst_291 = arith.constant 0.000000e+00 : f32
    %318 = vector.broadcast %cst_291 : f32 to vector<34x64xf32>
    %c0_292 = arith.constant 0 : index
    %c0_293 = arith.constant 0 : index
    %319 = vector.load %arg19[%c0_292, %c0_293] : memref<54x64xbf16, #tpu.memory_space<vmem>>, vector<34x64xbf16>
    %c0_294 = arith.constant 0 : index
    %c0_295 = arith.constant 0 : index
    %c0_296 = arith.constant 0 : index
    %320 = vector.load %arg8[%c0_294, %c0_295, %c0_296] : memref<9x64x64xbf16, #tpu.memory_space<vmem>>, vector<1x64x64xbf16>
    %321 = vector.shape_cast %320 : vector<1x64x64xbf16> to vector<64x64xbf16>
    %cst_297 = arith.constant dense<0.000000e+00> : vector<34x64xf32>
    %322 = tpu.matmul %319, %321, %cst_297 {dimension_numbers = #tpu.dot_dimension_numbers<[1], [0], [0], [1], [0, 0, 1, 1], [], []>} : vector<34x64xbf16>, vector<64x64xbf16>, vector<34x64xf32> -> vector<34x64xf32>
    %323 = arith.addf %318, %322 : vector<34x64xf32>
    %c1_298 = arith.constant 1 : index
    %c0_299 = arith.constant 0 : index
    %324 = vector.load %arg19[%c1_298, %c0_299] : memref<54x64xbf16, #tpu.memory_space<vmem>>, vector<34x64xbf16>
    %c1_300 = arith.constant 1 : index
    %c0_301 = arith.constant 0 : index
    %c0_302 = arith.constant 0 : index
    %325 = vector.load %arg8[%c1_300, %c0_301, %c0_302] : memref<9x64x64xbf16, #tpu.memory_space<vmem>>, vector<1x64x64xbf16>
    %326 = vector.shape_cast %325 : vector<1x64x64xbf16> to vector<64x64xbf16>
    %cst_303 = arith.constant dense<0.000000e+00> : vector<34x64xf32>
    %327 = tpu.matmul %324, %326, %cst_303 {dimension_numbers = #tpu.dot_dimension_numbers<[1], [0], [0], [1], [0, 0, 1, 1], [], []>} : vector<34x64xbf16>, vector<64x64xbf16>, vector<34x64xf32> -> vector<34x64xf32>
    %328 = arith.addf %323, %327 : vector<34x64xf32>
    %c2_304 = arith.constant 2 : index
    %c0_305 = arith.constant 0 : index
    %329 = vector.load %arg19[%c2_304, %c0_305] : memref<54x64xbf16, #tpu.memory_space<vmem>>, vector<34x64xbf16>
    %c2_306 = arith.constant 2 : index
    %c0_307 = arith.constant 0 : index
    %c0_308 = arith.constant 0 : index
    %330 = vector.load %arg8[%c2_306, %c0_307, %c0_308] : memref<9x64x64xbf16, #tpu.memory_space<vmem>>, vector<1x64x64xbf16>
    %331 = vector.shape_cast %330 : vector<1x64x64xbf16> to vector<64x64xbf16>
    %cst_309 = arith.constant dense<0.000000e+00> : vector<34x64xf32>
    %332 = tpu.matmul %329, %331, %cst_309 {dimension_numbers = #tpu.dot_dimension_numbers<[1], [0], [0], [1], [0, 0, 1, 1], [], []>} : vector<34x64xbf16>, vector<64x64xbf16>, vector<34x64xf32> -> vector<34x64xf32>
    %333 = arith.addf %328, %332 : vector<34x64xf32>
    %c9_310 = arith.constant 9 : index
    %c0_311 = arith.constant 0 : index
    %334 = vector.load %arg19[%c9_310, %c0_311] : memref<54x64xbf16, #tpu.memory_space<vmem>>, vector<34x64xbf16>
    %c3_312 = arith.constant 3 : index
    %c0_313 = arith.constant 0 : index
    %c0_314 = arith.constant 0 : index
    %335 = vector.load %arg8[%c3_312, %c0_313, %c0_314] : memref<9x64x64xbf16, #tpu.memory_space<vmem>>, vector<1x64x64xbf16>
    %336 = vector.shape_cast %335 : vector<1x64x64xbf16> to vector<64x64xbf16>
    %cst_315 = arith.constant dense<0.000000e+00> : vector<34x64xf32>
    %337 = tpu.matmul %334, %336, %cst_315 {dimension_numbers = #tpu.dot_dimension_numbers<[1], [0], [0], [1], [0, 0, 1, 1], [], []>} : vector<34x64xbf16>, vector<64x64xbf16>, vector<34x64xf32> -> vector<34x64xf32>
    %338 = arith.addf %333, %337 : vector<34x64xf32>
    %c10_316 = arith.constant 10 : index
    %c0_317 = arith.constant 0 : index
    %339 = vector.load %arg19[%c10_316, %c0_317] : memref<54x64xbf16, #tpu.memory_space<vmem>>, vector<34x64xbf16>
    %c4_318 = arith.constant 4 : index
    %c0_319 = arith.constant 0 : index
    %c0_320 = arith.constant 0 : index
    %340 = vector.load %arg8[%c4_318, %c0_319, %c0_320] : memref<9x64x64xbf16, #tpu.memory_space<vmem>>, vector<1x64x64xbf16>
    %341 = vector.shape_cast %340 : vector<1x64x64xbf16> to vector<64x64xbf16>
    %cst_321 = arith.constant dense<0.000000e+00> : vector<34x64xf32>
    %342 = tpu.matmul %339, %341, %cst_321 {dimension_numbers = #tpu.dot_dimension_numbers<[1], [0], [0], [1], [0, 0, 1, 1], [], []>} : vector<34x64xbf16>, vector<64x64xbf16>, vector<34x64xf32> -> vector<34x64xf32>
    %343 = arith.addf %338, %342 : vector<34x64xf32>
    %c11_322 = arith.constant 11 : index
    %c0_323 = arith.constant 0 : index
    %344 = vector.load %arg19[%c11_322, %c0_323] : memref<54x64xbf16, #tpu.memory_space<vmem>>, vector<34x64xbf16>
    %c5_324 = arith.constant 5 : index
    %c0_325 = arith.constant 0 : index
    %c0_326 = arith.constant 0 : index
    %345 = vector.load %arg8[%c5_324, %c0_325, %c0_326] : memref<9x64x64xbf16, #tpu.memory_space<vmem>>, vector<1x64x64xbf16>
    %346 = vector.shape_cast %345 : vector<1x64x64xbf16> to vector<64x64xbf16>
    %cst_327 = arith.constant dense<0.000000e+00> : vector<34x64xf32>
    %347 = tpu.matmul %344, %346, %cst_327 {dimension_numbers = #tpu.dot_dimension_numbers<[1], [0], [0], [1], [0, 0, 1, 1], [], []>} : vector<34x64xbf16>, vector<64x64xbf16>, vector<34x64xf32> -> vector<34x64xf32>
    %348 = arith.addf %343, %347 : vector<34x64xf32>
    %c18_328 = arith.constant 18 : index
    %c0_329 = arith.constant 0 : index
    %349 = vector.load %arg19[%c18_328, %c0_329] : memref<54x64xbf16, #tpu.memory_space<vmem>>, vector<34x64xbf16>
    %c6_330 = arith.constant 6 : index
    %c0_331 = arith.constant 0 : index
    %c0_332 = arith.constant 0 : index
    %350 = vector.load %arg8[%c6_330, %c0_331, %c0_332] : memref<9x64x64xbf16, #tpu.memory_space<vmem>>, vector<1x64x64xbf16>
    %351 = vector.shape_cast %350 : vector<1x64x64xbf16> to vector<64x64xbf16>
    %cst_333 = arith.constant dense<0.000000e+00> : vector<34x64xf32>
    %352 = tpu.matmul %349, %351, %cst_333 {dimension_numbers = #tpu.dot_dimension_numbers<[1], [0], [0], [1], [0, 0, 1, 1], [], []>} : vector<34x64xbf16>, vector<64x64xbf16>, vector<34x64xf32> -> vector<34x64xf32>
    %353 = arith.addf %348, %352 : vector<34x64xf32>
    %c19_334 = arith.constant 19 : index
    %c0_335 = arith.constant 0 : index
    %354 = vector.load %arg19[%c19_334, %c0_335] : memref<54x64xbf16, #tpu.memory_space<vmem>>, vector<34x64xbf16>
    %c7_336 = arith.constant 7 : index
    %c0_337 = arith.constant 0 : index
    %c0_338 = arith.constant 0 : index
    %355 = vector.load %arg8[%c7_336, %c0_337, %c0_338] : memref<9x64x64xbf16, #tpu.memory_space<vmem>>, vector<1x64x64xbf16>
    %356 = vector.shape_cast %355 : vector<1x64x64xbf16> to vector<64x64xbf16>
    %cst_339 = arith.constant dense<0.000000e+00> : vector<34x64xf32>
    %357 = tpu.matmul %354, %356, %cst_339 {dimension_numbers = #tpu.dot_dimension_numbers<[1], [0], [0], [1], [0, 0, 1, 1], [], []>} : vector<34x64xbf16>, vector<64x64xbf16>, vector<34x64xf32> -> vector<34x64xf32>
    %358 = arith.addf %353, %357 : vector<34x64xf32>
    %c20_340 = arith.constant 20 : index
    %c0_341 = arith.constant 0 : index
    %359 = vector.load %arg19[%c20_340, %c0_341] : memref<54x64xbf16, #tpu.memory_space<vmem>>, vector<34x64xbf16>
    %c8_342 = arith.constant 8 : index
    %c0_343 = arith.constant 0 : index
    %c0_344 = arith.constant 0 : index
    %360 = vector.load %arg8[%c8_342, %c0_343, %c0_344] : memref<9x64x64xbf16, #tpu.memory_space<vmem>>, vector<1x64x64xbf16>
    %361 = vector.shape_cast %360 : vector<1x64x64xbf16> to vector<64x64xbf16>
    %cst_345 = arith.constant dense<0.000000e+00> : vector<34x64xf32>
    %362 = tpu.matmul %359, %361, %cst_345 {dimension_numbers = #tpu.dot_dimension_numbers<[1], [0], [0], [1], [0, 0, 1, 1], [], []>} : vector<34x64xbf16>, vector<64x64xbf16>, vector<34x64xf32> -> vector<34x64xf32>
    %363 = arith.addf %358, %362 : vector<34x64xf32>
    %c0_346 = arith.constant 0 : index
    %c0_347 = arith.constant 0 : index
    %364 = vector.load %arg9[%c0_346, %c0_347] : memref<1x64xf32, #tpu.memory_space<vmem>>, vector<1x64xf32>
    %365 = vector.broadcast %364 : vector<1x64xf32> to vector<34x64xf32>
    %366 = arith.addf %363, %365 : vector<34x64xf32>
    %cst_348 = arith.constant 0.000000e+00 : f32
    %367 = vector.broadcast %cst_348 : f32 to vector<34x64xf32>
    %368 = arith.maximumf %366, %367 : vector<34x64xf32>
    %c0_349 = arith.constant 0 : index
    %c0_350 = arith.constant 0 : index
    %369 = vector.load %arg20[%c0_349, %c0_350] : memref<36x64xf32, #tpu.memory_space<vmem>>, vector<34x64xf32>
    tpu.vector_store %arg20[%c0_349, %c0_350], %368 {strides = array<i32>} : memref<36x64xf32, #tpu.memory_space<vmem>>, vector<34x64xf32>,
    %cst_351 = arith.constant 0.000000e+00 : f32
    %370 = vector.broadcast %cst_351 : f32 to vector<2x64xf32>
    %c34 = arith.constant 34 : index
    %c0_352 = arith.constant 0 : index
    %371 = vector.load %arg20[%c34, %c0_352] : memref<36x64xf32, #tpu.memory_space<vmem>>, vector<2x64xf32>
    tpu.vector_store %arg20[%c34, %c0_352], %370 {strides = array<i32>} : memref<36x64xf32, #tpu.memory_space<vmem>>, vector<2x64xf32>,
    %c0_353 = arith.constant 0 : index
    %c0_354 = arith.constant 0 : index
    %372 = tpu.strided_load %arg20[%c0_353, %c0_354] {strides = array<i32: 2, 1>} : memref<36x64xf32, #tpu.memory_space<vmem>>, vector<4x64xf32>
    %c1_355 = arith.constant 1 : index
    %c0_356 = arith.constant 0 : index
    %373 = tpu.strided_load %arg20[%c1_355, %c0_356] {strides = array<i32: 2, 1>} : memref<36x64xf32, #tpu.memory_space<vmem>>, vector<4x64xf32>
    %374 = arith.maximumf %372, %373 : vector<4x64xf32>
    %c9_357 = arith.constant 9 : index
    %c0_358 = arith.constant 0 : index
    %375 = tpu.strided_load %arg20[%c9_357, %c0_358] {strides = array<i32: 2, 1>} : memref<36x64xf32, #tpu.memory_space<vmem>>, vector<4x64xf32>
    %c10_359 = arith.constant 10 : index
    %c0_360 = arith.constant 0 : index
    %376 = tpu.strided_load %arg20[%c10_359, %c0_360] {strides = array<i32: 2, 1>} : memref<36x64xf32, #tpu.memory_space<vmem>>, vector<4x64xf32>
    %377 = arith.maximumf %375, %376 : vector<4x64xf32>
    %378 = arith.maximumf %374, %377 : vector<4x64xf32>
    %379 = arith.truncf %378 : vector<4x64xf32> to vector<4x64xbf16>
    %c0_361 = arith.constant 0 : index
    %c0_362 = arith.constant 0 : index
    %380 = vector.load %arg21[%c0_361, %c0_362] : memref<8x64xbf16, #tpu.memory_space<vmem>>, vector<4x64xbf16>
    tpu.vector_store %arg21[%c0_361, %c0_362], %379 {strides = array<i32>} : memref<8x64xbf16, #tpu.memory_space<vmem>>, vector<4x64xbf16>,
    %c18_363 = arith.constant 18 : index
    %c0_364 = arith.constant 0 : index
    %381 = tpu.strided_load %arg20[%c18_363, %c0_364] {strides = array<i32: 2, 1>} : memref<36x64xf32, #tpu.memory_space<vmem>>, vector<4x64xf32>
    %c19_365 = arith.constant 19 : index
    %c0_366 = arith.constant 0 : index
    %382 = tpu.strided_load %arg20[%c19_365, %c0_366] {strides = array<i32: 2, 1>} : memref<36x64xf32, #tpu.memory_space<vmem>>, vector<4x64xf32>
    %383 = arith.maximumf %381, %382 : vector<4x64xf32>
    %c27_367 = arith.constant 27 : index
    %c0_368 = arith.constant 0 : index
    %384 = tpu.strided_load %arg20[%c27_367, %c0_368] {strides = array<i32: 2, 1>} : memref<36x64xf32, #tpu.memory_space<vmem>>, vector<4x64xf32>
    %c28 = arith.constant 28 : index
    %c0_369 = arith.constant 0 : index
    %385 = tpu.strided_load %arg20[%c28, %c0_369] {strides = array<i32: 2, 1>} : memref<36x64xf32, #tpu.memory_space<vmem>>, vector<4x64xf32>
    %386 = arith.maximumf %384, %385 : vector<4x64xf32>
    %387 = arith.maximumf %383, %386 : vector<4x64xf32>
    %388 = arith.truncf %387 : vector<4x64xf32> to vector<4x64xbf16>
    %c4_370 = arith.constant 4 : index
    %c0_371 = arith.constant 0 : index
    %389 = vector.load %arg21[%c4_370, %c0_371] : memref<8x64xbf16, #tpu.memory_space<vmem>>, vector<4x64xbf16>
    tpu.vector_store %arg21[%c4_370, %c0_371], %388 {strides = array<i32>} : memref<8x64xbf16, #tpu.memory_space<vmem>>, vector<4x64xbf16>,
    %cst_372 = arith.constant 0.000000e+00 : f32
    %390 = vector.broadcast %cst_372 : f32 to vector<8x512xf32>
    %c0_373 = arith.constant 0 : index
    %c0_374 = arith.constant 0 : index
    %391 = vector.load %arg21[%c0_373, %c0_374] : memref<8x64xbf16, #tpu.memory_space<vmem>>, vector<1x64xbf16>
    %392 = vector.shape_cast %391 : vector<1x64xbf16> to vector<1x64xbf16>
    %393 = vector.broadcast %392 : vector<1x64xbf16> to vector<8x64xbf16>
    %c0_375 = arith.constant 0 : index
    %c0_376 = arith.constant 0 : index
    %c0_377 = arith.constant 0 : index
    %394 = vector.load %arg10[%c0_375, %c0_376, %c0_377] : memref<4x64x512xbf16, #tpu.memory_space<vmem>>, vector<1x64x512xbf16>
    %395 = vector.shape_cast %394 : vector<1x64x512xbf16> to vector<64x512xbf16>
    %cst_378 = arith.constant dense<0.000000e+00> : vector<8x512xf32>
    %396 = tpu.matmul %393, %395, %cst_378 {dimension_numbers = #tpu.dot_dimension_numbers<[1], [0], [0], [1], [0, 0, 1, 1], [], []>} : vector<8x64xbf16>, vector<64x512xbf16>, vector<8x512xf32> -> vector<8x512xf32>
    %397 = arith.addf %390, %396 : vector<8x512xf32>
    %c1_379 = arith.constant 1 : index
    %c0_380 = arith.constant 0 : index
    %398 = vector.load %arg21[%c1_379, %c0_380] : memref<8x64xbf16, #tpu.memory_space<vmem>>, vector<1x64xbf16>
    %399 = vector.shape_cast %398 : vector<1x64xbf16> to vector<1x64xbf16>
    %400 = vector.broadcast %399 : vector<1x64xbf16> to vector<8x64xbf16>
    %c1_381 = arith.constant 1 : index
    %c0_382 = arith.constant 0 : index
    %c0_383 = arith.constant 0 : index
    %401 = vector.load %arg10[%c1_381, %c0_382, %c0_383] : memref<4x64x512xbf16, #tpu.memory_space<vmem>>, vector<1x64x512xbf16>
    %402 = vector.shape_cast %401 : vector<1x64x512xbf16> to vector<64x512xbf16>
    %cst_384 = arith.constant dense<0.000000e+00> : vector<8x512xf32>
    %403 = tpu.matmul %400, %402, %cst_384 {dimension_numbers = #tpu.dot_dimension_numbers<[1], [0], [0], [1], [0, 0, 1, 1], [], []>} : vector<8x64xbf16>, vector<64x512xbf16>, vector<8x512xf32> -> vector<8x512xf32>
    %404 = arith.addf %397, %403 : vector<8x512xf32>
    %c4_385 = arith.constant 4 : index
    %c0_386 = arith.constant 0 : index
    %405 = vector.load %arg21[%c4_385, %c0_386] : memref<8x64xbf16, #tpu.memory_space<vmem>>, vector<1x64xbf16>
    %406 = vector.shape_cast %405 : vector<1x64xbf16> to vector<1x64xbf16>
    %407 = vector.broadcast %406 : vector<1x64xbf16> to vector<8x64xbf16>
    %c2_387 = arith.constant 2 : index
    %c0_388 = arith.constant 0 : index
    %c0_389 = arith.constant 0 : index
    %408 = vector.load %arg10[%c2_387, %c0_388, %c0_389] : memref<4x64x512xbf16, #tpu.memory_space<vmem>>, vector<1x64x512xbf16>
    %409 = vector.shape_cast %408 : vector<1x64x512xbf16> to vector<64x512xbf16>
    %cst_390 = arith.constant dense<0.000000e+00> : vector<8x512xf32>
    %410 = tpu.matmul %407, %409, %cst_390 {dimension_numbers = #tpu.dot_dimension_numbers<[1], [0], [0], [1], [0, 0, 1, 1], [], []>} : vector<8x64xbf16>, vector<64x512xbf16>, vector<8x512xf32> -> vector<8x512xf32>
    %411 = arith.addf %404, %410 : vector<8x512xf32>
    %c5_391 = arith.constant 5 : index
    %c0_392 = arith.constant 0 : index
    %412 = vector.load %arg21[%c5_391, %c0_392] : memref<8x64xbf16, #tpu.memory_space<vmem>>, vector<1x64xbf16>
    %413 = vector.shape_cast %412 : vector<1x64xbf16> to vector<1x64xbf16>
    %414 = vector.broadcast %413 : vector<1x64xbf16> to vector<8x64xbf16>
    %c3_393 = arith.constant 3 : index
    %c0_394 = arith.constant 0 : index
    %c0_395 = arith.constant 0 : index
    %415 = vector.load %arg10[%c3_393, %c0_394, %c0_395] : memref<4x64x512xbf16, #tpu.memory_space<vmem>>, vector<1x64x512xbf16>
    %416 = vector.shape_cast %415 : vector<1x64x512xbf16> to vector<64x512xbf16>
    %cst_396 = arith.constant dense<0.000000e+00> : vector<8x512xf32>
    %417 = tpu.matmul %414, %416, %cst_396 {dimension_numbers = #tpu.dot_dimension_numbers<[1], [0], [0], [1], [0, 0, 1, 1], [], []>} : vector<8x64xbf16>, vector<64x512xbf16>, vector<8x512xf32> -> vector<8x512xf32>
    %418 = arith.addf %411, %417 : vector<8x512xf32>
    %c0_397 = arith.constant 0 : index
    %c0_398 = arith.constant 0 : index
    %419 = vector.load %arg11[%c0_397, %c0_398] : memref<1x512xf32, #tpu.memory_space<vmem>>, vector<1x512xf32>
    %420 = vector.broadcast %419 : vector<1x512xf32> to vector<8x512xf32>
    %421 = arith.addf %418, %420 : vector<8x512xf32>
    %cst_399 = arith.constant 0.000000e+00 : f32
    %422 = vector.broadcast %cst_399 : f32 to vector<8x512xf32>
    %423 = arith.maximumf %421, %422 : vector<8x512xf32>
    %424 = vector.extract_strided_slice %423 {offsets = [0, 0], sizes = [1, 512], strides = [1, 1]} : vector<8x512xf32> to vector<1x512xf32>
    %c0_400 = arith.constant 0 : index
    %c0_401 = arith.constant 0 : index
    %c0_402 = arith.constant 0 : index
    %425 = vector.load %arg15[%c0_400, %c0_401, %c0_402] : memref<1x1x512xf32, #tpu.memory_space<vmem>>, vector<1x1x512xf32>
    %426 = vector.shape_cast %425 : vector<1x1x512xf32> to vector<1x512xf32>
    %427 = vector.shape_cast %424 : vector<1x512xf32> to vector<1x1x512xf32>
    tpu.vector_store %arg15[%c0_400, %c0_401, %c0_402], %427 {strides = array<i32>} : memref<1x1x512xf32, #tpu.memory_space<vmem>>, vector<1x1x512xf32>,
    %428 = arith.truncf %423 : vector<8x512xf32> to vector<8x512xbf16>
    %c0_403 = arith.constant 0 : index
    %c0_404 = arith.constant 0 : index
    %429 = vector.load %arg12[%c0_403, %c0_404] : memref<512x128xbf16, #tpu.memory_space<vmem>>, vector<512x128xbf16>
    %cst_405 = arith.constant dense<0.000000e+00> : vector<8x128xf32>
    %430 = tpu.matmul %428, %429, %cst_405 {dimension_numbers = #tpu.dot_dimension_numbers<[1], [0], [0], [1], [0, 0, 1, 1], [], []>} : vector<8x512xbf16>, vector<512x128xbf16>, vector<8x128xf32> -> vector<8x128xf32>
    %c0_406 = arith.constant 0 : index
    %c0_407 = arith.constant 0 : index
    %431 = vector.load %arg13[%c0_406, %c0_407] : memref<1x128xf32, #tpu.memory_space<vmem>>, vector<1x128xf32>
    %432 = vector.broadcast %431 : vector<1x128xf32> to vector<8x128xf32>
    %433 = arith.addf %430, %432 : vector<8x128xf32>
    %434 = vector.extract_strided_slice %433 {offsets = [0, 0], sizes = [1, 128], strides = [1, 1]} : vector<8x128xf32> to vector<1x128xf32>
    %c0_408 = arith.constant 0 : index
    %c0_409 = arith.constant 0 : index
    %c0_410 = arith.constant 0 : index
    %435 = vector.load %arg14[%c0_408, %c0_409, %c0_410] : memref<1x1x128xf32, #tpu.memory_space<vmem>>, vector<1x1x128xf32>
    %436 = vector.shape_cast %435 : vector<1x1x128xf32> to vector<1x128xf32>
    %437 = vector.shape_cast %434 : vector<1x128xf32> to vector<1x1x128xf32>
    tpu.vector_store %arg14[%c0_408, %c0_409, %c0_410], %437 {strides = array<i32>} : memref<1x1x128xf32, #tpu.memory_space<vmem>>, vector<1x1x128xf32>,
    return
  }
  func.func @transform_0(%arg0: i32) -> (i32, i32, i32) {
    %c0_i32 = arith.constant 0 : i32
    %c0_i32_0 = arith.constant 0 : i32
    %c0_i32_1 = arith.constant 0 : i32
    return %arg0, %c0_i32, %c0_i32_0 : i32, i32, i32
  }
  func.func @transform_1(%arg0: i32) -> (i32, i32) {
    %c0_i32 = arith.constant 0 : i32
    %c0_i32_0 = arith.constant 0 : i32
    %c0_i32_1 = arith.constant 0 : i32
    return %c0_i32, %c0_i32_0 : i32, i32
  }
  func.func @transform_2(%arg0: i32) -> (i32, i32) {
    %c0_i32 = arith.constant 0 : i32
    %c0_i32_0 = arith.constant 0 : i32
    %c0_i32_1 = arith.constant 0 : i32
    return %c0_i32, %c0_i32_0 : i32, i32
  }
  func.func @transform_3(%arg0: i32) -> (i32, i32, i32) {
    %c0_i32 = arith.constant 0 : i32
    %c0_i32_0 = arith.constant 0 : i32
    %c0_i32_1 = arith.constant 0 : i32
    %c0_i32_2 = arith.constant 0 : i32
    return %c0_i32, %c0_i32_0, %c0_i32_1 : i32, i32, i32
  }
  func.func @transform_4(%arg0: i32) -> (i32, i32) {
    %c0_i32 = arith.constant 0 : i32
    %c0_i32_0 = arith.constant 0 : i32
    %c0_i32_1 = arith.constant 0 : i32
    return %c0_i32, %c0_i32_0 : i32, i32
  }
  func.func @transform_5(%arg0: i32) -> (i32, i32, i32) {
    %c0_i32 = arith.constant 0 : i32
    %c0_i32_0 = arith.constant 0 : i32
    %c0_i32_1 = arith.constant 0 : i32
    %c0_i32_2 = arith.constant 0 : i32
    return %c0_i32, %c0_i32_0, %c0_i32_1 : i32, i32, i32
  }
  func.func @transform_6(%arg0: i32) -> (i32, i32) {
    %c0_i32 = arith.constant 0 : i32
    %c0_i32_0 = arith.constant 0 : i32
    %c0_i32_1 = arith.constant 0 : i32
    return %c0_i32, %c0_i32_0 : i32, i32
  }
  func.func @transform_7(%arg0: i32) -> (i32, i32, i32) {
    %c0_i32 = arith.constant 0 : i32
    %c0_i32_0 = arith.constant 0 : i32
    %c0_i32_1 = arith.constant 0 : i32
    %c0_i32_2 = arith.constant 0 : i32
    return %c0_i32, %c0_i32_0, %c0_i32_1 : i32, i32, i32
  }
  func.func @transform_8(%arg0: i32) -> (i32, i32) {
    %c0_i32 = arith.constant 0 : i32
    %c0_i32_0 = arith.constant 0 : i32
    %c0_i32_1 = arith.constant 0 : i32
    return %c0_i32, %c0_i32_0 : i32, i32
  }
  func.func @transform_9(%arg0: i32) -> (i32, i32, i32) {
    %c0_i32 = arith.constant 0 : i32
    %c0_i32_0 = arith.constant 0 : i32
    %c0_i32_1 = arith.constant 0 : i32
    %c0_i32_2 = arith.constant 0 : i32
    return %c0_i32, %c0_i32_0, %c0_i32_1 : i32, i32, i32
  }
  func.func @transform_10(%arg0: i32) -> (i32, i32) {
    %c0_i32 = arith.constant 0 : i32
    %c0_i32_0 = arith.constant 0 : i32
    %c0_i32_1 = arith.constant 0 : i32
    return %c0_i32, %c0_i32_0 : i32, i32
  }
  func.func @transform_11(%arg0: i32) -> (i32, i32) {
    %c0_i32 = arith.constant 0 : i32
    %c0_i32_0 = arith.constant 0 : i32
    %c0_i32_1 = arith.constant 0 : i32
    return %c0_i32, %c0_i32_0 : i32, i32
  }
  func.func @transform_12(%arg0: i32) -> (i32, i32) {
    %c0_i32 = arith.constant 0 : i32
    %c0_i32_0 = arith.constant 0 : i32
    %c0_i32_1 = arith.constant 0 : i32
    return %c0_i32, %c0_i32_0 : i32, i32
  }
  func.func @transform_13(%arg0: i32) -> (i32, i32, i32) {
    %c0_i32 = arith.constant 0 : i32
    %c0_i32_0 = arith.constant 0 : i32
    %c0_i32_1 = arith.constant 0 : i32
    return %arg0, %c0_i32, %c0_i32_0 : i32, i32, i32
  }
  func.func @transform_14(%arg0: i32) -> (i32, i32, i32) {
    %c0_i32 = arith.constant 0 : i32
    %c0_i32_0 = arith.constant 0 : i32
    %c0_i32_1 = arith.constant 0 : i32
    return %arg0, %c0_i32, %c0_i32_0 : i32, i32, i32
  }
}

</mosaic_0001>

<llo_original>
// kernel: cnn_forward.1
$region0: #{cnn_forward.1}
  #allocation0 [shape = 'u32[]', space=smem, size = 0x4, offset = 0x4, fixed_abs, tag = 'smem constant byte address 0x4 - core index']
  #allocation1 [shape = 'u32[144,128]{1,0:T(1,128)}', space=vmem, size = 0x12000, scoped, tag = 'internal scratch']
  #allocation2 [shape = 'bf16[324,32]{1,0:T(8,128)(2,1)}', space=vmem, size = 0x14800, scoped, tag = 'scratch operand']
  #allocation3 [shape = 'f32[288,32]{1,0:T(8,128)}', space=vmem, size = 0x24000, scoped, tag = 'scratch operand']
  #allocation4 [shape = 'bf16[72,32]{1,0:T(8,128)(2,1)}', space=vmem, size = 0x4800, scoped, tag = 'scratch operand']
  #allocation5 [shape = 'bf16[54,64]{1,0:T(8,128)(2,1)}', space=vmem, size = 0x3800, scoped, tag = 'scratch operand']
  #allocation6 [shape = 'f32[36,64]{1,0:T(8,128)}', space=vmem, size = 0x5000, scoped, tag = 'scratch operand']
  #allocation7 [shape = 'bf16[8,64]{1,0:T(8,128)(2,1)}', space=vmem, size = 0x800, scoped, tag = 'scratch operand']
  %s0 = inlined_call_operand.vmem [shape: bf16[2,324,32], index: 0, kind: input, shape index: {}]
  %s1 = inlined_call_operand.vmem [shape: bf16[32,32], index: 1, kind: input, shape index: {}]
  %s2 = inlined_call_operand.vmem [shape: f32[1,32], index: 2, kind: input, shape index: {}]
  %s3 = inlined_call_operand.vmem [shape: bf16[9,32,32], index: 3, kind: input, shape index: {}]
  %s4 = inlined_call_operand.vmem [shape: f32[1,32], index: 4, kind: input, shape index: {}]
  %s5 = inlined_call_operand.vmem [shape: bf16[9,32,64], index: 5, kind: input, shape index: {}]
  %s6 = inlined_call_operand.vmem [shape: f32[1,64], index: 6, kind: input, shape index: {}]
  %s7 = inlined_call_operand.vmem [shape: bf16[9,64,64], index: 7, kind: input, shape index: {}]
  %s8 = inlined_call_operand.vmem [shape: f32[1,64], index: 8, kind: input, shape index: {}]
  %s9 = inlined_call_operand.vmem [shape: bf16[4,64,512], index: 9, kind: input, shape index: {}]
  %s10 = inlined_call_operand.vmem [shape: f32[1,512], index: 10, kind: input, shape index: {}]
  %s11 = inlined_call_operand.vmem [shape: bf16[512,128], index: 11, kind: input, shape index: {}]
  %s12 = inlined_call_operand.vmem [shape: f32[1,128], index: 12, kind: input, shape index: {}]
  %s13 = inlined_call_operand.hbm [shape: f32[2,1,128], index: 13, kind: output, shape index: {0}]
  %s14 = inlined_call_operand.vmem [shape: f32[2,1,512], index: 14, kind: output, shape index: {1}]
  %15 = xla_tuple %s13, %s14
  %s16 = sld [smem:[#allocation0]]
  $region93: #{cnn_forward.1} parent=0
    _
  %s18 = ssub.s32 1, %s16
  %s19 = scalar_select 0, %s18, %s16
  $region1: #{cnn_forward.1} parent=0
    #allocation8 [shape = 'u8[1024]{0}', space=vmem, size = 0x400, scoped, tag = 'output window, operand 0']
    #allocation9 [shape = 's32[2]{0}', space=sflag, size = 0x8, scoped, tag = 'scoped memory for cnn_forward.1']
    %20 = vsyncpa [#allocation9], 0
    %s21 = scalar_lea.sflag [#allocation9], 1
    %22 = vsyncpa %s21, 0
    loop: start=0, step=1, limit=4
    $region2: #{cnn_forward.1} parent=1 // loop_pre_header
      _
    $region3: #{cnn_forward.1} parent=1 // loop_header
      %s24 = sphi 0, %s28
      %p25 = scmp.ge.s32.totalorder %s24, 4
      %s34 = sphi 0, %s36
      %s37 = sphi 0, %s34
      %s38 = sphi 0, %s37
      %s54 = sphi 0, %s38
      %s58 = sphi 0, %s58
      %s60 = sphi 0, %s58
      %s61 = sphi 0, %s60
      %s75 = sphi 0, %s61
      %s79 = sphi 0, %s79
      %s81 = sphi 0, %s79
      %s82 = sphi 0, %s81
      %s96 = sphi 0, %s82
      %s100 = sphi 0, %s100
      %s102 = sphi 0, %s100
      %s103 = sphi 0, %s102
      %s117 = sphi 0, %s103
      %s121 = sphi 0, %s121
      %s123 = sphi 0, %s121
      %s124 = sphi 0, %s123
      %s138 = sphi 0, %s124
      %s142 = sphi 0, %s142
      %s144 = sphi 0, %s142
      %s145 = sphi 0, %s144
      %s159 = sphi 0, %s145
      %s163 = sphi 0, %s163
      %s165 = sphi 0, %s163
      %s166 = sphi 0, %s165
      %s180 = sphi 0, %s166
      %s184 = sphi 0, %s184
      %s186 = sphi 0, %s184
      %s187 = sphi 0, %s186
      %s201 = sphi 0, %s187
      %s205 = sphi 0, %s205
      %s207 = sphi 0, %s205
      %s208 = sphi 0, %s207
      %s222 = sphi 0, %s208
      %s226 = sphi 0, %s226
      %s228 = sphi 0, %s226
      %s229 = sphi 0, %s228
      %s243 = sphi 0, %s229
      %s247 = sphi 0, %s247
      %s249 = sphi 0, %s247
      %s250 = sphi 0, %s249
      %s264 = sphi 0, %s250
      %s268 = sphi 0, %s268
      %s270 = sphi 0, %s268
      %s271 = sphi 0, %s270
      %s285 = sphi 0, %s271
      %s289 = sphi 0, %s289
      %s291 = sphi 0, %s289
      %s292 = sphi 0, %s291
      %s306 = sphi 0, %s292
      %s312 = sphi 0, %s314
      %s315 = sphi 0, %s312
      %s316 = sphi 0, %s315
      %s332 = sphi 0, %s316
      %s338 = sphi 0, %s340
      %s341 = sphi 0, %s338
      %s342 = sphi 0, %s341
      %s358 = sphi 0, %s342
    $region4: #{cnn_forward.1} parent=1 // loop_header_branch
      %27 = sbr.rel (%p25) target = $region8
    $region5: #{cnn_forward.1} parent=1 // loop_body
      %s29 = ssub.s32 %s24, 1
      %s30 = ssub.s32 %s24, 2
      %s31 = sadd.s32 %s24, 1
      %s32 = ssub.s32 %s24, %s31
      %p33 = scmp.eq.s32.totalorder %s32, 0
      %s35 = sadd.s32 %s34, 1
      %s36 = scalar_select %p33, %s34, %s35
      %p39 = pneg %p33
      %p40 = scmp.eq.s32.totalorder %s24, 1
      %p41 = por %p39, %p40
      %p42 = scmp.ne.s32.totalorder %s34, %s37
      %p43 = scmp.eq.s32.totalorder %s24, 0
      %p44 = por %p42, %p43
      %p45 = scmp.ne.s32.totalorder %s34, %s37
      %p46 = scmp.eq.s32.totalorder %s29, 1
      %p47 = por %p45, %p46
      %p48 = scmp.ne.s32.totalorder %s37, %s38
      %p49 = scmp.eq.s32.totalorder %s29, 0
      %p50 = por %p48, %p49
      %p51 = scmp.ne.s32.totalorder %s37, %s38
      %p52 = scmp.eq.s32.totalorder %s30, 1
      %p53 = por %p51, %p52
      %p55 = scmp.ne.s32.totalorder %s38, %s54
      %p56 = scmp.eq.s32.totalorder %s30, 0
      %p57 = por %p55, %p56
      %s59 = sadd.s32 %s58, 1
      %p62 = scmp.eq.s32.totalorder %s24, 1
      %p63 = scmp.ne.s32.totalorder %s58, %s60
      %p64 = scmp.eq.s32.totalorder %s24, 0
      %p65 = por %p63, %p64
      %p66 = scmp.ne.s32.totalorder %s58, %s60
      %p67 = scmp.eq.s32.totalorder %s29, 1
      %p68 = por %p66, %p67
      %p69 = scmp.ne.s32.totalorder %s60, %s61
      %p70 = scmp.eq.s32.totalorder %s29, 0
      %p71 = por %p69, %p70
      %p72 = scmp.ne.s32.totalorder %s60, %s61
      %p73 = scmp.eq.s32.totalorder %s30, 1
      %p74 = por %p72, %p73
      %p76 = scmp.ne.s32.totalorder %s61, %s75
      %p77 = scmp.eq.s32.totalorder %s30, 0
      %p78 = por %p76, %p77
      %s80 = sadd.s32 %s79, 1
      %p83 = scmp.eq.s32.totalorder %s24, 1
      %p84 = scmp.ne.s32.totalorder %s79, %s81
      %p85 = scmp.eq.s32.totalorder %s24, 0
      %p86 = por %p84, %p85
      %p87 = scmp.ne.s32.totalorder %s79, %s81
      %p88 = scmp.eq.s32.totalorder %s29, 1
      %p89 = por %p87, %p88
      %p90 = scmp.ne.s32.totalorder %s81, %s82
      %p91 = scmp.eq.s32.totalorder %s29, 0
      %p92 = por %p90, %p91
      %p93 = scmp.ne.s32.totalorder %s81, %s82
      %p94 = scmp.eq.s32.totalorder %s30, 1
      %p95 = por %p93, %p94
      %p97 = scmp.ne.s32.totalorder %s82, %s96
      %p98 = scmp.eq.s32.totalorder %s30, 0
      %p99 = por %p97, %p98
      %s101 = sadd.s32 %s100, 1
      %p104 = scmp.eq.s32.totalorder %s24, 1
      %p105 = scmp.ne.s32.totalorder %s100, %s102
      %p106 = scmp.eq.s32.totalorder %s24, 0
      %p107 = por %p105, %p106
      %p108 = scmp.ne.s32.totalorder %s100, %s102
      %p109 = scmp.eq.s32.totalorder %s29, 1
      %p110 = por %p108, %p109
      %p111 = scmp.ne.s32.totalorder %s102, %s103
      %p112 = scmp.eq.s32.totalorder %s29, 0
      %p113 = por %p111, %p112
      %p114 = scmp.ne.s32.totalorder %s102, %s103
      %p115 = scmp.eq.s32.totalorder %s30, 1
      %p116 = por %p114, %p115
      %p118 = scmp.ne.s32.totalorder %s103, %s117
      %p119 = scmp.eq.s32.totalorder %s30, 0
      %p120 = por %p118, %p119
      %s122 = sadd.s32 %s121, 1
      %p125 = scmp.eq.s32.totalorder %s24, 1
      %p126 = scmp.ne.s32.totalorder %s121, %s123
      %p127 = scmp.eq.s32.totalorder %s24, 0
      %p128 = por %p126, %p127
      %p129 = scmp.ne.s32.totalorder %s121, %s123
      %p130 = scmp.eq.s32.totalorder %s29, 1
      %p131 = por %p129, %p130
      %p132 = scmp.ne.s32.totalorder %s123, %s124
      %p133 = scmp.eq.s32.totalorder %s29, 0
      %p134 = por %p132, %p133
      %p135 = scmp.ne.s32.totalorder %s123, %s124
      %p136 = scmp.eq.s32.totalorder %s30, 1
      %p137 = por %p135, %p136
      %p139 = scmp.ne.s32.totalorder %s124, %s138
      %p140 = scmp.eq.s32.totalorder %s30, 0
      %p141 = por %p139, %p140
      %s143 = sadd.s32 %s142, 1
      %p146 = scmp.eq.s32.totalorder %s24, 1
      %p147 = scmp.ne.s32.totalorder %s142, %s144
      %p148 = scmp.eq.s32.totalorder %s24, 0
      %p149 = por %p147, %p148
      %p150 = scmp.ne.s32.totalorder %s142, %s144
      %p151 = scmp.eq.s32.totalorder %s29, 1
      %p152 = por %p150, %p151
      %p153 = scmp.ne.s32.totalorder %s144, %s145
      %p154 = scmp.eq.s32.totalorder %s29, 0
      %p155 = por %p153, %p154
      %p156 = scmp.ne.s32.totalorder %s144, %s145
      %p157 = scmp.eq.s32.totalorder %s30, 1
      %p158 = por %p156, %p157
      %p160 = scmp.ne.s32.totalorder %s145, %s159
      %p161 = scmp.eq.s32.totalorder %s30, 0
      %p162 = por %p160, %p161
      %s164 = sadd.s32 %s163, 1
      %p167 = scmp.eq.s32.totalorder %s24, 1
      %p168 = scmp.ne.s32.totalorder %s163, %s165
      %p169 = scmp.eq.s32.totalorder %s24, 0
      %p170 = por %p168, %p169
      %p171 = scmp.ne.s32.totalorder %s163, %s165
      %p172 = scmp.eq.s32.totalorder %s29, 1
      %p173 = por %p171, %p172
      %p174 = scmp.ne.s32.totalorder %s165, %s166
      %p175 = scmp.eq.s32.totalorder %s29, 0
      %p176 = por %p174, %p175
      %p177 = scmp.ne.s32.totalorder %s165, %s166
      %p178 = scmp.eq.s32.totalorder %s30, 1
      %p179 = por %p177, %p178
      %p181 = scmp.ne.s32.totalorder %s166, %s180
      %p182 = scmp.eq.s32.totalorder %s30, 0
      %p183 = por %p181, %p182
      %s185 = sadd.s32 %s184, 1
      %p188 = scmp.eq.s32.totalorder %s24, 1
      %p189 = scmp.ne.s32.totalorder %s184, %s186
      %p190 = scmp.eq.s32.totalorder %s24, 0
      %p191 = por %p189, %p190
      %p192 = scmp.ne.s32.totalorder %s184, %s186
      %p193 = scmp.eq.s32.totalorder %s29, 1
      %p194 = por %p192, %p193
      %p195 = scmp.ne.s32.totalorder %s186, %s187
      %p196 = scmp.eq.s32.totalorder %s29, 0
      %p197 = por %p195, %p196
      %p198 = scmp.ne.s32.totalorder %s186, %s187
      %p199 = scmp.eq.s32.totalorder %s30, 1
      %p200 = por %p198, %p199
      %p202 = scmp.ne.s32.totalorder %s187, %s201
      %p203 = scmp.eq.s32.totalorder %s30, 0
      %p204 = por %p202, %p203
      %s206 = sadd.s32 %s205, 1
      %p209 = scmp.eq.s32.totalorder %s24, 1
      %p210 = scmp.ne.s32.totalorder %s205, %s207
      %p211 = scmp.eq.s32.totalorder %s24, 0
      %p212 = por %p210, %p211
      %p213 = scmp.ne.s32.totalorder %s205, %s207
      %p214 = scmp.eq.s32.totalorder %s29, 1
      %p215 = por %p213, %p214
      %p216 = scmp.ne.s32.totalorder %s207, %s208
      %p217 = scmp.eq.s32.totalorder %s29, 0
      %p218 = por %p216, %p217
      %p219 = scmp.ne.s32.totalorder %s207, %s208
      %p220 = scmp.eq.s32.totalorder %s30, 1
      %p221 = por %p219, %p220
      %p223 = scmp.ne.s32.totalorder %s208, %s222
      %p224 = scmp.eq.s32.totalorder %s30, 0
      %p225 = por %p223, %p224
      %s227 = sadd.s32 %s226, 1
      %p230 = scmp.eq.s32.totalorder %s24, 1
      %p231 = scmp.ne.s32.totalorder %s226, %s228
      %p232 = scmp.eq.s32.totalorder %s24, 0
      %p233 = por %p231, %p232
      %p234 = scmp.ne.s32.totalorder %s226, %s228
      %p235 = scmp.eq.s32.totalorder %s29, 1
      %p236 = por %p234, %p235
      %p237 = scmp.ne.s32.totalorder %s228, %s229
      %p238 = scmp.eq.s32.totalorder %s29, 0
      %p239 = por %p237, %p238
      %p240 = scmp.ne.s32.totalorder %s228, %s229
      %p241 = scmp.eq.s32.totalorder %s30, 1
      %p242 = por %p240, %p241
      %p244 = scmp.ne.s32.totalorder %s229, %s243
      %p245 = scmp.eq.s32.totalorder %s30, 0
      %p246 = por %p244, %p245
      %s248 = sadd.s32 %s247, 1
      %p251 = scmp.eq.s32.totalorder %s24, 1
      %p252 = scmp.ne.s32.totalorder %s247, %s249
      %p253 = scmp.eq.s32.totalorder %s24, 0
      %p254 = por %p252, %p253
      %p255 = scmp.ne.s32.totalorder %s247, %s249
      %p256 = scmp.eq.s32.totalorder %s29, 1
      %p257 = por %p255, %p256
      %p258 = scmp.ne.s32.totalorder %s249, %s250
      %p259 = scmp.eq.s32.totalorder %s29, 0
      %p260 = por %p258, %p259
      %p261 = scmp.ne.s32.totalorder %s249, %s250
      %p262 = scmp.eq.s32.totalorder %s30, 1
      %p263 = por %p261, %p262
      %p265 = scmp.ne.s32.totalorder %s250, %s264
      %p266 = scmp.eq.s32.totalorder %s30, 0
      %p267 = por %p265, %p266
      %s269 = sadd.s32 %s268, 1
      %p272 = scmp.eq.s32.totalorder %s24, 1
      %p273 = scmp.ne.s32.totalorder %s268, %s270
      %p274 = scmp.eq.s32.totalorder %s24, 0
      %p275 = por %p273, %p274
      %p276 = scmp.ne.s32.totalorder %s268, %s270
      %p277 = scmp.eq.s32.totalorder %s29, 1
      %p278 = por %p276, %p277
      %p279 = scmp.ne.s32.totalorder %s270, %s271
      %p280 = scmp.eq.s32.totalorder %s29, 0
      %p281 = por %p279, %p280
      %p282 = scmp.ne.s32.totalorder %s270, %s271
      %p283 = scmp.eq.s32.totalorder %s30, 1
      %p284 = por %p282, %p283
      %p286 = scmp.ne.s32.totalorder %s271, %s285
      %p287 = scmp.eq.s32.totalorder %s30, 0
      %p288 = por %p286, %p287
      %s290 = sadd.s32 %s289, 1
      %p293 = scmp.eq.s32.totalorder %s24, 1
      %p294 = scmp.ne.s32.totalorder %s289, %s291
      %p295 = scmp.eq.s32.totalorder %s24, 0
      %p296 = por %p294, %p295
      %p297 = scmp.ne.s32.totalorder %s289, %s291
      %p298 = scmp.eq.s32.totalorder %s29, 1
      %p299 = por %p297, %p298
      %p300 = scmp.ne.s32.totalorder %s291, %s292
      %p301 = scmp.eq.s32.totalorder %s29, 0
      %p302 = por %p300, %p301
      %p303 = scmp.ne.s32.totalorder %s291, %s292
      %p304 = scmp.eq.s32.totalorder %s30, 1
      %p305 = por %p303, %p304
      %p307 = scmp.ne.s32.totalorder %s292, %s306
      %p308 = scmp.eq.s32.totalorder %s30, 0
      %p309 = por %p307, %p308
      %s310 = ssub.s32 %s24, %s31
      %p311 = scmp.eq.s32.totalorder %s310, 0
      %s313 = sadd.s32 %s312, 1
      %s314 = scalar_select %p311, %s312, %s313
      %p317 = pneg %p311
      %p318 = scmp.eq.s32.totalorder %s24, 1
      %p319 = por %p317, %p318
      %p320 = scmp.ne.s32.totalorder %s312, %s315
      %p321 = scmp.eq.s32.totalorder %s24, 0
      %p322 = por %p320, %p321
      %p323 = scmp.ne.s32.totalorder %s312, %s315
      %p324 = scmp.eq.s32.totalorder %s29, 1
      %p325 = por %p323, %p324
      %p326 = scmp.ne.s32.totalorder %s315, %s316
      %p327 = scmp.eq.s32.totalorder %s29, 0
      %p328 = por %p326, %p327
      %p329 = scmp.ne.s32.totalorder %s315, %s316
      %p330 = scmp.eq.s32.totalorder %s30, 1
      %p331 = por %p329, %p330
      %p333 = scmp.ne.s32.totalorder %s316, %s332
      %p334 = scmp.eq.s32.totalorder %s30, 0
      %p335 = por %p333, %p334
      %s336 = ssub.s32 %s24, %s31
      %p337 = scmp.eq.s32.totalorder %s336, 0
      %s339 = sadd.s32 %s338, 1
      %s340 = scalar_select %p337, %s338, %s339
      %p343 = pneg %p337
      %p344 = scmp.eq.s32.totalorder %s24, 1
      %p345 = por %p343, %p344
      %p346 = scmp.ne.s32.totalorder %s338, %s341
      %p347 = scmp.eq.s32.totalorder %s24, 0
      %p348 = por %p346, %p347
      %p349 = scmp.ne.s32.totalorder %s338, %s341
      %p350 = scmp.eq.s32.totalorder %s29, 1
      %p351 = por %p349, %p350
      %p352 = scmp.ne.s32.totalorder %s341, %s342
      %p353 = scmp.eq.s32.totalorder %s29, 0
      %p354 = por %p352, %p353
      %p355 = scmp.ne.s32.totalorder %s341, %s342
      %p356 = scmp.eq.s32.totalorder %s30, 1
      %p357 = por %p355, %p356
      %p359 = scmp.ne.s32.totalorder %s342, %s358
      %p360 = scmp.eq.s32.totalorder %s30, 0
      %p361 = por %p359, %p360
      %p362 = scmp.le.s32.totalorder 1, %s24
      %p363 = scmp.lt.s32.totalorder %s24, 3
      %p364 = pnand %p362, %p363
      %p365 = pneg %p364
      // Predicated region
      $region9: #{cnn_forward.1} parent=5 // pred_check
        _
      $region10: #{cnn_forward.1} parent=5 // pred_check_branch
        %367 = sbr.rel (%p364) target = $region12
      $region11: #{cnn_forward.1} parent=5 // pred_region
        %s368 = ssub.s32 %s24, 1
        // Predicated region
        $region13: #{cnn_forward.1} parent=11 // pred_check
          %p369 = pneg %p71
        $region14: #{cnn_forward.1} parent=11 // pred_check_branch
          %371 = sbr.rel (%p369) target = $region16
        $region15: #{cnn_forward.1} parent=11 // pred_region
          _
        $region16: #{cnn_forward.1} parent=11 // pred_fallthru
          _
        // Predicated region
        $region17: #{cnn_forward.1} parent=11 // pred_check
          %p372 = pneg %p92
        $region18: #{cnn_forward.1} parent=11 // pred_check_branch
          %374 = sbr.rel (%p372) target = $region20
        $region19: #{cnn_forward.1} parent=11 // pred_region
          _
        $region20: #{cnn_forward.1} parent=11 // pred_fallthru
          _
        // Predicated region
        $region21: #{cnn_forward.1} parent=11 // pred_check
          %p375 = pneg %p113
        $region22: #{cnn_forward.1} parent=11 // pred_check_branch
          %377 = sbr.rel (%p375) target = $region24
        $region23: #{cnn_forward.1} parent=11 // pred_region
          _
        $region24: #{cnn_forward.1} parent=11 // pred_fallthru
          _
        // Predicated region
        $region25: #{cnn_forward.1} parent=11 // pred_check
          %p378 = pneg %p134
        $region26: #{cnn_forward.1} parent=11 // pred_check_branch
          %380 = sbr.rel (%p378) target = $region28
        $region27: #{cnn_forward.1} parent=11 // pred_region
          _
        $region28: #{cnn_forward.1} parent=11 // pred_fallthru
          _
        // Predicated region
        $region29: #{cnn_forward.1} parent=11 // pred_check
          %p381 = pneg %p155
        $region30: #{cnn_forward.1} parent=11 // pred_check_branch
          %383 = sbr.rel (%p381) target = $region32
        $region31: #{cnn_forward.1} parent=11 // pred_region
          _
        $region32: #{cnn_forward.1} parent=11 // pred_fallthru
          _
        // Predicated region
        $region33: #{cnn_forward.1} parent=11 // pred_check
          %p384 = pneg %p176
        $region34: #{cnn_forward.1} parent=11 // pred_check_branch
          %386 = sbr.rel (%p384) target = $region36
        $region35: #{cnn_forward.1} parent=11 // pred_region
          _
        $region36: #{cnn_forward.1} parent=11 // pred_fallthru
          _
        // Predicated region
        $region37: #{cnn_forward.1} parent=11 // pred_check
          %p387 = pneg %p197
        $region38: #{cnn_forward.1} parent=11 // pred_check_branch
          %389 = sbr.rel (%p387) target = $region40
        $region39: #{cnn_forward.1} parent=11 // pred_region
          _
        $region40: #{cnn_forward.1} parent=11 // pred_fallthru
          _
        // Predicated region
        $region41: #{cnn_forward.1} parent=11 // pred_check
          %p390 = pneg %p218
        $region42: #{cnn_forward.1} parent=11 // pred_check_branch
          %392 = sbr.rel (%p390) target = $region44
        $region43: #{cnn_forward.1} parent=11 // pred_region
          _
        $region44: #{cnn_forward.1} parent=11 // pred_fallthru
          _
        // Predicated region
        $region45: #{cnn_forward.1} parent=11 // pred_check
          %p393 = pneg %p239
        $region46: #{cnn_forward.1} parent=11 // pred_check_branch
          %395 = sbr.rel (%p393) target = $region48
        $region47: #{cnn_forward.1} parent=11 // pred_region
          _
        $region48: #{cnn_forward.1} parent=11 // pred_fallthru
          _
        // Predicated region
        $region49: #{cnn_forward.1} parent=11 // pred_check
          %p396 = pneg %p260
        $region50: #{cnn_forward.1} parent=11 // pred_check_branch
          %398 = sbr.rel (%p396) target = $region52
        $region51: #{cnn_forward.1} parent=11 // pred_region
          _
        $region52: #{cnn_forward.1} parent=11 // pred_fallthru
          _
        // Predicated region
        $region53: #{cnn_forward.1} parent=11 // pred_check
          %p399 = pneg %p281
        $region54: #{cnn_forward.1} parent=11 // pred_check_branch
          %401 = sbr.rel (%p399) target = $region56
        $region55: #{cnn_forward.1} parent=11 // pred_region
          _
        $region56: #{cnn_forward.1} parent=11 // pred_fallthru
          _
        // Predicated region
        $region57: #{cnn_forward.1} parent=11 // pred_check
          %p402 = pneg %p302
        $region58: #{cnn_forward.1} parent=11 // pred_check_branch
          %404 = sbr.rel (%p402) target = $region60
        $region59: #{cnn_forward.1} parent=11 // pred_region
          _
        $region60: #{cnn_forward.1} parent=11 // pred_fallthru
          _
      $region12: #{cnn_forward.1} parent=5 // pred_fallthru
        _
      %p405 = scmp.lt.s32.totalorder %s24, 2
      // Predicated region
      $region61: #{cnn_forward.1} parent=5 // pred_check
        %p406 = pneg %p405
      $region62: #{cnn_forward.1} parent=5 // pred_check_branch
        %408 = sbr.rel (%p406) target = $region64
      $region63: #{cnn_forward.1} parent=5 // pred_region
        // Predicated region
        $region65: #{cnn_forward.1} parent=63 // pred_check
          %p409 = pneg %p44
        $region66: #{cnn_forward.1} parent=63 // pred_check_branch
          %411 = sbr.rel (%p409) target = $region68
        $region67: #{cnn_forward.1} parent=63 // pred_region
          %p412 = scmp.lt.s32.totalorder %s24, 1
          %s413 = scalar_select %p412, %s24, 1
          %s414 = smul.addr %s413, 41
          %s415 = smul.addr %s414, 4
          %s416 = scalar_lea.vmem %s0, %s415
        $region68: #{cnn_forward.1} parent=63 // pred_fallthru
          _
      $region64: #{cnn_forward.1} parent=5 // pred_fallthru
        _
      %p417 = scmp.le.s32.totalorder 1, %s24
      %p418 = scmp.lt.s32.totalorder %s24, 3
      %p419 = pnand %p417, %p418
      %p420 = pneg %p419
      // Predicated region
      $region69: #{cnn_forward.1} parent=5 // pred_check
        _
      $region70: #{cnn_forward.1} parent=5 // pred_check_branch
        %422 = sbr.rel (%p419) target = $region72
      $region71: #{cnn_forward.1} parent=5 // pred_region
        %s423 = ssub.s32 %s24, 1
        %p424 = scmp.lt.s32.totalorder %s29, 1
        %s425 = scalar_select %p424, %s29, 1
        %s426 = smul.addr %s425, 41
        %s427 = smul.addr %s426, 4
        %s428 = scalar_lea.vmem %s0, %s427
        %p429 = pneg %p50
        %p430 = pneg %p47
        %p431 = pneg %p71
        %p432 = pneg %p68
        %p433 = pneg %p92
        %p434 = pneg %p89
        %p435 = pneg %p113
        %p436 = pneg %p110
        %p437 = pneg %p134
        %p438 = pneg %p131
        %p439 = pneg %p155
        %p440 = pneg %p152
        %p441 = pneg %p176
        %p442 = pneg %p173
        %p443 = pneg %p197
        %p444 = pneg %p194
        %p445 = pneg %p218
        %p446 = pneg %p215
        %p447 = pneg %p239
        %p448 = pneg %p236
        %p449 = pneg %p260
        %p450 = pneg %p257
        %p451 = pneg %p281
        %p452 = pneg %p278
        %p453 = pneg %p302
        %p454 = pneg %p299
        %p455 = pneg %p328
        %p456 = pneg %p325
        %s457 = sand.u32 %s315, 1
        %s458 = scalar_lea.sflag [#allocation9], %s457
        %s459 = sand.u32 %s315, 1
        %s460 = scalar_lea.vmem [#allocation8], %s459
        %p461 = pneg %p354
        %p462 = pneg %p351
        %p463 = scmp.lt.s32.totalorder %s29, 1
        %s464 = scalar_select %p463, %s29, 1
        %s465 = smul.addr %s464, 4
        %s466 = scalar_lea.vmem %s14, %s465
        %p467 = scmp.lt.s32.totalorder %s29, 1
        %s468 = scalar_select %p467, %s29, 1
        %s469 = smul.addr %s468, 41
        %s470 = smul.addr %s469, 4
        %s471 = scalar_lea.vmem %s0, %s470
        %p472 = scmp.lt.s32.totalorder %s29, 1
        %s473 = scalar_select %p472, %s29, 1
        %s474 = smul.addr %s473, 4
        %s475 = scalar_lea.vmem %s14, %s474
        %v477 = vld [vmem:[%s471] sm:$0xf]
        %v478 = vld [vmem:[%s471 + $0x4] sm:$0xf]
        %v479 = vld [vmem:[%s471 + $0x8] sm:$0xf]
        %v480 = vld [vmem:[%s471 + $0xc] sm:$0xf]
        %v481 = vld [vmem:[%s471 + $0x10] sm:$0xf]
        %v482 = vld [vmem:[%s471 + $0x14] sm:$0xf]
        %v483 = vld [vmem:[%s471 + $0x18] sm:$0xf]
        %v484 = vld [vmem:[%s471 + $0x1c] sm:$0xf]
        %v485 = vld [vmem:[%s471 + $0x20] sm:$0xf]
        %v486 = vld [vmem:[%s471 + $0x24] sm:$0xf]
        %v487 = vld [vmem:[%s471 + $0x28] sm:$0xf]
        %v488 = vld [vmem:[%s471 + $0x2c] sm:$0xf]
        %v489 = vld [vmem:[%s471 + $0x30] sm:$0xf]
        %v490 = vld [vmem:[%s471 + $0x34] sm:$0xf]
        %v491 = vld [vmem:[%s471 + $0x38] sm:$0xf]
        %v492 = vld [vmem:[%s471 + $0x3c] sm:$0xf]
        %v493 = vld [vmem:[%s1] sm:$0xf]
        %v494 = vld [vmem:[%s1 + $0x4] sm:$0xf]
        %v495 = vld [vmem:[%s1 + $0x8] sm:$0xf]
        %v496 = vld [vmem:[%s1 + $0xc] sm:$0xf]
        %v497 = vld [vmem:[%s2] sm:$0x1]
        %v499 = vlaneseq
        %v500 = vshrl.u32 %v499, 7
        %v501 = vsub.s32 0, %v500
        %v502 = vrot.slane %v497, %v501
        %v520 = vunpack.c.l.b16 %v477
        %v521 = vunpack.c.l.b16 %v478
        %v522 = vunpack.c.l.b16 %v479
        %v523 = vunpack.c.l.b16 %v480
        %v524 = vunpack.c.l.b16 %v481
        %v525 = vunpack.c.l.b16 %v482
        %v526 = vunpack.c.l.b16 %v483
        %v527 = vunpack.c.l.b16 %v484
        %v528 = vunpack.c.l.b16 %v485
        %v529 = vunpack.c.l.b16 %v486
        %v530 = vunpack.c.l.b16 %v487
        %v531 = vunpack.c.l.b16 %v488
        %v532 = vunpack.c.l.b16 %v489
        %v533 = vunpack.c.l.b16 %v490
        %v534 = vunpack.c.l.b16 %v491
        %v535 = vunpack.c.l.b16 %v492
        %v536 = vpack.c.b16 %v521, %v520
        %v537 = vpack.c.b16 %v523, %v522
        %v538 = vpack.c.b16 %v525, %v524
        %v539 = vpack.c.b16 %v527, %v526
        %v540 = vpack.c.b16 %v529, %v528
        %v541 = vpack.c.b16 %v531, %v530
        %v542 = vpack.c.b16 %v533, %v532
        %v543 = vpack.c.b16 %v535, %v534
        %v548 = vunpack.c.l.b16 %v493
        %v549 = vunpack.c.l.b16 %v494
        %v550 = vunpack.c.l.b16 %v495
        %v551 = vunpack.c.l.b16 %v496
        %v552 = vpack.c.b16 %v549, %v548
        %v553 = vpack.c.b16 %v551, %v550
        %vm556 = vcmask 261120
        %v558 = vsel %vm556, %v536, 0
        %v561 = vsel %vm556, %v537, 0
        %v564 = vsel %vm556, %v538, 0
        %v567 = vsel %vm556, %v539, 0
        %v570 = vsel %vm556, %v540, 0
        %v573 = vsel %vm556, %v541, 0
        %v576 = vsel %vm556, %v542, 0
        %v579 = vsel %vm556, %v543, 0
        %581 = vmatprep.subr.bf16.mxu0 0
        %582 = vmatpush1.bf16.msra.mxu0 %v552
        %583 = vmatprep.subr.bf16.mxu0 0
        %584 = vmatpush1.bf16.msra.mxu0 %v553
        %585 = vmatprep.subr.bf16.mxu0 0
        %586 = vmatpush1.bf16.msra.mxu0 0
        %587 = vmatprep.subr.bf16.mxu0 0
        %588 = vmatpush1.bf16.msra.mxu0 0
        %589 = vmatprep.subr.bf16.mxu0 0
        %590 = vmatpush1.bf16.msra.mxu0 0
        %591 = vmatprep.subr.bf16.mxu0 0
        %592 = vmatpush1.bf16.msra.mxu0 0
        %593 = vmatprep.subr.bf16.mxu0 0
        %594 = vmatpush1.bf16.msra.mxu0 0
        %595 = vmatprep.subr.bf16.mxu0 0
        %596 = vmatpush1.bf16.msra.mxu0 0
        %597 = vmatprep.subr.bf16.mxu0 0
        %598 = vmatpush1.bf16.msra.mxu0 0
        %599 = vmatprep.subr.bf16.mxu0 0
        %600 = vmatpush1.bf16.msra.mxu0 0
        %601 = vmatprep.subr.bf16.mxu0 0
        %602 = vmatpush1.bf16.msra.mxu0 0
        %603 = vmatprep.subr.bf16.mxu0 0
        %604 = vmatpush1.bf16.msra.mxu0 0
        %605 = vmatprep.subr.bf16.mxu0 0
        %606 = vmatpush1.bf16.msra.mxu0 0
        %607 = vmatprep.subr.bf16.mxu0 0
        %608 = vmatpush1.bf16.msra.mxu0 0
        %609 = vmatprep.subr.bf16.mxu0 0
        %610 = vmatpush1.bf16.msra.mxu0 0
        %611 = vmatprep.subr.bf16.mxu0 0
        %612 = vmatpush1.bf16.msra.mxu0 0
        %613 = vmatprep.mubr.bf16.mxu0 0
        %614 = vmatmul.mubr.bf16.gmra.mrb[0].mxu0 %v558
        %v615 = vpop.f32.mrb[0].mxu0
        %v616 = vadd.f32 %v502, %v615
        %v617 = vpop.f32.mrb[0].mxu0
        %v618 = vpop.f32.mrb[0].mxu0
        %v619 = vadd.f32 %v502, %v618
        %v620 = vpop.f32.mrb[0].mxu0
        %621 = vmatprep.mubr.bf16.mxu0 0
        %622 = vmatmul.mubr.bf16.gmra.mrb[0].mxu0 %v561
        %v623 = vpop.f32.mrb[0].mxu0
        %v624 = vadd.f32 %v502, %v623
        %v625 = vpop.f32.mrb[0].mxu0
        %v626 = vpop.f32.mrb[0].mxu0
        %v627 = vadd.f32 %v502, %v626
        %v628 = vpop.f32.mrb[0].mxu0
        %629 = vmatprep.mubr.bf16.mxu0 0
        %630 = vmatmul.mubr.bf16.gmra.mrb[0].mxu0 %v564
        %v631 = vpop.f32.mrb[0].mxu0
        %v632 = vadd.f32 %v502, %v631
        %v633 = vpop.f32.mrb[0].mxu0
        %v634 = vpop.f32.mrb[0].mxu0
        %v635 = vadd.f32 %v502, %v634
        %v636 = vpop.f32.mrb[0].mxu0
        %637 = vmatprep.mubr.bf16.mxu0 0
        %638 = vmatmul.mubr.bf16.gmra.mrb[0].mxu0 %v567
        %v639 = vpop.f32.mrb[0].mxu0
        %v640 = vadd.f32 %v502, %v639
        %v641 = vpop.f32.mrb[0].mxu0
        %v642 = vpop.f32.mrb[0].mxu0
        %v643 = vadd.f32 %v502, %v642
        %v644 = vpop.f32.mrb[0].mxu0
        %645 = vmatprep.mubr.bf16.mxu0 0
        %646 = vmatmul.mubr.bf16.gmra.mrb[0].mxu0 %v570
        %v647 = vpop.f32.mrb[0].mxu0
        %v648 = vadd.f32 %v502, %v647
        %v649 = vpop.f32.mrb[0].mxu0
        %v650 = vpop.f32.mrb[0].mxu0
        %v651 = vadd.f32 %v502, %v650
        %v652 = vpop.f32.mrb[0].mxu0
        %653 = vmatprep.mubr.bf16.mxu0 0
        %654 = vmatmul.mubr.bf16.gmra.mrb[0].mxu0 %v573
        %v655 = vpop.f32.mrb[0].mxu0
        %v656 = vadd.f32 %v502, %v655
        %v657 = vpop.f32.mrb[0].mxu0
        %v658 = vpop.f32.mrb[0].mxu0
        %v659 = vadd.f32 %v502, %v658
        %v660 = vpop.f32.mrb[0].mxu0
        %661 = vmatprep.mubr.bf16.mxu0 0
        %662 = vmatmul.mubr.bf16.gmra.mrb[0].mxu0 %v576
        %v663 = vpop.f32.mrb[0].mxu0
        %v664 = vadd.f32 %v502, %v663
        %v665 = vpop.f32.mrb[0].mxu0
        %v666 = vpop.f32.mrb[0].mxu0
        %v667 = vadd.f32 %v502, %v666
        %v668 = vpop.f32.mrb[0].mxu0
        %669 = vmatprep.mubr.bf16.mxu0 0
        %670 = vmatmul.mubr.bf16.gmra.mrb[0].mxu0 %v579
        %v671 = vpop.f32.mrb[0].mxu0
        %v672 = vadd.f32 %v502, %v671
        %v673 = vpop.f32.mrb[0].mxu0
        %v674 = vpop.f32.mrb[0].mxu0
        %v675 = vadd.f32 %v502, %v674
        %v676 = vpop.f32.mrb[0].mxu0
        %677 = vdwg.mxu0
        %v678 = vmax.f32 %v616, 0.0
        %v679 = vmax.f32 %v619, 0.0
        %v680 = vmax.f32 %v624, 0.0
        %v681 = vmax.f32 %v627, 0.0
        %v682 = vmax.f32 %v632, 0.0
        %v683 = vmax.f32 %v635, 0.0
        %v684 = vmax.f32 %v640, 0.0
        %v685 = vmax.f32 %v643, 0.0
        %v686 = vmax.f32 %v648, 0.0
        %v687 = vmax.f32 %v651, 0.0
        %v688 = vmax.f32 %v656, 0.0
        %v689 = vmax.f32 %v659, 0.0
        %v690 = vmax.f32 %v664, 0.0
        %v691 = vmax.f32 %v667, 0.0
        %v692 = vmax.f32 %v672, 0.0
        %v693 = vmax.f32 %v675, 0.0
        %v694 = vpack.c.bf16 %v679, %v678
        %v695 = vpack.c.bf16 %v681, %v680
        %v696 = vpack.c.bf16 %v683, %v682
        %v697 = vpack.c.bf16 %v685, %v684
        %v698 = vpack.c.bf16 %v687, %v686
        %v699 = vpack.c.bf16 %v689, %v688
        %v700 = vpack.c.bf16 %v691, %v690
        %v701 = vpack.c.bf16 %v693, %v692
        %v710 = vunpack.c.l.b16 %v694
        %v711 = vunpack.c.h.b16 %v694
        %v712 = vunpack.c.l.b16 %v695
        %v713 = vunpack.c.h.b16 %v695
        %v714 = vunpack.c.l.b16 %v696
        %v715 = vunpack.c.h.b16 %v696
        %v716 = vunpack.c.l.b16 %v697
        %v717 = vunpack.c.h.b16 %v697
        %v718 = vunpack.c.l.b16 %v698
        %v719 = vunpack.c.h.b16 %v698
        %v720 = vunpack.c.l.b16 %v699
        %v721 = vunpack.c.h.b16 %v699
        %v722 = vunpack.c.l.b16 %v700
        %v723 = vunpack.c.h.b16 %v700
        %v724 = vunpack.c.l.b16 %v701
        %v725 = vunpack.c.h.b16 %v701
        %v726 = vpack.c.b16 %v710, %v710
        %v727 = vpack.c.b16 %v711, %v711
        %v728 = vpack.c.b16 %v712, %v712
        %v729 = vpack.c.b16 %v713, %v713
        %v730 = vpack.c.b16 %v714, %v714
        %v731 = vpack.c.b16 %v715, %v715
        %v732 = vpack.c.b16 %v716, %v716
        %v733 = vpack.c.b16 %v717, %v717
        %v734 = vpack.c.b16 %v718, %v718
        %v735 = vpack.c.b16 %v719, %v719
        %v736 = vpack.c.b16 %v720, %v720
        %v737 = vpack.c.b16 %v721, %v721
        %v738 = vpack.c.b16 %v722, %v722
        %v739 = vpack.c.b16 %v723, %v723
        %v740 = vpack.c.b16 %v724, %v724
        %v741 = vpack.c.b16 %v725, %v725
        %vm758 = vcmask 257024
        %759 = vst.msk [vmem:[#allocation2] sm:$0xf] %vm758, %v726
        %760 = vst.msk [vmem:[#allocation2 + $0x4] sm:$0xf] %vm758, %v727
        %761 = vst.msk [vmem:[#allocation2 + $0x8] sm:$0xf] %vm758, %v728
        %762 = vst.msk [vmem:[#allocation2 + $0xc] sm:$0xf] %vm758, %v729
        %763 = vst.msk [vmem:[#allocation2 + $0x10] sm:$0xf] %vm758, %v730
        %764 = vst.msk [vmem:[#allocation2 + $0x14] sm:$0xf] %vm758, %v731
        %765 = vst.msk [vmem:[#allocation2 + $0x18] sm:$0xf] %vm758, %v732
        %766 = vst.msk [vmem:[#allocation2 + $0x1c] sm:$0xf] %vm758, %v733
        %767 = vst.msk [vmem:[#allocation2 + $0x20] sm:$0xf] %vm758, %v734
        %768 = vst.msk [vmem:[#allocation2 + $0x24] sm:$0xf] %vm758, %v735
        %769 = vst.msk [vmem:[#allocation2 + $0x28] sm:$0xf] %vm758, %v736
        %770 = vst.msk [vmem:[#allocation2 + $0x2c] sm:$0xf] %vm758, %v737
        %771 = vst.msk [vmem:[#allocation2 + $0x30] sm:$0xf] %vm758, %v738
        %772 = vst.msk [vmem:[#allocation2 + $0x34] sm:$0xf] %vm758, %v739
        %773 = vst.msk [vmem:[#allocation2 + $0x38] sm:$0xf] %vm758, %v740
        %774 = vst.msk [vmem:[#allocation2 + $0x3c] sm:$0xf] %vm758, %v741
        %v775 = vld [vmem:[%s471 + $0x40] sm:$0xf]
        %v776 = vld [vmem:[%s471 + $0x44] sm:$0xf]
        %v777 = vld [vmem:[%s471 + $0x48] sm:$0xf]
        %v778 = vld [vmem:[%s471 + $0x4c] sm:$0xf]
        %v779 = vld [vmem:[%s471 + $0x50] sm:$0xf]
        %v780 = vld [vmem:[%s471 + $0x54] sm:$0xf]
        %v781 = vld [vmem:[%s471 + $0x58] sm:$0xf]
        %v782 = vld [vmem:[%s471 + $0x5c] sm:$0xf]
        %v783 = vld [vmem:[%s471 + $0x60] sm:$0xf]
        %v784 = vld [vmem:[%s471 + $0x64] sm:$0xf]
        %v785 = vld [vmem:[%s471 + $0x68] sm:$0xf]
        %v786 = vld [vmem:[%s471 + $0x6c] sm:$0xf]
        %v787 = vld [vmem:[%s471 + $0x70] sm:$0xf]
        %v788 = vld [vmem:[%s471 + $0x74] sm:$0xf]
        %v789 = vld [vmem:[%s471 + $0x78] sm:$0xf]
        %v790 = vld [vmem:[%s471 + $0x7c] sm:$0xf]
        %v791 = vld [vmem:[%s1] sm:$0xf]
        %v792 = vld [vmem:[%s1 + $0x4] sm:$0xf]
        %v793 = vld [vmem:[%s1 + $0x8] sm:$0xf]
        %v794 = vld [vmem:[%s1 + $0xc] sm:$0xf]
        %v795 = vld [vmem:[%s2] sm:$0x1]
        %v797 = vlaneseq
        %v798 = vshrl.u32 %v797, 7
        %v799 = vsub.s32 0, %v798
        %v800 = vrot.slane %v795, %v799
        %v818 = vunpack.c.l.b16 %v775
        %v819 = vunpack.c.l.b16 %v776
        %v820 = vunpack.c.l.b16 %v777
        %v821 = vunpack.c.l.b16 %v778
        %v822 = vunpack.c.l.b16 %v779
        %v823 = vunpack.c.l.b16 %v780
        %v824 = vunpack.c.l.b16 %v781
        %v825 = vunpack.c.l.b16 %v782
        %v826 = vunpack.c.l.b16 %v783
        %v827 = vunpack.c.l.b16 %v784
        %v828 = vunpack.c.l.b16 %v785
        %v829 = vunpack.c.l.b16 %v786
        %v830 = vunpack.c.l.b16 %v787
        %v831 = vunpack.c.l.b16 %v788
        %v832 = vunpack.c.l.b16 %v789
        %v833 = vunpack.c.l.b16 %v790
        %v834 = vpack.c.b16 %v819, %v818
        %v835 = vpack.c.b16 %v821, %v820
        %v836 = vpack.c.b16 %v823, %v822
        %v837 = vpack.c.b16 %v825, %v824
        %v838 = vpack.c.b16 %v827, %v826
        %v839 = vpack.c.b16 %v829, %v828
        %v840 = vpack.c.b16 %v831, %v830
        %v841 = vpack.c.b16 %v833, %v832
        %v846 = vunpack.c.l.b16 %v791
        %v847 = vunpack.c.l.b16 %v792
        %v848 = vunpack.c.l.b16 %v793
        %v849 = vunpack.c.l.b16 %v794
        %v850 = vpack.c.b16 %v847, %v846
        %v851 = vpack.c.b16 %v849, %v848
        %v855 = vsel %vm556, %v834, 0
        %v858 = vsel %vm556, %v835, 0
        %v861 = vsel %vm556, %v836, 0
        %v864 = vsel %vm556, %v837, 0
        %v867 = vsel %vm556, %v838, 0
        %v870 = vsel %vm556, %v839, 0
        %v873 = vsel %vm556, %v840, 0
        %v876 = vsel %vm556, %v841, 0
        %878 = vmatprep.subr.bf16.mxu0 0
        %879 = vmatpush1.bf16.msra.mxu0 %v850
        %880 = vmatprep.subr.bf16.mxu0 0
        %881 = vmatpush1.bf16.msra.mxu0 %v851
        %882 = vmatprep.subr.bf16.mxu0 0
        %883 = vmatpush1.bf16.msra.mxu0 0
        %884 = vmatprep.subr.bf16.mxu0 0
        %885 = vmatpush1.bf16.msra.mxu0 0
        %886 = vmatprep.subr.bf16.mxu0 0
        %887 = vmatpush1.bf16.msra.mxu0 0
        %888 = vmatprep.subr.bf16.mxu0 0
        %889 = vmatpush1.bf16.msra.mxu0 0
        %890 = vmatprep.subr.bf16.mxu0 0
        %891 = vmatpush1.bf16.msra.mxu0 0
        %892 = vmatprep.subr.bf16.mxu0 0
        %893 = vmatpush1.bf16.msra.mxu0 0
        %894 = vmatprep.subr.bf16.mxu0 0
        %895 = vmatpush1.bf16.msra.mxu0 0
        %896 = vmatprep.subr.bf16.mxu0 0
        %897 = vmatpush1.bf16.msra.mxu0 0
        %898 = vmatprep.subr.bf16.mxu0 0
        %899 = vmatpush1.bf16.msra.mxu0 0
        %900 = vmatprep.subr.bf16.mxu0 0
        %901 = vmatpush1.bf16.msra.mxu0 0
        %902 = vmatprep.subr.bf16.mxu0 0
        %903 = vmatpush1.bf16.msra.mxu0 0
        %904 = vmatprep.subr.bf16.mxu0 0
        %905 = vmatpush1.bf16.msra.mxu0 0
        %906 = vmatprep.subr.bf16.mxu0 0
        %907 = vmatpush1.bf16.msra.mxu0 0
        %908 = vmatprep.subr.bf16.mxu0 0
        %909 = vmatpush1.bf16.msra.mxu0 0
        %910 = vmatprep.mubr.bf16.mxu0 0
        %911 = vmatmul.mubr.bf16.gmra.mrb[0].mxu0 %v855
        %v912 = vpop.f32.mrb[0].mxu0
        %v913 = vadd.f32 %v800, %v912
        %v914 = vpop.f32.mrb[0].mxu0
        %v915 = vpop.f32.mrb[0].mxu0
        %v916 = vadd.f32 %v800, %v915
        %v917 = vpop.f32.mrb[0].mxu0
        %918 = vmatprep.mubr.bf16.mxu0 0
        %919 = vmatmul.mubr.bf16.gmra.mrb[0].mxu0 %v858
        %v920 = vpop.f32.mrb[0].mxu0
        %v921 = vadd.f32 %v800, %v920
        %v922 = vpop.f32.mrb[0].mxu0
        %v923 = vpop.f32.mrb[0].mxu0
        %v924 = vadd.f32 %v800, %v923
        %v925 = vpop.f32.mrb[0].mxu0
        %926 = vmatprep.mubr.bf16.mxu0 0
        %927 = vmatmul.mubr.bf16.gmra.mrb[0].mxu0 %v861
        %v928 = vpop.f32.mrb[0].mxu0
        %v929 = vadd.f32 %v800, %v928
        %v930 = vpop.f32.mrb[0].mxu0
        %v931 = vpop.f32.mrb[0].mxu0
        %v932 = vadd.f32 %v800, %v931
        %v933 = vpop.f32.mrb[0].mxu0
        %934 = vmatprep.mubr.bf16.mxu0 0
        %935 = vmatmul.mubr.bf16.gmra.mrb[0].mxu0 %v864
        %v936 = vpop.f32.mrb[0].mxu0
        %v937 = vadd.f32 %v800, %v936
        %v938 = vpop.f32.mrb[0].mxu0
        %v939 = vpop.f32.mrb[0].mxu0
        %v940 = vadd.f32 %v800, %v939
        %v941 = vpop.f32.mrb[0].mxu0
        %942 = vmatprep.mubr.bf16.mxu0 0
        %943 = vmatmul.mubr.bf16.gmra.mrb[0].mxu0 %v867
        %v944 = vpop.f32.mrb[0].mxu0
        %v945 = vadd.f32 %v800, %v944
        %v946 = vpop.f32.mrb[0].mxu0
        %v947 = vpop.f32.mrb[0].mxu0
        %v948 = vadd.f32 %v800, %v947
        %v949 = vpop.f32.mrb[0].mxu0
        %950 = vmatprep.mubr.bf16.mxu0 0
        %951 = vmatmul.mubr.bf16.gmra.mrb[0].mxu0 %v870
        %v952 = vpop.f32.mrb[0].mxu0
        %v953 = vadd.f32 %v800, %v952
        %v954 = vpop.f32.mrb[0].mxu0
        %v955 = vpop.f32.mrb[0].mxu0
        %v956 = vadd.f32 %v800, %v955
        %v957 = vpop.f32.mrb[0].mxu0
        %958 = vmatprep.mubr.bf16.mxu0 0
        %959 = vmatmul.mubr.bf16.gmra.mrb[0].mxu0 %v873
        %v960 = vpop.f32.mrb[0].mxu0
        %v961 = vadd.f32 %v800, %v960
        %v962 = vpop.f32.mrb[0].mxu0
        %v963 = vpop.f32.mrb[0].mxu0
        %v964 = vadd.f32 %v800, %v963
        %v965 = vpop.f32.mrb[0].mxu0
        %966 = vmatprep.mubr.bf16.mxu0 0
        %967 = vmatmul.mubr.bf16.gmra.mrb[0].mxu0 %v876
        %v968 = vpop.f32.mrb[0].mxu0
        %v969 = vadd.f32 %v800, %v968
        %v970 = vpop.f32.mrb[0].mxu0
        %v971 = vpop.f32.mrb[0].mxu0
        %v972 = vadd.f32 %v800, %v971
        %v973 = vpop.f32.mrb[0].mxu0
        %974 = vdwg.mxu0
        %v975 = vmax.f32 %v913, 0.0
        %v976 = vmax.f32 %v916, 0.0
        %v977 = vmax.f32 %v921, 0.0
        %v978 = vmax.f32 %v924, 0.0
        %v979 = vmax.f32 %v929, 0.0
        %v980 = vmax.f32 %v932, 0.0
        %v981 = vmax.f32 %v937, 0.0
        %v982 = vmax.f32 %v940, 0.0
        %v983 = vmax.f32 %v945, 0.0
        %v984 = vmax.f32 %v948, 0.0
        %v985 = vmax.f32 %v953, 0.0
        %v986 = vmax.f32 %v956, 0.0
        %v987 = vmax.f32 %v961, 0.0
        %v988 = vmax.f32 %v964, 0.0
        %v989 = vmax.f32 %v969, 0.0
        %v990 = vmax.f32 %v972, 0.0
        %v991 = vpack.c.bf16 %v976, %v975
        %v992 = vpack.c.bf16 %v978, %v977
        %v993 = vpack.c.bf16 %v980, %v979
        %v994 = vpack.c.bf16 %v982, %v981
        %v995 = vpack.c.bf16 %v984, %v983
        %v996 = vpack.c.bf16 %v986, %v985
        %v997 = vpack.c.bf16 %v988, %v987
        %v998 = vpack.c.bf16 %v990, %v989
        %v1007 = vunpack.c.l.b16 %v991
        %v1008 = vunpack.c.h.b16 %v991
        %v1009 = vunpack.c.l.b16 %v992
        %v1010 = vunpack.c.h.b16 %v992
        %v1011 = vunpack.c.l.b16 %v993
        %v1012 = vunpack.c.h.b16 %v993
        %v1013 = vunpack.c.l.b16 %v994
        %v1014 = vunpack.c.h.b16 %v994
        %v1015 = vunpack.c.l.b16 %v995
        %v1016 = vunpack.c.h.b16 %v995
        %v1017 = vunpack.c.l.b16 %v996
        %v1018 = vunpack.c.h.b16 %v996
        %v1019 = vunpack.c.l.b16 %v997
        %v1020 = vunpack.c.h.b16 %v997
        %v1021 = vunpack.c.l.b16 %v998
        %v1022 = vunpack.c.h.b16 %v998
        %v1023 = vpack.c.b16 %v1007, %v1007
        %v1024 = vpack.c.b16 %v1008, %v1008
        %v1025 = vpack.c.b16 %v1009, %v1009
        %v1026 = vpack.c.b16 %v1010, %v1010
        %v1027 = vpack.c.b16 %v1011, %v1011
        %v1028 = vpack.c.b16 %v1012, %v1012
        %v1029 = vpack.c.b16 %v1013, %v1013
        %v1030 = vpack.c.b16 %v1014, %v1014
        %v1031 = vpack.c.b16 %v1015, %v1015
        %v1032 = vpack.c.b16 %v1016, %v1016
        %v1033 = vpack.c.b16 %v1017, %v1017
        %v1034 = vpack.c.b16 %v1018, %v1018
        %v1035 = vpack.c.b16 %v1019, %v1019
        %v1036 = vpack.c.b16 %v1020, %v1020
        %v1037 = vpack.c.b16 %v1021, %v1021
        %v1038 = vpack.c.b16 %v1022, %v1022
        %1055 = vst.msk [vmem:[#allocation2 + $0x40] sm:$0xf] %vm758, %v1023
        %1056 = vst.msk [vmem:[#allocation2 + $0x44] sm:$0xf] %vm758, %v1024
        %1057 = vst.msk [vmem:[#allocation2 + $0x48] sm:$0xf] %vm758, %v1025
        %1058 = vst.msk [vmem:[#allocation2 + $0x4c] sm:$0xf] %vm758, %v1026
        %1059 = vst.msk [vmem:[#allocation2 + $0x50] sm:$0xf] %vm758, %v1027
        %1060 = vst.msk [vmem:[#allocation2 + $0x54] sm:$0xf] %vm758, %v1028
        %1061 = vst.msk [vmem:[#allocation2 + $0x58] sm:$0xf] %vm758, %v1029
        %1062 = vst.msk [vmem:[#allocation2 + $0x5c] sm:$0xf] %vm758, %v1030
        %1063 = vst.msk [vmem:[#allocation2 + $0x60] sm:$0xf] %vm758, %v1031
        %1064 = vst.msk [vmem:[#allocation2 + $0x64] sm:$0xf] %vm758, %v1032
        %1065 = vst.msk [vmem:[#allocation2 + $0x68] sm:$0xf] %vm758, %v1033
        %1066 = vst.msk [vmem:[#allocation2 + $0x6c] sm:$0xf] %vm758, %v1034
        %1067 = vst.msk [vmem:[#allocation2 + $0x70] sm:$0xf] %vm758, %v1035
        %1068 = vst.msk [vmem:[#allocation2 + $0x74] sm:$0xf] %vm758, %v1036
        %1069 = vst.msk [vmem:[#allocation2 + $0x78] sm:$0xf] %vm758, %v1037
        %1070 = vst.msk [vmem:[#allocation2 + $0x7c] sm:$0xf] %vm758, %v1038
        %v1071 = vld [vmem:[%s471 + $0x80] sm:$0xf]
        %v1072 = vld [vmem:[%s471 + $0x84] sm:$0xf]
        %v1073 = vld [vmem:[%s471 + $0x88] sm:$0xf]
        %v1074 = vld [vmem:[%s471 + $0x8c] sm:$0xf]
        %v1075 = vld [vmem:[%s471 + $0x90] sm:$0xf]
        %v1076 = vld [vmem:[%s471 + $0x94] sm:$0xf]
        %v1077 = vld [vmem:[%s471 + $0x98] sm:$0xf]
        %v1078 = vld [vmem:[%s471 + $0x9c] sm:$0xf]
        %v1079 = vld [vmem:[%s471 + $0xa0] sm:$0x3]
        %v1080 = vld [vmem:[%s1] sm:$0xf]
        %v1081 = vld [vmem:[%s1 + $0x4] sm:$0xf]
        %v1082 = vld [vmem:[%s1 + $0x8] sm:$0xf]
        %v1083 = vld [vmem:[%s1 + $0xc] sm:$0xf]
        %v1084 = vld [vmem:[%s2] sm:$0x1]
        %v1086 = vlaneseq
        %v1087 = vshrl.u32 %v1086, 7
        %v1088 = vsub.s32 0, %v1087
        %v1089 = vrot.slane %v1084, %v1088
        %v1100 = vunpack.c.l.b16 %v1071
        %v1101 = vunpack.c.l.b16 %v1072
        %v1102 = vunpack.c.l.b16 %v1073
        %v1103 = vunpack.c.l.b16 %v1074
        %v1104 = vunpack.c.l.b16 %v1075
        %v1105 = vunpack.c.l.b16 %v1076
        %v1106 = vunpack.c.l.b16 %v1077
        %v1107 = vunpack.c.l.b16 %v1078
        %v1108 = vunpack.c.l.b16 %v1079
        %v1109 = vpack.c.b16 %v1101, %v1100
        %v1110 = vpack.c.b16 %v1103, %v1102
        %v1111 = vpack.c.b16 %v1105, %v1104
        %v1112 = vpack.c.b16 %v1107, %v1106
        %v1113 = vpack.c.b16 %v1108, %v1108
        %v1118 = vunpack.c.l.b16 %v1080
        %v1119 = vunpack.c.l.b16 %v1081
        %v1120 = vunpack.c.l.b16 %v1082
        %v1121 = vunpack.c.l.b16 %v1083
        %v1122 = vpack.c.b16 %v1119, %v1118
        %v1123 = vpack.c.b16 %v1121, %v1120
        %v1127 = vsel %vm556, %v1109, 0
        %v1130 = vsel %vm556, %v1110, 0
        %v1133 = vsel %vm556, %v1111, 0
        %v1136 = vsel %vm556, %v1112, 0
        %v1139 = vsel %vm556, %v1113, 0
        %1141 = vmatprep.subr.bf16.mxu0 0
        %1142 = vmatpush1.bf16.msra.mxu0 %v1122
        %1143 = vmatprep.subr.bf16.mxu0 0
        %1144 = vmatpush1.bf16.msra.mxu0 %v1123
        %1145 = vmatprep.subr.bf16.mxu0 0
        %1146 = vmatpush1.bf16.msra.mxu0 0
        %1147 = vmatprep.subr.bf16.mxu0 0
        %1148 = vmatpush1.bf16.msra.mxu0 0
        %1149 = vmatprep.subr.bf16.mxu0 0
        %1150 = vmatpush1.bf16.msra.mxu0 0
        %1151 = vmatprep.subr.bf16.mxu0 0
        %1152 = vmatpush1.bf16.msra.mxu0 0
        %1153 = vmatprep.subr.bf16.mxu0 0
        %1154 = vmatpush1.bf16.msra.mxu0 0
        %1155 = vmatprep.subr.bf16.mxu0 0
        %1156 = vmatpush1.bf16.msra.mxu0 0
        %1157 = vmatprep.subr.bf16.mxu0 0
        %1158 = vmatpush1.bf16.msra.mxu0 0
        %1159 = vmatprep.subr.bf16.mxu0 0
        %1160 = vmatpush1.bf16.msra.mxu0 0
        %1161 = vmatprep.subr.bf16.mxu0 0
        %1162 = vmatpush1.bf16.msra.mxu0 0
        %1163 = vmatprep.subr.bf16.mxu0 0
        %1164 = vmatpush1.bf16.msra.mxu0 0
        %1165 = vmatprep.subr.bf16.mxu0 0
        %1166 = vmatpush1.bf16.msra.mxu0 0
        %1167 = vmatprep.subr.bf16.mxu0 0
        %1168 = vmatpush1.bf16.msra.mxu0 0
        %1169 = vmatprep.subr.bf16.mxu0 0
        %1170 = vmatpush1.bf16.msra.mxu0 0
        %1171 = vmatprep.subr.bf16.mxu0 0
        %1172 = vmatpush1.bf16.msra.mxu0 0
        %1173 = vmatprep.mubr.bf16.mxu0 0
        %1174 = vmatmul.mubr.bf16.gmra.mrb[0].mxu0 %v1127
        %v1175 = vpop.f32.mrb[0].mxu0
        %v1176 = vadd.f32 %v1089, %v1175
        %v1177 = vpop.f32.mrb[0].mxu0
        %v1178 = vpop.f32.mrb[0].mxu0
        %v1179 = vadd.f32 %v1089, %v1178
        %v1180 = vpop.f32.mrb[0].mxu0
        %1181 = vmatprep.mubr.bf16.mxu0 0
        %1182 = vmatmul.mubr.bf16.gmra.mrb[0].mxu0 %v1130
        %v1183 = vpop.f32.mrb[0].mxu0
        %v1184 = vadd.f32 %v1089, %v1183
        %v1185 = vpop.f32.mrb[0].mxu0
        %v1186 = vpop.f32.mrb[0].mxu0
        %v1187 = vadd.f32 %v1089, %v1186
        %v1188 = vpop.f32.mrb[0].mxu0
        %1189 = vmatprep.mubr.bf16.mxu0 0
        %1190 = vmatmul.mubr.bf16.gmra.mrb[0].mxu0 %v1133
        %v1191 = vpop.f32.mrb[0].mxu0
        %v1192 = vadd.f32 %v1089, %v1191
        %v1193 = vpop.f32.mrb[0].mxu0
        %v1194 = vpop.f32.mrb[0].mxu0
        %v1195 = vadd.f32 %v1089, %v1194
        %v1196 = vpop.f32.mrb[0].mxu0
        %1197 = vmatprep.mubr.bf16.mxu0 0
        %1198 = vmatmul.mubr.bf16.gmra.mrb[0].mxu0 %v1136
        %v1199 = vpop.f32.mrb[0].mxu0
        %v1200 = vadd.f32 %v1089, %v1199
        %v1201 = vpop.f32.mrb[0].mxu0
        %v1202 = vpop.f32.mrb[0].mxu0
        %v1203 = vadd.f32 %v1089, %v1202
        %v1204 = vpop.f32.mrb[0].mxu0
        %1205 = vmatprep.mubr.bf16.mxu0 0
        %1206 = vmatmul.mubr.bf16.gmra.mrb[0].mxu0 %v1139
        %v1207 = vpop.f32.mrb[0].mxu0
        %v1208 = vadd.f32 %v1089, %v1207
        %v1209 = vpop.f32.mrb[0].mxu0
        %v1210 = vpop.f32.mrb[0].mxu0
        %v1211 = vpop.f32.mrb[0].mxu0
        %1212 = vdwg.mxu0
        %v1213 = vmax.f32 %v1176, 0.0
        %v1214 = vmax.f32 %v1179, 0.0
        %v1215 = vmax.f32 %v1184, 0.0
        %v1216 = vmax.f32 %v1187, 0.0
        %v1217 = vmax.f32 %v1192, 0.0
        %v1218 = vmax.f32 %v1195, 0.0
        %v1219 = vmax.f32 %v1200, 0.0
        %v1220 = vmax.f32 %v1203, 0.0
        %v1221 = vmax.f32 %v1208, 0.0
        %v1222 = vpack.c.bf16 %v1214, %v1213
        %v1223 = vpack.c.bf16 %v1216, %v1215
        %v1224 = vpack.c.bf16 %v1218, %v1217
        %v1225 = vpack.c.bf16 %v1220, %v1219
        %v1226 = vpack.c.bf16 %v1221, %v1221
        %v1232 = vunpack.c.l.b16 %v1222
        %v1233 = vunpack.c.h.b16 %v1222
        %v1234 = vunpack.c.l.b16 %v1223
        %v1235 = vunpack.c.h.b16 %v1223
        %v1236 = vunpack.c.l.b16 %v1224
        %v1237 = vunpack.c.h.b16 %v1224
        %v1238 = vunpack.c.l.b16 %v1225
        %v1239 = vunpack.c.h.b16 %v1225
        %v1240 = vunpack.c.l.b16 %v1226
        %v1241 = vpack.c.b16 %v1232, %v1232
        %v1242 = vpack.c.b16 %v1233, %v1233
        %v1243 = vpack.c.b16 %v1234, %v1234
        %v1244 = vpack.c.b16 %v1235, %v1235
        %v1245 = vpack.c.b16 %v1236, %v1236
        %v1246 = vpack.c.b16 %v1237, %v1237
        %v1247 = vpack.c.b16 %v1238, %v1238
        %v1248 = vpack.c.b16 %v1239, %v1239
        %v1249 = vpack.c.b16 %v1240, %v1240
        %1259 = vst.msk [vmem:[#allocation2 + $0x80] sm:$0xf] %vm758, %v1241
        %1260 = vst.msk [vmem:[#allocation2 + $0x84] sm:$0xf] %vm758, %v1242
        %1261 = vst.msk [vmem:[#allocation2 + $0x88] sm:$0xf] %vm758, %v1243
        %1262 = vst.msk [vmem:[#allocation2 + $0x8c] sm:$0xf] %vm758, %v1244
        %1263 = vst.msk [vmem:[#allocation2 + $0x90] sm:$0xf] %vm758, %v1245
        %1264 = vst.msk [vmem:[#allocation2 + $0x94] sm:$0xf] %vm758, %v1246
        %1265 = vst.msk [vmem:[#allocation2 + $0x98] sm:$0xf] %vm758, %v1247
        %1266 = vst.msk [vmem:[#allocation2 + $0x9c] sm:$0xf] %vm758, %v1248
        %vm1267 = vcmask 254976
        %1268 = vst.msk [vmem:[#allocation2 + $0xa0] sm:$0x3] %vm1267, %v1249
        %v1269 = vld [vmem:[#allocation2] sm:$0xf]
        %v1270 = vld [vmem:[#allocation2 + $0x4] sm:$0xf]
        %v1271 = vld [vmem:[#allocation2 + $0x8] sm:$0xf]
        %v1272 = vld [vmem:[#allocation2 + $0xc] sm:$0xf]
        %v1273 = vld [vmem:[#allocation2 + $0x10] sm:$0xf]
        %v1274 = vld [vmem:[#allocation2 + $0x14] sm:$0xf]
        %v1275 = vld [vmem:[#allocation2 + $0x18] sm:$0xf]
        %v1276 = vld [vmem:[#allocation2 + $0x1c] sm:$0xf]
        %v1277 = vld [vmem:[#allocation2 + $0x20] sm:$0xf]
        %v1278 = vld [vmem:[#allocation2 + $0x24] sm:$0xf]
        %v1279 = vld [vmem:[#allocation2 + $0x28] sm:$0xf]
        %v1280 = vld [vmem:[#allocation2 + $0x2c] sm:$0xf]
        %v1281 = vld [vmem:[#allocation2 + $0x30] sm:$0xf]
        %v1282 = vld [vmem:[#allocation2 + $0x34] sm:$0xf]
        %v1283 = vld [vmem:[#allocation2 + $0x38] sm:$0xf]
        %v1284 = vld [vmem:[#allocation2 + $0x3c] sm:$0xf]
        %v1285 = vld [vmem:[%s3] sm:$0xf]
        %v1286 = vld [vmem:[%s3 + $0x4] sm:$0xf]
        %v1287 = vld [vmem:[%s3 + $0x8] sm:$0xf]
        %v1288 = vld [vmem:[%s3 + $0xc] sm:$0xf]
        %v1289 = vld [vmem:[#allocation2 + $0x40] sm:$0x1]
        %s1290 = scalar_lea.vmem %s3, 16
        %v1291 = vld [vmem:[%s1290] sm:$0xf]
        %v1292 = vld [vmem:[%s1290 + $0x4] sm:$0xf]
        %v1293 = vld [vmem:[%s1290 + $0x8] sm:$0xf]
        %v1294 = vld [vmem:[%s1290 + $0xc] sm:$0xf]
        %v1312 = vunpack.c.l.b16 %v1269
        %v1313 = vunpack.c.l.b16 %v1270
        %v1314 = vunpack.c.l.b16 %v1271
        %v1315 = vunpack.c.l.b16 %v1272
        %v1316 = vunpack.c.l.b16 %v1273
        %v1317 = vunpack.c.l.b16 %v1274
        %v1318 = vunpack.c.l.b16 %v1275
        %v1319 = vunpack.c.l.b16 %v1276
        %v1320 = vunpack.c.l.b16 %v1277
        %v1321 = vunpack.c.l.b16 %v1278
        %v1322 = vunpack.c.l.b16 %v1279
        %v1323 = vunpack.c.l.b16 %v1280
        %v1324 = vunpack.c.l.b16 %v1281
        %v1325 = vunpack.c.l.b16 %v1282
        %v1326 = vunpack.c.l.b16 %v1283
        %v1327 = vunpack.c.l.b16 %v1284
        %v1328 = vunpack.c.l.b16 %v1289
        %v1329 = vpack.c.b16 %v1313, %v1312
        %v1330 = vpack.c.b16 %v1315, %v1314
        %v1331 = vpack.c.b16 %v1317, %v1316
        %v1332 = vpack.c.b16 %v1319, %v1318
        %v1333 = vpack.c.b16 %v1321, %v1320
        %v1334 = vpack.c.b16 %v1323, %v1322
        %v1335 = vpack.c.b16 %v1325, %v1324
        %v1336 = vpack.c.b16 %v1327, %v1326
        %v1337 = vpack.c.b16 %v1328, %v1328
        %vm1338 = vsmask.f32 7424
        %v1340 = vshrl.u32 %v1329, 16
        %v1342 = vshll.u32 %v1329, 16
        %v1344 = vrot.slane %v1342, 1
        %v1345 = vor.u32 %v1340, %v1344
        %v1347 = vshll.u32 %v1330, 16
        %v1349 = vrot.slane %v1347, 1
        %v1350 = vsel %vm1338, %v1345, %v1349
        %v1351 = vshrl.u32 %v1330, 16
        %v1353 = vor.u32 %v1351, %v1349
        %v1355 = vshll.u32 %v1331, 16
        %v1357 = vrot.slane %v1355, 1
        %v1358 = vsel %vm1338, %v1353, %v1357
        %v1359 = vshrl.u32 %v1331, 16
        %v1361 = vor.u32 %v1359, %v1357
        %v1363 = vshll.u32 %v1332, 16
        %v1365 = vrot.slane %v1363, 1
        %v1366 = vsel %vm1338, %v1361, %v1365
        %v1367 = vshrl.u32 %v1332, 16
        %v1369 = vor.u32 %v1367, %v1365
        %v1371 = vshll.u32 %v1333, 16
        %v1373 = vrot.slane %v1371, 1
        %v1374 = vsel %vm1338, %v1369, %v1373
        %v1375 = vshrl.u32 %v1333, 16
        %v1377 = vor.u32 %v1375, %v1373
        %v1379 = vshll.u32 %v1334, 16
        %v1381 = vrot.slane %v1379, 1
        %v1382 = vsel %vm1338, %v1377, %v1381
        %v1383 = vshrl.u32 %v1334, 16
        %v1385 = vor.u32 %v1383, %v1381
        %v1387 = vshll.u32 %v1335, 16
        %v1389 = vrot.slane %v1387, 1
        %v1390 = vsel %vm1338, %v1385, %v1389
        %v1391 = vshrl.u32 %v1335, 16
        %v1393 = vor.u32 %v1391, %v1389
        %v1395 = vshll.u32 %v1336, 16
        %v1397 = vrot.slane %v1395, 1
        %v1398 = vsel %vm1338, %v1393, %v1397
        %v1399 = vshrl.u32 %v1336, 16
        %v1401 = vor.u32 %v1399, %v1397
        %v1403 = vshll.u32 %v1337, 16
        %v1405 = vrot.slane %v1403, 1
        %v1406 = vsel %vm1338, %v1401, %v1405
        %v1411 = vunpack.c.l.b16 %v1291
        %v1412 = vunpack.c.l.b16 %v1292
        %v1413 = vunpack.c.l.b16 %v1293
        %v1414 = vunpack.c.l.b16 %v1294
        %v1415 = vpack.c.b16 %v1412, %v1411
        %v1416 = vpack.c.b16 %v1414, %v1413
        %v1420 = vsel %vm556, %v1350, 0
        %v1423 = vsel %vm556, %v1358, 0
        %v1426 = vsel %vm556, %v1366, 0
        %v1429 = vsel %vm556, %v1374, 0
        %v1432 = vsel %vm556, %v1382, 0
        %v1435 = vsel %vm556, %v1390, 0
        %v1438 = vsel %vm556, %v1398, 0
        %v1441 = vsel %vm556, %v1406, 0
        %1443 = vmatprep.subr.bf16.mxu0 0
        %1444 = vmatpush1.bf16.msra.mxu0 %v1415
        %1445 = vmatprep.subr.bf16.mxu0 0
        %1446 = vmatpush1.bf16.msra.mxu0 %v1416
        %1447 = vmatprep.subr.bf16.mxu0 0
        %1448 = vmatpush1.bf16.msra.mxu0 0
        %1449 = vmatprep.subr.bf16.mxu0 0
        %1450 = vmatpush1.bf16.msra.mxu0 0
        %1451 = vmatprep.subr.bf16.mxu0 0
        %1452 = vmatpush1.bf16.msra.mxu0 0
        %1453 = vmatprep.subr.bf16.mxu0 0
        %1454 = vmatpush1.bf16.msra.mxu0 0
        %1455 = vmatprep.subr.bf16.mxu0 0
        %1456 = vmatpush1.bf16.msra.mxu0 0
        %1457 = vmatprep.subr.bf16.mxu0 0
        %1458 = vmatpush1.bf16.msra.mxu0 0
        %1459 = vmatprep.subr.bf16.mxu0 0
        %1460 = vmatpush1.bf16.msra.mxu0 0
        %1461 = vmatprep.subr.bf16.mxu0 0
        %1462 = vmatpush1.bf16.msra.mxu0 0
        %1463 = vmatprep.subr.bf16.mxu0 0
        %1464 = vmatpush1.bf16.msra.mxu0 0
        %1465 = vmatprep.subr.bf16.mxu0 0
        %1466 = vmatpush1.bf16.msra.mxu0 0
        %1467 = vmatprep.subr.bf16.mxu0 0
        %1468 = vmatpush1.bf16.msra.mxu0 0
        %1469 = vmatprep.subr.bf16.mxu0 0
        %1470 = vmatpush1.bf16.msra.mxu0 0
        %1471 = vmatprep.subr.bf16.mxu0 0
        %1472 = vmatpush1.bf16.msra.mxu0 0
        %1473 = vmatprep.subr.bf16.mxu0 0
        %1474 = vmatpush1.bf16.msra.mxu0 0
        %1475 = vmatprep.mubr.bf16.mxu0 0
        %1476 = vmatmul.mubr.bf16.gmra.mrb[0].mxu0 %v1420
        %v1477 = vpop.f32.mrb[0].mxu0
        %v1478 = vadd.f32 0.0, %v1477
        %v1479 = vpop.f32.mrb[0].mxu0
        %v1480 = vpop.f32.mrb[0].mxu0
        %v1481 = vadd.f32 0.0, %v1480
        %v1482 = vpop.f32.mrb[0].mxu0
        %1483 = vmatprep.mubr.bf16.mxu0 0
        %1484 = vmatmul.mubr.bf16.gmra.mrb[0].mxu0 %v1423
        %v1485 = vpop.f32.mrb[0].mxu0
        %v1486 = vadd.f32 0.0, %v1485
        %v1487 = vpop.f32.mrb[0].mxu0
        %v1488 = vpop.f32.mrb[0].mxu0
        %v1489 = vadd.f32 0.0, %v1488
        %v1490 = vpop.f32.mrb[0].mxu0
        %1491 = vmatprep.mubr.bf16.mxu0 0
        %1492 = vmatmul.mubr.bf16.gmra.mrb[0].mxu0 %v1426
        %v1493 = vpop.f32.mrb[0].mxu0
        %v1494 = vadd.f32 0.0, %v1493
        %v1495 = vpop.f32.mrb[0].mxu0
        %v1496 = vpop.f32.mrb[0].mxu0
        %v1497 = vadd.f32 0.0, %v1496
        %v1498 = vpop.f32.mrb[0].mxu0
        %1499 = vmatprep.mubr.bf16.mxu0 0
        %1500 = vmatmul.mubr.bf16.gmra.mrb[0].mxu0 %v1429
        %v1501 = vpop.f32.mrb[0].mxu0
        %v1502 = vadd.f32 0.0, %v1501
        %v1503 = vpop.f32.mrb[0].mxu0
        %v1504 = vpop.f32.mrb[0].mxu0
        %v1505 = vadd.f32 0.0, %v1504
        %v1506 = vpop.f32.mrb[0].mxu0
        %1507 = vmatprep.mubr.bf16.mxu0 0
        %1508 = vmatmul.mubr.bf16.gmra.mrb[0].mxu0 %v1432
        %v1509 = vpop.f32.mrb[0].mxu0
        %v1510 = vadd.f32 0.0, %v1509
        %v1511 = vpop.f32.mrb[0].mxu0
        %v1512 = vpop.f32.mrb[0].mxu0
        %v1513 = vadd.f32 0.0, %v1512
        %v1514 = vpop.f32.mrb[0].mxu0
        %1515 = vmatprep.mubr.bf16.mxu0 0
        %1516 = vmatmul.mubr.bf16.gmra.mrb[0].mxu0 %v1435
        %v1517 = vpop.f32.mrb[0].mxu0
        %v1518 = vadd.f32 0.0, %v1517
        %v1519 = vpop.f32.mrb[0].mxu0
        %v1520 = vpop.f32.mrb[0].mxu0
        %v1521 = vadd.f32 0.0, %v1520
        %v1522 = vpop.f32.mrb[0].mxu0
        %1523 = vmatprep.mubr.bf16.mxu0 0
        %1524 = vmatmul.mubr.bf16.gmra.mrb[0].mxu0 %v1438
        %v1525 = vpop.f32.mrb[0].mxu0
        %v1526 = vadd.f32 0.0, %v1525
        %v1527 = vpop.f32.mrb[0].mxu0
        %v1528 = vpop.f32.mrb[0].mxu0
        %v1529 = vadd.f32 0.0, %v1528
        %v1530 = vpop.f32.mrb[0].mxu0
        %1531 = vmatprep.mubr.bf16.mxu0 0
        %1532 = vmatmul.mubr.bf16.gmra.mrb[0].mxu0 %v1441
        %v1533 = vpop.f32.mrb[0].mxu0
        %v1534 = vadd.f32 0.0, %v1533
        %v1535 = vpop.f32.mrb[0].mxu0
        %v1536 = vpop.f32.mrb[0].mxu0
        %v1537 = vadd.f32 0.0, %v1536
        %v1538 = vpop.f32.mrb[0].mxu0
        %1539 = vdwg.mxu0
        %v1544 = vunpack.c.l.b16 %v1285
        %v1545 = vunpack.c.l.b16 %v1286
        %v1546 = vunpack.c.l.b16 %v1287
        %v1547 = vunpack.c.l.b16 %v1288
        %v1548 = vpack.c.b16 %v1545, %v1544
        %v1549 = vpack.c.b16 %v1547, %v1546
        %v1552 = vsel %vm556, %v1329, 0
        %v1554 = vsel %vm556, %v1330, 0
        %v1556 = vsel %vm556, %v1331, 0
        %v1558 = vsel %vm556, %v1332, 0
        %v1560 = vsel %vm556, %v1333, 0
        %v1562 = vsel %vm556, %v1334, 0
        %v1564 = vsel %vm556, %v1335, 0
        %v1566 = vsel %vm556, %v1336, 0
        %1568 = vmatprep.subr.bf16.mxu0 0
        %1569 = vmatpush1.bf16.msra.mxu0 %v1548
        %1570 = vmatprep.subr.bf16.mxu0 0
        %1571 = vmatpush1.bf16.msra.mxu0 %v1549
        %1572 = vmatprep.subr.bf16.mxu0 0
        %1573 = vmatpush1.bf16.msra.mxu0 0
        %1574 = vmatprep.subr.bf16.mxu0 0
        %1575 = vmatpush1.bf16.msra.mxu0 0
        %1576 = vmatprep.subr.bf16.mxu0 0
        %1577 = vmatpush1.bf16.msra.mxu0 0
        %1578 = vmatprep.subr.bf16.mxu0 0
        %1579 = vmatpush1.bf16.msra.mxu0 0
        %1580 = vmatprep.subr.bf16.mxu0 0
        %1581 = vmatpush1.bf16.msra.mxu0 0
        %1582 = vmatprep.subr.bf16.mxu0 0
        %1583 = vmatpush1.bf16.msra.mxu0 0
        %1584 = vmatprep.subr.bf16.mxu0 0
        %1585 = vmatpush1.bf16.msra.mxu0 0
        %1586 = vmatprep.subr.bf16.mxu0 0
        %1587 = vmatpush1.bf16.msra.mxu0 0
        %1588 = vmatprep.subr.bf16.mxu0 0
        %1589 = vmatpush1.bf16.msra.mxu0 0
        %1590 = vmatprep.subr.bf16.mxu0 0
        %1591 = vmatpush1.bf16.msra.mxu0 0
        %1592 = vmatprep.subr.bf16.mxu0 0
        %1593 = vmatpush1.bf16.msra.mxu0 0
        %1594 = vmatprep.subr.bf16.mxu0 0
        %1595 = vmatpush1.bf16.msra.mxu0 0
        %1596 = vmatprep.subr.bf16.mxu0 0
        %1597 = vmatpush1.bf16.msra.mxu0 0
        %1598 = vmatprep.subr.bf16.mxu0 0
        %1599 = vmatpush1.bf16.msra.mxu0 0
        %1600 = vmatprep.mubr.bf16.mxu0 0
        %1601 = vmatmul.mubr.bf16.gmra.mrb[0].mxu0 %v1552
        %v1602 = vpop.f32.mrb[0].mxu0
        %v1603 = vadd.f32 %v1478, %v1602
        %v1604 = vpop.f32.mrb[0].mxu0
        %v1605 = vpop.f32.mrb[0].mxu0
        %v1606 = vadd.f32 %v1481, %v1605
        %v1607 = vpop.f32.mrb[0].mxu0
        %1608 = vmatprep.mubr.bf16.mxu0 0
        %1609 = vmatmul.mubr.bf16.gmra.mrb[0].mxu0 %v1554
        %v1610 = vpop.f32.mrb[0].mxu0
        %v1611 = vadd.f32 %v1486, %v1610
        %v1612 = vpop.f32.mrb[0].mxu0
        %v1613 = vpop.f32.mrb[0].mxu0
        %v1614 = vadd.f32 %v1489, %v1613
        %v1615 = vpop.f32.mrb[0].mxu0
        %1616 = vmatprep.mubr.bf16.mxu0 0
        %1617 = vmatmul.mubr.bf16.gmra.mrb[0].mxu0 %v1556
        %v1618 = vpop.f32.mrb[0].mxu0
        %v1619 = vadd.f32 %v1494, %v1618
        %v1620 = vpop.f32.mrb[0].mxu0
        %v1621 = vpop.f32.mrb[0].mxu0
        %v1622 = vadd.f32 %v1497, %v1621
        %v1623 = vpop.f32.mrb[0].mxu0
        %1624 = vmatprep.mubr.bf16.mxu0 0
        %1625 = vmatmul.mubr.bf16.gmra.mrb[0].mxu0 %v1558
        %v1626 = vpop.f32.mrb[0].mxu0
        %v1627 = vadd.f32 %v1502, %v1626
        %v1628 = vpop.f32.mrb[0].mxu0
        %v1629 = vpop.f32.mrb[0].mxu0
        %v1630 = vadd.f32 %v1505, %v1629
        %v1631 = vpop.f32.mrb[0].mxu0
        %1632 = vmatprep.mubr.bf16.mxu0 0
        %1633 = vmatmul.mubr.bf16.gmra.mrb[0].mxu0 %v1560
        %v1634 = vpop.f32.mrb[0].mxu0
        %v1635 = vadd.f32 %v1510, %v1634
        %v1636 = vpop.f32.mrb[0].mxu0
        %v1637 = vpop.f32.mrb[0].mxu0
        %v1638 = vadd.f32 %v1513, %v1637
        %v1639 = vpop.f32.mrb[0].mxu0
        %1640 = vmatprep.mubr.bf16.mxu0 0
        %1641 = vmatmul.mubr.bf16.gmra.mrb[0].mxu0 %v1562
        %v1642 = vpop.f32.mrb[0].mxu0
        %v1643 = vadd.f32 %v1518, %v1642
        %v1644 = vpop.f32.mrb[0].mxu0
        %v1645 = vpop.f32.mrb[0].mxu0
        %v1646 = vadd.f32 %v1521, %v1645
        %v1647 = vpop.f32.mrb[0].mxu0
        %1648 = vmatprep.mubr.bf16.mxu0 0
        %1649 = vmatmul.mubr.bf16.gmra.mrb[0].mxu0 %v1564
        %v1650 = vpop.f32.mrb[0].mxu0
        %v1651 = vadd.f32 %v1526, %v1650
        %v1652 = vpop.f32.mrb[0].mxu0
        %v1653 = vpop.f32.mrb[0].mxu0
        %v1654 = vadd.f32 %v1529, %v1653
        %v1655 = vpop.f32.mrb[0].mxu0
        %1656 = vmatprep.mubr.bf16.mxu0 0
        %1657 = vmatmul.mubr.bf16.gmra.mrb[0].mxu0 %v1566
        %v1658 = vpop.f32.mrb[0].mxu0
        %v1659 = vadd.f32 %v1534, %v1658
        %v1660 = vpop.f32.mrb[0].mxu0
        %v1661 = vpop.f32.mrb[0].mxu0
        %v1662 = vadd.f32 %v1537, %v1661
        %v1663 = vpop.f32.mrb[0].mxu0
        %1664 = vdwg.mxu0
        %v1665 = vld [vmem:[#allocation2] sm:$0xe]
        %s1666 = scalar_lea.vmem %s3, 32
        %v1667 = vld [vmem:[%s1666] sm:$0xf]
        %v1668 = vld [vmem:[%s1666 + $0x4] sm:$0xf]
        %v1669 = vld [vmem:[%s1666 + $0x8] sm:$0xf]
        %v1670 = vld [vmem:[%s1666 + $0xc] sm:$0xf]
        %v1672 = vunpack.c.l.b16 %v1665
        %v1673 = vpack.c.b16 %v1313, %v1672
        %vm1674 = vcmask 1046528
        %v1675 = vrot.slane %v1673, 1
        %v1676 = vrot.slane %v1330, 1
        %v1677 = vsel %vm1674, %v1675, %v1676
        %v1678 = vrot.slane %v1331, 1
        %v1679 = vsel %vm1674, %v1676, %v1678
        %v1680 = vrot.slane %v1332, 1
        %v1681 = vsel %vm1674, %v1678, %v1680
        %v1682 = vrot.slane %v1333, 1
        %v1683 = vsel %vm1674, %v1680, %v1682
        %v1684 = vrot.slane %v1334, 1
        %v1685 = vsel %vm1674, %v1682, %v1684
        %v1686 = vrot.slane %v1335, 1
        %v1687 = vsel %vm1674, %v1684, %v1686
        %v1688 = vrot.slane %v1336, 1
        %v1689 = vsel %vm1674, %v1686, %v1688
        %v1690 = vrot.slane %v1337, 1
        %v1691 = vsel %vm1674, %v1688, %v1690
        %v1696 = vunpack.c.l.b16 %v1667
        %v1697 = vunpack.c.l.b16 %v1668
        %v1698 = vunpack.c.l.b16 %v1669
        %v1699 = vunpack.c.l.b16 %v1670
        %v1700 = vpack.c.b16 %v1697, %v1696
        %v1701 = vpack.c.b16 %v1699, %v1698
        %v1705 = vsel %vm556, %v1677, 0
        %v1708 = vsel %vm556, %v1679, 0
        %v1711 = vsel %vm556, %v1681, 0
        %v1714 = vsel %vm556, %v1683, 0
        %v1717 = vsel %vm556, %v1685, 0
        %v1720 = vsel %vm556, %v1687, 0
        %v1723 = vsel %vm556, %v1689, 0
        %v1726 = vsel %vm556, %v1691, 0
        %1728 = vmatprep.subr.bf16.mxu0 0
        %1729 = vmatpush1.bf16.msra.mxu0 %v1700
        %1730 = vmatprep.subr.bf16.mxu0 0
        %1731 = vmatpush1.bf16.msra.mxu0 %v1701
        %1732 = vmatprep.subr.bf16.mxu0 0
        %1733 = vmatpush1.bf16.msra.mxu0 0
        %1734 = vmatprep.subr.bf16.mxu0 0
        %1735 = vmatpush1.bf16.msra.mxu0 0
        %1736 = vmatprep.subr.bf16.mxu0 0
        %1737 = vmatpush1.bf16.msra.mxu0 0
        %1738 = vmatprep.subr.bf16.mxu0 0
        %1739 = vmatpush1.bf16.msra.mxu0 0
        %1740 = vmatprep.subr.bf16.mxu0 0
        %1741 = vmatpush1.bf16.msra.mxu0 0
        %1742 = vmatprep.subr.bf16.mxu0 0
        %1743 = vmatpush1.bf16.msra.mxu0 0
        %1744 = vmatprep.subr.bf16.mxu0 0
        %1745 = vmatpush1.bf16.msra.mxu0 0
        %1746 = vmatprep.subr.bf16.mxu0 0
        %1747 = vmatpush1.bf16.msra.mxu0 0
        %1748 = vmatprep.subr.bf16.mxu0 0
        %1749 = vmatpush1.bf16.msra.mxu0 0
        %1750 = vmatprep.subr.bf16.mxu0 0
        %1751 = vmatpush1.bf16.msra.mxu0 0
        %1752 = vmatprep.subr.bf16.mxu0 0
        %1753 = vmatpush1.bf16.msra.mxu0 0
        %1754 = vmatprep.subr.bf16.mxu0 0
        %1755 = vmatpush1.bf16.msra.mxu0 0
        %1756 = vmatprep.subr.bf16.mxu0 0
        %1757 = vmatpush1.bf16.msra.mxu0 0
        %1758 = vmatprep.subr.bf16.mxu0 0
        %1759 = vmatpush1.bf16.msra.mxu0 0
        %1760 = vmatprep.mubr.bf16.mxu0 0
        %1761 = vmatmul.mubr.bf16.gmra.mrb[0].mxu0 %v1705
        %v1762 = vpop.f32.mrb[0].mxu0
        %v1763 = vadd.f32 0.0, %v1762
        %v1764 = vpop.f32.mrb[0].mxu0
        %v1765 = vpop.f32.mrb[0].mxu0
        %v1766 = vadd.f32 0.0, %v1765
        %v1767 = vpop.f32.mrb[0].mxu0
        %1768 = vmatprep.mubr.bf16.mxu0 0
        %1769 = vmatmul.mubr.bf16.gmra.mrb[0].mxu0 %v1708
        %v1770 = vpop.f32.mrb[0].mxu0
        %v1771 = vadd.f32 0.0, %v1770
        %v1772 = vpop.f32.mrb[0].mxu0
        %v1773 = vpop.f32.mrb[0].mxu0
        %v1774 = vadd.f32 0.0, %v1773
        %v1775 = vpop.f32.mrb[0].mxu0
        %1776 = vmatprep.mubr.bf16.mxu0 0
        %1777 = vmatmul.mubr.bf16.gmra.mrb[0].mxu0 %v1711
        %v1778 = vpop.f32.mrb[0].mxu0
        %v1779 = vadd.f32 0.0, %v1778
        %v1780 = vpop.f32.mrb[0].mxu0
        %v1781 = vpop.f32.mrb[0].mxu0
        %v1782 = vadd.f32 0.0, %v1781
        %v1783 = vpop.f32.mrb[0].mxu0
        %1784 = vmatprep.mubr.bf16.mxu0 0
        %1785 = vmatmul.mubr.bf16.gmra.mrb[0].mxu0 %v1714
        %v1786 = vpop.f32.mrb[0].mxu0
        %v1787 = vadd.f32 0.0, %v1786
        %v1788 = vpop.f32.mrb[0].mxu0
        %v1789 = vpop.f32.mrb[0].mxu0
        %v1790 = vadd.f32 0.0, %v1789
        %v1791 = vpop.f32.mrb[0].mxu0
        %1792 = vmatprep.mubr.bf16.mxu0 0
        %1793 = vmatmul.mubr.bf16.gmra.mrb[0].mxu0 %v1717
        %v1794 = vpop.f32.mrb[0].mxu0
        %v1795 = vadd.f32 0.0, %v1794
        %v1796 = vpop.f32.mrb[0].mxu0
        %v1797 = vpop.f32.mrb[0].mxu0
        %v1798 = vadd.f32 0.0, %v1797
        %v1799 = vpop.f32.mrb[0].mxu0
        %1800 = vmatprep.mubr.bf16.mxu0 0
        %1801 = vmatmul.mubr.bf16.gmra.mrb[0].mxu0 %v1720
        %v1802 = vpop.f32.mrb[0].mxu0
        %v1803 = vadd.f32 0.0, %v1802
        %v1804 = vpop.f32.mrb[0].mxu0
        %v1805 = vpop.f32.mrb[0].mxu0
        %v1806 = vadd.f32 0.0, %v1805
        %v1807 = vpop.f32.mrb[0].mxu0
        %1808 = vmatprep.mubr.bf16.mxu0 0
        %1809 = vmatmul.mubr.bf16.gmra.mrb[0].mxu0 %v1723
        %v1810 = vpop.f32.mrb[0].mxu0
        %v1811 = vadd.f32 0.0, %v1810
        %v1812 = vpop.f32.mrb[0].mxu0
        %v1813 = vpop.f32.mrb[0].mxu0
        %v1814 = vadd.f32 0.0, %v1813
        %v1815 = vpop.f32.mrb[0].mxu0
        %1816 = vmatprep.mubr.bf16.mxu0 0
        %1817 = vmatmul.mubr.bf16.gmra.mrb[0].mxu0 %v1726
        %v1818 = vpop.f32.mrb[0].mxu0
        %v1819 = vadd.f32 0.0, %v1818
        %v1820 = vpop.f32.mrb[0].mxu0
        %v1821 = vpop.f32.mrb[0].mxu0
        %v1822 = vadd.f32 0.0, %v1821
        %v1823 = vpop.f32.mrb[0].mxu0
        %1824 = vdwg.mxu0
        %v1825 = vadd.f32 %v1603, %v1763
        %v1826 = vadd.f32 %v1606, %v1766
        %v1827 = vadd.f32 %v1611, %v1771
        %v1828 = vadd.f32 %v1614, %v1774
        %v1829 = vadd.f32 %v1619, %v1779
        %v1830 = vadd.f32 %v1622, %v1782
        %v1831 = vadd.f32 %v1627, %v1787
        %v1832 = vadd.f32 %v1630, %v1790
        %v1833 = vadd.f32 %v1635, %v1795
        %v1834 = vadd.f32 %v1638, %v1798
        %v1835 = vadd.f32 %v1643, %v1803
        %v1836 = vadd.f32 %v1646, %v1806
        %v1837 = vadd.f32 %v1651, %v1811
        %v1838 = vadd.f32 %v1654, %v1814
        %v1839 = vadd.f32 %v1659, %v1819
        %v1840 = vadd.f32 %v1662, %v1822
        %v1841 = vld [vmem:[#allocation2 + $0x8] sm:$0xe]
        %v1842 = vld [vmem:[#allocation2 + $0xc] sm:$0xf]
        %v1843 = vld [vmem:[#allocation2 + $0x10] sm:$0xf]
        %v1844 = vld [vmem:[#allocation2 + $0x14] sm:$0xf]
        %v1845 = vld [vmem:[#allocation2 + $0x18] sm:$0xf]
        %v1846 = vld [vmem:[#allocation2 + $0x1c] sm:$0xf]
        %v1847 = vld [vmem:[#allocation2 + $0x20] sm:$0xf]
        %v1848 = vld [vmem:[#allocation2 + $0x24] sm:$0xf]
        %v1849 = vld [vmem:[#allocation2 + $0x28] sm:$0xf]
        %v1850 = vld [vmem:[#allocation2 + $0x2c] sm:$0xf]
        %v1851 = vld [vmem:[#allocation2 + $0x30] sm:$0xf]
        %v1852 = vld [vmem:[#allocation2 + $0x34] sm:$0xf]
        %v1853 = vld [vmem:[#allocation2 + $0x38] sm:$0xf]
        %v1854 = vld [vmem:[#allocation2 + $0x3c] sm:$0xf]
        %v1855 = vld [vmem:[#allocation2 + $0x40] sm:$0xf]
        %v1856 = vld [vmem:[#allocation2 + $0x44] sm:$0xf]
        %v1857 = vld [vmem:[#allocation2 + $0x48] sm:$0x1]
        %s1858 = scalar_lea.vmem %s3, 48
        %v1859 = vld [vmem:[%s1858] sm:$0xf]
        %v1860 = vld [vmem:[%s1858 + $0x4] sm:$0xf]
        %v1861 = vld [vmem:[%s1858 + $0x8] sm:$0xf]
        %v1862 = vld [vmem:[%s1858 + $0xc] sm:$0xf]
        %v1880 = vunpack.c.l.b16 %v1841
        %v1881 = vunpack.c.l.b16 %v1842
        %v1882 = vunpack.c.l.b16 %v1843
        %v1883 = vunpack.c.l.b16 %v1844
        %v1884 = vunpack.c.l.b16 %v1845
        %v1885 = vunpack.c.l.b16 %v1846
        %v1886 = vunpack.c.l.b16 %v1847
        %v1887 = vunpack.c.l.b16 %v1848
        %v1888 = vunpack.c.l.b16 %v1849
        %v1889 = vunpack.c.l.b16 %v1850
        %v1890 = vunpack.c.l.b16 %v1851
        %v1891 = vunpack.c.l.b16 %v1852
        %v1892 = vunpack.c.l.b16 %v1853
        %v1893 = vunpack.c.l.b16 %v1854
        %v1894 = vunpack.c.l.b16 %v1855
        %v1895 = vunpack.c.l.b16 %v1856
        %v1896 = vunpack.c.l.b16 %v1857
        %v1897 = vpack.c.b16 %v1881, %v1880
        %v1898 = vpack.c.b16 %v1883, %v1882
        %v1899 = vpack.c.b16 %v1885, %v1884
        %v1900 = vpack.c.b16 %v1887, %v1886
        %v1901 = vpack.c.b16 %v1889, %v1888
        %v1902 = vpack.c.b16 %v1891, %v1890
        %v1903 = vpack.c.b16 %v1893, %v1892
        %v1904 = vpack.c.b16 %v1895, %v1894
        %v1905 = vpack.c.b16 %v1896, %v1896
        %v1906 = vrot.slane %v1897, 1
        %v1907 = vrot.slane %v1898, 1
        %v1908 = vsel %vm1674, %v1906, %v1907
        %v1909 = vrot.slane %v1899, 1
        %v1910 = vsel %vm1674, %v1907, %v1909
        %v1911 = vrot.slane %v1900, 1
        %v1912 = vsel %vm1674, %v1909, %v1911
        %v1913 = vrot.slane %v1901, 1
        %v1914 = vsel %vm1674, %v1911, %v1913
        %v1915 = vrot.slane %v1902, 1
        %v1916 = vsel %vm1674, %v1913, %v1915
        %v1917 = vrot.slane %v1903, 1
        %v1918 = vsel %vm1674, %v1915, %v1917
        %v1919 = vrot.slane %v1904, 1
        %v1920 = vsel %vm1674, %v1917, %v1919
        %v1921 = vrot.slane %v1905, 1
        %v1922 = vsel %vm1674, %v1919, %v1921
        %v1927 = vunpack.c.l.b16 %v1859
        %v1928 = vunpack.c.l.b16 %v1860
        %v1929 = vunpack.c.l.b16 %v1861
        %v1930 = vunpack.c.l.b16 %v1862
        %v1931 = vpack.c.b16 %v1928, %v1927
        %v1932 = vpack.c.b16 %v1930, %v1929
        %v1936 = vsel %vm556, %v1908, 0
        %v1939 = vsel %vm556, %v1910, 0
        %v1942 = vsel %vm556, %v1912, 0
        %v1945 = vsel %vm556, %v1914, 0
        %v1948 = vsel %vm556, %v1916, 0
        %v1951 = vsel %vm556, %v1918, 0
        %v1954 = vsel %vm556, %v1920, 0
        %v1957 = vsel %vm556, %v1922, 0
        %1959 = vmatprep.subr.bf16.mxu0 0
        %1960 = vmatpush1.bf16.msra.mxu0 %v1931
        %1961 = vmatprep.subr.bf16.mxu0 0
        %1962 = vmatpush1.bf16.msra.mxu0 %v1932
        %1963 = vmatprep.subr.bf16.mxu0 0
        %1964 = vmatpush1.bf16.msra.mxu0 0
        %1965 = vmatprep.subr.bf16.mxu0 0
        %1966 = vmatpush1.bf16.msra.mxu0 0
        %1967 = vmatprep.subr.bf16.mxu0 0
        %1968 = vmatpush1.bf16.msra.mxu0 0
        %1969 = vmatprep.subr.bf16.mxu0 0
        %1970 = vmatpush1.bf16.msra.mxu0 0
        %1971 = vmatprep.subr.bf16.mxu0 0
        %1972 = vmatpush1.bf16.msra.mxu0 0
        %1973 = vmatprep.subr.bf16.mxu0 0
        %1974 = vmatpush1.bf16.msra.mxu0 0
        %1975 = vmatprep.subr.bf16.mxu0 0
        %1976 = vmatpush1.bf16.msra.mxu0 0
        %1977 = vmatprep.subr.bf16.mxu0 0
        %1978 = vmatpush1.bf16.msra.mxu0 0
        %1979 = vmatprep.subr.bf16.mxu0 0
        %1980 = vmatpush1.bf16.msra.mxu0 0
        %1981 = vmatprep.subr.bf16.mxu0 0
        %1982 = vmatpush1.bf16.msra.mxu0 0
        %1983 = vmatprep.subr.bf16.mxu0 0
        %1984 = vmatpush1.bf16.msra.mxu0 0
        %1985 = vmatprep.subr.bf16.mxu0 0
        %1986 = vmatpush1.bf16.msra.mxu0 0
        %1987 = vmatprep.subr.bf16.mxu0 0
        %1988 = vmatpush1.bf16.msra.mxu0 0
        %1989 = vmatprep.subr.bf16.mxu0 0
        %1990 = vmatpush1.bf16.msra.mxu0 0
        %1991 = vmatprep.mubr.bf16.mxu0 0
        %1992 = vmatmul.mubr.bf16.gmra.mrb[0].mxu0 %v1936
        %v1993 = vpop.f32.mrb[0].mxu0
        %v1994 = vadd.f32 0.0, %v1993
        %v1995 = vpop.f32.mrb[0].mxu0
        %v1996 = vpop.f32.mrb[0].mxu0
        %v1997 = vadd.f32 0.0, %v1996
        %v1998 = vpop.f32.mrb[0].mxu0
        %1999 = vmatprep.mubr.bf16.mxu0 0
        %2000 = vmatmul.mubr.bf16.gmra.mrb[0].mxu0 %v1939
        %v2001 = vpop.f32.mrb[0].mxu0
        %v2002 = vadd.f32 0.0, %v2001
        %v2003 = vpop.f32.mrb[0].mxu0
        %v2004 = vpop.f32.mrb[0].mxu0
        %v2005 = vadd.f32 0.0, %v2004
        %v2006 = vpop.f32.mrb[0].mxu0
        %2007 = vmatprep.mubr.bf16.mxu0 0
        %2008 = vmatmul.mubr.bf16.gmra.mrb[0].mxu0 %v1942
        %v2009 = vpop.f32.mrb[0].mxu0
        %v2010 = vadd.f32 0.0, %v2009
        %v2011 = vpop.f32.mrb[0].mxu0
        %v2012 = vpop.f32.mrb[0].mxu0
        %v2013 = vadd.f32 0.0, %v2012
        %v2014 = vpop.f32.mrb[0].mxu0
        %2015 = vmatprep.mubr.bf16.mxu0 0
        %2016 = vmatmul.mubr.bf16.gmra.mrb[0].mxu0 %v1945
        %v2017 = vpop.f32.mrb[0].mxu0
        %v2018 = vadd.f32 0.0, %v2017
        %v2019 = vpop.f32.mrb[0].mxu0
        %v2020 = vpop.f32.mrb[0].mxu0
        %v2021 = vadd.f32 0.0, %v2020
        %v2022 = vpop.f32.mrb[0].mxu0
        %2023 = vmatprep.mubr.bf16.mxu0 0
        %2024 = vmatmul.mubr.bf16.gmra.mrb[0].mxu0 %v1948
        %v2025 = vpop.f32.mrb[0].mxu0
        %v2026 = vadd.f32 0.0, %v2025
        %v2027 = vpop.f32.mrb[0].mxu0
        %v2028 = vpop.f32.mrb[0].mxu0
        %v2029 = vadd.f32 0.0, %v2028
        %v2030 = vpop.f32.mrb[0].mxu0
        %2031 = vmatprep.mubr.bf16.mxu0 0
        %2032 = vmatmul.mubr.bf16.gmra.mrb[0].mxu0 %v1951
        %v2033 = vpop.f32.mrb[0].mxu0
        %v2034 = vadd.f32 0.0, %v2033
        %v2035 = vpop.f32.mrb[0].mxu0
        %v2036 = vpop.f32.mrb[0].mxu0
        %v2037 = vadd.f32 0.0, %v2036
        %v2038 = vpop.f32.mrb[0].mxu0
        %2039 = vmatprep.mubr.bf16.mxu0 0
        %2040 = vmatmul.mubr.bf16.gmra.mrb[0].mxu0 %v1954
        %v2041 = vpop.f32.mrb[0].mxu0
        %v2042 = vadd.f32 0.0, %v2041
        %v2043 = vpop.f32.mrb[0].mxu0
        %v2044 = vpop.f32.mrb[0].mxu0
        %v2045 = vadd.f32 0.0, %v2044
        %v2046 = vpop.f32.mrb[0].mxu0
        %2047 = vmatprep.mubr.bf16.mxu0 0
        %2048 = vmatmul.mubr.bf16.gmra.mrb[0].mxu0 %v1957
        %v2049 = vpop.f32.mrb[0].mxu0
        %v2050 = vadd.f32 0.0, %v2049
        %v2051 = vpop.f32.mrb[0].mxu0
        %v2052 = vpop.f32.mrb[0].mxu0
        %v2053 = vadd.f32 0.0, %v2052
        %v2054 = vpop.f32.mrb[0].mxu0
        %2055 = vdwg.mxu0
        %v2056 = vadd.f32 %v1825, %v1994
        %v2057 = vadd.f32 %v1826, %v1997
        %v2058 = vadd.f32 %v1827, %v2002
        %v2059 = vadd.f32 %v1828, %v2005
        %v2060 = vadd.f32 %v1829, %v2010
        %v2061 = vadd.f32 %v1830, %v2013
        %v2062 = vadd.f32 %v1831, %v2018
        %v2063 = vadd.f32 %v1832, %v2021
        %v2064 = vadd.f32 %v1833, %v2026
        %v2065 = vadd.f32 %v1834, %v2029
        %v2066 = vadd.f32 %v1835, %v2034
        %v2067 = vadd.f32 %v1836, %v2037
        %v2068 = vadd.f32 %v1837, %v2042
        %v2069 = vadd.f32 %v1838, %v2045
        %v2070 = vadd.f32 %v1839, %v2050
        %v2071 = vadd.f32 %v1840, %v2053
        %v2072 = vld [vmem:[#allocation2 + $0x48] sm:$0x3]
        %s2073 = scalar_lea.vmem %s3, 64
        %v2074 = vld [vmem:[%s2073] sm:$0xf]
        %v2075 = vld [vmem:[%s2073 + $0x4] sm:$0xf]
        %v2076 = vld [vmem:[%s2073 + $0x8] sm:$0xf]
        %v2077 = vld [vmem:[%s2073 + $0xc] sm:$0xf]
        %v2079 = vunpack.c.l.b16 %v2072
        %v2080 = vpack.c.b16 %v2079, %v2079
        %vm2081 = vsmask.f32 6400
        %v2083 = vshrl.u32 %v1897, 16
        %v2085 = vrot.slane %v2083, 1
        %v2086 = vshll.u32 %v1897, 16
        %v2088 = vrot.slane %v2086, 2
        %v2089 = vor.u32 %v2085, %v2088
        %v2091 = vshrl.u32 %v1898, 16
        %v2093 = vrot.slane %v2091, 1
        %v2094 = vshll.u32 %v1898, 16
        %v2096 = vrot.slane %v2094, 2
        %v2097 = vor.u32 %v2093, %v2096
        %v2098 = vsel %vm2081, %v2089, %v2097
        %v2100 = vshrl.u32 %v1899, 16
        %v2102 = vrot.slane %v2100, 1
        %v2103 = vshll.u32 %v1899, 16
        %v2105 = vrot.slane %v2103, 2
        %v2106 = vor.u32 %v2102, %v2105
        %v2107 = vsel %vm2081, %v2097, %v2106
        %v2109 = vshrl.u32 %v1900, 16
        %v2111 = vrot.slane %v2109, 1
        %v2112 = vshll.u32 %v1900, 16
        %v2114 = vrot.slane %v2112, 2
        %v2115 = vor.u32 %v2111, %v2114
        %v2116 = vsel %vm2081, %v2106, %v2115
        %v2118 = vshrl.u32 %v1901, 16
        %v2120 = vrot.slane %v2118, 1
        %v2121 = vshll.u32 %v1901, 16
        %v2123 = vrot.slane %v2121, 2
        %v2124 = vor.u32 %v2120, %v2123
        %v2125 = vsel %vm2081, %v2115, %v2124
        %v2127 = vshrl.u32 %v1902, 16
        %v2129 = vrot.slane %v2127, 1
        %v2130 = vshll.u32 %v1902, 16
        %v2132 = vrot.slane %v2130, 2
        %v2133 = vor.u32 %v2129, %v2132
        %v2134 = vsel %vm2081, %v2124, %v2133
        %v2136 = vshrl.u32 %v1903, 16
        %v2138 = vrot.slane %v2136, 1
        %v2139 = vshll.u32 %v1903, 16
        %v2141 = vrot.slane %v2139, 2
        %v2142 = vor.u32 %v2138, %v2141
        %v2143 = vsel %vm2081, %v2133, %v2142
        %v2145 = vshrl.u32 %v1904, 16
        %v2147 = vrot.slane %v2145, 1
        %v2148 = vshll.u32 %v1904, 16
        %v2150 = vrot.slane %v2148, 2
        %v2151 = vor.u32 %v2147, %v2150
        %v2152 = vsel %vm2081, %v2142, %v2151
        %v2154 = vshrl.u32 %v2080, 16
        %v2156 = vrot.slane %v2154, 1
        %v2157 = vshll.u32 %v2080, 16
        %v2159 = vrot.slane %v2157, 2
        %v2160 = vor.u32 %v2156, %v2159
        %v2161 = vsel %vm2081, %v2151, %v2160
        %v2166 = vunpack.c.l.b16 %v2074
        %v2167 = vunpack.c.l.b16 %v2075
        %v2168 = vunpack.c.l.b16 %v2076
        %v2169 = vunpack.c.l.b16 %v2077
        %v2170 = vpack.c.b16 %v2167, %v2166
        %v2171 = vpack.c.b16 %v2169, %v2168
        %v2175 = vsel %vm556, %v2098, 0
        %v2178 = vsel %vm556, %v2107, 0
        %v2181 = vsel %vm556, %v2116, 0
        %v2184 = vsel %vm556, %v2125, 0
        %v2187 = vsel %vm556, %v2134, 0
        %v2190 = vsel %vm556, %v2143, 0
        %v2193 = vsel %vm556, %v2152, 0
        %v2196 = vsel %vm556, %v2161, 0
        %2198 = vmatprep.subr.bf16.mxu0 0
        %2199 = vmatpush1.bf16.msra.mxu0 %v2170
        %2200 = vmatprep.subr.bf16.mxu0 0
        %2201 = vmatpush1.bf16.msra.mxu0 %v2171
        %2202 = vmatprep.subr.bf16.mxu0 0
        %2203 = vmatpush1.bf16.msra.mxu0 0
        %2204 = vmatprep.subr.bf16.mxu0 0
        %2205 = vmatpush1.bf16.msra.mxu0 0
        %2206 = vmatprep.subr.bf16.mxu0 0
        %2207 = vmatpush1.bf16.msra.mxu0 0
        %2208 = vmatprep.subr.bf16.mxu0 0
        %2209 = vmatpush1.bf16.msra.mxu0 0
        %2210 = vmatprep.subr.bf16.mxu0 0
        %2211 = vmatpush1.bf16.msra.mxu0 0
        %2212 = vmatprep.subr.bf16.mxu0 0
        %2213 = vmatpush1.bf16.msra.mxu0 0
        %2214 = vmatprep.subr.bf16.mxu0 0
        %2215 = vmatpush1.bf16.msra.mxu0 0
        %2216 = vmatprep.subr.bf16.mxu0 0
        %2217 = vmatpush1.bf16.msra.mxu0 0
        %2218 = vmatprep.subr.bf16.mxu0 0
        %2219 = vmatpush1.bf16.msra.mxu0 0
        %2220 = vmatprep.subr.bf16.mxu0 0
        %2221 = vmatpush1.bf16.msra.mxu0 0
        %2222 = vmatprep.subr.bf16.mxu0 0
        %2223 = vmatpush1.bf16.msra.mxu0 0
        %2224 = vmatprep.subr.bf16.mxu0 0
        %2225 = vmatpush1.bf16.msra.mxu0 0
        %2226 = vmatprep.subr.bf16.mxu0 0
        %2227 = vmatpush1.bf16.msra.mxu0 0
        %2228 = vmatprep.subr.bf16.mxu0 0
        %2229 = vmatpush1.bf16.msra.mxu0 0
        %2230 = vmatprep.mubr.bf16.mxu0 0
        %2231 = vmatmul.mubr.bf16.gmra.mrb[0].mxu0 %v2175
        %v2232 = vpop.f32.mrb[0].mxu0
        %v2233 = vadd.f32 0.0, %v2232
        %v2234 = vpop.f32.mrb[0].mxu0
        %v2235 = vpop.f32.mrb[0].mxu0
        %v2236 = vadd.f32 0.0, %v2235
        %v2237 = vpop.f32.mrb[0].mxu0
        %2238 = vmatprep.mubr.bf16.mxu0 0
        %2239 = vmatmul.mubr.bf16.gmra.mrb[0].mxu0 %v2178
        %v2240 = vpop.f32.mrb[0].mxu0
        %v2241 = vadd.f32 0.0, %v2240
        %v2242 = vpop.f32.mrb[0].mxu0
        %v2243 = vpop.f32.mrb[0].mxu0
        %v2244 = vadd.f32 0.0, %v2243
        %v2245 = vpop.f32.mrb[0].mxu0
        %2246 = vmatprep.mubr.bf16.mxu0 0
        %2247 = vmatmul.mubr.bf16.gmra.mrb[0].mxu0 %v2181
        %v2248 = vpop.f32.mrb[0].mxu0
        %v2249 = vadd.f32 0.0, %v2248
        %v2250 = vpop.f32.mrb[0].mxu0
        %v2251 = vpop.f32.mrb[0].mxu0
        %v2252 = vadd.f32 0.0, %v2251
        %v2253 = vpop.f32.mrb[0].mxu0
        %2254 = vmatprep.mubr.bf16.mxu0 0
        %2255 = vmatmul.mubr.bf16.gmra.mrb[0].mxu0 %v2184
        %v2256 = vpop.f32.mrb[0].mxu0
        %v2257 = vadd.f32 0.0, %v2256
        %v2258 = vpop.f32.mrb[0].mxu0
        %v2259 = vpop.f32.mrb[0].mxu0
        %v2260 = vadd.f32 0.0, %v2259
        %v2261 = vpop.f32.mrb[0].mxu0
        %2262 = vmatprep.mubr.bf16.mxu0 0
        %2263 = vmatmul.mubr.bf16.gmra.mrb[0].mxu0 %v2187
        %v2264 = vpop.f32.mrb[0].mxu0
        %v2265 = vadd.f32 0.0, %v2264
        %v2266 = vpop.f32.mrb[0].mxu0
        %v2267 = vpop.f32.mrb[0].mxu0
        %v2268 = vadd.f32 0.0, %v2267
        %v2269 = vpop.f32.mrb[0].mxu0
        %2270 = vmatprep.mubr.bf16.mxu0 0
        %2271 = vmatmul.mubr.bf16.gmra.mrb[0].mxu0 %v2190
        %v2272 = vpop.f32.mrb[0].mxu0
        %v2273 = vadd.f32 0.0, %v2272
        %v2274 = vpop.f32.mrb[0].mxu0
        %v2275 = vpop.f32.mrb[0].mxu0
        %v2276 = vadd.f32 0.0, %v2275
        %v2277 = vpop.f32.mrb[0].mxu0
        %2278 = vmatprep.mubr.bf16.mxu0 0
        %2279 = vmatmul.mubr.bf16.gmra.mrb[0].mxu0 %v2193
        %v2280 = vpop.f32.mrb[0].mxu0
        %v2281 = vadd.f32 0.0, %v2280
        %v2282 = vpop.f32.mrb[0].mxu0
        %v2283 = vpop.f32.mrb[0].mxu0
        %v2284 = vadd.f32 0.0, %v2283
        %v2285 = vpop.f32.mrb[0].mxu0
        %2286 = vmatprep.mubr.bf16.mxu0 0
        %2287 = vmatmul.mubr.bf16.gmra.mrb[0].mxu0 %v2196
        %v2288 = vpop.f32.mrb[0].mxu0
        %v2289 = vadd.f32 0.0, %v2288
        %v2290 = vpop.f32.mrb[0].mxu0
        %v2291 = vpop.f32.mrb[0].mxu0
        %v2292 = vadd.f32 0.0, %v2291
        %v2293 = vpop.f32.mrb[0].mxu0
        %2294 = vdwg.mxu0
        %v2295 = vadd.f32 %v2056, %v2233
        %v2296 = vadd.f32 %v2057, %v2236
        %v2297 = vadd.f32 %v2058, %v2241
        %v2298 = vadd.f32 %v2059, %v2244
        %v2299 = vadd.f32 %v2060, %v2249
        %v2300 = vadd.f32 %v2061, %v2252
        %v2301 = vadd.f32 %v2062, %v2257
        %v2302 = vadd.f32 %v2063, %v2260
        %v2303 = vadd.f32 %v2064, %v2265
        %v2304 = vadd.f32 %v2065, %v2268
        %v2305 = vadd.f32 %v2066, %v2273
        %v2306 = vadd.f32 %v2067, %v2276
        %v2307 = vadd.f32 %v2068, %v2281
        %v2308 = vadd.f32 %v2069, %v2284
        %v2309 = vadd.f32 %v2070, %v2289
        %v2310 = vadd.f32 %v2071, %v2292
        %v2311 = vld [vmem:[#allocation2 + $0x8] sm:$0xc]
        %s2312 = scalar_lea.vmem %s3, 80
        %v2313 = vld [vmem:[%s2312] sm:$0xf]
        %v2314 = vld [vmem:[%s2312 + $0x4] sm:$0xf]
        %v2315 = vld [vmem:[%s2312 + $0x8] sm:$0xf]
        %v2316 = vld [vmem:[%s2312 + $0xc] sm:$0xf]
        %v2318 = vunpack.c.l.b16 %v2311
        %v2319 = vpack.c.b16 %v1881, %v2318
        %vm2320 = vcmask 1045504
        %v2321 = vrot.slane %v2319, 2
        %v2322 = vrot.slane %v1898, 2
        %v2323 = vsel %vm2320, %v2321, %v2322
        %v2324 = vrot.slane %v1899, 2
        %v2325 = vsel %vm2320, %v2322, %v2324
        %v2326 = vrot.slane %v1900, 2
        %v2327 = vsel %vm2320, %v2324, %v2326
        %v2328 = vrot.slane %v1901, 2
        %v2329 = vsel %vm2320, %v2326, %v2328
        %v2330 = vrot.slane %v1902, 2
        %v2331 = vsel %vm2320, %v2328, %v2330
        %v2332 = vrot.slane %v1903, 2
        %v2333 = vsel %vm2320, %v2330, %v2332
        %v2334 = vrot.slane %v1904, 2
        %v2335 = vsel %vm2320, %v2332, %v2334
        %v2336 = vrot.slane %v2080, 2
        %v2337 = vsel %vm2320, %v2334, %v2336
        %v2342 = vunpack.c.l.b16 %v2313
        %v2343 = vunpack.c.l.b16 %v2314
        %v2344 = vunpack.c.l.b16 %v2315
        %v2345 = vunpack.c.l.b16 %v2316
        %v2346 = vpack.c.b16 %v2343, %v2342
        %v2347 = vpack.c.b16 %v2345, %v2344
        %v2351 = vsel %vm556, %v2323, 0
        %v2354 = vsel %vm556, %v2325, 0
        %v2357 = vsel %vm556, %v2327, 0
        %v2360 = vsel %vm556, %v2329, 0
        %v2363 = vsel %vm556, %v2331, 0
        %v2366 = vsel %vm556, %v2333, 0
        %v2369 = vsel %vm556, %v2335, 0
        %v2372 = vsel %vm556, %v2337, 0
        %2374 = vmatprep.subr.bf16.mxu0 0
        %2375 = vmatpush1.bf16.msra.mxu0 %v2346
        %2376 = vmatprep.subr.bf16.mxu0 0
        %2377 = vmatpush1.bf16.msra.mxu0 %v2347
        %2378 = vmatprep.subr.bf16.mxu0 0
        %2379 = vmatpush1.bf16.msra.mxu0 0
        %2380 = vmatprep.subr.bf16.mxu0 0
        %2381 = vmatpush1.bf16.msra.mxu0 0
        %2382 = vmatprep.subr.bf16.mxu0 0
        %2383 = vmatpush1.bf16.msra.mxu0 0
        %2384 = vmatprep.subr.bf16.mxu0 0
        %2385 = vmatpush1.bf16.msra.mxu0 0
        %2386 = vmatprep.subr.bf16.mxu0 0
        %2387 = vmatpush1.bf16.msra.mxu0 0
        %2388 = vmatprep.subr.bf16.mxu0 0
        %2389 = vmatpush1.bf16.msra.mxu0 0
        %2390 = vmatprep.subr.bf16.mxu0 0
        %2391 = vmatpush1.bf16.msra.mxu0 0
        %2392 = vmatprep.subr.bf16.mxu0 0
        %2393 = vmatpush1.bf16.msra.mxu0 0
        %2394 = vmatprep.subr.bf16.mxu0 0
        %2395 = vmatpush1.bf16.msra.mxu0 0
        %2396 = vmatprep.subr.bf16.mxu0 0
        %2397 = vmatpush1.bf16.msra.mxu0 0
        %2398 = vmatprep.subr.bf16.mxu0 0
        %2399 = vmatpush1.bf16.msra.mxu0 0
        %2400 = vmatprep.subr.bf16.mxu0 0
        %2401 = vmatpush1.bf16.msra.mxu0 0
        %2402 = vmatprep.subr.bf16.mxu0 0
        %2403 = vmatpush1.bf16.msra.mxu0 0
        %2404 = vmatprep.subr.bf16.mxu0 0
        %2405 = vmatpush1.bf16.msra.mxu0 0
        %2406 = vmatprep.mubr.bf16.mxu0 0
        %2407 = vmatmul.mubr.bf16.gmra.mrb[0].mxu0 %v2351
        %v2408 = vpop.f32.mrb[0].mxu0
        %v2409 = vadd.f32 0.0, %v2408
        %v2410 = vpop.f32.mrb[0].mxu0
        %v2411 = vpop.f32.mrb[0].mxu0
        %v2412 = vadd.f32 0.0, %v2411
        %v2413 = vpop.f32.mrb[0].mxu0
        %2414 = vmatprep.mubr.bf16.mxu0 0
        %2415 = vmatmul.mubr.bf16.gmra.mrb[0].mxu0 %v2354
        %v2416 = vpop.f32.mrb[0].mxu0
        %v2417 = vadd.f32 0.0, %v2416
        %v2418 = vpop.f32.mrb[0].mxu0
        %v2419 = vpop.f32.mrb[0].mxu0
        %v2420 = vadd.f32 0.0, %v2419
        %v2421 = vpop.f32.mrb[0].mxu0
        %2422 = vmatprep.mubr.bf16.mxu0 0
        %2423 = vmatmul.mubr.bf16.gmra.mrb[0].mxu0 %v2357
        %v2424 = vpop.f32.mrb[0].mxu0
        %v2425 = vadd.f32 0.0, %v2424
        %v2426 = vpop.f32.mrb[0].mxu0
        %v2427 = vpop.f32.mrb[0].mxu0
        %v2428 = vadd.f32 0.0, %v2427
        %v2429 = vpop.f32.mrb[0].mxu0
        %2430 = vmatprep.mubr.bf16.mxu0 0
        %2431 = vmatmul.mubr.bf16.gmra.mrb[0].mxu0 %v2360
        %v2432 = vpop.f32.mrb[0].mxu0
        %v2433 = vadd.f32 0.0, %v2432
        %v2434 = vpop.f32.mrb[0].mxu0
        %v2435 = vpop.f32.mrb[0].mxu0
        %v2436 = vadd.f32 0.0, %v2435
        %v2437 = vpop.f32.mrb[0].mxu0
        %2438 = vmatprep.mubr.bf16.mxu0 0
        %2439 = vmatmul.mubr.bf16.gmra.mrb[0].mxu0 %v2363
        %v2440 = vpop.f32.mrb[0].mxu0
        %v2441 = vadd.f32 0.0, %v2440
        %v2442 = vpop.f32.mrb[0].mxu0
        %v2443 = vpop.f32.mrb[0].mxu0
        %v2444 = vadd.f32 0.0, %v2443
        %v2445 = vpop.f32.mrb[0].mxu0
        %2446 = vmatprep.mubr.bf16.mxu0 0
        %2447 = vmatmul.mubr.bf16.gmra.mrb[0].mxu0 %v2366
        %v2448 = vpop.f32.mrb[0].mxu0
        %v2449 = vadd.f32 0.0, %v2448
        %v2450 = vpop.f32.mrb[0].mxu0
        %v2451 = vpop.f32.mrb[0].mxu0
        %v2452 = vadd.f32 0.0, %v2451
        %v2453 = vpop.f32.mrb[0].mxu0
        %2454 = vmatprep.mubr.bf16.mxu0 0
        %2455 = vmatmul.mubr.bf16.gmra.mrb[0].mxu0 %v2369
        %v2456 = vpop.f32.mrb[0].mxu0
        %v2457 = vadd.f32 0.0, %v2456
        %v2458 = vpop.f32.mrb[0].mxu0
        %v2459 = vpop.f32.mrb[0].mxu0
        %v2460 = vadd.f32 0.0, %v2459
        %v2461 = vpop.f32.mrb[0].mxu0
        %2462 = vmatprep.mubr.bf16.mxu0 0
        %2463 = vmatmul.mubr.bf16.gmra.mrb[0].mxu0 %v2372
        %v2464 = vpop.f32.mrb[0].mxu0
        %v2465 = vadd.f32 0.0, %v2464
        %v2466 = vpop.f32.mrb[0].mxu0
        %v2467 = vpop.f32.mrb[0].mxu0
        %v2468 = vadd.f32 0.0, %v2467
        %v2469 = vpop.f32.mrb[0].mxu0
        %2470 = vdwg.mxu0
        %v2471 = vadd.f32 %v2295, %v2409
        %v2472 = vadd.f32 %v2296, %v2412
        %v2473 = vadd.f32 %v2297, %v2417
        %v2474 = vadd.f32 %v2298, %v2420
        %v2475 = vadd.f32 %v2299, %v2425
        %v2476 = vadd.f32 %v2300, %v2428
        %v2477 = vadd.f32 %v2301, %v2433
        %v2478 = vadd.f32 %v2302, %v2436
        %v2479 = vadd.f32 %v2303, %v2441
        %v2480 = vadd.f32 %v2304, %v2444
        %v2481 = vadd.f32 %v2305, %v2449
        %v2482 = vadd.f32 %v2306, %v2452
        %v2483 = vadd.f32 %v2307, %v2457
        %v2484 = vadd.f32 %v2308, %v2460
        %v2485 = vadd.f32 %v2309, %v2465
        %v2486 = vadd.f32 %v2310, %v2468
        %v2487 = vld [vmem:[#allocation2 + $0x10] sm:$0xc]
        %v2488 = vld [vmem:[#allocation2 + $0x14] sm:$0xf]
        %v2489 = vld [vmem:[#allocation2 + $0x18] sm:$0xf]
        %v2490 = vld [vmem:[#allocation2 + $0x1c] sm:$0xf]
        %v2491 = vld [vmem:[#allocation2 + $0x20] sm:$0xf]
        %v2492 = vld [vmem:[#allocation2 + $0x24] sm:$0xf]
        %v2493 = vld [vmem:[#allocation2 + $0x28] sm:$0xf]
        %v2494 = vld [vmem:[#allocation2 + $0x2c] sm:$0xf]
        %v2495 = vld [vmem:[#allocation2 + $0x30] sm:$0xf]
        %v2496 = vld [vmem:[#allocation2 + $0x34] sm:$0xf]
        %v2497 = vld [vmem:[#allocation2 + $0x38] sm:$0xf]
        %v2498 = vld [vmem:[#allocation2 + $0x3c] sm:$0xf]
        %v2499 = vld [vmem:[#allocation2 + $0x40] sm:$0xf]
        %v2500 = vld [vmem:[#allocation2 + $0x44] sm:$0xf]
        %v2501 = vld [vmem:[#allocation2 + $0x48] sm:$0xf]
        %v2502 = vld [vmem:[#allocation2 + $0x4c] sm:$0xf]
        %v2503 = vld [vmem:[#allocation2 + $0x50] sm:$0x3]
        %s2504 = scalar_lea.vmem %s3, 96
        %v2505 = vld [vmem:[%s2504] sm:$0xf]
        %v2506 = vld [vmem:[%s2504 + $0x4] sm:$0xf]
        %v2507 = vld [vmem:[%s2504 + $0x8] sm:$0xf]
        %v2508 = vld [vmem:[%s2504 + $0xc] sm:$0xf]
        %v2526 = vunpack.c.l.b16 %v2487
        %v2527 = vunpack.c.l.b16 %v2488
        %v2528 = vunpack.c.l.b16 %v2489
        %v2529 = vunpack.c.l.b16 %v2490
        %v2530 = vunpack.c.l.b16 %v2491
        %v2531 = vunpack.c.l.b16 %v2492
        %v2532 = vunpack.c.l.b16 %v2493
        %v2533 = vunpack.c.l.b16 %v2494
        %v2534 = vunpack.c.l.b16 %v2495
        %v2535 = vunpack.c.l.b16 %v2496
        %v2536 = vunpack.c.l.b16 %v2497
        %v2537 = vunpack.c.l.b16 %v2498
        %v2538 = vunpack.c.l.b16 %v2499
        %v2539 = vunpack.c.l.b16 %v2500
        %v2540 = vunpack.c.l.b16 %v2501
        %v2541 = vunpack.c.l.b16 %v2502
        %v2542 = vunpack.c.l.b16 %v2503
        %v2543 = vpack.c.b16 %v2527, %v2526
        %v2544 = vpack.c.b16 %v2529, %v2528
        %v2545 = vpack.c.b16 %v2531, %v2530
        %v2546 = vpack.c.b16 %v2533, %v2532
        %v2547 = vpack.c.b16 %v2535, %v2534
        %v2548 = vpack.c.b16 %v2537, %v2536
        %v2549 = vpack.c.b16 %v2539, %v2538
        %v2550 = vpack.c.b16 %v2541, %v2540
        %v2551 = vpack.c.b16 %v2542, %v2542
        %v2552 = vrot.slane %v2543, 2
        %v2553 = vrot.slane %v2544, 2
        %v2554 = vsel %vm2320, %v2552, %v2553
        %v2555 = vrot.slane %v2545, 2
        %v2556 = vsel %vm2320, %v2553, %v2555
        %v2557 = vrot.slane %v2546, 2
        %v2558 = vsel %vm2320, %v2555, %v2557
        %v2559 = vrot.slane %v2547, 2
        %v2560 = vsel %vm2320, %v2557, %v2559
        %v2561 = vrot.slane %v2548, 2
        %v2562 = vsel %vm2320, %v2559, %v2561
        %v2563 = vrot.slane %v2549, 2
        %v2564 = vsel %vm2320, %v2561, %v2563
        %v2565 = vrot.slane %v2550, 2
        %v2566 = vsel %vm2320, %v2563, %v2565
        %v2567 = vrot.slane %v2551, 2
        %v2568 = vsel %vm2320, %v2565, %v2567
        %v2573 = vunpack.c.l.b16 %v2505
        %v2574 = vunpack.c.l.b16 %v2506
        %v2575 = vunpack.c.l.b16 %v2507
        %v2576 = vunpack.c.l.b16 %v2508
        %v2577 = vpack.c.b16 %v2574, %v2573
        %v2578 = vpack.c.b16 %v2576, %v2575
        %v2582 = vsel %vm556, %v2554, 0
        %v2585 = vsel %vm556, %v2556, 0
        %v2588 = vsel %vm556, %v2558, 0
        %v2591 = vsel %vm556, %v2560, 0
        %v2594 = vsel %vm556, %v2562, 0
        %v2597 = vsel %vm556, %v2564, 0
        %v2600 = vsel %vm556, %v2566, 0
        %v2603 = vsel %vm556, %v2568, 0
        %2605 = vmatprep.subr.bf16.mxu0 0
        %2606 = vmatpush1.bf16.msra.mxu0 %v2577
        %2607 = vmatprep.subr.bf16.mxu0 0
        %2608 = vmatpush1.bf16.msra.mxu0 %v2578
        %2609 = vmatprep.subr.bf16.mxu0 0
        %2610 = vmatpush1.bf16.msra.mxu0 0
        %2611 = vmatprep.subr.bf16.mxu0 0
        %2612 = vmatpush1.bf16.msra.mxu0 0
        %2613 = vmatprep.subr.bf16.mxu0 0
        %2614 = vmatpush1.bf16.msra.mxu0 0
        %2615 = vmatprep.subr.bf16.mxu0 0
        %2616 = vmatpush1.bf16.msra.mxu0 0
        %2617 = vmatprep.subr.bf16.mxu0 0
        %2618 = vmatpush1.bf16.msra.mxu0 0
        %2619 = vmatprep.subr.bf16.mxu0 0
        %2620 = vmatpush1.bf16.msra.mxu0 0
        %2621 = vmatprep.subr.bf16.mxu0 0
        %2622 = vmatpush1.bf16.msra.mxu0 0
        %2623 = vmatprep.subr.bf16.mxu0 0
        %2624 = vmatpush1.bf16.msra.mxu0 0
        %2625 = vmatprep.subr.bf16.mxu0 0
        %2626 = vmatpush1.bf16.msra.mxu0 0
        %2627 = vmatprep.subr.bf16.mxu0 0
        %2628 = vmatpush1.bf16.msra.mxu0 0
        %2629 = vmatprep.subr.bf16.mxu0 0
        %2630 = vmatpush1.bf16.msra.mxu0 0
        %2631 = vmatprep.subr.bf16.mxu0 0
        %2632 = vmatpush1.bf16.msra.mxu0 0
        %2633 = vmatprep.subr.bf16.mxu0 0
        %2634 = vmatpush1.bf16.msra.mxu0 0
        %2635 = vmatprep.subr.bf16.mxu0 0
        %2636 = vmatpush1.bf16.msra.mxu0 0
        %2637 = vmatprep.mubr.bf16.mxu0 0
        %2638 = vmatmul.mubr.bf16.gmra.mrb[0].mxu0 %v2582
        %v2639 = vpop.f32.mrb[0].mxu0
        %v2640 = vadd.f32 0.0, %v2639
        %v2641 = vpop.f32.mrb[0].mxu0
        %v2642 = vpop.f32.mrb[0].mxu0
        %v2643 = vadd.f32 0.0, %v2642
        %v2644 = vpop.f32.mrb[0].mxu0
        %2645 = vmatprep.mubr.bf16.mxu0 0
        %2646 = vmatmul.mubr.bf16.gmra.mrb[0].mxu0 %v2585
        %v2647 = vpop.f32.mrb[0].mxu0
        %v2648 = vadd.f32 0.0, %v2647
        %v2649 = vpop.f32.mrb[0].mxu0
        %v2650 = vpop.f32.mrb[0].mxu0
        %v2651 = vadd.f32 0.0, %v2650
        %v2652 = vpop.f32.mrb[0].mxu0
        %2653 = vmatprep.mubr.bf16.mxu0 0
        %2654 = vmatmul.mubr.bf16.gmra.mrb[0].mxu0 %v2588
        %v2655 = vpop.f32.mrb[0].mxu0
        %v2656 = vadd.f32 0.0, %v2655
        %v2657 = vpop.f32.mrb[0].mxu0
        %v2658 = vpop.f32.mrb[0].mxu0
        %v2659 = vadd.f32 0.0, %v2658
        %v2660 = vpop.f32.mrb[0].mxu0
        %2661 = vmatprep.mubr.bf16.mxu0 0
        %2662 = vmatmul.mubr.bf16.gmra.mrb[0].mxu0 %v2591
        %v2663 = vpop.f32.mrb[0].mxu0
        %v2664 = vadd.f32 0.0, %v2663
        %v2665 = vpop.f32.mrb[0].mxu0
        %v2666 = vpop.f32.mrb[0].mxu0
        %v2667 = vadd.f32 0.0, %v2666
        %v2668 = vpop.f32.mrb[0].mxu0
        %2669 = vmatprep.mubr.bf16.mxu0 0
        %2670 = vmatmul.mubr.bf16.gmra.mrb[0].mxu0 %v2594
        %v2671 = vpop.f32.mrb[0].mxu0
        %v2672 = vadd.f32 0.0, %v2671
        %v2673 = vpop.f32.mrb[0].mxu0
        %v2674 = vpop.f32.mrb[0].mxu0
        %v2675 = vadd.f32 0.0, %v2674
        %v2676 = vpop.f32.mrb[0].mxu0
        %2677 = vmatprep.mubr.bf16.mxu0 0
        %2678 = vmatmul.mubr.bf16.gmra.mrb[0].mxu0 %v2597
        %v2679 = vpop.f32.mrb[0].mxu0
        %v2680 = vadd.f32 0.0, %v2679
        %v2681 = vpop.f32.mrb[0].mxu0
        %v2682 = vpop.f32.mrb[0].mxu0
        %v2683 = vadd.f32 0.0, %v2682
        %v2684 = vpop.f32.mrb[0].mxu0
        %2685 = vmatprep.mubr.bf16.mxu0 0
        %2686 = vmatmul.mubr.bf16.gmra.mrb[0].mxu0 %v2600
        %v2687 = vpop.f32.mrb[0].mxu0
        %v2688 = vadd.f32 0.0, %v2687
        %v2689 = vpop.f32.mrb[0].mxu0
        %v2690 = vpop.f32.mrb[0].mxu0
        %v2691 = vadd.f32 0.0, %v2690
        %v2692 = vpop.f32.mrb[0].mxu0
        %2693 = vmatprep.mubr.bf16.mxu0 0
        %2694 = vmatmul.mubr.bf16.gmra.mrb[0].mxu0 %v2603
        %v2695 = vpop.f32.mrb[0].mxu0
        %v2696 = vadd.f32 0.0, %v2695
        %v2697 = vpop.f32.mrb[0].mxu0
        %v2698 = vpop.f32.mrb[0].mxu0
        %v2699 = vadd.f32 0.0, %v2698
        %v2700 = vpop.f32.mrb[0].mxu0
        %2701 = vdwg.mxu0
        %v2702 = vadd.f32 %v2471, %v2640
        %v2703 = vadd.f32 %v2472, %v2643
        %v2704 = vadd.f32 %v2473, %v2648
        %v2705 = vadd.f32 %v2474, %v2651
        %v2706 = vadd.f32 %v2475, %v2656
        %v2707 = vadd.f32 %v2476, %v2659
        %v2708 = vadd.f32 %v2477, %v2664
        %v2709 = vadd.f32 %v2478, %v2667
        %v2710 = vadd.f32 %v2479, %v2672
        %v2711 = vadd.f32 %v2480, %v2675
        %v2712 = vadd.f32 %v2481, %v2680
        %v2713 = vadd.f32 %v2482, %v2683
        %v2714 = vadd.f32 %v2483, %v2688
        %v2715 = vadd.f32 %v2484, %v2691
        %v2716 = vadd.f32 %v2485, %v2696
        %v2717 = vadd.f32 %v2486, %v2699
        %v2718 = vld [vmem:[#allocation2 + $0x50] sm:$0x7]
        %s2719 = scalar_lea.vmem %s3, 112
        %v2720 = vld [vmem:[%s2719] sm:$0xf]
        %v2721 = vld [vmem:[%s2719 + $0x4] sm:$0xf]
        %v2722 = vld [vmem:[%s2719 + $0x8] sm:$0xf]
        %v2723 = vld [vmem:[%s2719 + $0xc] sm:$0xf]
        %v2725 = vunpack.c.l.b16 %v2718
        %v2726 = vpack.c.b16 %v2725, %v2725
        %vm2727 = vsmask.f32 5376
        %v2729 = vshrl.u32 %v2543, 16
        %v2731 = vrot.slane %v2729, 2
        %v2732 = vshll.u32 %v2543, 16
        %v2734 = vrot.slane %v2732, 3
        %v2735 = vor.u32 %v2731, %v2734
        %v2737 = vshrl.u32 %v2544, 16
        %v2739 = vrot.slane %v2737, 2
        %v2740 = vshll.u32 %v2544, 16
        %v2742 = vrot.slane %v2740, 3
        %v2743 = vor.u32 %v2739, %v2742
        %v2744 = vsel %vm2727, %v2735, %v2743
        %v2746 = vshrl.u32 %v2545, 16
        %v2748 = vrot.slane %v2746, 2
        %v2749 = vshll.u32 %v2545, 16
        %v2751 = vrot.slane %v2749, 3
        %v2752 = vor.u32 %v2748, %v2751
        %v2753 = vsel %vm2727, %v2743, %v2752
        %v2755 = vshrl.u32 %v2546, 16
        %v2757 = vrot.slane %v2755, 2
        %v2758 = vshll.u32 %v2546, 16
        %v2760 = vrot.slane %v2758, 3
        %v2761 = vor.u32 %v2757, %v2760
        %v2762 = vsel %vm2727, %v2752, %v2761
        %v2764 = vshrl.u32 %v2547, 16
        %v2766 = vrot.slane %v2764, 2
        %v2767 = vshll.u32 %v2547, 16
        %v2769 = vrot.slane %v2767, 3
        %v2770 = vor.u32 %v2766, %v2769
        %v2771 = vsel %vm2727, %v2761, %v2770
        %v2773 = vshrl.u32 %v2548, 16
        %v2775 = vrot.slane %v2773, 2
        %v2776 = vshll.u32 %v2548, 16
        %v2778 = vrot.slane %v2776, 3
        %v2779 = vor.u32 %v2775, %v2778
        %v2780 = vsel %vm2727, %v2770, %v2779
        %v2782 = vshrl.u32 %v2549, 16
        %v2784 = vrot.slane %v2782, 2
        %v2785 = vshll.u32 %v2549, 16
        %v2787 = vrot.slane %v2785, 3
        %v2788 = vor.u32 %v2784, %v2787
        %v2789 = vsel %vm2727, %v2779, %v2788
        %v2791 = vshrl.u32 %v2550, 16
        %v2793 = vrot.slane %v2791, 2
        %v2794 = vshll.u32 %v2550, 16
        %v2796 = vrot.slane %v2794, 3
        %v2797 = vor.u32 %v2793, %v2796
        %v2798 = vsel %vm2727, %v2788, %v2797
        %v2800 = vshrl.u32 %v2726, 16
        %v2802 = vrot.slane %v2800, 2
        %v2803 = vshll.u32 %v2726, 16
        %v2805 = vrot.slane %v2803, 3
        %v2806 = vor.u32 %v2802, %v2805
        %v2807 = vsel %vm2727, %v2797, %v2806
        %v2812 = vunpack.c.l.b16 %v2720
        %v2813 = vunpack.c.l.b16 %v2721
        %v2814 = vunpack.c.l.b16 %v2722
        %v2815 = vunpack.c.l.b16 %v2723
        %v2816 = vpack.c.b16 %v2813, %v2812
        %v2817 = vpack.c.b16 %v2815, %v2814
        %v2821 = vsel %vm556, %v2744, 0
        %v2824 = vsel %vm556, %v2753, 0
        %v2827 = vsel %vm556, %v2762, 0
        %v2830 = vsel %vm556, %v2771, 0
        %v2833 = vsel %vm556, %v2780, 0
        %v2836 = vsel %vm556, %v2789, 0
        %v2839 = vsel %vm556, %v2798, 0
        %v2842 = vsel %vm556, %v2807, 0
        %2844 = vmatprep.subr.bf16.mxu0 0
        %2845 = vmatpush1.bf16.msra.mxu0 %v2816
        %2846 = vmatprep.subr.bf16.mxu0 0
        %2847 = vmatpush1.bf16.msra.mxu0 %v2817
        %2848 = vmatprep.subr.bf16.mxu0 0
        %2849 = vmatpush1.bf16.msra.mxu0 0
        %2850 = vmatprep.subr.bf16.mxu0 0
        %2851 = vmatpush1.bf16.msra.mxu0 0
        %2852 = vmatprep.subr.bf16.mxu0 0
        %2853 = vmatpush1.bf16.msra.mxu0 0
        %2854 = vmatprep.subr.bf16.mxu0 0
        %2855 = vmatpush1.bf16.msra.mxu0 0
        %2856 = vmatprep.subr.bf16.mxu0 0
        %2857 = vmatpush1.bf16.msra.mxu0 0
        %2858 = vmatprep.subr.bf16.mxu0 0
        %2859 = vmatpush1.bf16.msra.mxu0 0
        %2860 = vmatprep.subr.bf16.mxu0 0
        %2861 = vmatpush1.bf16.msra.mxu0 0
        %2862 = vmatprep.subr.bf16.mxu0 0
        %2863 = vmatpush1.bf16.msra.mxu0 0
        %2864 = vmatprep.subr.bf16.mxu0 0
        %2865 = vmatpush1.bf16.msra.mxu0 0
        %2866 = vmatprep.subr.bf16.mxu0 0
        %2867 = vmatpush1.bf16.msra.mxu0 0
        %2868 = vmatprep.subr.bf16.mxu0 0
        %2869 = vmatpush1.bf16.msra.mxu0 0
        %2870 = vmatprep.subr.bf16.mxu0 0
        %2871 = vmatpush1.bf16.msra.mxu0 0
        %2872 = vmatprep.subr.bf16.mxu0 0
        %2873 = vmatpush1.bf16.msra.mxu0 0
        %2874 = vmatprep.subr.bf16.mxu0 0
        %2875 = vmatpush1.bf16.msra.mxu0 0
        %2876 = vmatprep.mubr.bf16.mxu0 0
        %2877 = vmatmul.mubr.bf16.gmra.mrb[0].mxu0 %v2821
        %v2878 = vpop.f32.mrb[0].mxu0
        %v2879 = vadd.f32 0.0, %v2878
        %v2880 = vpop.f32.mrb[0].mxu0
        %v2881 = vpop.f32.mrb[0].mxu0
        %v2882 = vadd.f32 0.0, %v2881
        %v2883 = vpop.f32.mrb[0].mxu0
        %2884 = vmatprep.mubr.bf16.mxu0 0
        %2885 = vmatmul.mubr.bf16.gmra.mrb[0].mxu0 %v2824
        %v2886 = vpop.f32.mrb[0].mxu0
        %v2887 = vadd.f32 0.0, %v2886
        %v2888 = vpop.f32.mrb[0].mxu0
        %v2889 = vpop.f32.mrb[0].mxu0
        %v2890 = vadd.f32 0.0, %v2889
        %v2891 = vpop.f32.mrb[0].mxu0
        %2892 = vmatprep.mubr.bf16.mxu0 0
        %2893 = vmatmul.mubr.bf16.gmra.mrb[0].mxu0 %v2827
        %v2894 = vpop.f32.mrb[0].mxu0
        %v2895 = vadd.f32 0.0, %v2894
        %v2896 = vpop.f32.mrb[0].mxu0
        %v2897 = vpop.f32.mrb[0].mxu0
        %v2898 = vadd.f32 0.0, %v2897
        %v2899 = vpop.f32.mrb[0].mxu0
        %2900 = vmatprep.mubr.bf16.mxu0 0
        %2901 = vmatmul.mubr.bf16.gmra.mrb[0].mxu0 %v2830
        %v2902 = vpop.f32.mrb[0].mxu0
        %v2903 = vadd.f32 0.0, %v2902
        %v2904 = vpop.f32.mrb[0].mxu0
        %v2905 = vpop.f32.mrb[0].mxu0
        %v2906 = vadd.f32 0.0, %v2905
        %v2907 = vpop.f32.mrb[0].mxu0
        %2908 = vmatprep.mubr.bf16.mxu0 0
        %2909 = vmatmul.mubr.bf16.gmra.mrb[0].mxu0 %v2833
        %v2910 = vpop.f32.mrb[0].mxu0
        %v2911 = vadd.f32 0.0, %v2910
        %v2912 = vpop.f32.mrb[0].mxu0
        %v2913 = vpop.f32.mrb[0].mxu0
        %v2914 = vadd.f32 0.0, %v2913
        %v2915 = vpop.f32.mrb[0].mxu0
        %2916 = vmatprep.mubr.bf16.mxu0 0
        %2917 = vmatmul.mubr.bf16.gmra.mrb[0].mxu0 %v2836
        %v2918 = vpop.f32.mrb[0].mxu0
        %v2919 = vadd.f32 0.0, %v2918
        %v2920 = vpop.f32.mrb[0].mxu0
        %v2921 = vpop.f32.mrb[0].mxu0
        %v2922 = vadd.f32 0.0, %v2921
        %v2923 = vpop.f32.mrb[0].mxu0
        %2924 = vmatprep.mubr.bf16.mxu0 0
        %2925 = vmatmul.mubr.bf16.gmra.mrb[0].mxu0 %v2839
        %v2926 = vpop.f32.mrb[0].mxu0
        %v2927 = vadd.f32 0.0, %v2926
        %v2928 = vpop.f32.mrb[0].mxu0
        %v2929 = vpop.f32.mrb[0].mxu0
        %v2930 = vadd.f32 0.0, %v2929
        %v2931 = vpop.f32.mrb[0].mxu0
        %2932 = vmatprep.mubr.bf16.mxu0 0
        %2933 = vmatmul.mubr.bf16.gmra.mrb[0].mxu0 %v2842
        %v2934 = vpop.f32.mrb[0].mxu0
        %v2935 = vadd.f32 0.0, %v2934
        %v2936 = vpop.f32.mrb[0].mxu0
        %v2937 = vpop.f32.mrb[0].mxu0
        %v2938 = vadd.f32 0.0, %v2937
        %v2939 = vpop.f32.mrb[0].mxu0
        %2940 = vdwg.mxu0
        %v2941 = vadd.f32 %v2702, %v2879
        %v2942 = vadd.f32 %v2703, %v2882
        %v2943 = vadd.f32 %v2704, %v2887
        %v2944 = vadd.f32 %v2705, %v2890
        %v2945 = vadd.f32 %v2706, %v2895
        %v2946 = vadd.f32 %v2707, %v2898
        %v2947 = vadd.f32 %v2708, %v2903
        %v2948 = vadd.f32 %v2709, %v2906
        %v2949 = vadd.f32 %v2710, %v2911
        %v2950 = vadd.f32 %v2711, %v2914
        %v2951 = vadd.f32 %v2712, %v2919
        %v2952 = vadd.f32 %v2713, %v2922
        %v2953 = vadd.f32 %v2714, %v2927
        %v2954 = vadd.f32 %v2715, %v2930
        %v2955 = vadd.f32 %v2716, %v2935
        %v2956 = vadd.f32 %v2717, %v2938
        %v2957 = vld [vmem:[#allocation2 + $0x10] sm:$0x8]
        %s2958 = scalar_lea.vmem %s3, 128
        %v2959 = vld [vmem:[%s2958] sm:$0xf]
        %v2960 = vld [vmem:[%s2958 + $0x4] sm:$0xf]
        %v2961 = vld [vmem:[%s2958 + $0x8] sm:$0xf]
        %v2962 = vld [vmem:[%s2958 + $0xc] sm:$0xf]
        %v2964 = vunpack.c.l.b16 %v2957
        %v2965 = vpack.c.b16 %v2527, %v2964
        %vm2966 = vcmask 1044480
        %v2967 = vrot.slane %v2965, 3
        %v2968 = vrot.slane %v2544, 3
        %v2969 = vsel %vm2966, %v2967, %v2968
        %v2970 = vrot.slane %v2545, 3
        %v2971 = vsel %vm2966, %v2968, %v2970
        %v2972 = vrot.slane %v2546, 3
        %v2973 = vsel %vm2966, %v2970, %v2972
        %v2974 = vrot.slane %v2547, 3
        %v2975 = vsel %vm2966, %v2972, %v2974
        %v2976 = vrot.slane %v2548, 3
        %v2977 = vsel %vm2966, %v2974, %v2976
        %v2978 = vrot.slane %v2549, 3
        %v2979 = vsel %vm2966, %v2976, %v2978
        %v2980 = vrot.slane %v2550, 3
        %v2981 = vsel %vm2966, %v2978, %v2980
        %v2982 = vrot.slane %v2726, 3
        %v2983 = vsel %vm2966, %v2980, %v2982
        %v2988 = vunpack.c.l.b16 %v2959
        %v2989 = vunpack.c.l.b16 %v2960
        %v2990 = vunpack.c.l.b16 %v2961
        %v2991 = vunpack.c.l.b16 %v2962
        %v2992 = vpack.c.b16 %v2989, %v2988
        %v2993 = vpack.c.b16 %v2991, %v2990
        %v2997 = vsel %vm556, %v2969, 0
        %v3000 = vsel %vm556, %v2971, 0
        %v3003 = vsel %vm556, %v2973, 0
        %v3006 = vsel %vm556, %v2975, 0
        %v3009 = vsel %vm556, %v2977, 0
        %v3012 = vsel %vm556, %v2979, 0
        %v3015 = vsel %vm556, %v2981, 0
        %v3018 = vsel %vm556, %v2983, 0
        %3020 = vmatprep.subr.bf16.mxu0 0
        %3021 = vmatpush1.bf16.msra.mxu0 %v2992
        %3022 = vmatprep.subr.bf16.mxu0 0
        %3023 = vmatpush1.bf16.msra.mxu0 %v2993
        %3024 = vmatprep.subr.bf16.mxu0 0
        %3025 = vmatpush1.bf16.msra.mxu0 0
        %3026 = vmatprep.subr.bf16.mxu0 0
        %3027 = vmatpush1.bf16.msra.mxu0 0
        %3028 = vmatprep.subr.bf16.mxu0 0
        %3029 = vmatpush1.bf16.msra.mxu0 0
        %3030 = vmatprep.subr.bf16.mxu0 0
        %3031 = vmatpush1.bf16.msra.mxu0 0
        %3032 = vmatprep.subr.bf16.mxu0 0
        %3033 = vmatpush1.bf16.msra.mxu0 0
        %3034 = vmatprep.subr.bf16.mxu0 0
        %3035 = vmatpush1.bf16.msra.mxu0 0
        %3036 = vmatprep.subr.bf16.mxu0 0
        %3037 = vmatpush1.bf16.msra.mxu0 0
        %3038 = vmatprep.subr.bf16.mxu0 0
        %3039 = vmatpush1.bf16.msra.mxu0 0
        %3040 = vmatprep.subr.bf16.mxu0 0
        %3041 = vmatpush1.bf16.msra.mxu0 0
        %3042 = vmatprep.subr.bf16.mxu0 0
        %3043 = vmatpush1.bf16.msra.mxu0 0
        %3044 = vmatprep.subr.bf16.mxu0 0
        %3045 = vmatpush1.bf16.msra.mxu0 0
        %3046 = vmatprep.subr.bf16.mxu0 0
        %3047 = vmatpush1.bf16.msra.mxu0 0
        %3048 = vmatprep.subr.bf16.mxu0 0
        %3049 = vmatpush1.bf16.msra.mxu0 0
        %3050 = vmatprep.subr.bf16.mxu0 0
        %3051 = vmatpush1.bf16.msra.mxu0 0
        %3052 = vmatprep.mubr.bf16.mxu0 0
        %3053 = vmatmul.mubr.bf16.gmra.mrb[0].mxu0 %v2997
        %v3054 = vpop.f32.mrb[0].mxu0
        %v3055 = vadd.f32 0.0, %v3054
        %v3056 = vpop.f32.mrb[0].mxu0
        %v3057 = vpop.f32.mrb[0].mxu0
        %v3058 = vadd.f32 0.0, %v3057
        %v3059 = vpop.f32.mrb[0].mxu0
        %3060 = vmatprep.mubr.bf16.mxu0 0
        %3061 = vmatmul.mubr.bf16.gmra.mrb[0].mxu0 %v3000
        %v3062 = vpop.f32.mrb[0].mxu0
        %v3063 = vadd.f32 0.0, %v3062
        %v3064 = vpop.f32.mrb[0].mxu0
        %v3065 = vpop.f32.mrb[0].mxu0
        %v3066 = vadd.f32 0.0, %v3065
        %v3067 = vpop.f32.mrb[0].mxu0
        %3068 = vmatprep.mubr.bf16.mxu0 0
        %3069 = vmatmul.mubr.bf16.gmra.mrb[0].mxu0 %v3003
        %v3070 = vpop.f32.mrb[0].mxu0
        %v3071 = vadd.f32 0.0, %v3070
        %v3072 = vpop.f32.mrb[0].mxu0
        %v3073 = vpop.f32.mrb[0].mxu0
        %v3074 = vadd.f32 0.0, %v3073
        %v3075 = vpop.f32.mrb[0].mxu0
        %3076 = vmatprep.mubr.bf16.mxu0 0
        %3077 = vmatmul.mubr.bf16.gmra.mrb[0].mxu0 %v3006
        %v3078 = vpop.f32.mrb[0].mxu0
        %v3079 = vadd.f32 0.0, %v3078
        %v3080 = vpop.f32.mrb[0].mxu0
        %v3081 = vpop.f32.mrb[0].mxu0
        %v3082 = vadd.f32 0.0, %v3081
        %v3083 = vpop.f32.mrb[0].mxu0
        %3084 = vmatprep.mubr.bf16.mxu0 0
        %3085 = vmatmul.mubr.bf16.gmra.mrb[0].mxu0 %v3009
        %v3086 = vpop.f32.mrb[0].mxu0
        %v3087 = vadd.f32 0.0, %v3086
        %v3088 = vpop.f32.mrb[0].mxu0
        %v3089 = vpop.f32.mrb[0].mxu0
        %v3090 = vadd.f32 0.0, %v3089
        %v3091 = vpop.f32.mrb[0].mxu0
        %3092 = vmatprep.mubr.bf16.mxu0 0
        %3093 = vmatmul.mubr.bf16.gmra.mrb[0].mxu0 %v3012
        %v3094 = vpop.f32.mrb[0].mxu0
        %v3095 = vadd.f32 0.0, %v3094
        %v3096 = vpop.f32.mrb[0].mxu0
        %v3097 = vpop.f32.mrb[0].mxu0
        %v3098 = vadd.f32 0.0, %v3097
        %v3099 = vpop.f32.mrb[0].mxu0
        %3100 = vmatprep.mubr.bf16.mxu0 0
        %3101 = vmatmul.mubr.bf16.gmra.mrb[0].mxu0 %v3015
        %v3102 = vpop.f32.mrb[0].mxu0
        %v3103 = vadd.f32 0.0, %v3102
        %v3104 = vpop.f32.mrb[0].mxu0
        %v3105 = vpop.f32.mrb[0].mxu0
        %v3106 = vadd.f32 0.0, %v3105
        %v3107 = vpop.f32.mrb[0].mxu0
        %3108 = vmatprep.mubr.bf16.mxu0 0
        %3109 = vmatmul.mubr.bf16.gmra.mrb[0].mxu0 %v3018
        %v3110 = vpop.f32.mrb[0].mxu0
        %v3111 = vadd.f32 0.0, %v3110
        %v3112 = vpop.f32.mrb[0].mxu0
        %v3113 = vpop.f32.mrb[0].mxu0
        %v3114 = vadd.f32 0.0, %v3113
        %v3115 = vpop.f32.mrb[0].mxu0
        %3116 = vdwg.mxu0
        %v3117 = vadd.f32 %v2941, %v3055
        %v3118 = vadd.f32 %v2942, %v3058
        %v3119 = vadd.f32 %v2943, %v3063
        %v3120 = vadd.f32 %v2944, %v3066
        %v3121 = vadd.f32 %v2945, %v3071
        %v3122 = vadd.f32 %v2946, %v3074
        %v3123 = vadd.f32 %v2947, %v3079
        %v3124 = vadd.f32 %v2948, %v3082
        %v3125 = vadd.f32 %v2949, %v3087
        %v3126 = vadd.f32 %v2950, %v3090
        %v3127 = vadd.f32 %v2951, %v3095
        %v3128 = vadd.f32 %v2952, %v3098
        %v3129 = vadd.f32 %v2953, %v3103
        %v3130 = vadd.f32 %v2954, %v3106
        %v3131 = vadd.f32 %v2955, %v3111
        %v3132 = vadd.f32 %v2956, %v3114
        %v3133 = vld [vmem:[%s4] sm:$0x1]
        %v3135 = vlaneseq
        %v3136 = vshrl.u32 %v3135, 7
        %v3137 = vsub.s32 0, %v3136
        %v3138 = vrot.slane %v3133, %v3137
        %v3140 = vadd.f32 %v3117, %v3138
        %v3141 = vadd.f32 %v3118, %v3138
        %v3142 = vadd.f32 %v3119, %v3138
        %v3143 = vadd.f32 %v3120, %v3138
        %v3144 = vadd.f32 %v3121, %v3138
        %v3145 = vadd.f32 %v3122, %v3138
        %v3146 = vadd.f32 %v3123, %v3138
        %v3147 = vadd.f32 %v3124, %v3138
        %v3148 = vadd.f32 %v3125, %v3138
        %v3149 = vadd.f32 %v3126, %v3138
        %v3150 = vadd.f32 %v3127, %v3138
        %v3151 = vadd.f32 %v3128, %v3138
        %v3152 = vadd.f32 %v3129, %v3138
        %v3153 = vadd.f32 %v3130, %v3138
        %v3154 = vadd.f32 %v3131, %v3138
        %v3155 = vadd.f32 %v3132, %v3138
        %v3156 = vmax.f32 %v3140, 0.0
        %v3157 = vmax.f32 %v3141, 0.0
        %v3158 = vmax.f32 %v3142, 0.0
        %v3159 = vmax.f32 %v3143, 0.0
        %v3160 = vmax.f32 %v3144, 0.0
        %v3161 = vmax.f32 %v3145, 0.0
        %v3162 = vmax.f32 %v3146, 0.0
        %v3163 = vmax.f32 %v3147, 0.0
        %v3164 = vmax.f32 %v3148, 0.0
        %v3165 = vmax.f32 %v3149, 0.0
        %v3166 = vmax.f32 %v3150, 0.0
        %v3167 = vmax.f32 %v3151, 0.0
        %v3168 = vmax.f32 %v3152, 0.0
        %v3169 = vmax.f32 %v3153, 0.0
        %v3170 = vmax.f32 %v3154, 0.0
        %v3171 = vmax.f32 %v3155, 0.0
        %3172 = vst.msk [vmem:[#allocation3] sm:$0xff] %vm556, %v3156
        %3173 = vst.msk [vmem:[#allocation3 + $0x8] sm:$0xff] %vm556, %v3157
        %3174 = vst.msk [vmem:[#allocation3 + $0x10] sm:$0xff] %vm556, %v3158
        %3175 = vst.msk [vmem:[#allocation3 + $0x18] sm:$0xff] %vm556, %v3159
        %3176 = vst.msk [vmem:[#allocation3 + $0x20] sm:$0xff] %vm556, %v3160
        %3177 = vst.msk [vmem:[#allocation3 + $0x28] sm:$0xff] %vm556, %v3161
        %3178 = vst.msk [vmem:[#allocation3 + $0x30] sm:$0xff] %vm556, %v3162
        %3179 = vst.msk [vmem:[#allocation3 + $0x38] sm:$0xff] %vm556, %v3163
        %3180 = vst.msk [vmem:[#allocation3 + $0x40] sm:$0xff] %vm556, %v3164
        %3181 = vst.msk [vmem:[#allocation3 + $0x48] sm:$0xff] %vm556, %v3165
        %3182 = vst.msk [vmem:[#allocation3 + $0x50] sm:$0xff] %vm556, %v3166
        %3183 = vst.msk [vmem:[#allocation3 + $0x58] sm:$0xff] %vm556, %v3167
        %3184 = vst.msk [vmem:[#allocation3 + $0x60] sm:$0xff] %vm556, %v3168
        %3185 = vst.msk [vmem:[#allocation3 + $0x68] sm:$0xff] %vm556, %v3169
        %3186 = vst.msk [vmem:[#allocation3 + $0x70] sm:$0xff] %vm556, %v3170
        %3187 = vst.msk [vmem:[#allocation3 + $0x78] sm:$0xff] %vm556, %v3171
        %v3188 = vld [vmem:[#allocation2 + $0x40] sm:$0xf]
        %v3189 = vld [vmem:[#allocation2 + $0x44] sm:$0xf]
        %v3190 = vld [vmem:[#allocation2 + $0x48] sm:$0xf]
        %v3191 = vld [vmem:[#allocation2 + $0x4c] sm:$0xf]
        %v3192 = vld [vmem:[#allocation2 + $0x50] sm:$0xf]
        %v3193 = vld [vmem:[#allocation2 + $0x54] sm:$0xf]
        %v3194 = vld [vmem:[#allocation2 + $0x58] sm:$0xf]
        %v3195 = vld [vmem:[#allocation2 + $0x5c] sm:$0xf]
        %v3196 = vld [vmem:[#allocation2 + $0x60] sm:$0xf]
        %v3197 = vld [vmem:[#allocation2 + $0x64] sm:$0xf]
        %v3198 = vld [vmem:[#allocation2 + $0x68] sm:$0xf]
        %v3199 = vld [vmem:[#allocation2 + $0x6c] sm:$0xf]
        %v3200 = vld [vmem:[#allocation2 + $0x70] sm:$0xf]
        %v3201 = vld [vmem:[#allocation2 + $0x74] sm:$0xf]
        %v3202 = vld [vmem:[#allocation2 + $0x78] sm:$0xf]
        %v3203 = vld [vmem:[#allocation2 + $0x7c] sm:$0xf]
        %v3204 = vld [vmem:[%s3] sm:$0xf]
        %v3205 = vld [vmem:[%s3 + $0x4] sm:$0xf]
        %v3206 = vld [vmem:[%s3 + $0x8] sm:$0xf]
        %v3207 = vld [vmem:[%s3 + $0xc] sm:$0xf]
        %v3208 = vld [vmem:[#allocation2 + $0x80] sm:$0x1]
        %v3209 = vld [vmem:[%s1290] sm:$0xf]
        %v3210 = vld [vmem:[%s1290 + $0x4] sm:$0xf]
        %v3211 = vld [vmem:[%s1290 + $0x8] sm:$0xf]
        %v3212 = vld [vmem:[%s1290 + $0xc] sm:$0xf]
        %v3230 = vunpack.c.l.b16 %v3188
        %v3231 = vunpack.c.l.b16 %v3189
        %v3232 = vunpack.c.l.b16 %v3190
        %v3233 = vunpack.c.l.b16 %v3191
        %v3234 = vunpack.c.l.b16 %v3192
        %v3235 = vunpack.c.l.b16 %v3193
        %v3236 = vunpack.c.l.b16 %v3194
        %v3237 = vunpack.c.l.b16 %v3195
        %v3238 = vunpack.c.l.b16 %v3196
        %v3239 = vunpack.c.l.b16 %v3197
        %v3240 = vunpack.c.l.b16 %v3198
        %v3241 = vunpack.c.l.b16 %v3199
        %v3242 = vunpack.c.l.b16 %v3200
        %v3243 = vunpack.c.l.b16 %v3201
        %v3244 = vunpack.c.l.b16 %v3202
        %v3245 = vunpack.c.l.b16 %v3203
        %v3246 = vunpack.c.l.b16 %v3208
        %v3247 = vpack.c.b16 %v3231, %v3230
        %v3248 = vpack.c.b16 %v3233, %v3232
        %v3249 = vpack.c.b16 %v3235, %v3234
        %v3250 = vpack.c.b16 %v3237, %v3236
        %v3251 = vpack.c.b16 %v3239, %v3238
        %v3252 = vpack.c.b16 %v3241, %v3240
        %v3253 = vpack.c.b16 %v3243, %v3242
        %v3254 = vpack.c.b16 %v3245, %v3244
        %v3255 = vpack.c.b16 %v3246, %v3246
        %v3257 = vshrl.u32 %v3247, 16
        %v3259 = vshll.u32 %v3247, 16
        %v3261 = vrot.slane %v3259, 1
        %v3262 = vor.u32 %v3257, %v3261
        %v3264 = vshll.u32 %v3248, 16
        %v3266 = vrot.slane %v3264, 1
        %v3267 = vsel %vm1338, %v3262, %v3266
        %v3268 = vshrl.u32 %v3248, 16
        %v3270 = vor.u32 %v3268, %v3266
        %v3272 = vshll.u32 %v3249, 16
        %v3274 = vrot.slane %v3272, 1
        %v3275 = vsel %vm1338, %v3270, %v3274
        %v3276 = vshrl.u32 %v3249, 16
        %v3278 = vor.u32 %v3276, %v3274
        %v3280 = vshll.u32 %v3250, 16
        %v3282 = vrot.slane %v3280, 1
        %v3283 = vsel %vm1338, %v3278, %v3282
        %v3284 = vshrl.u32 %v3250, 16
        %v3286 = vor.u32 %v3284, %v3282
        %v3288 = vshll.u32 %v3251, 16
        %v3290 = vrot.slane %v3288, 1
        %v3291 = vsel %vm1338, %v3286, %v3290
        %v3292 = vshrl.u32 %v3251, 16
        %v3294 = vor.u32 %v3292, %v3290
        %v3296 = vshll.u32 %v3252, 16
        %v3298 = vrot.slane %v3296, 1
        %v3299 = vsel %vm1338, %v3294, %v3298
        %v3300 = vshrl.u32 %v3252, 16
        %v3302 = vor.u32 %v3300, %v3298
        %v3304 = vshll.u32 %v3253, 16
        %v3306 = vrot.slane %v3304, 1
        %v3307 = vsel %vm1338, %v3302, %v3306
        %v3308 = vshrl.u32 %v3253, 16
        %v3310 = vor.u32 %v3308, %v3306
        %v3312 = vshll.u32 %v3254, 16
        %v3314 = vrot.slane %v3312, 1
        %v3315 = vsel %vm1338, %v3310, %v3314
        %v3316 = vshrl.u32 %v3254, 16
        %v3318 = vor.u32 %v3316, %v3314
        %v3320 = vshll.u32 %v3255, 16
        %v3322 = vrot.slane %v3320, 1
        %v3323 = vsel %vm1338, %v3318, %v3322
        %v3328 = vunpack.c.l.b16 %v3209
        %v3329 = vunpack.c.l.b16 %v3210
        %v3330 = vunpack.c.l.b16 %v3211
        %v3331 = vunpack.c.l.b16 %v3212
        %v3332 = vpack.c.b16 %v3329, %v3328
        %v3333 = vpack.c.b16 %v3331, %v3330
        %v3337 = vsel %vm556, %v3267, 0
        %v3340 = vsel %vm556, %v3275, 0
        %v3343 = vsel %vm556, %v3283, 0
        %v3346 = vsel %vm556, %v3291, 0
        %v3349 = vsel %vm556, %v3299, 0
        %v3352 = vsel %vm556, %v3307, 0
        %v3355 = vsel %vm556, %v3315, 0
        %v3358 = vsel %vm556, %v3323, 0
        %3360 = vmatprep.subr.bf16.mxu0 0
        %3361 = vmatpush1.bf16.msra.mxu0 %v3332
        %3362 = vmatprep.subr.bf16.mxu0 0
        %3363 = vmatpush1.bf16.msra.mxu0 %v3333
        %3364 = vmatprep.subr.bf16.mxu0 0
        %3365 = vmatpush1.bf16.msra.mxu0 0
        %3366 = vmatprep.subr.bf16.mxu0 0
        %3367 = vmatpush1.bf16.msra.mxu0 0
        %3368 = vmatprep.subr.bf16.mxu0 0
        %3369 = vmatpush1.bf16.msra.mxu0 0
        %3370 = vmatprep.subr.bf16.mxu0 0
        %3371 = vmatpush1.bf16.msra.mxu0 0
        %3372 = vmatprep.subr.bf16.mxu0 0
        %3373 = vmatpush1.bf16.msra.mxu0 0
        %3374 = vmatprep.subr.bf16.mxu0 0
        %3375 = vmatpush1.bf16.msra.mxu0 0
        %3376 = vmatprep.subr.bf16.mxu0 0
        %3377 = vmatpush1.bf16.msra.mxu0 0
        %3378 = vmatprep.subr.bf16.mxu0 0
        %3379 = vmatpush1.bf16.msra.mxu0 0
        %3380 = vmatprep.subr.bf16.mxu0 0
        %3381 = vmatpush1.bf16.msra.mxu0 0
        %3382 = vmatprep.subr.bf16.mxu0 0
        %3383 = vmatpush1.bf16.msra.mxu0 0
        %3384 = vmatprep.subr.bf16.mxu0 0
        %3385 = vmatpush1.bf16.msra.mxu0 0
        %3386 = vmatprep.subr.bf16.mxu0 0
        %3387 = vmatpush1.bf16.msra.mxu0 0
        %3388 = vmatprep.subr.bf16.mxu0 0
        %3389 = vmatpush1.bf16.msra.mxu0 0
        %3390 = vmatprep.subr.bf16.mxu0 0
        %3391 = vmatpush1.bf16.msra.mxu0 0
        %3392 = vmatprep.mubr.bf16.mxu0 0
        %3393 = vmatmul.mubr.bf16.gmra.mrb[0].mxu0 %v3337
        %v3394 = vpop.f32.mrb[0].mxu0
        %v3395 = vadd.f32 0.0, %v3394
        %v3396 = vpop.f32.mrb[0].mxu0
        %v3397 = vpop.f32.mrb[0].mxu0
        %v3398 = vadd.f32 0.0, %v3397
        %v3399 = vpop.f32.mrb[0].mxu0
        %3400 = vmatprep.mubr.bf16.mxu0 0
        %3401 = vmatmul.mubr.bf16.gmra.mrb[0].mxu0 %v3340
        %v3402 = vpop.f32.mrb[0].mxu0
        %v3403 = vadd.f32 0.0, %v3402
        %v3404 = vpop.f32.mrb[0].mxu0
        %v3405 = vpop.f32.mrb[0].mxu0
        %v3406 = vadd.f32 0.0, %v3405
        %v3407 = vpop.f32.mrb[0].mxu0
        %3408 = vmatprep.mubr.bf16.mxu0 0
        %3409 = vmatmul.mubr.bf16.gmra.mrb[0].mxu0 %v3343
        %v3410 = vpop.f32.mrb[0].mxu0
        %v3411 = vadd.f32 0.0, %v3410
        %v3412 = vpop.f32.mrb[0].mxu0
        %v3413 = vpop.f32.mrb[0].mxu0
        %v3414 = vadd.f32 0.0, %v3413
        %v3415 = vpop.f32.mrb[0].mxu0
        %3416 = vmatprep.mubr.bf16.mxu0 0
        %3417 = vmatmul.mubr.bf16.gmra.mrb[0].mxu0 %v3346
        %v3418 = vpop.f32.mrb[0].mxu0
        %v3419 = vadd.f32 0.0, %v3418
        %v3420 = vpop.f32.mrb[0].mxu0
        %v3421 = vpop.f32.mrb[0].mxu0
        %v3422 = vadd.f32 0.0, %v3421
        %v3423 = vpop.f32.mrb[0].mxu0
        %3424 = vmatprep.mubr.bf16.mxu0 0
        %3425 = vmatmul.mubr.bf16.gmra.mrb[0].mxu0 %v3349
        %v3426 = vpop.f32.mrb[0].mxu0
        %v3427 = vadd.f32 0.0, %v3426
        %v3428 = vpop.f32.mrb[0].mxu0
        %v3429 = vpop.f32.mrb[0].mxu0
        %v3430 = vadd.f32 0.0, %v3429
        %v3431 = vpop.f32.mrb[0].mxu0
        %3432 = vmatprep.mubr.bf16.mxu0 0
        %3433 = vmatmul.mubr.bf16.gmra.mrb[0].mxu0 %v3352
        %v3434 = vpop.f32.mrb[0].mxu0
        %v3435 = vadd.f32 0.0, %v3434
        %v3436 = vpop.f32.mrb[0].mxu0
        %v3437 = vpop.f32.mrb[0].mxu0
        %v3438 = vadd.f32 0.0, %v3437
        %v3439 = vpop.f32.mrb[0].mxu0
        %3440 = vmatprep.mubr.bf16.mxu0 0
        %3441 = vmatmul.mubr.bf16.gmra.mrb[0].mxu0 %v3355
        %v3442 = vpop.f32.mrb[0].mxu0
        %v3443 = vadd.f32 0.0, %v3442
        %v3444 = vpop.f32.mrb[0].mxu0
        %v3445 = vpop.f32.mrb[0].mxu0
        %v3446 = vadd.f32 0.0, %v3445
        %v3447 = vpop.f32.mrb[0].mxu0
        %3448 = vmatprep.mubr.bf16.mxu0 0
        %3449 = vmatmul.mubr.bf16.gmra.mrb[0].mxu0 %v3358
        %v3450 = vpop.f32.mrb[0].mxu0
        %v3451 = vadd.f32 0.0, %v3450
        %v3452 = vpop.f32.mrb[0].mxu0
        %v3453 = vpop.f32.mrb[0].mxu0
        %v3454 = vadd.f32 0.0, %v3453
        %v3455 = vpop.f32.mrb[0].mxu0
        %3456 = vdwg.mxu0
        %v3461 = vunpack.c.l.b16 %v3204
        %v3462 = vunpack.c.l.b16 %v3205
        %v3463 = vunpack.c.l.b16 %v3206
        %v3464 = vunpack.c.l.b16 %v3207
        %v3465 = vpack.c.b16 %v3462, %v3461
        %v3466 = vpack.c.b16 %v3464, %v3463
        %v3469 = vsel %vm556, %v3247, 0
        %v3471 = vsel %vm556, %v3248, 0
        %v3473 = vsel %vm556, %v3249, 0
        %v3475 = vsel %vm556, %v3250, 0
        %v3477 = vsel %vm556, %v3251, 0
        %v3479 = vsel %vm556, %v3252, 0
        %v3481 = vsel %vm556, %v3253, 0
        %v3483 = vsel %vm556, %v3254, 0
        %3485 = vmatprep.subr.bf16.mxu0 0
        %3486 = vmatpush1.bf16.msra.mxu0 %v3465
        %3487 = vmatprep.subr.bf16.mxu0 0
        %3488 = vmatpush1.bf16.msra.mxu0 %v3466
        %3489 = vmatprep.subr.bf16.mxu0 0
        %3490 = vmatpush1.bf16.msra.mxu0 0
        %3491 = vmatprep.subr.bf16.mxu0 0
        %3492 = vmatpush1.bf16.msra.mxu0 0
        %3493 = vmatprep.subr.bf16.mxu0 0
        %3494 = vmatpush1.bf16.msra.mxu0 0
        %3495 = vmatprep.subr.bf16.mxu0 0
        %3496 = vmatpush1.bf16.msra.mxu0 0
        %3497 = vmatprep.subr.bf16.mxu0 0
        %3498 = vmatpush1.bf16.msra.mxu0 0
        %3499 = vmatprep.subr.bf16.mxu0 0
        %3500 = vmatpush1.bf16.msra.mxu0 0
        %3501 = vmatprep.subr.bf16.mxu0 0
        %3502 = vmatpush1.bf16.msra.mxu0 0
        %3503 = vmatprep.subr.bf16.mxu0 0
        %3504 = vmatpush1.bf16.msra.mxu0 0
        %3505 = vmatprep.subr.bf16.mxu0 0
        %3506 = vmatpush1.bf16.msra.mxu0 0
        %3507 = vmatprep.subr.bf16.mxu0 0
        %3508 = vmatpush1.bf16.msra.mxu0 0
        %3509 = vmatprep.subr.bf16.mxu0 0
        %3510 = vmatpush1.bf16.msra.mxu0 0
        %3511 = vmatprep.subr.bf16.mxu0 0
        %3512 = vmatpush1.bf16.msra.mxu0 0
        %3513 = vmatprep.subr.bf16.mxu0 0
        %3514 = vmatpush1.bf16.msra.mxu0 0
        %3515 = vmatprep.subr.bf16.mxu0 0
        %3516 = vmatpush1.bf16.msra.mxu0 0
        %3517 = vmatprep.mubr.bf16.mxu0 0
        %3518 = vmatmul.mubr.bf16.gmra.mrb[0].mxu0 %v3469
        %v3519 = vpop.f32.mrb[0].mxu0
        %v3520 = vadd.f32 %v3395, %v3519
        %v3521 = vpop.f32.mrb[0].mxu0
        %v3522 = vpop.f32.mrb[0].mxu0
        %v3523 = vadd.f32 %v3398, %v3522
        %v3524 = vpop.f32.mrb[0].mxu0
        %3525 = vmatprep.mubr.bf16.mxu0 0
        %3526 = vmatmul.mubr.bf16.gmra.mrb[0].mxu0 %v3471
        %v3527 = vpop.f32.mrb[0].mxu0
        %v3528 = vadd.f32 %v3403, %v3527
        %v3529 = vpop.f32.mrb[0].mxu0
        %v3530 = vpop.f32.mrb[0].mxu0
        %v3531 = vadd.f32 %v3406, %v3530
        %v3532 = vpop.f32.mrb[0].mxu0
        %3533 = vmatprep.mubr.bf16.mxu0 0
        %3534 = vmatmul.mubr.bf16.gmra.mrb[0].mxu0 %v3473
        %v3535 = vpop.f32.mrb[0].mxu0
        %v3536 = vadd.f32 %v3411, %v3535
        %v3537 = vpop.f32.mrb[0].mxu0
        %v3538 = vpop.f32.mrb[0].mxu0
        %v3539 = vadd.f32 %v3414, %v3538
        %v3540 = vpop.f32.mrb[0].mxu0
        %3541 = vmatprep.mubr.bf16.mxu0 0
        %3542 = vmatmul.mubr.bf16.gmra.mrb[0].mxu0 %v3475
        %v3543 = vpop.f32.mrb[0].mxu0
        %v3544 = vadd.f32 %v3419, %v3543
        %v3545 = vpop.f32.mrb[0].mxu0
        %v3546 = vpop.f32.mrb[0].mxu0
        %v3547 = vadd.f32 %v3422, %v3546
        %v3548 = vpop.f32.mrb[0].mxu0
        %3549 = vmatprep.mubr.bf16.mxu0 0
        %3550 = vmatmul.mubr.bf16.gmra.mrb[0].mxu0 %v3477
        %v3551 = vpop.f32.mrb[0].mxu0
        %v3552 = vadd.f32 %v3427, %v3551
        %v3553 = vpop.f32.mrb[0].mxu0
        %v3554 = vpop.f32.mrb[0].mxu0
        %v3555 = vadd.f32 %v3430, %v3554
        %v3556 = vpop.f32.mrb[0].mxu0
        %3557 = vmatprep.mubr.bf16.mxu0 0
        %3558 = vmatmul.mubr.bf16.gmra.mrb[0].mxu0 %v3479
        %v3559 = vpop.f32.mrb[0].mxu0
        %v3560 = vadd.f32 %v3435, %v3559
        %v3561 = vpop.f32.mrb[0].mxu0
        %v3562 = vpop.f32.mrb[0].mxu0
        %v3563 = vadd.f32 %v3438, %v3562
        %v3564 = vpop.f32.mrb[0].mxu0
        %3565 = vmatprep.mubr.bf16.mxu0 0
        %3566 = vmatmul.mubr.bf16.gmra.mrb[0].mxu0 %v3481
        %v3567 = vpop.f32.mrb[0].mxu0
        %v3568 = vadd.f32 %v3443, %v3567
        %v3569 = vpop.f32.mrb[0].mxu0
        %v3570 = vpop.f32.mrb[0].mxu0
        %v3571 = vadd.f32 %v3446, %v3570
        %v3572 = vpop.f32.mrb[0].mxu0
        %3573 = vmatprep.mubr.bf16.mxu0 0
        %3574 = vmatmul.mubr.bf16.gmra.mrb[0].mxu0 %v3483
        %v3575 = vpop.f32.mrb[0].mxu0
        %v3576 = vadd.f32 %v3451, %v3575
        %v3577 = vpop.f32.mrb[0].mxu0
        %v3578 = vpop.f32.mrb[0].mxu0
        %v3579 = vadd.f32 %v3454, %v3578
        %v3580 = vpop.f32.mrb[0].mxu0
        %3581 = vdwg.mxu0
        %v3582 = vld [vmem:[#allocation2 + $0x40] sm:$0xe]
        %v3583 = vld [vmem:[%s1666] sm:$0xf]
        %v3584 = vld [vmem:[%s1666 + $0x4] sm:$0xf]
        %v3585 = vld [vmem:[%s1666 + $0x8] sm:$0xf]
        %v3586 = vld [vmem:[%s1666 + $0xc] sm:$0xf]
        %v3588 = vunpack.c.l.b16 %v3582
        %v3589 = vpack.c.b16 %v3231, %v3588
        %v3590 = vrot.slane %v3589, 1
        %v3591 = vrot.slane %v3248, 1
        %v3592 = vsel %vm1674, %v3590, %v3591
        %v3593 = vrot.slane %v3249, 1
        %v3594 = vsel %vm1674, %v3591, %v3593
        %v3595 = vrot.slane %v3250, 1
        %v3596 = vsel %vm1674, %v3593, %v3595
        %v3597 = vrot.slane %v3251, 1
        %v3598 = vsel %vm1674, %v3595, %v3597
        %v3599 = vrot.slane %v3252, 1
        %v3600 = vsel %vm1674, %v3597, %v3599
        %v3601 = vrot.slane %v3253, 1
        %v3602 = vsel %vm1674, %v3599, %v3601
        %v3603 = vrot.slane %v3254, 1
        %v3604 = vsel %vm1674, %v3601, %v3603
        %v3605 = vrot.slane %v3255, 1
        %v3606 = vsel %vm1674, %v3603, %v3605
        %v3611 = vunpack.c.l.b16 %v3583
        %v3612 = vunpack.c.l.b16 %v3584
        %v3613 = vunpack.c.l.b16 %v3585
        %v3614 = vunpack.c.l.b16 %v3586
        %v3615 = vpack.c.b16 %v3612, %v3611
        %v3616 = vpack.c.b16 %v3614, %v3613
        %v3620 = vsel %vm556, %v3592, 0
        %v3623 = vsel %vm556, %v3594, 0
        %v3626 = vsel %vm556, %v3596, 0
        %v3629 = vsel %vm556, %v3598, 0
        %v3632 = vsel %vm556, %v3600, 0
        %v3635 = vsel %vm556, %v3602, 0
        %v3638 = vsel %vm556, %v3604, 0
        %v3641 = vsel %vm556, %v3606, 0
        %3643 = vmatprep.subr.bf16.mxu0 0
        %3644 = vmatpush1.bf16.msra.mxu0 %v3615
        %3645 = vmatprep.subr.bf16.mxu0 0
        %3646 = vmatpush1.bf16.msra.mxu0 %v3616
        %3647 = vmatprep.subr.bf16.mxu0 0
        %3648 = vmatpush1.bf16.msra.mxu0 0
        %3649 = vmatprep.subr.bf16.mxu0 0
        %3650 = vmatpush1.bf16.msra.mxu0 0
        %3651 = vmatprep.subr.bf16.mxu0 0
        %3652 = vmatpush1.bf16.msra.mxu0 0
        %3653 = vmatprep.subr.bf16.mxu0 0
        %3654 = vmatpush1.bf16.msra.mxu0 0
        %3655 = vmatprep.subr.bf16.mxu0 0
        %3656 = vmatpush1.bf16.msra.mxu0 0
        %3657 = vmatprep.subr.bf16.mxu0 0
        %3658 = vmatpush1.bf16.msra.mxu0 0
        %3659 = vmatprep.subr.bf16.mxu0 0
        %3660 = vmatpush1.bf16.msra.mxu0 0
        %3661 = vmatprep.subr.bf16.mxu0 0
        %3662 = vmatpush1.bf16.msra.mxu0 0
        %3663 = vmatprep.subr.bf16.mxu0 0
        %3664 = vmatpush1.bf16.msra.mxu0 0
        %3665 = vmatprep.subr.bf16.mxu0 0
        %3666 = vmatpush1.bf16.msra.mxu0 0
        %3667 = vmatprep.subr.bf16.mxu0 0
        %3668 = vmatpush1.bf16.msra.mxu0 0
        %3669 = vmatprep.subr.bf16.mxu0 0
        %3670 = vmatpush1.bf16.msra.mxu0 0
        %3671 = vmatprep.subr.bf16.mxu0 0
        %3672 = vmatpush1.bf16.msra.mxu0 0
        %3673 = vmatprep.subr.bf16.mxu0 0
        %3674 = vmatpush1.bf16.msra.mxu0 0
        %3675 = vmatprep.mubr.bf16.mxu0 0
        %3676 = vmatmul.mubr.bf16.gmra.mrb[0].mxu0 %v3620
        %v3677 = vpop.f32.mrb[0].mxu0
        %v3678 = vadd.f32 0.0, %v3677
        %v3679 = vpop.f32.mrb[0].mxu0
        %v3680 = vpop.f32.mrb[0].mxu0
        %v3681 = vadd.f32 0.0, %v3680
        %v3682 = vpop.f32.mrb[0].mxu0
        %3683 = vmatprep.mubr.bf16.mxu0 0
        %3684 = vmatmul.mubr.bf16.gmra.mrb[0].mxu0 %v3623
        %v3685 = vpop.f32.mrb[0].mxu0
        %v3686 = vadd.f32 0.0, %v3685
        %v3687 = vpop.f32.mrb[0].mxu0
        %v3688 = vpop.f32.mrb[0].mxu0
        %v3689 = vadd.f32 0.0, %v3688
        %v3690 = vpop.f32.mrb[0].mxu0
        %3691 = vmatprep.mubr.bf16.mxu0 0
        %3692 = vmatmul.mubr.bf16.gmra.mrb[0].mxu0 %v3626
        %v3693 = vpop.f32.mrb[0].mxu0
        %v3694 = vadd.f32 0.0, %v3693
        %v3695 = vpop.f32.mrb[0].mxu0
        %v3696 = vpop.f32.mrb[0].mxu0
        %v3697 = vadd.f32 0.0, %v3696
        %v3698 = vpop.f32.mrb[0].mxu0
        %3699 = vmatprep.mubr.bf16.mxu0 0
        %3700 = vmatmul.mubr.bf16.gmra.mrb[0].mxu0 %v3629
        %v3701 = vpop.f32.mrb[0].mxu0
        %v3702 = vadd.f32 0.0, %v3701
        %v3703 = vpop.f32.mrb[0].mxu0
        %v3704 = vpop.f32.mrb[0].mxu0
        %v3705 = vadd.f32 0.0, %v3704
        %v3706 = vpop.f32.mrb[0].mxu0
        %3707 = vmatprep.mubr.bf16.mxu0 0
        %3708 = vmatmul.mubr.bf16.gmra.mrb[0].mxu0 %v3632
        %v3709 = vpop.f32.mrb[0].mxu0
        %v3710 = vadd.f32 0.0, %v3709
        %v3711 = vpop.f32.mrb[0].mxu0
        %v3712 = vpop.f32.mrb[0].mxu0
        %v3713 = vadd.f32 0.0, %v3712
        %v3714 = vpop.f32.mrb[0].mxu0
        %3715 = vmatprep.mubr.bf16.mxu0 0
        %3716 = vmatmul.mubr.bf16.gmra.mrb[0].mxu0 %v3635
        %v3717 = vpop.f32.mrb[0].mxu0
        %v3718 = vadd.f32 0.0, %v3717
        %v3719 = vpop.f32.mrb[0].mxu0
        %v3720 = vpop.f32.mrb[0].mxu0
        %v3721 = vadd.f32 0.0, %v3720
        %v3722 = vpop.f32.mrb[0].mxu0
        %3723 = vmatprep.mubr.bf16.mxu0 0
        %3724 = vmatmul.mubr.bf16.gmra.mrb[0].mxu0 %v3638
        %v3725 = vpop.f32.mrb[0].mxu0
        %v3726 = vadd.f32 0.0, %v3725
        %v3727 = vpop.f32.mrb[0].mxu0
        %v3728 = vpop.f32.mrb[0].mxu0
        %v3729 = vadd.f32 0.0, %v3728
        %v3730 = vpop.f32.mrb[0].mxu0
        %3731 = vmatprep.mubr.bf16.mxu0 0
        %3732 = vmatmul.mubr.bf16.gmra.mrb[0].mxu0 %v3641
        %v3733 = vpop.f32.mrb[0].mxu0
        %v3734 = vadd.f32 0.0, %v3733
        %v3735 = vpop.f32.mrb[0].mxu0
        %v3736 = vpop.f32.mrb[0].mxu0
        %v3737 = vadd.f32 0.0, %v3736
        %v3738 = vpop.f32.mrb[0].mxu0
        %3739 = vdwg.mxu0
        %v3740 = vadd.f32 %v3520, %v3678
        %v3741 = vadd.f32 %v3523, %v3681
        %v3742 = vadd.f32 %v3528, %v3686
        %v3743 = vadd.f32 %v3531, %v3689
        %v3744 = vadd.f32 %v3536, %v3694
        %v3745 = vadd.f32 %v3539, %v3697
        %v3746 = vadd.f32 %v3544, %v3702
        %v3747 = vadd.f32 %v3547, %v3705
        %v3748 = vadd.f32 %v3552, %v3710
        %v3749 = vadd.f32 %v3555, %v3713
        %v3750 = vadd.f32 %v3560, %v3718
        %v3751 = vadd.f32 %v3563, %v3721
        %v3752 = vadd.f32 %v3568, %v3726
        %v3753 = vadd.f32 %v3571, %v3729
        %v3754 = vadd.f32 %v3576, %v3734
        %v3755 = vadd.f32 %v3579, %v3737
        %v3756 = vld [vmem:[#allocation2 + $0x48] sm:$0xe]
        %v3757 = vld [vmem:[#allocation2 + $0x4c] sm:$0xf]
        %v3758 = vld [vmem:[#allocation2 + $0x50] sm:$0xf]
        %v3759 = vld [vmem:[#allocation2 + $0x54] sm:$0xf]
        %v3760 = vld [vmem:[#allocation2 + $0x58] sm:$0xf]
        %v3761 = vld [vmem:[#allocation2 + $0x5c] sm:$0xf]
        %v3762 = vld [vmem:[#allocation2 + $0x60] sm:$0xf]
        %v3763 = vld [vmem:[#allocation2 + $0x64] sm:$0xf]
        %v3764 = vld [vmem:[#allocation2 + $0x68] sm:$0xf]
        %v3765 = vld [vmem:[#allocation2 + $0x6c] sm:$0xf]
        %v3766 = vld [vmem:[#allocation2 + $0x70] sm:$0xf]
        %v3767 = vld [vmem:[#allocation2 + $0x74] sm:$0xf]
        %v3768 = vld [vmem:[#allocation2 + $0x78] sm:$0xf]
        %v3769 = vld [vmem:[#allocation2 + $0x7c] sm:$0xf]
        %v3770 = vld [vmem:[#allocation2 + $0x80] sm:$0xf]
        %v3771 = vld [vmem:[#allocation2 + $0x84] sm:$0xf]
        %v3772 = vld [vmem:[#allocation2 + $0x88] sm:$0x1]
        %v3773 = vld [vmem:[%s1858] sm:$0xf]
        %v3774 = vld [vmem:[%s1858 + $0x4] sm:$0xf]
        %v3775 = vld [vmem:[%s1858 + $0x8] sm:$0xf]
        %v3776 = vld [vmem:[%s1858 + $0xc] sm:$0xf]
        %v3794 = vunpack.c.l.b16 %v3756
        %v3795 = vunpack.c.l.b16 %v3757
        %v3796 = vunpack.c.l.b16 %v3758
        %v3797 = vunpack.c.l.b16 %v3759
        %v3798 = vunpack.c.l.b16 %v3760
        %v3799 = vunpack.c.l.b16 %v3761
        %v3800 = vunpack.c.l.b16 %v3762
        %v3801 = vunpack.c.l.b16 %v3763
        %v3802 = vunpack.c.l.b16 %v3764
        %v3803 = vunpack.c.l.b16 %v3765
        %v3804 = vunpack.c.l.b16 %v3766
        %v3805 = vunpack.c.l.b16 %v3767
        %v3806 = vunpack.c.l.b16 %v3768
        %v3807 = vunpack.c.l.b16 %v3769
        %v3808 = vunpack.c.l.b16 %v3770
        %v3809 = vunpack.c.l.b16 %v3771
        %v3810 = vunpack.c.l.b16 %v3772
        %v3811 = vpack.c.b16 %v3795, %v3794
        %v3812 = vpack.c.b16 %v3797, %v3796
        %v3813 = vpack.c.b16 %v3799, %v3798
        %v3814 = vpack.c.b16 %v3801, %v3800
        %v3815 = vpack.c.b16 %v3803, %v3802
        %v3816 = vpack.c.b16 %v3805, %v3804
        %v3817 = vpack.c.b16 %v3807, %v3806
        %v3818 = vpack.c.b16 %v3809, %v3808
        %v3819 = vpack.c.b16 %v3810, %v3810
        %v3820 = vrot.slane %v3811, 1
        %v3821 = vrot.slane %v3812, 1
        %v3822 = vsel %vm1674, %v3820, %v3821
        %v3823 = vrot.slane %v3813, 1
        %v3824 = vsel %vm1674, %v3821, %v3823
        %v3825 = vrot.slane %v3814, 1
        %v3826 = vsel %vm1674, %v3823, %v3825
        %v3827 = vrot.slane %v3815, 1
        %v3828 = vsel %vm1674, %v3825, %v3827
        %v3829 = vrot.slane %v3816, 1
        %v3830 = vsel %vm1674, %v3827, %v3829
        %v3831 = vrot.slane %v3817, 1
        %v3832 = vsel %vm1674, %v3829, %v3831
        %v3833 = vrot.slane %v3818, 1
        %v3834 = vsel %vm1674, %v3831, %v3833
        %v3835 = vrot.slane %v3819, 1
        %v3836 = vsel %vm1674, %v3833, %v3835
        %v3841 = vunpack.c.l.b16 %v3773
        %v3842 = vunpack.c.l.b16 %v3774
        %v3843 = vunpack.c.l.b16 %v3775
        %v3844 = vunpack.c.l.b16 %v3776
        %v3845 = vpack.c.b16 %v3842, %v3841
        %v3846 = vpack.c.b16 %v3844, %v3843
        %v3850 = vsel %vm556, %v3822, 0
        %v3853 = vsel %vm556, %v3824, 0
        %v3856 = vsel %vm556, %v3826, 0
        %v3859 = vsel %vm556, %v3828, 0
        %v3862 = vsel %vm556, %v3830, 0
        %v3865 = vsel %vm556, %v3832, 0
        %v3868 = vsel %vm556, %v3834, 0
        %v3871 = vsel %vm556, %v3836, 0
        %3873 = vmatprep.subr.bf16.mxu0 0
        %3874 = vmatpush1.bf16.msra.mxu0 %v3845
        %3875 = vmatprep.subr.bf16.mxu0 0
        %3876 = vmatpush1.bf16.msra.mxu0 %v3846
        %3877 = vmatprep.subr.bf16.mxu0 0
        %3878 = vmatpush1.bf16.msra.mxu0 0
        %3879 = vmatprep.subr.bf16.mxu0 0
        %3880 = vmatpush1.bf16.msra.mxu0 0
        %3881 = vmatprep.subr.bf16.mxu0 0
        %3882 = vmatpush1.bf16.msra.mxu0 0
        %3883 = vmatprep.subr.bf16.mxu0 0
        %3884 = vmatpush1.bf16.msra.mxu0 0
        %3885 = vmatprep.subr.bf16.mxu0 0
        %3886 = vmatpush1.bf16.msra.mxu0 0
        %3887 = vmatprep.subr.bf16.mxu0 0
        %3888 = vmatpush1.bf16.msra.mxu0 0
        %3889 = vmatprep.subr.bf16.mxu0 0
        %3890 = vmatpush1.bf16.msra.mxu0 0
        %3891 = vmatprep.subr.bf16.mxu0 0
        %3892 = vmatpush1.bf16.msra.mxu0 0
        %3893 = vmatprep.subr.bf16.mxu0 0
        %3894 = vmatpush1.bf16.msra.mxu0 0
        %3895 = vmatprep.subr.bf16.mxu0 0
        %3896 = vmatpush1.bf16.msra.mxu0 0
        %3897 = vmatprep.subr.bf16.mxu0 0
        %3898 = vmatpush1.bf16.msra.mxu0 0
        %3899 = vmatprep.subr.bf16.mxu0 0
        %3900 = vmatpush1.bf16.msra.mxu0 0
        %3901 = vmatprep.subr.bf16.mxu0 0
        %3902 = vmatpush1.bf16.msra.mxu0 0
        %3903 = vmatprep.subr.bf16.mxu0 0
        %3904 = vmatpush1.bf16.msra.mxu0 0
        %3905 = vmatprep.mubr.bf16.mxu0 0
        %3906 = vmatmul.mubr.bf16.gmra.mrb[0].mxu0 %v3850
        %v3907 = vpop.f32.mrb[0].mxu0
        %v3908 = vadd.f32 0.0, %v3907
        %v3909 = vpop.f32.mrb[0].mxu0
        %v3910 = vpop.f32.mrb[0].mxu0
        %v3911 = vadd.f32 0.0, %v3910
        %v3912 = vpop.f32.mrb[0].mxu0
        %3913 = vmatprep.mubr.bf16.mxu0 0
        %3914 = vmatmul.mubr.bf16.gmra.mrb[0].mxu0 %v3853
        %v3915 = vpop.f32.mrb[0].mxu0
        %v3916 = vadd.f32 0.0, %v3915
        %v3917 = vpop.f32.mrb[0].mxu0
        %v3918 = vpop.f32.mrb[0].mxu0
        %v3919 = vadd.f32 0.0, %v3918
        %v3920 = vpop.f32.mrb[0].mxu0
        %3921 = vmatprep.mubr.bf16.mxu0 0
        %3922 = vmatmul.mubr.bf16.gmra.mrb[0].mxu0 %v3856
        %v3923 = vpop.f32.mrb[0].mxu0
        %v3924 = vadd.f32 0.0, %v3923
        %v3925 = vpop.f32.mrb[0].mxu0
        %v3926 = vpop.f32.mrb[0].mxu0
        %v3927 = vadd.f32 0.0, %v3926
        %v3928 = vpop.f32.mrb[0].mxu0
        %3929 = vmatprep.mubr.bf16.mxu0 0
        %3930 = vmatmul.mubr.bf16.gmra.mrb[0].mxu0 %v3859
        %v3931 = vpop.f32.mrb[0].mxu0
        %v3932 = vadd.f32 0.0, %v3931
        %v3933 = vpop.f32.mrb[0].mxu0
        %v3934 = vpop.f32.mrb[0].mxu0
        %v3935 = vadd.f32 0.0, %v3934
        %v3936 = vpop.f32.mrb[0].mxu0
        %3937 = vmatprep.mubr.bf16.mxu0 0
        %3938 = vmatmul.mubr.bf16.gmra.mrb[0].mxu0 %v3862
        %v3939 = vpop.f32.mrb[0].mxu0
        %v3940 = vadd.f32 0.0, %v3939
        %v3941 = vpop.f32.mrb[0].mxu0
        %v3942 = vpop.f32.mrb[0].mxu0
        %v3943 = vadd.f32 0.0, %v3942
        %v3944 = vpop.f32.mrb[0].mxu0
        %3945 = vmatprep.mubr.bf16.mxu0 0
        %3946 = vmatmul.mubr.bf16.gmra.mrb[0].mxu0 %v3865
        %v3947 = vpop.f32.mrb[0].mxu0
        %v3948 = vadd.f32 0.0, %v3947
        %v3949 = vpop.f32.mrb[0].mxu0
        %v3950 = vpop.f32.mrb[0].mxu0
        %v3951 = vadd.f32 0.0, %v3950
        %v3952 = vpop.f32.mrb[0].mxu0
        %3953 = vmatprep.mubr.bf16.mxu0 0
        %3954 = vmatmul.mubr.bf16.gmra.mrb[0].mxu0 %v3868
        %v3955 = vpop.f32.mrb[0].mxu0
        %v3956 = vadd.f32 0.0, %v3955
        %v3957 = vpop.f32.mrb[0].mxu0
        %v3958 = vpop.f32.mrb[0].mxu0
        %v3959 = vadd.f32 0.0, %v3958
        %v3960 = vpop.f32.mrb[0].mxu0
        %3961 = vmatprep.mubr.bf16.mxu0 0
        %3962 = vmatmul.mubr.bf16.gmra.mrb[0].mxu0 %v3871
        %v3963 = vpop.f32.mrb[0].mxu0
        %v3964 = vadd.f32 0.0, %v3963
        %v3965 = vpop.f32.mrb[0].mxu0
        %v3966 = vpop.f32.mrb[0].mxu0
        %v3967 = vadd.f32 0.0, %v3966
        %v3968 = vpop.f32.mrb[0].mxu0
        %3969 = vdwg.mxu0
        %v3970 = vadd.f32 %v3740, %v3908
        %v3971 = vadd.f32 %v3741, %v3911
        %v3972 = vadd.f32 %v3742, %v3916
        %v3973 = vadd.f32 %v3743, %v3919
        %v3974 = vadd.f32 %v3744, %v3924
        %v3975 = vadd.f32 %v3745, %v3927
        %v3976 = vadd.f32 %v3746, %v3932
        %v3977 = vadd.f32 %v3747, %v3935
        %v3978 = vadd.f32 %v3748, %v3940
        %v3979 = vadd.f32 %v3749, %v3943
        %v3980 = vadd.f32 %v3750, %v3948
        %v3981 = vadd.f32 %v3751, %v3951
        %v3982 = vadd.f32 %v3752, %v3956
        %v3983 = vadd.f32 %v3753, %v3959
        %v3984 = vadd.f32 %v3754, %v3964
        %v3985 = vadd.f32 %v3755, %v3967
        %v3986 = vld [vmem:[#allocation2 + $0x88] sm:$0x3]
        %v3987 = vld [vmem:[%s2073] sm:$0xf]
        %v3988 = vld [vmem:[%s2073 + $0x4] sm:$0xf]
        %v3989 = vld [vmem:[%s2073 + $0x8] sm:$0xf]
        %v3990 = vld [vmem:[%s2073 + $0xc] sm:$0xf]
        %v3992 = vunpack.c.l.b16 %v3986
        %v3993 = vpack.c.b16 %v3992, %v3992
        %v3995 = vshrl.u32 %v3811, 16
        %v3997 = vrot.slane %v3995, 1
        %v3998 = vshll.u32 %v3811, 16
        %v4000 = vrot.slane %v3998, 2
        %v4001 = vor.u32 %v3997, %v4000
        %v4003 = vshrl.u32 %v3812, 16
        %v4005 = vrot.slane %v4003, 1
        %v4006 = vshll.u32 %v3812, 16
        %v4008 = vrot.slane %v4006, 2
        %v4009 = vor.u32 %v4005, %v4008
        %v4010 = vsel %vm2081, %v4001, %v4009
        %v4012 = vshrl.u32 %v3813, 16
        %v4014 = vrot.slane %v4012, 1
        %v4015 = vshll.u32 %v3813, 16
        %v4017 = vrot.slane %v4015, 2
        %v4018 = vor.u32 %v4014, %v4017
        %v4019 = vsel %vm2081, %v4009, %v4018
        %v4021 = vshrl.u32 %v3814, 16
        %v4023 = vrot.slane %v4021, 1
        %v4024 = vshll.u32 %v3814, 16
        %v4026 = vrot.slane %v4024, 2
        %v4027 = vor.u32 %v4023, %v4026
        %v4028 = vsel %vm2081, %v4018, %v4027
        %v4030 = vshrl.u32 %v3815, 16
        %v4032 = vrot.slane %v4030, 1
        %v4033 = vshll.u32 %v3815, 16
        %v4035 = vrot.slane %v4033, 2
        %v4036 = vor.u32 %v4032, %v4035
        %v4037 = vsel %vm2081, %v4027, %v4036
        %v4039 = vshrl.u32 %v3816, 16
        %v4041 = vrot.slane %v4039, 1
        %v4042 = vshll.u32 %v3816, 16
        %v4044 = vrot.slane %v4042, 2
        %v4045 = vor.u32 %v4041, %v4044
        %v4046 = vsel %vm2081, %v4036, %v4045
        %v4048 = vshrl.u32 %v3817, 16
        %v4050 = vrot.slane %v4048, 1
        %v4051 = vshll.u32 %v3817, 16
        %v4053 = vrot.slane %v4051, 2
        %v4054 = vor.u32 %v4050, %v4053
        %v4055 = vsel %vm2081, %v4045, %v4054
        %v4057 = vshrl.u32 %v3818, 16
        %v4059 = vrot.slane %v4057, 1
        %v4060 = vshll.u32 %v3818, 16
        %v4062 = vrot.slane %v4060, 2
        %v4063 = vor.u32 %v4059, %v4062
        %v4064 = vsel %vm2081, %v4054, %v4063
        %v4066 = vshrl.u32 %v3993, 16
        %v4068 = vrot.slane %v4066, 1
        %v4069 = vshll.u32 %v3993, 16
        %v4071 = vrot.slane %v4069, 2
        %v4072 = vor.u32 %v4068, %v4071
        %v4073 = vsel %vm2081, %v4063, %v4072
        %v4078 = vunpack.c.l.b16 %v3987
        %v4079 = vunpack.c.l.b16 %v3988
        %v4080 = vunpack.c.l.b16 %v3989
        %v4081 = vunpack.c.l.b16 %v3990
        %v4082 = vpack.c.b16 %v4079, %v4078
        %v4083 = vpack.c.b16 %v4081, %v4080
        %v4087 = vsel %vm556, %v4010, 0
        %v4090 = vsel %vm556, %v4019, 0
        %v4093 = vsel %vm556, %v4028, 0
        %v4096 = vsel %vm556, %v4037, 0
        %v4099 = vsel %vm556, %v4046, 0
        %v4102 = vsel %vm556, %v4055, 0
        %v4105 = vsel %vm556, %v4064, 0
        %v4108 = vsel %vm556, %v4073, 0
        %4110 = vmatprep.subr.bf16.mxu0 0
        %4111 = vmatpush1.bf16.msra.mxu0 %v4082
        %4112 = vmatprep.subr.bf16.mxu0 0
        %4113 = vmatpush1.bf16.msra.mxu0 %v4083
        %4114 = vmatprep.subr.bf16.mxu0 0
        %4115 = vmatpush1.bf16.msra.mxu0 0
        %4116 = vmatprep.subr.bf16.mxu0 0
        %4117 = vmatpush1.bf16.msra.mxu0 0
        %4118 = vmatprep.subr.bf16.mxu0 0
        %4119 = vmatpush1.bf16.msra.mxu0 0
        %4120 = vmatprep.subr.bf16.mxu0 0
        %4121 = vmatpush1.bf16.msra.mxu0 0
        %4122 = vmatprep.subr.bf16.mxu0 0
        %4123 = vmatpush1.bf16.msra.mxu0 0
        %4124 = vmatprep.subr.bf16.mxu0 0
        %4125 = vmatpush1.bf16.msra.mxu0 0
        %4126 = vmatprep.subr.bf16.mxu0 0
        %4127 = vmatpush1.bf16.msra.mxu0 0
        %4128 = vmatprep.subr.bf16.mxu0 0
        %4129 = vmatpush1.bf16.msra.mxu0 0
        %4130 = vmatprep.subr.bf16.mxu0 0
        %4131 = vmatpush1.bf16.msra.mxu0 0
        %4132 = vmatprep.subr.bf16.mxu0 0
        %4133 = vmatpush1.bf16.msra.mxu0 0
        %4134 = vmatprep.subr.bf16.mxu0 0
        %4135 = vmatpush1.bf16.msra.mxu0 0
        %4136 = vmatprep.subr.bf16.mxu0 0
        %4137 = vmatpush1.bf16.msra.mxu0 0
        %4138 = vmatprep.subr.bf16.mxu0 0
        %4139 = vmatpush1.bf16.msra.mxu0 0
        %4140 = vmatprep.subr.bf16.mxu0 0
        %4141 = vmatpush1.bf16.msra.mxu0 0
        %4142 = vmatprep.mubr.bf16.mxu0 0
        %4143 = vmatmul.mubr.bf16.gmra.mrb[0].mxu0 %v4087
        %v4144 = vpop.f32.mrb[0].mxu0
        %v4145 = vadd.f32 0.0, %v4144
        %v4146 = vpop.f32.mrb[0].mxu0
        %v4147 = vpop.f32.mrb[0].mxu0
        %v4148 = vadd.f32 0.0, %v4147
        %v4149 = vpop.f32.mrb[0].mxu0
        %4150 = vmatprep.mubr.bf16.mxu0 0
        %4151 = vmatmul.mubr.bf16.gmra.mrb[0].mxu0 %v4090
        %v4152 = vpop.f32.mrb[0].mxu0
        %v4153 = vadd.f32 0.0, %v4152
        %v4154 = vpop.f32.mrb[0].mxu0
        %v4155 = vpop.f32.mrb[0].mxu0
        %v4156 = vadd.f32 0.0, %v4155
        %v4157 = vpop.f32.mrb[0].mxu0
        %4158 = vmatprep.mubr.bf16.mxu0 0
        %4159 = vmatmul.mubr.bf16.gmra.mrb[0].mxu0 %v4093
        %v4160 = vpop.f32.mrb[0].mxu0
        %v4161 = vadd.f32 0.0, %v4160
        %v4162 = vpop.f32.mrb[0].mxu0
        %v4163 = vpop.f32.mrb[0].mxu0
        %v4164 = vadd.f32 0.0, %v4163
        %v4165 = vpop.f32.mrb[0].mxu0
        %4166 = vmatprep.mubr.bf16.mxu0 0
        %4167 = vmatmul.mubr.bf16.gmra.mrb[0].mxu0 %v4096
        %v4168 = vpop.f32.mrb[0].mxu0
        %v4169 = vadd.f32 0.0, %v4168
        %v4170 = vpop.f32.mrb[0].mxu0
        %v4171 = vpop.f32.mrb[0].mxu0
        %v4172 = vadd.f32 0.0, %v4171
        %v4173 = vpop.f32.mrb[0].mxu0
        %4174 = vmatprep.mubr.bf16.mxu0 0
        %4175 = vmatmul.mubr.bf16.gmra.mrb[0].mxu0 %v4099
        %v4176 = vpop.f32.mrb[0].mxu0
        %v4177 = vadd.f32 0.0, %v4176
        %v4178 = vpop.f32.mrb[0].mxu0
        %v4179 = vpop.f32.mrb[0].mxu0
        %v4180 = vadd.f32 0.0, %v4179
        %v4181 = vpop.f32.mrb[0].mxu0
        %4182 = vmatprep.mubr.bf16.mxu0 0
        %4183 = vmatmul.mubr.bf16.gmra.mrb[0].mxu0 %v4102
        %v4184 = vpop.f32.mrb[0].mxu0
        %v4185 = vadd.f32 0.0, %v4184
        %v4186 = vpop.f32.mrb[0].mxu0
        %v4187 = vpop.f32.mrb[0].mxu0
        %v4188 = vadd.f32 0.0, %v4187
        %v4189 = vpop.f32.mrb[0].mxu0
        %4190 = vmatprep.mubr.bf16.mxu0 0
        %4191 = vmatmul.mubr.bf16.gmra.mrb[0].mxu0 %v4105
        %v4192 = vpop.f32.mrb[0].mxu0
        %v4193 = vadd.f32 0.0, %v4192
        %v4194 = vpop.f32.mrb[0].mxu0
        %v4195 = vpop.f32.mrb[0].mxu0
        %v4196 = vadd.f32 0.0, %v4195
        %v4197 = vpop.f32.mrb[0].mxu0
        %4198 = vmatprep.mubr.bf16.mxu0 0
        %4199 = vmatmul.mubr.bf16.gmra.mrb[0].mxu0 %v4108
        %v4200 = vpop.f32.mrb[0].mxu0
        %v4201 = vadd.f32 0.0, %v4200
        %v4202 = vpop.f32.mrb[0].mxu0
        %v4203 = vpop.f32.mrb[0].mxu0
        %v4204 = vadd.f32 0.0, %v4203
        %v4205 = vpop.f32.mrb[0].mxu0
        %4206 = vdwg.mxu0
        %v4207 = vadd.f32 %v3970, %v4145
        %v4208 = vadd.f32 %v3971, %v4148
        %v4209 = vadd.f32 %v3972, %v4153
        %v4210 = vadd.f32 %v3973, %v4156
        %v4211 = vadd.f32 %v3974, %v4161
        %v4212 = vadd.f32 %v3975, %v4164
        %v4213 = vadd.f32 %v3976, %v4169
        %v4214 = vadd.f32 %v3977, %v4172
        %v4215 = vadd.f32 %v3978, %v4177
        %v4216 = vadd.f32 %v3979, %v4180
        %v4217 = vadd.f32 %v3980, %v4185
        %v4218 = vadd.f32 %v3981, %v4188
        %v4219 = vadd.f32 %v3982, %v4193
        %v4220 = vadd.f32 %v3983, %v4196
        %v4221 = vadd.f32 %v3984, %v4201
        %v4222 = vadd.f32 %v3985, %v4204
        %v4223 = vld [vmem:[#allocation2 + $0x48] sm:$0xc]
        %v4224 = vld [vmem:[%s2312] sm:$0xf]
        %v4225 = vld [vmem:[%s2312 + $0x4] sm:$0xf]
        %v4226 = vld [vmem:[%s2312 + $0x8] sm:$0xf]
        %v4227 = vld [vmem:[%s2312 + $0xc] sm:$0xf]
        %v4229 = vunpack.c.l.b16 %v4223
        %v4230 = vpack.c.b16 %v3795, %v4229
        %v4231 = vrot.slane %v4230, 2
        %v4232 = vrot.slane %v3812, 2
        %v4233 = vsel %vm2320, %v4231, %v4232
        %v4234 = vrot.slane %v3813, 2
        %v4235 = vsel %vm2320, %v4232, %v4234
        %v4236 = vrot.slane %v3814, 2
        %v4237 = vsel %vm2320, %v4234, %v4236
        %v4238 = vrot.slane %v3815, 2
        %v4239 = vsel %vm2320, %v4236, %v4238
        %v4240 = vrot.slane %v3816, 2
        %v4241 = vsel %vm2320, %v4238, %v4240
        %v4242 = vrot.slane %v3817, 2
        %v4243 = vsel %vm2320, %v4240, %v4242
        %v4244 = vrot.slane %v3818, 2
        %v4245 = vsel %vm2320, %v4242, %v4244
        %v4246 = vrot.slane %v3993, 2
        %v4247 = vsel %vm2320, %v4244, %v4246
        %v4252 = vunpack.c.l.b16 %v4224
        %v4253 = vunpack.c.l.b16 %v4225
        %v4254 = vunpack.c.l.b16 %v4226
        %v4255 = vunpack.c.l.b16 %v4227
        %v4256 = vpack.c.b16 %v4253, %v4252
        %v4257 = vpack.c.b16 %v4255, %v4254
        %v4261 = vsel %vm556, %v4233, 0
        %v4264 = vsel %vm556, %v4235, 0
        %v4267 = vsel %vm556, %v4237, 0
        %v4270 = vsel %vm556, %v4239, 0
        %v4273 = vsel %vm556, %v4241, 0
        %v4276 = vsel %vm556, %v4243, 0
        %v4279 = vsel %vm556, %v4245, 0
        %v4282 = vsel %vm556, %v4247, 0
        %4284 = vmatprep.subr.bf16.mxu0 0
        %4285 = vmatpush1.bf16.msra.mxu0 %v4256
        %4286 = vmatprep.subr.bf16.mxu0 0
        %4287 = vmatpush1.bf16.msra.mxu0 %v4257
        %4288 = vmatprep.subr.bf16.mxu0 0
        %4289 = vmatpush1.bf16.msra.mxu0 0
        %4290 = vmatprep.subr.bf16.mxu0 0
        %4291 = vmatpush1.bf16.msra.mxu0 0
        %4292 = vmatprep.subr.bf16.mxu0 0
        %4293 = vmatpush1.bf16.msra.mxu0 0
        %4294 = vmatprep.subr.bf16.mxu0 0
        %4295 = vmatpush1.bf16.msra.mxu0 0
        %4296 = vmatprep.subr.bf16.mxu0 0
        %4297 = vmatpush1.bf16.msra.mxu0 0
        %4298 = vmatprep.subr.bf16.mxu0 0
        %4299 = vmatpush1.bf16.msra.mxu0 0
        %4300 = vmatprep.subr.bf16.mxu0 0
        %4301 = vmatpush1.bf16.msra.mxu0 0
        %4302 = vmatprep.subr.bf16.mxu0 0
        %4303 = vmatpush1.bf16.msra.mxu0 0
        %4304 = vmatprep.subr.bf16.mxu0 0
        %4305 = vmatpush1.bf16.msra.mxu0 0
        %4306 = vmatprep.subr.bf16.mxu0 0
        %4307 = vmatpush1.bf16.msra.mxu0 0
        %4308 = vmatprep.subr.bf16.mxu0 0
        %4309 = vmatpush1.bf16.msra.mxu0 0
        %4310 = vmatprep.subr.bf16.mxu0 0
        %4311 = vmatpush1.bf16.msra.mxu0 0
        %4312 = vmatprep.subr.bf16.mxu0 0
        %4313 = vmatpush1.bf16.msra.mxu0 0
        %4314 = vmatprep.subr.bf16.mxu0 0
        %4315 = vmatpush1.bf16.msra.mxu0 0
        %4316 = vmatprep.mubr.bf16.mxu0 0
        %4317 = vmatmul.mubr.bf16.gmra.mrb[0].mxu0 %v4261
        %v4318 = vpop.f32.mrb[0].mxu0
        %v4319 = vadd.f32 0.0, %v4318
        %v4320 = vpop.f32.mrb[0].mxu0
        %v4321 = vpop.f32.mrb[0].mxu0
        %v4322 = vadd.f32 0.0, %v4321
        %v4323 = vpop.f32.mrb[0].mxu0
        %4324 = vmatprep.mubr.bf16.mxu0 0
        %4325 = vmatmul.mubr.bf16.gmra.mrb[0].mxu0 %v4264
        %v4326 = vpop.f32.mrb[0].mxu0
        %v4327 = vadd.f32 0.0, %v4326
        %v4328 = vpop.f32.mrb[0].mxu0
        %v4329 = vpop.f32.mrb[0].mxu0
        %v4330 = vadd.f32 0.0, %v4329
        %v4331 = vpop.f32.mrb[0].mxu0
        %4332 = vmatprep.mubr.bf16.mxu0 0
        %4333 = vmatmul.mubr.bf16.gmra.mrb[0].mxu0 %v4267
        %v4334 = vpop.f32.mrb[0].mxu0
        %v4335 = vadd.f32 0.0, %v4334
        %v4336 = vpop.f32.mrb[0].mxu0
        %v4337 = vpop.f32.mrb[0].mxu0
        %v4338 = vadd.f32 0.0, %v4337
        %v4339 = vpop.f32.mrb[0].mxu0
        %4340 = vmatprep.mubr.bf16.mxu0 0
        %4341 = vmatmul.mubr.bf16.gmra.mrb[0].mxu0 %v4270
        %v4342 = vpop.f32.mrb[0].mxu0
        %v4343 = vadd.f32 0.0, %v4342
        %v4344 = vpop.f32.mrb[0].mxu0
        %v4345 = vpop.f32.mrb[0].mxu0
        %v4346 = vadd.f32 0.0, %v4345
        %v4347 = vpop.f32.mrb[0].mxu0
        %4348 = vmatprep.mubr.bf16.mxu0 0
        %4349 = vmatmul.mubr.bf16.gmra.mrb[0].mxu0 %v4273
        %v4350 = vpop.f32.mrb[0].mxu0
        %v4351 = vadd.f32 0.0, %v4350
        %v4352 = vpop.f32.mrb[0].mxu0
        %v4353 = vpop.f32.mrb[0].mxu0
        %v4354 = vadd.f32 0.0, %v4353
        %v4355 = vpop.f32.mrb[0].mxu0
        %4356 = vmatprep.mubr.bf16.mxu0 0
        %4357 = vmatmul.mubr.bf16.gmra.mrb[0].mxu0 %v4276
        %v4358 = vpop.f32.mrb[0].mxu0
        %v4359 = vadd.f32 0.0, %v4358
        %v4360 = vpop.f32.mrb[0].mxu0
        %v4361 = vpop.f32.mrb[0].mxu0
        %v4362 = vadd.f32 0.0, %v4361
        %v4363 = vpop.f32.mrb[0].mxu0
        %4364 = vmatprep.mubr.bf16.mxu0 0
        %4365 = vmatmul.mubr.bf16.gmra.mrb[0].mxu0 %v4279
        %v4366 = vpop.f32.mrb[0].mxu0
        %v4367 = vadd.f32 0.0, %v4366
        %v4368 = vpop.f32.mrb[0].mxu0
        %v4369 = vpop.f32.mrb[0].mxu0
        %v4370 = vadd.f32 0.0, %v4369
        %v4371 = vpop.f32.mrb[0].mxu0
        %4372 = vmatprep.mubr.bf16.mxu0 0
        %4373 = vmatmul.mubr.bf16.gmra.mrb[0].mxu0 %v4282
        %v4374 = vpop.f32.mrb[0].mxu0
        %v4375 = vadd.f32 0.0, %v4374
        %v4376 = vpop.f32.mrb[0].mxu0
        %v4377 = vpop.f32.mrb[0].mxu0
        %v4378 = vadd.f32 0.0, %v4377
        %v4379 = vpop.f32.mrb[0].mxu0
        %4380 = vdwg.mxu0
        %v4381 = vadd.f32 %v4207, %v4319
        %v4382 = vadd.f32 %v4208, %v4322
        %v4383 = vadd.f32 %v4209, %v4327
        %v4384 = vadd.f32 %v4210, %v4330
        %v4385 = vadd.f32 %v4211, %v4335
        %v4386 = vadd.f32 %v4212, %v4338
        %v4387 = vadd.f32 %v4213, %v4343
        %v4388 = vadd.f32 %v4214, %v4346
        %v4389 = vadd.f32 %v4215, %v4351
        %v4390 = vadd.f32 %v4216, %v4354
        %v4391 = vadd.f32 %v4217, %v4359
        %v4392 = vadd.f32 %v4218, %v4362
        %v4393 = vadd.f32 %v4219, %v4367
        %v4394 = vadd.f32 %v4220, %v4370
        %v4395 = vadd.f32 %v4221, %v4375
        %v4396 = vadd.f32 %v4222, %v4378
        %v4397 = vld [vmem:[#allocation2 + $0x50] sm:$0xc]
        %v4398 = vld [vmem:[#allocation2 + $0x54] sm:$0xf]
        %v4399 = vld [vmem:[#allocation2 + $0x58] sm:$0xf]
        %v4400 = vld [vmem:[#allocation2 + $0x5c] sm:$0xf]
        %v4401 = vld [vmem:[#allocation2 + $0x60] sm:$0xf]
        %v4402 = vld [vmem:[#allocation2 + $0x64] sm:$0xf]
        %v4403 = vld [vmem:[#allocation2 + $0x68] sm:$0xf]
        %v4404 = vld [vmem:[#allocation2 + $0x6c] sm:$0xf]
        %v4405 = vld [vmem:[#allocation2 + $0x70] sm:$0xf]
        %v4406 = vld [vmem:[#allocation2 + $0x74] sm:$0xf]
        %v4407 = vld [vmem:[#allocation2 + $0x78] sm:$0xf]
        %v4408 = vld [vmem:[#allocation2 + $0x7c] sm:$0xf]
        %v4409 = vld [vmem:[#allocation2 + $0x80] sm:$0xf]
        %v4410 = vld [vmem:[#allocation2 + $0x84] sm:$0xf]
        %v4411 = vld [vmem:[#allocation2 + $0x88] sm:$0xf]
        %v4412 = vld [vmem:[#allocation2 + $0x8c] sm:$0xf]
        %v4413 = vld [vmem:[#allocation2 + $0x90] sm:$0x3]
        %v4414 = vld [vmem:[%s2504] sm:$0xf]
        %v4415 = vld [vmem:[%s2504 + $0x4] sm:$0xf]
        %v4416 = vld [vmem:[%s2504 + $0x8] sm:$0xf]
        %v4417 = vld [vmem:[%s2504 + $0xc] sm:$0xf]
        %v4435 = vunpack.c.l.b16 %v4397
        %v4436 = vunpack.c.l.b16 %v4398
        %v4437 = vunpack.c.l.b16 %v4399
        %v4438 = vunpack.c.l.b16 %v4400
        %v4439 = vunpack.c.l.b16 %v4401
        %v4440 = vunpack.c.l.b16 %v4402
        %v4441 = vunpack.c.l.b16 %v4403
        %v4442 = vunpack.c.l.b16 %v4404
        %v4443 = vunpack.c.l.b16 %v4405
        %v4444 = vunpack.c.l.b16 %v4406
        %v4445 = vunpack.c.l.b16 %v4407
        %v4446 = vunpack.c.l.b16 %v4408
        %v4447 = vunpack.c.l.b16 %v4409
        %v4448 = vunpack.c.l.b16 %v4410
        %v4449 = vunpack.c.l.b16 %v4411
        %v4450 = vunpack.c.l.b16 %v4412
        %v4451 = vunpack.c.l.b16 %v4413
        %v4452 = vpack.c.b16 %v4436, %v4435
        %v4453 = vpack.c.b16 %v4438, %v4437
        %v4454 = vpack.c.b16 %v4440, %v4439
        %v4455 = vpack.c.b16 %v4442, %v4441
        %v4456 = vpack.c.b16 %v4444, %v4443
        %v4457 = vpack.c.b16 %v4446, %v4445
        %v4458 = vpack.c.b16 %v4448, %v4447
        %v4459 = vpack.c.b16 %v4450, %v4449
        %v4460 = vpack.c.b16 %v4451, %v4451
        %v4461 = vrot.slane %v4452, 2
        %v4462 = vrot.slane %v4453, 2
        %v4463 = vsel %vm2320, %v4461, %v4462
        %v4464 = vrot.slane %v4454, 2
        %v4465 = vsel %vm2320, %v4462, %v4464
        %v4466 = vrot.slane %v4455, 2
        %v4467 = vsel %vm2320, %v4464, %v4466
        %v4468 = vrot.slane %v4456, 2
        %v4469 = vsel %vm2320, %v4466, %v4468
        %v4470 = vrot.slane %v4457, 2
        %v4471 = vsel %vm2320, %v4468, %v4470
        %v4472 = vrot.slane %v4458, 2
        %v4473 = vsel %vm2320, %v4470, %v4472
        %v4474 = vrot.slane %v4459, 2
        %v4475 = vsel %vm2320, %v4472, %v4474
        %v4476 = vrot.slane %v4460, 2
        %v4477 = vsel %vm2320, %v4474, %v4476
        %v4482 = vunpack.c.l.b16 %v4414
        %v4483 = vunpack.c.l.b16 %v4415
        %v4484 = vunpack.c.l.b16 %v4416
        %v4485 = vunpack.c.l.b16 %v4417
        %v4486 = vpack.c.b16 %v4483, %v4482
        %v4487 = vpack.c.b16 %v4485, %v4484
        %v4491 = vsel %vm556, %v4463, 0
        %v4494 = vsel %vm556, %v4465, 0
        %v4497 = vsel %vm556, %v4467, 0
        %v4500 = vsel %vm556, %v4469, 0
        %v4503 = vsel %vm556, %v4471, 0
        %v4506 = vsel %vm556, %v4473, 0
        %v4509 = vsel %vm556, %v4475, 0
        %v4512 = vsel %vm556, %v4477, 0
        %4514 = vmatprep.subr.bf16.mxu0 0
        %4515 = vmatpush1.bf16.msra.mxu0 %v4486
        %4516 = vmatprep.subr.bf16.mxu0 0
        %4517 = vmatpush1.bf16.msra.mxu0 %v4487
        %4518 = vmatprep.subr.bf16.mxu0 0
        %4519 = vmatpush1.bf16.msra.mxu0 0
        %4520 = vmatprep.subr.bf16.mxu0 0
        %4521 = vmatpush1.bf16.msra.mxu0 0
        %4522 = vmatprep.subr.bf16.mxu0 0
        %4523 = vmatpush1.bf16.msra.mxu0 0
        %4524 = vmatprep.subr.bf16.mxu0 0
        %4525 = vmatpush1.bf16.msra.mxu0 0
        %4526 = vmatprep.subr.bf16.mxu0 0
        %4527 = vmatpush1.bf16.msra.mxu0 0
        %4528 = vmatprep.subr.bf16.mxu0 0
        %4529 = vmatpush1.bf16.msra.mxu0 0
        %4530 = vmatprep.subr.bf16.mxu0 0
        %4531 = vmatpush1.bf16.msra.mxu0 0
        %4532 = vmatprep.subr.bf16.mxu0 0
        %4533 = vmatpush1.bf16.msra.mxu0 0
        %4534 = vmatprep.subr.bf16.mxu0 0
        %4535 = vmatpush1.bf16.msra.mxu0 0
        %4536 = vmatprep.subr.bf16.mxu0 0
        %4537 = vmatpush1.bf16.msra.mxu0 0
        %4538 = vmatprep.subr.bf16.mxu0 0
        %4539 = vmatpush1.bf16.msra.mxu0 0
        %4540 = vmatprep.subr.bf16.mxu0 0
        %4541 = vmatpush1.bf16.msra.mxu0 0
        %4542 = vmatprep.subr.bf16.mxu0 0
        %4543 = vmatpush1.bf16.msra.mxu0 0
        %4544 = vmatprep.subr.bf16.mxu0 0
        %4545 = vmatpush1.bf16.msra.mxu0 0
        %4546 = vmatprep.mubr.bf16.mxu0 0
        %4547 = vmatmul.mubr.bf16.gmra.mrb[0].mxu0 %v4491
        %v4548 = vpop.f32.mrb[0].mxu0
        %v4549 = vadd.f32 0.0, %v4548
        %v4550 = vpop.f32.mrb[0].mxu0
        %v4551 = vpop.f32.mrb[0].mxu0
        %v4552 = vadd.f32 0.0, %v4551
        %v4553 = vpop.f32.mrb[0].mxu0
        %4554 = vmatprep.mubr.bf16.mxu0 0
        %4555 = vmatmul.mubr.bf16.gmra.mrb[0].mxu0 %v4494
        %v4556 = vpop.f32.mrb[0].mxu0
        %v4557 = vadd.f32 0.0, %v4556
        %v4558 = vpop.f32.mrb[0].mxu0
        %v4559 = vpop.f32.mrb[0].mxu0
        %v4560 = vadd.f32 0.0, %v4559
        %v4561 = vpop.f32.mrb[0].mxu0
        %4562 = vmatprep.mubr.bf16.mxu0 0
        %4563 = vmatmul.mubr.bf16.gmra.mrb[0].mxu0 %v4497
        %v4564 = vpop.f32.mrb[0].mxu0
        %v4565 = vadd.f32 0.0, %v4564
        %v4566 = vpop.f32.mrb[0].mxu0
        %v4567 = vpop.f32.mrb[0].mxu0
        %v4568 = vadd.f32 0.0, %v4567
        %v4569 = vpop.f32.mrb[0].mxu0
        %4570 = vmatprep.mubr.bf16.mxu0 0
        %4571 = vmatmul.mubr.bf16.gmra.mrb[0].mxu0 %v4500
        %v4572 = vpop.f32.mrb[0].mxu0
        %v4573 = vadd.f32 0.0, %v4572
        %v4574 = vpop.f32.mrb[0].mxu0
        %v4575 = vpop.f32.mrb[0].mxu0
        %v4576 = vadd.f32 0.0, %v4575
        %v4577 = vpop.f32.mrb[0].mxu0
        %4578 = vmatprep.mubr.bf16.mxu0 0
        %4579 = vmatmul.mubr.bf16.gmra.mrb[0].mxu0 %v4503
        %v4580 = vpop.f32.mrb[0].mxu0
        %v4581 = vadd.f32 0.0, %v4580
        %v4582 = vpop.f32.mrb[0].mxu0
        %v4583 = vpop.f32.mrb[0].mxu0
        %v4584 = vadd.f32 0.0, %v4583
        %v4585 = vpop.f32.mrb[0].mxu0
        %4586 = vmatprep.mubr.bf16.mxu0 0
        %4587 = vmatmul.mubr.bf16.gmra.mrb[0].mxu0 %v4506
        %v4588 = vpop.f32.mrb[0].mxu0
        %v4589 = vadd.f32 0.0, %v4588
        %v4590 = vpop.f32.mrb[0].mxu0
        %v4591 = vpop.f32.mrb[0].mxu0
        %v4592 = vadd.f32 0.0, %v4591
        %v4593 = vpop.f32.mrb[0].mxu0
        %4594 = vmatprep.mubr.bf16.mxu0 0
        %4595 = vmatmul.mubr.bf16.gmra.mrb[0].mxu0 %v4509
        %v4596 = vpop.f32.mrb[0].mxu0
        %v4597 = vadd.f32 0.0, %v4596
        %v4598 = vpop.f32.mrb[0].mxu0
        %v4599 = vpop.f32.mrb[0].mxu0
        %v4600 = vadd.f32 0.0, %v4599
        %v4601 = vpop.f32.mrb[0].mxu0
        %4602 = vmatprep.mubr.bf16.mxu0 0
        %4603 = vmatmul.mubr.bf16.gmra.mrb[0].mxu0 %v4512
        %v4604 = vpop.f32.mrb[0].mxu0
        %v4605 = vadd.f32 0.0, %v4604
        %v4606 = vpop.f32.mrb[0].mxu0
        %v4607 = vpop.f32.mrb[0].mxu0
        %v4608 = vadd.f32 0.0, %v4607
        %v4609 = vpop.f32.mrb[0].mxu0
        %4610 = vdwg.mxu0
        %v4611 = vadd.f32 %v4381, %v4549
        %v4612 = vadd.f32 %v4382, %v4552
        %v4613 = vadd.f32 %v4383, %v4557
        %v4614 = vadd.f32 %v4384, %v4560
        %v4615 = vadd.f32 %v4385, %v4565
        %v4616 = vadd.f32 %v4386, %v4568
        %v4617 = vadd.f32 %v4387, %v4573
        %v4618 = vadd.f32 %v4388, %v4576
        %v4619 = vadd.f32 %v4389, %v4581
        %v4620 = vadd.f32 %v4390, %v4584
        %v4621 = vadd.f32 %v4391, %v4589
        %v4622 = vadd.f32 %v4392, %v4592
        %v4623 = vadd.f32 %v4393, %v4597
        %v4624 = vadd.f32 %v4394, %v4600
        %v4625 = vadd.f32 %v4395, %v4605
        %v4626 = vadd.f32 %v4396, %v4608
        %v4627 = vld [vmem:[#allocation2 + $0x90] sm:$0x7]
        %v4628 = vld [vmem:[%s2719] sm:$0xf]
        %v4629 = vld [vmem:[%s2719 + $0x4] sm:$0xf]
        %v4630 = vld [vmem:[%s2719 + $0x8] sm:$0xf]
        %v4631 = vld [vmem:[%s2719 + $0xc] sm:$0xf]
        %v4633 = vunpack.c.l.b16 %v4627
        %v4634 = vpack.c.b16 %v4633, %v4633
        %v4636 = vshrl.u32 %v4452, 16
        %v4638 = vrot.slane %v4636, 2
        %v4639 = vshll.u32 %v4452, 16
        %v4641 = vrot.slane %v4639, 3
        %v4642 = vor.u32 %v4638, %v4641
        %v4644 = vshrl.u32 %v4453, 16
        %v4646 = vrot.slane %v4644, 2
        %v4647 = vshll.u32 %v4453, 16
        %v4649 = vrot.slane %v4647, 3
        %v4650 = vor.u32 %v4646, %v4649
        %v4651 = vsel %vm2727, %v4642, %v4650
        %v4653 = vshrl.u32 %v4454, 16
        %v4655 = vrot.slane %v4653, 2
        %v4656 = vshll.u32 %v4454, 16
        %v4658 = vrot.slane %v4656, 3
        %v4659 = vor.u32 %v4655, %v4658
        %v4660 = vsel %vm2727, %v4650, %v4659
        %v4662 = vshrl.u32 %v4455, 16
        %v4664 = vrot.slane %v4662, 2
        %v4665 = vshll.u32 %v4455, 16
        %v4667 = vrot.slane %v4665, 3
        %v4668 = vor.u32 %v4664, %v4667
        %v4669 = vsel %vm2727, %v4659, %v4668
        %v4671 = vshrl.u32 %v4456, 16
        %v4673 = vrot.slane %v4671, 2
        %v4674 = vshll.u32 %v4456, 16
        %v4676 = vrot.slane %v4674, 3
        %v4677 = vor.u32 %v4673, %v4676
        %v4678 = vsel %vm2727, %v4668, %v4677
        %v4680 = vshrl.u32 %v4457, 16
        %v4682 = vrot.slane %v4680, 2
        %v4683 = vshll.u32 %v4457, 16
        %v4685 = vrot.slane %v4683, 3
        %v4686 = vor.u32 %v4682, %v4685
        %v4687 = vsel %vm2727, %v4677, %v4686
        %v4689 = vshrl.u32 %v4458, 16
        %v4691 = vrot.slane %v4689, 2
        %v4692 = vshll.u32 %v4458, 16
        %v4694 = vrot.slane %v4692, 3
        %v4695 = vor.u32 %v4691, %v4694
        %v4696 = vsel %vm2727, %v4686, %v4695
        %v4698 = vshrl.u32 %v4459, 16
        %v4700 = vrot.slane %v4698, 2
        %v4701 = vshll.u32 %v4459, 16
        %v4703 = vrot.slane %v4701, 3
        %v4704 = vor.u32 %v4700, %v4703
        %v4705 = vsel %vm2727, %v4695, %v4704
        %v4707 = vshrl.u32 %v4634, 16
        %v4709 = vrot.slane %v4707, 2
        %v4710 = vshll.u32 %v4634, 16
        %v4712 = vrot.slane %v4710, 3
        %v4713 = vor.u32 %v4709, %v4712
        %v4714 = vsel %vm2727, %v4704, %v4713
        %v4719 = vunpack.c.l.b16 %v4628
        %v4720 = vunpack.c.l.b16 %v4629
        %v4721 = vunpack.c.l.b16 %v4630
        %v4722 = vunpack.c.l.b16 %v4631
        %v4723 = vpack.c.b16 %v4720, %v4719
        %v4724 = vpack.c.b16 %v4722, %v4721
        %v4728 = vsel %vm556, %v4651, 0
        %v4731 = vsel %vm556, %v4660, 0
        %v4734 = vsel %vm556, %v4669, 0
        %v4737 = vsel %vm556, %v4678, 0
        %v4740 = vsel %vm556, %v4687, 0
        %v4743 = vsel %vm556, %v4696, 0
        %v4746 = vsel %vm556, %v4705, 0
        %v4749 = vsel %vm556, %v4714, 0
        %4751 = vmatprep.subr.bf16.mxu0 0
        %4752 = vmatpush1.bf16.msra.mxu0 %v4723
        %4753 = vmatprep.subr.bf16.mxu0 0
        %4754 = vmatpush1.bf16.msra.mxu0 %v4724
        %4755 = vmatprep.subr.bf16.mxu0 0
        %4756 = vmatpush1.bf16.msra.mxu0 0
        %4757 = vmatprep.subr.bf16.mxu0 0
        %4758 = vmatpush1.bf16.msra.mxu0 0
        %4759 = vmatprep.subr.bf16.mxu0 0
        %4760 = vmatpush1.bf16.msra.mxu0 0
        %4761 = vmatprep.subr.bf16.mxu0 0
        %4762 = vmatpush1.bf16.msra.mxu0 0
        %4763 = vmatprep.subr.bf16.mxu0 0
        %4764 = vmatpush1.bf16.msra.mxu0 0
        %4765 = vmatprep.subr.bf16.mxu0 0
        %4766 = vmatpush1.bf16.msra.mxu0 0
        %4767 = vmatprep.subr.bf16.mxu0 0
        %4768 = vmatpush1.bf16.msra.mxu0 0
        %4769 = vmatprep.subr.bf16.mxu0 0
        %4770 = vmatpush1.bf16.msra.mxu0 0
        %4771 = vmatprep.subr.bf16.mxu0 0
        %4772 = vmatpush1.bf16.msra.mxu0 0
        %4773 = vmatprep.subr.bf16.mxu0 0
        %4774 = vmatpush1.bf16.msra.mxu0 0
        %4775 = vmatprep.subr.bf16.mxu0 0
        %4776 = vmatpush1.bf16.msra.mxu0 0
        %4777 = vmatprep.subr.bf16.mxu0 0
        %4778 = vmatpush1.bf16.msra.mxu0 0
        %4779 = vmatprep.subr.bf16.mxu0 0
        %4780 = vmatpush1.bf16.msra.mxu0 0
        %4781 = vmatprep.subr.bf16.mxu0 0
        %4782 = vmatpush1.bf16.msra.mxu0 0
        %4783 = vmatprep.mubr.bf16.mxu0 0
        %4784 = vmatmul.mubr.bf16.gmra.mrb[0].mxu0 %v4728
        %v4785 = vpop.f32.mrb[0].mxu0
        %v4786 = vadd.f32 0.0, %v4785
        %v4787 = vpop.f32.mrb[0].mxu0
        %v4788 = vpop.f32.mrb[0].mxu0
        %v4789 = vadd.f32 0.0, %v4788
        %v4790 = vpop.f32.mrb[0].mxu0
        %4791 = vmatprep.mubr.bf16.mxu0 0
        %4792 = vmatmul.mubr.bf16.gmra.mrb[0].mxu0 %v4731
        %v4793 = vpop.f32.mrb[0].mxu0
        %v4794 = vadd.f32 0.0, %v4793
        %v4795 = vpop.f32.mrb[0].mxu0
        %v4796 = vpop.f32.mrb[0].mxu0
        %v4797 = vadd.f32 0.0, %v4796
        %v4798 = vpop.f32.mrb[0].mxu0
        %4799 = vmatprep.mubr.bf16.mxu0 0
        %4800 = vmatmul.mubr.bf16.gmra.mrb[0].mxu0 %v4734
        %v4801 = vpop.f32.mrb[0].mxu0
        %v4802 = vadd.f32 0.0, %v4801
        %v4803 = vpop.f32.mrb[0].mxu0
        %v4804 = vpop.f32.mrb[0].mxu0
        %v4805 = vadd.f32 0.0, %v4804
        %v4806 = vpop.f32.mrb[0].mxu0
        %4807 = vmatprep.mubr.bf16.mxu0 0
        %4808 = vmatmul.mubr.bf16.gmra.mrb[0].mxu0 %v4737
        %v4809 = vpop.f32.mrb[0].mxu0
        %v4810 = vadd.f32 0.0, %v4809
        %v4811 = vpop.f32.mrb[0].mxu0
        %v4812 = vpop.f32.mrb[0].mxu0
        %v4813 = vadd.f32 0.0, %v4812
        %v4814 = vpop.f32.mrb[0].mxu0
        %4815 = vmatprep.mubr.bf16.mxu0 0
        %4816 = vmatmul.mubr.bf16.gmra.mrb[0].mxu0 %v4740
        %v4817 = vpop.f32.mrb[0].mxu0
        %v4818 = vadd.f32 0.0, %v4817
        %v4819 = vpop.f32.mrb[0].mxu0
        %v4820 = vpop.f32.mrb[0].mxu0
        %v4821 = vadd.f32 0.0, %v4820
        %v4822 = vpop.f32.mrb[0].mxu0
        %4823 = vmatprep.mubr.bf16.mxu0 0
        %4824 = vmatmul.mubr.bf16.gmra.mrb[0].mxu0 %v4743
        %v4825 = vpop.f32.mrb[0].mxu0
        %v4826 = vadd.f32 0.0, %v4825
        %v4827 = vpop.f32.mrb[0].mxu0
        %v4828 = vpop.f32.mrb[0].mxu0
        %v4829 = vadd.f32 0.0, %v4828
        %v4830 = vpop.f32.mrb[0].mxu0
        %4831 = vmatprep.mubr.bf16.mxu0 0
        %4832 = vmatmul.mubr.bf16.gmra.mrb[0].mxu0 %v4746
        %v4833 = vpop.f32.mrb[0].mxu0
        %v4834 = vadd.f32 0.0, %v4833
        %v4835 = vpop.f32.mrb[0].mxu0
        %v4836 = vpop.f32.mrb[0].mxu0
        %v4837 = vadd.f32 0.0, %v4836
        %v4838 = vpop.f32.mrb[0].mxu0
        %4839 = vmatprep.mubr.bf16.mxu0 0
        %4840 = vmatmul.mubr.bf16.gmra.mrb[0].mxu0 %v4749
        %v4841 = vpop.f32.mrb[0].mxu0
        %v4842 = vadd.f32 0.0, %v4841
        %v4843 = vpop.f32.mrb[0].mxu0
        %v4844 = vpop.f32.mrb[0].mxu0
        %v4845 = vadd.f32 0.0, %v4844
        %v4846 = vpop.f32.mrb[0].mxu0
        %4847 = vdwg.mxu0
        %v4848 = vadd.f32 %v4611, %v4786
        %v4849 = vadd.f32 %v4612, %v4789
        %v4850 = vadd.f32 %v4613, %v4794
        %v4851 = vadd.f32 %v4614, %v4797
        %v4852 = vadd.f32 %v4615, %v4802
        %v4853 = vadd.f32 %v4616, %v4805
        %v4854 = vadd.f32 %v4617, %v4810
        %v4855 = vadd.f32 %v4618, %v4813
        %v4856 = vadd.f32 %v4619, %v4818
        %v4857 = vadd.f32 %v4620, %v4821
        %v4858 = vadd.f32 %v4621, %v4826
        %v4859 = vadd.f32 %v4622, %v4829
        %v4860 = vadd.f32 %v4623, %v4834
        %v4861 = vadd.f32 %v4624, %v4837
        %v4862 = vadd.f32 %v4625, %v4842
        %v4863 = vadd.f32 %v4626, %v4845
        %v4864 = vld [vmem:[#allocation2 + $0x50] sm:$0x8]
        %v4865 = vld [vmem:[%s2958] sm:$0xf]
        %v4866 = vld [vmem:[%s2958 + $0x4] sm:$0xf]
        %v4867 = vld [vmem:[%s2958 + $0x8] sm:$0xf]
        %v4868 = vld [vmem:[%s2958 + $0xc] sm:$0xf]
        %v4870 = vunpack.c.l.b16 %v4864
        %v4871 = vpack.c.b16 %v4436, %v4870
        %v4872 = vrot.slane %v4871, 3
        %v4873 = vrot.slane %v4453, 3
        %v4874 = vsel %vm2966, %v4872, %v4873
        %v4875 = vrot.slane %v4454, 3
        %v4876 = vsel %vm2966, %v4873, %v4875
        %v4877 = vrot.slane %v4455, 3
        %v4878 = vsel %vm2966, %v4875, %v4877
        %v4879 = vrot.slane %v4456, 3
        %v4880 = vsel %vm2966, %v4877, %v4879
        %v4881 = vrot.slane %v4457, 3
        %v4882 = vsel %vm2966, %v4879, %v4881
        %v4883 = vrot.slane %v4458, 3
        %v4884 = vsel %vm2966, %v4881, %v4883
        %v4885 = vrot.slane %v4459, 3
        %v4886 = vsel %vm2966, %v4883, %v4885
        %v4887 = vrot.slane %v4634, 3
        %v4888 = vsel %vm2966, %v4885, %v4887
        %v4893 = vunpack.c.l.b16 %v4865
        %v4894 = vunpack.c.l.b16 %v4866
        %v4895 = vunpack.c.l.b16 %v4867
        %v4896 = vunpack.c.l.b16 %v4868
        %v4897 = vpack.c.b16 %v4894, %v4893
        %v4898 = vpack.c.b16 %v4896, %v4895
        %v4902 = vsel %vm556, %v4874, 0
        %v4905 = vsel %vm556, %v4876, 0
        %v4908 = vsel %vm556, %v4878, 0
        %v4911 = vsel %vm556, %v4880, 0
        %v4914 = vsel %vm556, %v4882, 0
        %v4917 = vsel %vm556, %v4884, 0
        %v4920 = vsel %vm556, %v4886, 0
        %v4923 = vsel %vm556, %v4888, 0
        %4925 = vmatprep.subr.bf16.mxu0 0
        %4926 = vmatpush1.bf16.msra.mxu0 %v4897
        %4927 = vmatprep.subr.bf16.mxu0 0
        %4928 = vmatpush1.bf16.msra.mxu0 %v4898
        %4929 = vmatprep.subr.bf16.mxu0 0
        %4930 = vmatpush1.bf16.msra.mxu0 0
        %4931 = vmatprep.subr.bf16.mxu0 0
        %4932 = vmatpush1.bf16.msra.mxu0 0
        %4933 = vmatprep.subr.bf16.mxu0 0
        %4934 = vmatpush1.bf16.msra.mxu0 0
        %4935 = vmatprep.subr.bf16.mxu0 0
        %4936 = vmatpush1.bf16.msra.mxu0 0
        %4937 = vmatprep.subr.bf16.mxu0 0
        %4938 = vmatpush1.bf16.msra.mxu0 0
        %4939 = vmatprep.subr.bf16.mxu0 0
        %4940 = vmatpush1.bf16.msra.mxu0 0
        %4941 = vmatprep.subr.bf16.mxu0 0
        %4942 = vmatpush1.bf16.msra.mxu0 0
        %4943 = vmatprep.subr.bf16.mxu0 0
        %4944 = vmatpush1.bf16.msra.mxu0 0
        %4945 = vmatprep.subr.bf16.mxu0 0
        %4946 = vmatpush1.bf16.msra.mxu0 0
        %4947 = vmatprep.subr.bf16.mxu0 0
        %4948 = vmatpush1.bf16.msra.mxu0 0
        %4949 = vmatprep.subr.bf16.mxu0 0
        %4950 = vmatpush1.bf16.msra.mxu0 0
        %4951 = vmatprep.subr.bf16.mxu0 0
        %4952 = vmatpush1.bf16.msra.mxu0 0
        %4953 = vmatprep.subr.bf16.mxu0 0
        %4954 = vmatpush1.bf16.msra.mxu0 0
        %4955 = vmatprep.subr.bf16.mxu0 0
        %4956 = vmatpush1.bf16.msra.mxu0 0
        %4957 = vmatprep.mubr.bf16.mxu0 0
        %4958 = vmatmul.mubr.bf16.gmra.mrb[0].mxu0 %v4902
        %v4959 = vpop.f32.mrb[0].mxu0
        %v4960 = vadd.f32 0.0, %v4959
        %v4961 = vpop.f32.mrb[0].mxu0
        %v4962 = vpop.f32.mrb[0].mxu0
        %v4963 = vadd.f32 0.0, %v4962
        %v4964 = vpop.f32.mrb[0].mxu0
        %4965 = vmatprep.mubr.bf16.mxu0 0
        %4966 = vmatmul.mubr.bf16.gmra.mrb[0].mxu0 %v4905
        %v4967 = vpop.f32.mrb[0].mxu0
        %v4968 = vadd.f32 0.0, %v4967
        %v4969 = vpop.f32.mrb[0].mxu0
        %v4970 = vpop.f32.mrb[0].mxu0
        %v4971 = vadd.f32 0.0, %v4970
        %v4972 = vpop.f32.mrb[0].mxu0
        %4973 = vmatprep.mubr.bf16.mxu0 0
        %4974 = vmatmul.mubr.bf16.gmra.mrb[0].mxu0 %v4908
        %v4975 = vpop.f32.mrb[0].mxu0
        %v4976 = vadd.f32 0.0, %v4975
        %v4977 = vpop.f32.mrb[0].mxu0
        %v4978 = vpop.f32.mrb[0].mxu0
        %v4979 = vadd.f32 0.0, %v4978
        %v4980 = vpop.f32.mrb[0].mxu0
        %4981 = vmatprep.mubr.bf16.mxu0 0
        %4982 = vmatmul.mubr.bf16.gmra.mrb[0].mxu0 %v4911
        %v4983 = vpop.f32.mrb[0].mxu0
        %v4984 = vadd.f32 0.0, %v4983
        %v4985 = vpop.f32.mrb[0].mxu0
        %v4986 = vpop.f32.mrb[0].mxu0
        %v4987 = vadd.f32 0.0, %v4986
        %v4988 = vpop.f32.mrb[0].mxu0
        %4989 = vmatprep.mubr.bf16.mxu0 0
        %4990 = vmatmul.mubr.bf16.gmra.mrb[0].mxu0 %v4914
        %v4991 = vpop.f32.mrb[0].mxu0
        %v4992 = vadd.f32 0.0, %v4991
        %v4993 = vpop.f32.mrb[0].mxu0
        %v4994 = vpop.f32.mrb[0].mxu0
        %v4995 = vadd.f32 0.0, %v4994
        %v4996 = vpop.f32.mrb[0].mxu0
        %4997 = vmatprep.mubr.bf16.mxu0 0
        %4998 = vmatmul.mubr.bf16.gmra.mrb[0].mxu0 %v4917
        %v4999 = vpop.f32.mrb[0].mxu0
        %v5000 = vadd.f32 0.0, %v4999
        %v5001 = vpop.f32.mrb[0].mxu0
        %v5002 = vpop.f32.mrb[0].mxu0
        %v5003 = vadd.f32 0.0, %v5002
        %v5004 = vpop.f32.mrb[0].mxu0
        %5005 = vmatprep.mubr.bf16.mxu0 0
        %5006 = vmatmul.mubr.bf16.gmra.mrb[0].mxu0 %v4920
        %v5007 = vpop.f32.mrb[0].mxu0
        %v5008 = vadd.f32 0.0, %v5007
        %v5009 = vpop.f32.mrb[0].mxu0
        %v5010 = vpop.f32.mrb[0].mxu0
        %v5011 = vadd.f32 0.0, %v5010
        %v5012 = vpop.f32.mrb[0].mxu0
        %5013 = vmatprep.mubr.bf16.mxu0 0
        %5014 = vmatmul.mubr.bf16.gmra.mrb[0].mxu0 %v4923
        %v5015 = vpop.f32.mrb[0].mxu0
        %v5016 = vadd.f32 0.0, %v5015
        %v5017 = vpop.f32.mrb[0].mxu0
        %v5018 = vpop.f32.mrb[0].mxu0
        %v5019 = vadd.f32 0.0, %v5018
        %v5020 = vpop.f32.mrb[0].mxu0
        %5021 = vdwg.mxu0
        %v5022 = vadd.f32 %v4848, %v4960
        %v5023 = vadd.f32 %v4849, %v4963
        %v5024 = vadd.f32 %v4850, %v4968
        %v5025 = vadd.f32 %v4851, %v4971
        %v5026 = vadd.f32 %v4852, %v4976
        %v5027 = vadd.f32 %v4853, %v4979
        %v5028 = vadd.f32 %v4854, %v4984
        %v5029 = vadd.f32 %v4855, %v4987
        %v5030 = vadd.f32 %v4856, %v4992
        %v5031 = vadd.f32 %v4857, %v4995
        %v5032 = vadd.f32 %v4858, %v5000
        %v5033 = vadd.f32 %v4859, %v5003
        %v5034 = vadd.f32 %v4860, %v5008
        %v5035 = vadd.f32 %v4861, %v5011
        %v5036 = vadd.f32 %v4862, %v5016
        %v5037 = vadd.f32 %v4863, %v5019
        %v5038 = vld [vmem:[%s4] sm:$0x1]
        %v5040 = vlaneseq
        %v5041 = vshrl.u32 %v5040, 7
        %v5042 = vsub.s32 0, %v5041
        %v5043 = vrot.slane %v5038, %v5042
        %v5045 = vadd.f32 %v5022, %v5043
        %v5046 = vadd.f32 %v5023, %v5043
        %v5047 = vadd.f32 %v5024, %v5043
        %v5048 = vadd.f32 %v5025, %v5043
        %v5049 = vadd.f32 %v5026, %v5043
        %v5050 = vadd.f32 %v5027, %v5043
        %v5051 = vadd.f32 %v5028, %v5043
        %v5052 = vadd.f32 %v5029, %v5043
        %v5053 = vadd.f32 %v5030, %v5043
        %v5054 = vadd.f32 %v5031, %v5043
        %v5055 = vadd.f32 %v5032, %v5043
        %v5056 = vadd.f32 %v5033, %v5043
        %v5057 = vadd.f32 %v5034, %v5043
        %v5058 = vadd.f32 %v5035, %v5043
        %v5059 = vadd.f32 %v5036, %v5043
        %v5060 = vadd.f32 %v5037, %v5043
        %v5061 = vmax.f32 %v5045, 0.0
        %v5062 = vmax.f32 %v5046, 0.0
        %v5063 = vmax.f32 %v5047, 0.0
        %v5064 = vmax.f32 %v5048, 0.0
        %v5065 = vmax.f32 %v5049, 0.0
        %v5066 = vmax.f32 %v5050, 0.0
        %v5067 = vmax.f32 %v5051, 0.0
        %v5068 = vmax.f32 %v5052, 0.0
        %v5069 = vmax.f32 %v5053, 0.0
        %v5070 = vmax.f32 %v5054, 0.0
        %v5071 = vmax.f32 %v5055, 0.0
        %v5072 = vmax.f32 %v5056, 0.0
        %v5073 = vmax.f32 %v5057, 0.0
        %v5074 = vmax.f32 %v5058, 0.0
        %v5075 = vmax.f32 %v5059, 0.0
        %v5076 = vmax.f32 %v5060, 0.0
        %5077 = vst.msk [vmem:[#allocation3 + $0x80] sm:$0xff] %vm556, %v5061
        %5078 = vst.msk [vmem:[#allocation3 + $0x88] sm:$0xff] %vm556, %v5062
        %5079 = vst.msk [vmem:[#allocation3 + $0x90] sm:$0xff] %vm556, %v5063
        %5080 = vst.msk [vmem:[#allocation3 + $0x98] sm:$0xff] %vm556, %v5064
        %5081 = vst.msk [vmem:[#allocation3 + $0xa0] sm:$0xff] %vm556, %v5065
        %5082 = vst.msk [vmem:[#allocation3 + $0xa8] sm:$0xff] %vm556, %v5066
        %5083 = vst.msk [vmem:[#allocation3 + $0xb0] sm:$0xff] %vm556, %v5067
        %5084 = vst.msk [vmem:[#allocation3 + $0xb8] sm:$0xff] %vm556, %v5068
        %5085 = vst.msk [vmem:[#allocation3 + $0xc0] sm:$0xff] %vm556, %v5069
        %5086 = vst.msk [vmem:[#allocation3 + $0xc8] sm:$0xff] %vm556, %v5070
        %5087 = vst.msk [vmem:[#allocation3 + $0xd0] sm:$0xff] %vm556, %v5071
        %5088 = vst.msk [vmem:[#allocation3 + $0xd8] sm:$0xff] %vm556, %v5072
        %5089 = vst.msk [vmem:[#allocation3 + $0xe0] sm:$0xff] %vm556, %v5073
        %5090 = vst.msk [vmem:[#allocation3 + $0xe8] sm:$0xff] %vm556, %v5074
        %5091 = vst.msk [vmem:[#allocation3 + $0xf0] sm:$0xff] %vm556, %v5075
        %5092 = vst.msk [vmem:[#allocation3 + $0xf8] sm:$0xff] %vm556, %v5076
        %v5093 = vld [vmem:[#allocation2 + $0x80] sm:$0xf]
        %v5094 = vld [vmem:[#allocation2 + $0x84] sm:$0xf]
        %v5095 = vld [vmem:[#allocation2 + $0x88] sm:$0xf]
        %v5096 = vld [vmem:[#allocation2 + $0x8c] sm:$0x7]
        %v5097 = vld [vmem:[%s3] sm:$0xf]
        %v5098 = vld [vmem:[%s3 + $0x4] sm:$0xf]
        %v5099 = vld [vmem:[%s3 + $0x8] sm:$0xf]
        %v5100 = vld [vmem:[%s3 + $0xc] sm:$0xf]
        %v5101 = vld [vmem:[#allocation2 + $0x8c] sm:$0xf]
        %v5102 = vld [vmem:[%s1290] sm:$0xf]
        %v5103 = vld [vmem:[%s1290 + $0x4] sm:$0xf]
        %v5104 = vld [vmem:[%s1290 + $0x8] sm:$0xf]
        %v5105 = vld [vmem:[%s1290 + $0xc] sm:$0xf]
        %v5110 = vunpack.c.l.b16 %v5093
        %v5111 = vunpack.c.l.b16 %v5094
        %v5112 = vunpack.c.l.b16 %v5095
        %v5113 = vunpack.c.l.b16 %v5101
        %v5114 = vpack.c.b16 %v5111, %v5110
        %v5115 = vpack.c.b16 %v5113, %v5112
        %v5117 = vshrl.u32 %v5114, 16
        %v5119 = vshll.u32 %v5114, 16
        %v5121 = vrot.slane %v5119, 1
        %v5122 = vor.u32 %v5117, %v5121
        %v5124 = vshll.u32 %v5115, 16
        %v5126 = vrot.slane %v5124, 1
        %v5127 = vsel %vm1338, %v5122, %v5126
        %v5128 = vshrl.u32 %v5115, 16
        %v5130 = vor.u32 %v5128, %v5126
        %v5135 = vunpack.c.l.b16 %v5102
        %v5136 = vunpack.c.l.b16 %v5103
        %v5137 = vunpack.c.l.b16 %v5104
        %v5138 = vunpack.c.l.b16 %v5105
        %v5139 = vpack.c.b16 %v5136, %v5135
        %v5140 = vpack.c.b16 %v5138, %v5137
        %v5144 = vsel %vm556, %v5127, 0
        %v5147 = vsel %vm556, %v5130, 0
        %5149 = vmatprep.subr.bf16.mxu0 0
        %5150 = vmatpush1.bf16.msra.mxu0 %v5139
        %5151 = vmatprep.subr.bf16.mxu0 0
        %5152 = vmatpush1.bf16.msra.mxu0 %v5140
        %5153 = vmatprep.subr.bf16.mxu0 0
        %5154 = vmatpush1.bf16.msra.mxu0 0
        %5155 = vmatprep.subr.bf16.mxu0 0
        %5156 = vmatpush1.bf16.msra.mxu0 0
        %5157 = vmatprep.subr.bf16.mxu0 0
        %5158 = vmatpush1.bf16.msra.mxu0 0
        %5159 = vmatprep.subr.bf16.mxu0 0
        %5160 = vmatpush1.bf16.msra.mxu0 0
        %5161 = vmatprep.subr.bf16.mxu0 0
        %5162 = vmatpush1.bf16.msra.mxu0 0
        %5163 = vmatprep.subr.bf16.mxu0 0
        %5164 = vmatpush1.bf16.msra.mxu0 0
        %5165 = vmatprep.subr.bf16.mxu0 0
        %5166 = vmatpush1.bf16.msra.mxu0 0
        %5167 = vmatprep.subr.bf16.mxu0 0
        %5168 = vmatpush1.bf16.msra.mxu0 0
        %5169 = vmatprep.subr.bf16.mxu0 0
        %5170 = vmatpush1.bf16.msra.mxu0 0
        %5171 = vmatprep.subr.bf16.mxu0 0
        %5172 = vmatpush1.bf16.msra.mxu0 0
        %5173 = vmatprep.subr.bf16.mxu0 0
        %5174 = vmatpush1.bf16.msra.mxu0 0
        %5175 = vmatprep.subr.bf16.mxu0 0
        %5176 = vmatpush1.bf16.msra.mxu0 0
        %5177 = vmatprep.subr.bf16.mxu0 0
        %5178 = vmatpush1.bf16.msra.mxu0 0
        %5179 = vmatprep.subr.bf16.mxu0 0
        %5180 = vmatpush1.bf16.msra.mxu0 0
        %5181 = vmatprep.mubr.bf16.mxu0 0
        %5182 = vmatmul.mubr.bf16.gmra.mrb[0].mxu0 %v5144
        %v5183 = vpop.f32.mrb[0].mxu0
        %v5184 = vadd.f32 0.0, %v5183
        %v5185 = vpop.f32.mrb[0].mxu0
        %v5186 = vpop.f32.mrb[0].mxu0
        %v5187 = vadd.f32 0.0, %v5186
        %v5188 = vpop.f32.mrb[0].mxu0
        %5189 = vmatprep.mubr.bf16.mxu0 0
        %5190 = vmatmul.mubr.bf16.gmra.mrb[0].mxu0 %v5147
        %v5191 = vpop.f32.mrb[0].mxu0
        %v5192 = vadd.f32 0.0, %v5191
        %v5193 = vpop.f32.mrb[0].mxu0
        %v5194 = vpop.f32.mrb[0].mxu0
        %v5195 = vadd.f32 0.0, %v5194
        %v5196 = vpop.f32.mrb[0].mxu0
        %5197 = vdwg.mxu0
        %v5199 = vunpack.c.l.b16 %v5096
        %v5200 = vpack.c.b16 %v5199, %v5112
        %v5205 = vunpack.c.l.b16 %v5097
        %v5206 = vunpack.c.l.b16 %v5098
        %v5207 = vunpack.c.l.b16 %v5099
        %v5208 = vunpack.c.l.b16 %v5100
        %v5209 = vpack.c.b16 %v5206, %v5205
        %v5210 = vpack.c.b16 %v5208, %v5207
        %v5213 = vsel %vm556, %v5114, 0
        %v5216 = vsel %vm556, %v5200, 0
        %5218 = vmatprep.subr.bf16.mxu0 0
        %5219 = vmatpush1.bf16.msra.mxu0 %v5209
        %5220 = vmatprep.subr.bf16.mxu0 0
        %5221 = vmatpush1.bf16.msra.mxu0 %v5210
        %5222 = vmatprep.subr.bf16.mxu0 0
        %5223 = vmatpush1.bf16.msra.mxu0 0
        %5224 = vmatprep.subr.bf16.mxu0 0
        %5225 = vmatpush1.bf16.msra.mxu0 0
        %5226 = vmatprep.subr.bf16.mxu0 0
        %5227 = vmatpush1.bf16.msra.mxu0 0
        %5228 = vmatprep.subr.bf16.mxu0 0
        %5229 = vmatpush1.bf16.msra.mxu0 0
        %5230 = vmatprep.subr.bf16.mxu0 0
        %5231 = vmatpush1.bf16.msra.mxu0 0
        %5232 = vmatprep.subr.bf16.mxu0 0
        %5233 = vmatpush1.bf16.msra.mxu0 0
        %5234 = vmatprep.subr.bf16.mxu0 0
        %5235 = vmatpush1.bf16.msra.mxu0 0
        %5236 = vmatprep.subr.bf16.mxu0 0
        %5237 = vmatpush1.bf16.msra.mxu0 0
        %5238 = vmatprep.subr.bf16.mxu0 0
        %5239 = vmatpush1.bf16.msra.mxu0 0
        %5240 = vmatprep.subr.bf16.mxu0 0
        %5241 = vmatpush1.bf16.msra.mxu0 0
        %5242 = vmatprep.subr.bf16.mxu0 0
        %5243 = vmatpush1.bf16.msra.mxu0 0
        %5244 = vmatprep.subr.bf16.mxu0 0
        %5245 = vmatpush1.bf16.msra.mxu0 0
        %5246 = vmatprep.subr.bf16.mxu0 0
        %5247 = vmatpush1.bf16.msra.mxu0 0
        %5248 = vmatprep.subr.bf16.mxu0 0
        %5249 = vmatpush1.bf16.msra.mxu0 0
        %5250 = vmatprep.mubr.bf16.mxu0 0
        %5251 = vmatmul.mubr.bf16.gmra.mrb[0].mxu0 %v5213
        %v5252 = vpop.f32.mrb[0].mxu0
        %v5253 = vadd.f32 %v5184, %v5252
        %v5254 = vpop.f32.mrb[0].mxu0
        %v5255 = vpop.f32.mrb[0].mxu0
        %v5256 = vadd.f32 %v5187, %v5255
        %v5257 = vpop.f32.mrb[0].mxu0
        %5258 = vmatprep.mubr.bf16.mxu0 0
        %5259 = vmatmul.mubr.bf16.gmra.mrb[0].mxu0 %v5216
        %v5260 = vpop.f32.mrb[0].mxu0
        %v5261 = vadd.f32 %v5192, %v5260
        %v5262 = vpop.f32.mrb[0].mxu0
        %v5263 = vpop.f32.mrb[0].mxu0
        %v5264 = vadd.f32 %v5195, %v5263
        %v5265 = vpop.f32.mrb[0].mxu0
        %5266 = vdwg.mxu0
        %v5267 = vld [vmem:[#allocation2 + $0x80] sm:$0xe]
        %v5268 = vld [vmem:[%s1666] sm:$0xf]
        %v5269 = vld [vmem:[%s1666 + $0x4] sm:$0xf]
        %v5270 = vld [vmem:[%s1666 + $0x8] sm:$0xf]
        %v5271 = vld [vmem:[%s1666 + $0xc] sm:$0xf]
        %v5273 = vunpack.c.l.b16 %v5267
        %v5274 = vpack.c.b16 %v5111, %v5273
        %v5275 = vrot.slane %v5274, 1
        %v5276 = vrot.slane %v5115, 1
        %v5277 = vsel %vm1674, %v5275, %v5276
        %v5282 = vunpack.c.l.b16 %v5268
        %v5283 = vunpack.c.l.b16 %v5269
        %v5284 = vunpack.c.l.b16 %v5270
        %v5285 = vunpack.c.l.b16 %v5271
        %v5286 = vpack.c.b16 %v5283, %v5282
        %v5287 = vpack.c.b16 %v5285, %v5284
        %v5291 = vsel %vm556, %v5277, 0
        %v5294 = vsel %vm556, %v5276, 0
        %5296 = vmatprep.subr.bf16.mxu0 0
        %5297 = vmatpush1.bf16.msra.mxu0 %v5286
        %5298 = vmatprep.subr.bf16.mxu0 0
        %5299 = vmatpush1.bf16.msra.mxu0 %v5287
        %5300 = vmatprep.subr.bf16.mxu0 0
        %5301 = vmatpush1.bf16.msra.mxu0 0
        %5302 = vmatprep.subr.bf16.mxu0 0
        %5303 = vmatpush1.bf16.msra.mxu0 0
        %5304 = vmatprep.subr.bf16.mxu0 0
        %5305 = vmatpush1.bf16.msra.mxu0 0
        %5306 = vmatprep.subr.bf16.mxu0 0
        %5307 = vmatpush1.bf16.msra.mxu0 0
        %5308 = vmatprep.subr.bf16.mxu0 0
        %5309 = vmatpush1.bf16.msra.mxu0 0
        %5310 = vmatprep.subr.bf16.mxu0 0
        %5311 = vmatpush1.bf16.msra.mxu0 0
        %5312 = vmatprep.subr.bf16.mxu0 0
        %5313 = vmatpush1.bf16.msra.mxu0 0
        %5314 = vmatprep.subr.bf16.mxu0 0
        %5315 = vmatpush1.bf16.msra.mxu0 0
        %5316 = vmatprep.subr.bf16.mxu0 0
        %5317 = vmatpush1.bf16.msra.mxu0 0
        %5318 = vmatprep.subr.bf16.mxu0 0
        %5319 = vmatpush1.bf16.msra.mxu0 0
        %5320 = vmatprep.subr.bf16.mxu0 0
        %5321 = vmatpush1.bf16.msra.mxu0 0
        %5322 = vmatprep.subr.bf16.mxu0 0
        %5323 = vmatpush1.bf16.msra.mxu0 0
        %5324 = vmatprep.subr.bf16.mxu0 0
        %5325 = vmatpush1.bf16.msra.mxu0 0
        %5326 = vmatprep.subr.bf16.mxu0 0
        %5327 = vmatpush1.bf16.msra.mxu0 0
        %5328 = vmatprep.mubr.bf16.mxu0 0
        %5329 = vmatmul.mubr.bf16.gmra.mrb[0].mxu0 %v5291
        %v5330 = vpop.f32.mrb[0].mxu0
        %v5331 = vadd.f32 0.0, %v5330
        %v5332 = vpop.f32.mrb[0].mxu0
        %v5333 = vpop.f32.mrb[0].mxu0
        %v5334 = vadd.f32 0.0, %v5333
        %v5335 = vpop.f32.mrb[0].mxu0
        %5336 = vmatprep.mubr.bf16.mxu0 0
        %5337 = vmatmul.mubr.bf16.gmra.mrb[0].mxu0 %v5294
        %v5338 = vpop.f32.mrb[0].mxu0
        %v5339 = vadd.f32 0.0, %v5338
        %v5340 = vpop.f32.mrb[0].mxu0
        %v5341 = vpop.f32.mrb[0].mxu0
        %v5342 = vadd.f32 0.0, %v5341
        %v5343 = vpop.f32.mrb[0].mxu0
        %5344 = vdwg.mxu0
        %v5345 = vadd.f32 %v5253, %v5331
        %v5346 = vadd.f32 %v5256, %v5334
        %v5347 = vadd.f32 %v5261, %v5339
        %v5348 = vadd.f32 %v5264, %v5342
        %v5349 = vld [vmem:[#allocation2 + $0x88] sm:$0xe]
        %v5350 = vld [vmem:[#allocation2 + $0x8c] sm:$0xf]
        %v5351 = vld [vmem:[#allocation2 + $0x90] sm:$0xf]
        %v5352 = vld [vmem:[#allocation2 + $0x94] sm:$0xf]
        %v5353 = vld [vmem:[%s1858] sm:$0xf]
        %v5354 = vld [vmem:[%s1858 + $0x4] sm:$0xf]
        %v5355 = vld [vmem:[%s1858 + $0x8] sm:$0xf]
        %v5356 = vld [vmem:[%s1858 + $0xc] sm:$0xf]
        %v5361 = vunpack.c.l.b16 %v5349
        %v5362 = vunpack.c.l.b16 %v5350
        %v5363 = vunpack.c.l.b16 %v5351
        %v5364 = vunpack.c.l.b16 %v5352
        %v5365 = vpack.c.b16 %v5362, %v5361
        %v5366 = vpack.c.b16 %v5364, %v5363
        %v5367 = vrot.slane %v5365, 1
        %v5368 = vrot.slane %v5366, 1
        %v5369 = vsel %vm1674, %v5367, %v5368
        %v5374 = vunpack.c.l.b16 %v5353
        %v5375 = vunpack.c.l.b16 %v5354
        %v5376 = vunpack.c.l.b16 %v5355
        %v5377 = vunpack.c.l.b16 %v5356
        %v5378 = vpack.c.b16 %v5375, %v5374
        %v5379 = vpack.c.b16 %v5377, %v5376
        %v5383 = vsel %vm556, %v5369, 0
        %v5386 = vsel %vm556, %v5368, 0
        %5388 = vmatprep.subr.bf16.mxu0 0
        %5389 = vmatpush1.bf16.msra.mxu0 %v5378
        %5390 = vmatprep.subr.bf16.mxu0 0
        %5391 = vmatpush1.bf16.msra.mxu0 %v5379
        %5392 = vmatprep.subr.bf16.mxu0 0
        %5393 = vmatpush1.bf16.msra.mxu0 0
        %5394 = vmatprep.subr.bf16.mxu0 0
        %5395 = vmatpush1.bf16.msra.mxu0 0
        %5396 = vmatprep.subr.bf16.mxu0 0
        %5397 = vmatpush1.bf16.msra.mxu0 0
        %5398 = vmatprep.subr.bf16.mxu0 0
        %5399 = vmatpush1.bf16.msra.mxu0 0
        %5400 = vmatprep.subr.bf16.mxu0 0
        %5401 = vmatpush1.bf16.msra.mxu0 0
        %5402 = vmatprep.subr.bf16.mxu0 0
        %5403 = vmatpush1.bf16.msra.mxu0 0
        %5404 = vmatprep.subr.bf16.mxu0 0
        %5405 = vmatpush1.bf16.msra.mxu0 0
        %5406 = vmatprep.subr.bf16.mxu0 0
        %5407 = vmatpush1.bf16.msra.mxu0 0
        %5408 = vmatprep.subr.bf16.mxu0 0
        %5409 = vmatpush1.bf16.msra.mxu0 0
        %5410 = vmatprep.subr.bf16.mxu0 0
        %5411 = vmatpush1.bf16.msra.mxu0 0
        %5412 = vmatprep.subr.bf16.mxu0 0
        %5413 = vmatpush1.bf16.msra.mxu0 0
        %5414 = vmatprep.subr.bf16.mxu0 0
        %5415 = vmatpush1.bf16.msra.mxu0 0
        %5416 = vmatprep.subr.bf16.mxu0 0
        %5417 = vmatpush1.bf16.msra.mxu0 0
        %5418 = vmatprep.subr.bf16.mxu0 0
        %5419 = vmatpush1.bf16.msra.mxu0 0
        %5420 = vmatprep.mubr.bf16.mxu0 0
        %5421 = vmatmul.mubr.bf16.gmra.mrb[0].mxu0 %v5383
        %v5422 = vpop.f32.mrb[0].mxu0
        %v5423 = vadd.f32 0.0, %v5422
        %v5424 = vpop.f32.mrb[0].mxu0
        %v5425 = vpop.f32.mrb[0].mxu0
        %v5426 = vadd.f32 0.0, %v5425
        %v5427 = vpop.f32.mrb[0].mxu0
        %5428 = vmatprep.mubr.bf16.mxu0 0
        %5429 = vmatmul.mubr.bf16.gmra.mrb[0].mxu0 %v5386
        %v5430 = vpop.f32.mrb[0].mxu0
        %v5431 = vadd.f32 0.0, %v5430
        %v5432 = vpop.f32.mrb[0].mxu0
        %v5433 = vpop.f32.mrb[0].mxu0
        %v5434 = vadd.f32 0.0, %v5433
        %v5435 = vpop.f32.mrb[0].mxu0
        %5436 = vdwg.mxu0
        %v5437 = vadd.f32 %v5345, %v5423
        %v5438 = vadd.f32 %v5346, %v5426
        %v5439 = vadd.f32 %v5347, %v5431
        %v5440 = vadd.f32 %v5348, %v5434
        %v5441 = vld [vmem:[#allocation2 + $0x88] sm:$0xe]
        %v5442 = vld [vmem:[#allocation2 + $0x8c] sm:$0xf]
        %v5443 = vld [vmem:[#allocation2 + $0x90] sm:$0xf]
        %v5444 = vld [vmem:[#allocation2 + $0x94] sm:$0xf]
        %v5445 = vld [vmem:[#allocation2 + $0x98] sm:$0x1]
        %v5446 = vld [vmem:[%s2073] sm:$0xf]
        %v5447 = vld [vmem:[%s2073 + $0x4] sm:$0xf]
        %v5448 = vld [vmem:[%s2073 + $0x8] sm:$0xf]
        %v5449 = vld [vmem:[%s2073 + $0xc] sm:$0xf]
        %v5455 = vunpack.c.l.b16 %v5441
        %v5456 = vunpack.c.l.b16 %v5442
        %v5457 = vunpack.c.l.b16 %v5443
        %v5458 = vunpack.c.l.b16 %v5444
        %v5459 = vunpack.c.l.b16 %v5445
        %v5460 = vpack.c.b16 %v5456, %v5455
        %v5461 = vpack.c.b16 %v5458, %v5457
        %v5462 = vpack.c.b16 %v5459, %v5459
        %v5464 = vshrl.u32 %v5460, 16
        %v5466 = vrot.slane %v5464, 1
        %v5467 = vshll.u32 %v5460, 16
        %v5469 = vrot.slane %v5467, 2
        %v5470 = vor.u32 %v5466, %v5469
        %v5472 = vshrl.u32 %v5461, 16
        %v5474 = vrot.slane %v5472, 1
        %v5475 = vshll.u32 %v5461, 16
        %v5477 = vrot.slane %v5475, 2
        %v5478 = vor.u32 %v5474, %v5477
        %v5479 = vsel %vm2081, %v5470, %v5478
        %v5481 = vshll.u32 %v5462, 16
        %v5483 = vrot.slane %v5481, 2
        %v5484 = vsel %vm2081, %v5478, %v5483
        %v5489 = vunpack.c.l.b16 %v5446
        %v5490 = vunpack.c.l.b16 %v5447
        %v5491 = vunpack.c.l.b16 %v5448
        %v5492 = vunpack.c.l.b16 %v5449
        %v5493 = vpack.c.b16 %v5490, %v5489
        %v5494 = vpack.c.b16 %v5492, %v5491
        %v5498 = vsel %vm556, %v5479, 0
        %v5501 = vsel %vm556, %v5484, 0
        %5503 = vmatprep.subr.bf16.mxu0 0
        %5504 = vmatpush1.bf16.msra.mxu0 %v5493
        %5505 = vmatprep.subr.bf16.mxu0 0
        %5506 = vmatpush1.bf16.msra.mxu0 %v5494
        %5507 = vmatprep.subr.bf16.mxu0 0
        %5508 = vmatpush1.bf16.msra.mxu0 0
        %5509 = vmatprep.subr.bf16.mxu0 0
        %5510 = vmatpush1.bf16.msra.mxu0 0
        %5511 = vmatprep.subr.bf16.mxu0 0
        %5512 = vmatpush1.bf16.msra.mxu0 0
        %5513 = vmatprep.subr.bf16.mxu0 0
        %5514 = vmatpush1.bf16.msra.mxu0 0
        %5515 = vmatprep.subr.bf16.mxu0 0
        %5516 = vmatpush1.bf16.msra.mxu0 0
        %5517 = vmatprep.subr.bf16.mxu0 0
        %5518 = vmatpush1.bf16.msra.mxu0 0
        %5519 = vmatprep.subr.bf16.mxu0 0
        %5520 = vmatpush1.bf16.msra.mxu0 0
        %5521 = vmatprep.subr.bf16.mxu0 0
        %5522 = vmatpush1.bf16.msra.mxu0 0
        %5523 = vmatprep.subr.bf16.mxu0 0
        %5524 = vmatpush1.bf16.msra.mxu0 0
        %5525 = vmatprep.subr.bf16.mxu0 0
        %5526 = vmatpush1.bf16.msra.mxu0 0
        %5527 = vmatprep.subr.bf16.mxu0 0
        %5528 = vmatpush1.bf16.msra.mxu0 0
        %5529 = vmatprep.subr.bf16.mxu0 0
        %5530 = vmatpush1.bf16.msra.mxu0 0
        %5531 = vmatprep.subr.bf16.mxu0 0
        %5532 = vmatpush1.bf16.msra.mxu0 0
        %5533 = vmatprep.subr.bf16.mxu0 0
        %5534 = vmatpush1.bf16.msra.mxu0 0
        %5535 = vmatprep.mubr.bf16.mxu0 0
        %5536 = vmatmul.mubr.bf16.gmra.mrb[0].mxu0 %v5498
        %v5537 = vpop.f32.mrb[0].mxu0
        %v5538 = vadd.f32 0.0, %v5537
        %v5539 = vpop.f32.mrb[0].mxu0
        %v5540 = vpop.f32.mrb[0].mxu0
        %v5541 = vadd.f32 0.0, %v5540
        %v5542 = vpop.f32.mrb[0].mxu0
        %5543 = vmatprep.mubr.bf16.mxu0 0
        %5544 = vmatmul.mubr.bf16.gmra.mrb[0].mxu0 %v5501
        %v5545 = vpop.f32.mrb[0].mxu0
        %v5546 = vadd.f32 0.0, %v5545
        %v5547 = vpop.f32.mrb[0].mxu0
        %v5548 = vpop.f32.mrb[0].mxu0
        %v5549 = vadd.f32 0.0, %v5548
        %v5550 = vpop.f32.mrb[0].mxu0
        %5551 = vdwg.mxu0
        %v5552 = vadd.f32 %v5437, %v5538
        %v5553 = vadd.f32 %v5438, %v5541
        %v5554 = vadd.f32 %v5439, %v5546
        %v5555 = vadd.f32 %v5440, %v5549
        %v5556 = vld [vmem:[#allocation2 + $0x88] sm:$0xc]
        %v5557 = vld [vmem:[%s2312] sm:$0xf]
        %v5558 = vld [vmem:[%s2312 + $0x4] sm:$0xf]
        %v5559 = vld [vmem:[%s2312 + $0x8] sm:$0xf]
        %v5560 = vld [vmem:[%s2312 + $0xc] sm:$0xf]
        %v5562 = vunpack.c.l.b16 %v5556
        %v5563 = vpack.c.b16 %v5456, %v5562
        %v5564 = vrot.slane %v5563, 2
        %v5565 = vrot.slane %v5461, 2
        %v5566 = vsel %vm2320, %v5564, %v5565
        %v5567 = vrot.slane %v5462, 2
        %v5568 = vsel %vm2320, %v5565, %v5567
        %v5573 = vunpack.c.l.b16 %v5557
        %v5574 = vunpack.c.l.b16 %v5558
        %v5575 = vunpack.c.l.b16 %v5559
        %v5576 = vunpack.c.l.b16 %v5560
        %v5577 = vpack.c.b16 %v5574, %v5573
        %v5578 = vpack.c.b16 %v5576, %v5575
        %v5582 = vsel %vm556, %v5566, 0
        %v5585 = vsel %vm556, %v5568, 0
        %5587 = vmatprep.subr.bf16.mxu0 0
        %5588 = vmatpush1.bf16.msra.mxu0 %v5577
        %5589 = vmatprep.subr.bf16.mxu0 0
        %5590 = vmatpush1.bf16.msra.mxu0 %v5578
        %5591 = vmatprep.subr.bf16.mxu0 0
        %5592 = vmatpush1.bf16.msra.mxu0 0
        %5593 = vmatprep.subr.bf16.mxu0 0
        %5594 = vmatpush1.bf16.msra.mxu0 0
        %5595 = vmatprep.subr.bf16.mxu0 0
        %5596 = vmatpush1.bf16.msra.mxu0 0
        %5597 = vmatprep.subr.bf16.mxu0 0
        %5598 = vmatpush1.bf16.msra.mxu0 0
        %5599 = vmatprep.subr.bf16.mxu0 0
        %5600 = vmatpush1.bf16.msra.mxu0 0
        %5601 = vmatprep.subr.bf16.mxu0 0
        %5602 = vmatpush1.bf16.msra.mxu0 0
        %5603 = vmatprep.subr.bf16.mxu0 0
        %5604 = vmatpush1.bf16.msra.mxu0 0
        %5605 = vmatprep.subr.bf16.mxu0 0
        %5606 = vmatpush1.bf16.msra.mxu0 0
        %5607 = vmatprep.subr.bf16.mxu0 0
        %5608 = vmatpush1.bf16.msra.mxu0 0
        %5609 = vmatprep.subr.bf16.mxu0 0
        %5610 = vmatpush1.bf16.msra.mxu0 0
        %5611 = vmatprep.subr.bf16.mxu0 0
        %5612 = vmatpush1.bf16.msra.mxu0 0
        %5613 = vmatprep.subr.bf16.mxu0 0
        %5614 = vmatpush1.bf16.msra.mxu0 0
        %5615 = vmatprep.subr.bf16.mxu0 0
        %5616 = vmatpush1.bf16.msra.mxu0 0
        %5617 = vmatprep.subr.bf16.mxu0 0
        %5618 = vmatpush1.bf16.msra.mxu0 0
        %5619 = vmatprep.mubr.bf16.mxu0 0
        %5620 = vmatmul.mubr.bf16.gmra.mrb[0].mxu0 %v5582
        %v5621 = vpop.f32.mrb[0].mxu0
        %v5622 = vadd.f32 0.0, %v5621
        %v5623 = vpop.f32.mrb[0].mxu0
        %v5624 = vpop.f32.mrb[0].mxu0
        %v5625 = vadd.f32 0.0, %v5624
        %v5626 = vpop.f32.mrb[0].mxu0
        %5627 = vmatprep.mubr.bf16.mxu0 0
        %5628 = vmatmul.mubr.bf16.gmra.mrb[0].mxu0 %v5585
        %v5629 = vpop.f32.mrb[0].mxu0
        %v5630 = vadd.f32 0.0, %v5629
        %v5631 = vpop.f32.mrb[0].mxu0
        %v5632 = vpop.f32.mrb[0].mxu0
        %v5633 = vadd.f32 0.0, %v5632
        %v5634 = vpop.f32.mrb[0].mxu0
        %5635 = vdwg.mxu0
        %v5636 = vadd.f32 %v5552, %v5622
        %v5637 = vadd.f32 %v5553, %v5625
        %v5638 = vadd.f32 %v5554, %v5630
        %v5639 = vadd.f32 %v5555, %v5633
        %v5640 = vld [vmem:[#allocation2 + $0x90] sm:$0xc]
        %v5641 = vld [vmem:[#allocation2 + $0x94] sm:$0xf]
        %v5642 = vld [vmem:[#allocation2 + $0x98] sm:$0xf]
        %v5643 = vld [vmem:[#allocation2 + $0x9c] sm:$0xf]
        %v5644 = vld [vmem:[#allocation2 + $0xa0] sm:$0x1]
        %v5645 = vld [vmem:[%s2504] sm:$0xf]
        %v5646 = vld [vmem:[%s2504 + $0x4] sm:$0xf]
        %v5647 = vld [vmem:[%s2504 + $0x8] sm:$0xf]
        %v5648 = vld [vmem:[%s2504 + $0xc] sm:$0xf]
        %v5654 = vunpack.c.l.b16 %v5640
        %v5655 = vunpack.c.l.b16 %v5641
        %v5656 = vunpack.c.l.b16 %v5642
        %v5657 = vunpack.c.l.b16 %v5643
        %v5658 = vunpack.c.l.b16 %v5644
        %v5659 = vpack.c.b16 %v5655, %v5654
        %v5660 = vpack.c.b16 %v5657, %v5656
        %v5661 = vpack.c.b16 %v5658, %v5658
        %v5662 = vrot.slane %v5659, 2
        %v5663 = vrot.slane %v5660, 2
        %v5664 = vsel %vm2320, %v5662, %v5663
        %v5665 = vrot.slane %v5661, 2
        %v5666 = vsel %vm2320, %v5663, %v5665
        %v5671 = vunpack.c.l.b16 %v5645
        %v5672 = vunpack.c.l.b16 %v5646
        %v5673 = vunpack.c.l.b16 %v5647
        %v5674 = vunpack.c.l.b16 %v5648
        %v5675 = vpack.c.b16 %v5672, %v5671
        %v5676 = vpack.c.b16 %v5674, %v5673
        %v5680 = vsel %vm556, %v5664, 0
        %v5683 = vsel %vm556, %v5666, 0
        %5685 = vmatprep.subr.bf16.mxu0 0
        %5686 = vmatpush1.bf16.msra.mxu0 %v5675
        %5687 = vmatprep.subr.bf16.mxu0 0
        %5688 = vmatpush1.bf16.msra.mxu0 %v5676
        %5689 = vmatprep.subr.bf16.mxu0 0
        %5690 = vmatpush1.bf16.msra.mxu0 0
        %5691 = vmatprep.subr.bf16.mxu0 0
        %5692 = vmatpush1.bf16.msra.mxu0 0
        %5693 = vmatprep.subr.bf16.mxu0 0
        %5694 = vmatpush1.bf16.msra.mxu0 0
        %5695 = vmatprep.subr.bf16.mxu0 0
        %5696 = vmatpush1.bf16.msra.mxu0 0
        %5697 = vmatprep.subr.bf16.mxu0 0
        %5698 = vmatpush1.bf16.msra.mxu0 0
        %5699 = vmatprep.subr.bf16.mxu0 0
        %5700 = vmatpush1.bf16.msra.mxu0 0
        %5701 = vmatprep.subr.bf16.mxu0 0
        %5702 = vmatpush1.bf16.msra.mxu0 0
        %5703 = vmatprep.subr.bf16.mxu0 0
        %5704 = vmatpush1.bf16.msra.mxu0 0
        %5705 = vmatprep.subr.bf16.mxu0 0
        %5706 = vmatpush1.bf16.msra.mxu0 0
        %5707 = vmatprep.subr.bf16.mxu0 0
        %5708 = vmatpush1.bf16.msra.mxu0 0
        %5709 = vmatprep.subr.bf16.mxu0 0
        %5710 = vmatpush1.bf16.msra.mxu0 0
        %5711 = vmatprep.subr.bf16.mxu0 0
        %5712 = vmatpush1.bf16.msra.mxu0 0
        %5713 = vmatprep.subr.bf16.mxu0 0
        %5714 = vmatpush1.bf16.msra.mxu0 0
        %5715 = vmatprep.subr.bf16.mxu0 0
        %5716 = vmatpush1.bf16.msra.mxu0 0
        %5717 = vmatprep.mubr.bf16.mxu0 0
        %5718 = vmatmul.mubr.bf16.gmra.mrb[0].mxu0 %v5680
        %v5719 = vpop.f32.mrb[0].mxu0
        %v5720 = vadd.f32 0.0, %v5719
        %v5721 = vpop.f32.mrb[0].mxu0
        %v5722 = vpop.f32.mrb[0].mxu0
        %v5723 = vadd.f32 0.0, %v5722
        %v5724 = vpop.f32.mrb[0].mxu0
        %5725 = vmatprep.mubr.bf16.mxu0 0
        %5726 = vmatmul.mubr.bf16.gmra.mrb[0].mxu0 %v5683
        %v5727 = vpop.f32.mrb[0].mxu0
        %v5728 = vadd.f32 0.0, %v5727
        %v5729 = vpop.f32.mrb[0].mxu0
        %v5730 = vpop.f32.mrb[0].mxu0
        %v5731 = vadd.f32 0.0, %v5730
        %v5732 = vpop.f32.mrb[0].mxu0
        %5733 = vdwg.mxu0
        %v5734 = vadd.f32 %v5636, %v5720
        %v5735 = vadd.f32 %v5637, %v5723
        %v5736 = vadd.f32 %v5638, %v5728
        %v5737 = vadd.f32 %v5639, %v5731
        %v5738 = vld [vmem:[#allocation2 + $0xa0] sm:$0x3]
        %v5739 = vld [vmem:[%s2719] sm:$0xf]
        %v5740 = vld [vmem:[%s2719 + $0x4] sm:$0xf]
        %v5741 = vld [vmem:[%s2719 + $0x8] sm:$0xf]
        %v5742 = vld [vmem:[%s2719 + $0xc] sm:$0xf]
        %v5744 = vunpack.c.l.b16 %v5738
        %v5745 = vpack.c.b16 %v5744, %v5744
        %v5747 = vshrl.u32 %v5659, 16
        %v5749 = vrot.slane %v5747, 2
        %v5750 = vshll.u32 %v5659, 16
        %v5752 = vrot.slane %v5750, 3
        %v5753 = vor.u32 %v5749, %v5752
        %v5755 = vshrl.u32 %v5660, 16
        %v5757 = vrot.slane %v5755, 2
        %v5758 = vshll.u32 %v5660, 16
        %v5760 = vrot.slane %v5758, 3
        %v5761 = vor.u32 %v5757, %v5760
        %v5762 = vsel %vm2727, %v5753, %v5761
        %v5764 = vshrl.u32 %v5745, 16
        %v5766 = vrot.slane %v5764, 2
        %v5767 = vshll.u32 %v5745, 16
        %v5769 = vrot.slane %v5767, 3
        %v5770 = vor.u32 %v5766, %v5769
        %v5771 = vsel %vm2727, %v5761, %v5770
        %v5776 = vunpack.c.l.b16 %v5739
        %v5777 = vunpack.c.l.b16 %v5740
        %v5778 = vunpack.c.l.b16 %v5741
        %v5779 = vunpack.c.l.b16 %v5742
        %v5780 = vpack.c.b16 %v5777, %v5776
        %v5781 = vpack.c.b16 %v5779, %v5778
        %v5785 = vsel %vm556, %v5762, 0
        %v5788 = vsel %vm556, %v5771, 0
        %5790 = vmatprep.subr.bf16.mxu0 0
        %5791 = vmatpush1.bf16.msra.mxu0 %v5780
        %5792 = vmatprep.subr.bf16.mxu0 0
        %5793 = vmatpush1.bf16.msra.mxu0 %v5781
        %5794 = vmatprep.subr.bf16.mxu0 0
        %5795 = vmatpush1.bf16.msra.mxu0 0
        %5796 = vmatprep.subr.bf16.mxu0 0
        %5797 = vmatpush1.bf16.msra.mxu0 0
        %5798 = vmatprep.subr.bf16.mxu0 0
        %5799 = vmatpush1.bf16.msra.mxu0 0
        %5800 = vmatprep.subr.bf16.mxu0 0
        %5801 = vmatpush1.bf16.msra.mxu0 0
        %5802 = vmatprep.subr.bf16.mxu0 0
        %5803 = vmatpush1.bf16.msra.mxu0 0
        %5804 = vmatprep.subr.bf16.mxu0 0
        %5805 = vmatpush1.bf16.msra.mxu0 0
        %5806 = vmatprep.subr.bf16.mxu0 0
        %5807 = vmatpush1.bf16.msra.mxu0 0
        %5808 = vmatprep.subr.bf16.mxu0 0
        %5809 = vmatpush1.bf16.msra.mxu0 0
        %5810 = vmatprep.subr.bf16.mxu0 0
        %5811 = vmatpush1.bf16.msra.mxu0 0
        %5812 = vmatprep.subr.bf16.mxu0 0
        %5813 = vmatpush1.bf16.msra.mxu0 0
        %5814 = vmatprep.subr.bf16.mxu0 0
        %5815 = vmatpush1.bf16.msra.mxu0 0
        %5816 = vmatprep.subr.bf16.mxu0 0
        %5817 = vmatpush1.bf16.msra.mxu0 0
        %5818 = vmatprep.subr.bf16.mxu0 0
        %5819 = vmatpush1.bf16.msra.mxu0 0
        %5820 = vmatprep.subr.bf16.mxu0 0
        %5821 = vmatpush1.bf16.msra.mxu0 0
        %5822 = vmatprep.mubr.bf16.mxu0 0
        %5823 = vmatmul.mubr.bf16.gmra.mrb[0].mxu0 %v5785
        %v5824 = vpop.f32.mrb[0].mxu0
        %v5825 = vadd.f32 0.0, %v5824
        %v5826 = vpop.f32.mrb[0].mxu0
        %v5827 = vpop.f32.mrb[0].mxu0
        %v5828 = vadd.f32 0.0, %v5827
        %v5829 = vpop.f32.mrb[0].mxu0
        %5830 = vmatprep.mubr.bf16.mxu0 0
        %5831 = vmatmul.mubr.bf16.gmra.mrb[0].mxu0 %v5788
        %v5832 = vpop.f32.mrb[0].mxu0
        %v5833 = vadd.f32 0.0, %v5832
        %v5834 = vpop.f32.mrb[0].mxu0
        %v5835 = vpop.f32.mrb[0].mxu0
        %v5836 = vadd.f32 0.0, %v5835
        %v5837 = vpop.f32.mrb[0].mxu0
        %5838 = vdwg.mxu0
        %v5839 = vadd.f32 %v5734, %v5825
        %v5840 = vadd.f32 %v5735, %v5828
        %v5841 = vadd.f32 %v5736, %v5833
        %v5842 = vadd.f32 %v5737, %v5836
        %v5843 = vld [vmem:[#allocation2 + $0x90] sm:$0x8]
        %v5844 = vld [vmem:[%s2958] sm:$0xf]
        %v5845 = vld [vmem:[%s2958 + $0x4] sm:$0xf]
        %v5846 = vld [vmem:[%s2958 + $0x8] sm:$0xf]
        %v5847 = vld [vmem:[%s2958 + $0xc] sm:$0xf]
        %v5849 = vunpack.c.l.b16 %v5843
        %v5850 = vpack.c.b16 %v5655, %v5849
        %v5851 = vrot.slane %v5850, 3
        %v5852 = vrot.slane %v5660, 3
        %v5853 = vsel %vm2966, %v5851, %v5852
        %v5854 = vrot.slane %v5745, 3
        %v5855 = vsel %vm2966, %v5852, %v5854
        %v5860 = vunpack.c.l.b16 %v5844
        %v5861 = vunpack.c.l.b16 %v5845
        %v5862 = vunpack.c.l.b16 %v5846
        %v5863 = vunpack.c.l.b16 %v5847
        %v5864 = vpack.c.b16 %v5861, %v5860
        %v5865 = vpack.c.b16 %v5863, %v5862
        %v5869 = vsel %vm556, %v5853, 0
        %v5872 = vsel %vm556, %v5855, 0
        %5874 = vmatprep.subr.bf16.mxu0 0
        %5875 = vmatpush1.bf16.msra.mxu0 %v5864
        %5876 = vmatprep.subr.bf16.mxu0 0
        %5877 = vmatpush1.bf16.msra.mxu0 %v5865
        %5878 = vmatprep.subr.bf16.mxu0 0
        %5879 = vmatpush1.bf16.msra.mxu0 0
        %5880 = vmatprep.subr.bf16.mxu0 0
        %5881 = vmatpush1.bf16.msra.mxu0 0
        %5882 = vmatprep.subr.bf16.mxu0 0
        %5883 = vmatpush1.bf16.msra.mxu0 0
        %5884 = vmatprep.subr.bf16.mxu0 0
        %5885 = vmatpush1.bf16.msra.mxu0 0
        %5886 = vmatprep.subr.bf16.mxu0 0
        %5887 = vmatpush1.bf16.msra.mxu0 0
        %5888 = vmatprep.subr.bf16.mxu0 0
        %5889 = vmatpush1.bf16.msra.mxu0 0
        %5890 = vmatprep.subr.bf16.mxu0 0
        %5891 = vmatpush1.bf16.msra.mxu0 0
        %5892 = vmatprep.subr.bf16.mxu0 0
        %5893 = vmatpush1.bf16.msra.mxu0 0
        %5894 = vmatprep.subr.bf16.mxu0 0
        %5895 = vmatpush1.bf16.msra.mxu0 0
        %5896 = vmatprep.subr.bf16.mxu0 0
        %5897 = vmatpush1.bf16.msra.mxu0 0
        %5898 = vmatprep.subr.bf16.mxu0 0
        %5899 = vmatpush1.bf16.msra.mxu0 0
        %5900 = vmatprep.subr.bf16.mxu0 0
        %5901 = vmatpush1.bf16.msra.mxu0 0
        %5902 = vmatprep.subr.bf16.mxu0 0
        %5903 = vmatpush1.bf16.msra.mxu0 0
        %5904 = vmatprep.subr.bf16.mxu0 0
        %5905 = vmatpush1.bf16.msra.mxu0 0
        %5906 = vmatprep.mubr.bf16.mxu0 0
        %5907 = vmatmul.mubr.bf16.gmra.mrb[0].mxu0 %v5869
        %v5908 = vpop.f32.mrb[0].mxu0
        %v5909 = vadd.f32 0.0, %v5908
        %v5910 = vpop.f32.mrb[0].mxu0
        %v5911 = vpop.f32.mrb[0].mxu0
        %v5912 = vadd.f32 0.0, %v5911
        %v5913 = vpop.f32.mrb[0].mxu0
        %5914 = vmatprep.mubr.bf16.mxu0 0
        %5915 = vmatmul.mubr.bf16.gmra.mrb[0].mxu0 %v5872
        %v5916 = vpop.f32.mrb[0].mxu0
        %v5917 = vadd.f32 0.0, %v5916
        %v5918 = vpop.f32.mrb[0].mxu0
        %v5919 = vpop.f32.mrb[0].mxu0
        %v5920 = vadd.f32 0.0, %v5919
        %v5921 = vpop.f32.mrb[0].mxu0
        %5922 = vdwg.mxu0
        %v5923 = vadd.f32 %v5839, %v5909
        %v5924 = vadd.f32 %v5840, %v5912
        %v5925 = vadd.f32 %v5841, %v5917
        %v5926 = vadd.f32 %v5842, %v5920
        %v5927 = vld [vmem:[%s4] sm:$0x1]
        %v5929 = vlaneseq
        %v5930 = vshrl.u32 %v5929, 7
        %v5931 = vsub.s32 0, %v5930
        %v5932 = vrot.slane %v5927, %v5931
        %v5934 = vadd.f32 %v5923, %v5932
        %v5935 = vadd.f32 %v5924, %v5932
        %v5936 = vadd.f32 %v5925, %v5932
        %v5937 = vadd.f32 %v5926, %v5932
        %v5938 = vmax.f32 %v5934, 0.0
        %v5939 = vmax.f32 %v5935, 0.0
        %v5940 = vmax.f32 %v5936, 0.0
        %v5941 = vmax.f32 %v5937, 0.0
        %5942 = vst.msk [vmem:[#allocation3 + $0x100] sm:$0xff] %vm556, %v5938
        %5943 = vst.msk [vmem:[#allocation3 + $0x108] sm:$0xff] %vm556, %v5939
        %5944 = vst.msk [vmem:[#allocation3 + $0x110] sm:$0xff] %vm556, %v5940
        %vm5945 = vcmask 259072
        %5946 = vst.msk [vmem:[#allocation3 + $0x118] sm:$0x3f] %vm5945, %v5941
        %5947 = vst.msk [vmem:[#allocation3 + $0x11e] sm:$0x3] %vm1267, 0.0
        %v5948 = vld [vmem:[#allocation3] ss:$2 sm:$0xff]
        %s5949 = scalar_lea.vmem [#allocation3], 16
        %v5950 = vld [vmem:[%s5949] ss:$2 sm:$0x1]
        %s5951 = scalar_lea.vmem [#allocation3], 1
        %v5952 = vld [vmem:[%s5951] ss:$2 sm:$0xff]
        %s5953 = scalar_lea.vmem [#allocation3], 17
        %v5954 = vld [vmem:[%s5953] ss:$2 sm:$0x1]
        %v5955 = vmax.f32 %v5948, %v5952
        %v5956 = vmax.f32 %v5950, %v5954
        %s5957 = scalar_lea.vmem [#allocation3], 18
        %v5958 = vld [vmem:[%s5957] ss:$2 sm:$0xff]
        %s5959 = scalar_lea.vmem [#allocation3], 34
        %v5960 = vld [vmem:[%s5959] ss:$2 sm:$0x1]
        %s5961 = scalar_lea.vmem [#allocation3], 19
        %v5962 = vld [vmem:[%s5961] ss:$2 sm:$0xff]
        %s5963 = scalar_lea.vmem [#allocation3], 35
        %v5964 = vld [vmem:[%s5963] ss:$2 sm:$0x1]
        %v5965 = vmax.f32 %v5958, %v5962
        %v5966 = vmax.f32 %v5960, %v5964
        %v5967 = vmax.f32 %v5955, %v5965
        %v5968 = vmax.f32 %v5956, %v5966
        %v5969 = vpack.c.bf16 %v5968, %v5967
        %v5971 = vunpack.c.l.b16 %v5969
        %v5972 = vunpack.c.h.b16 %v5969
        %v5973 = vpack.c.b16 %v5971, %v5971
        %v5974 = vpack.c.b16 %v5972, %v5972
        %5977 = vst.msk [vmem:[#allocation4] sm:$0xf] %vm758, %v5973
        %vm5978 = vcmask 253952
        %vm5979 = vsmask.f32 256
        %vm5980 = vmand %vm5978, %vm5979
        %v5981 = vld [vmem:[#allocation4 + $0x4] sm:$0x1]
        %v5982 = vsel %vm5980, %v5974, %v5981
        %5983 = vst [vmem:[#allocation4 + $0x4] sm:$0x1] %v5982
        %s5984 = scalar_lea.vmem [#allocation3], 36
        %v5985 = vld [vmem:[%s5984] ss:$2 sm:$0xff]
        %s5986 = scalar_lea.vmem [#allocation3], 52
        %v5987 = vld [vmem:[%s5986] ss:$2 sm:$0x1]
        %s5988 = scalar_lea.vmem [#allocation3], 37
        %v5989 = vld [vmem:[%s5988] ss:$2 sm:$0xff]
        %s5990 = scalar_lea.vmem [#allocation3], 53
        %v5991 = vld [vmem:[%s5990] ss:$2 sm:$0x1]
        %v5992 = vmax.f32 %v5985, %v5989
        %v5993 = vmax.f32 %v5987, %v5991
        %s5994 = scalar_lea.vmem [#allocation3], 54
        %v5995 = vld [vmem:[%s5994] ss:$2 sm:$0xff]
        %s5996 = scalar_lea.vmem [#allocation3], 70
        %v5997 = vld [vmem:[%s5996] ss:$2 sm:$0x1]
        %s5998 = scalar_lea.vmem [#allocation3], 55
        %v5999 = vld [vmem:[%s5998] ss:$2 sm:$0xff]
        %s6000 = scalar_lea.vmem [#allocation3], 71
        %v6001 = vld [vmem:[%s6000] ss:$2 sm:$0x1]
        %v6002 = vmax.f32 %v5995, %v5999
        %v6003 = vmax.f32 %v5997, %v6001
        %v6004 = vmax.f32 %v5992, %v6002
        %v6005 = vmax.f32 %v5993, %v6003
        %v6006 = vpack.c.bf16 %v6005, %v6004
        %v6008 = vunpack.c.l.b16 %v6006
        %v6009 = vunpack.c.h.b16 %v6006
        %v6010 = vpack.c.b16 %v6008, %v6008
        %v6011 = vpack.c.b16 %v6009, %v6009
        %vm6012 = vsmask.f32 4368
        %vm6013 = vmor %vm5979, %vm6012
        %v6015 = vshrl.u32 %v6010, 16
        %v6017 = vrot.slane %v6015, 7
        %v6018 = vshll.u32 %v6010, 16
        %v6020 = vor.u32 %v6017, %v6018
        %v6021 = vrot.slane %v6017, 4
        %v6023 = vshll.u32 %v6011, 16
        %v6025 = vsel %vm6013, %v6021, %v6023
        %vm6028 = vcmask 257024
        %vm6029 = vsmask.f32 7938
        %vm6030 = vmand %vm6028, %vm6029
        %v6031 = vld [vmem:[#allocation4 + $0x4] sm:$0xf]
        %v6032 = vsel %vm6030, %v6020, %v6031
        %6033 = vst [vmem:[#allocation4 + $0x4] sm:$0xf] %v6032
        %vm6034 = vcmask 253952
        %6035 = vst.msk [vmem:[#allocation4 + $0x8] sm:$0x1] %vm6034, %v6025
        %s6036 = scalar_lea.vmem [#allocation3], 72
        %v6037 = vld [vmem:[%s6036] ss:$2 sm:$0xff]
        %s6038 = scalar_lea.vmem [#allocation3], 88
        %v6039 = vld [vmem:[%s6038] ss:$2 sm:$0x1]
        %s6040 = scalar_lea.vmem [#allocation3], 73
        %v6041 = vld [vmem:[%s6040] ss:$2 sm:$0xff]
        %s6042 = scalar_lea.vmem [#allocation3], 89
        %v6043 = vld [vmem:[%s6042] ss:$2 sm:$0x1]
        %v6044 = vmax.f32 %v6037, %v6041
        %v6045 = vmax.f32 %v6039, %v6043
        %s6046 = scalar_lea.vmem [#allocation3], 90
        %v6047 = vld [vmem:[%s6046] ss:$2 sm:$0xff]
        %s6048 = scalar_lea.vmem [#allocation3], 106
        %v6049 = vld [vmem:[%s6048] ss:$2 sm:$0x1]
        %s6050 = scalar_lea.vmem [#allocation3], 91
        %v6051 = vld [vmem:[%s6050] ss:$2 sm:$0xff]
        %s6052 = scalar_lea.vmem [#allocation3], 107
        %v6053 = vld [vmem:[%s6052] ss:$2 sm:$0x1]
        %v6054 = vmax.f32 %v6047, %v6051
        %v6055 = vmax.f32 %v6049, %v6053
        %v6056 = vmax.f32 %v6044, %v6054
        %v6057 = vmax.f32 %v6045, %v6055
        %v6058 = vpack.c.bf16 %v6057, %v6056
        %v6060 = vunpack.c.l.b16 %v6058
        %v6061 = vunpack.c.h.b16 %v6058
        %v6062 = vpack.c.b16 %v6060, %v6060
        %v6063 = vpack.c.b16 %v6061, %v6061
        %vm6064 = vcmask 1040384
        %vm6065 = vcmask 1044484
        %vm6066 = vmor %vm6064, %vm6065
        %v6067 = vrot.slane %v6062, 7
        %v6068 = vrot.slane %v6067, 4
        %v6069 = vrot.slane %v6063, 7
        %v6070 = vsel %vm6066, %v6068, %v6069
        %vm6073 = vcmask 257025
        %6074 = vst.msk [vmem:[#allocation4 + $0x8] sm:$0xe] %vm6073, %v6067
        %vm6075 = vcmask 254976
        %vm6076 = vsmask.f32 1280
        %vm6077 = vmand %vm6075, %vm6076
        %v6078 = vld [vmem:[#allocation4 + $0xc] sm:$0x3]
        %v6079 = vsel %vm6077, %v6070, %v6078
        %6080 = vst [vmem:[#allocation4 + $0xc] sm:$0x3] %v6079
        %s6081 = scalar_lea.vmem [#allocation3], 108
        %v6082 = vld [vmem:[%s6081] ss:$2 sm:$0xff]
        %s6083 = scalar_lea.vmem [#allocation3], 124
        %v6084 = vld [vmem:[%s6083] ss:$2 sm:$0x1]
        %s6085 = scalar_lea.vmem [#allocation3], 109
        %v6086 = vld [vmem:[%s6085] ss:$2 sm:$0xff]
        %s6087 = scalar_lea.vmem [#allocation3], 125
        %v6088 = vld [vmem:[%s6087] ss:$2 sm:$0x1]
        %v6089 = vmax.f32 %v6082, %v6086
        %v6090 = vmax.f32 %v6084, %v6088
        %s6091 = scalar_lea.vmem [#allocation3], 126
        %v6092 = vld [vmem:[%s6091] ss:$2 sm:$0xff]
        %s6093 = scalar_lea.vmem [#allocation3], 142
        %v6094 = vld [vmem:[%s6093] ss:$2 sm:$0x1]
        %s6095 = scalar_lea.vmem [#allocation3], 127
        %v6096 = vld [vmem:[%s6095] ss:$2 sm:$0xff]
        %s6097 = scalar_lea.vmem [#allocation3], 143
        %v6098 = vld [vmem:[%s6097] ss:$2 sm:$0x1]
        %v6099 = vmax.f32 %v6092, %v6096
        %v6100 = vmax.f32 %v6094, %v6098
        %v6101 = vmax.f32 %v6089, %v6099
        %v6102 = vmax.f32 %v6090, %v6100
        %v6103 = vpack.c.bf16 %v6102, %v6101
        %v6105 = vunpack.c.l.b16 %v6103
        %v6106 = vunpack.c.h.b16 %v6103
        %v6107 = vpack.c.b16 %v6105, %v6105
        %v6108 = vpack.c.b16 %v6106, %v6106
        %vm6109 = vsmask.f32 5392
        %vm6110 = vmor %vm6076, %vm6109
        %v6112 = vshrl.u32 %v6107, 16
        %v6114 = vrot.slane %v6112, 6
        %v6115 = vshll.u32 %v6107, 16
        %v6117 = vrot.slane %v6115, 7
        %v6118 = vor.u32 %v6114, %v6117
        %v6119 = vrot.slane %v6118, 4
        %v6121 = vshll.u32 %v6108, 16
        %v6123 = vrot.slane %v6121, 7
        %v6124 = vsel %vm6110, %v6119, %v6123
        %vm6127 = vcmask 257025
        %vm6128 = vsmask.f32 7942
        %vm6129 = vmand %vm6127, %vm6128
        %v6130 = vld [vmem:[#allocation4 + $0xc] sm:$0xe]
        %v6131 = vsel %vm6129, %v6118, %v6130
        %6132 = vst [vmem:[#allocation4 + $0xc] sm:$0xe] %v6131
        %6133 = vst.msk [vmem:[#allocation4 + $0x10] sm:$0x3] %vm1267, %v6124
        %s6134 = scalar_lea.vmem [#allocation3], 144
        %v6135 = vld [vmem:[%s6134] ss:$2 sm:$0xff]
        %s6136 = scalar_lea.vmem [#allocation3], 160
        %v6137 = vld [vmem:[%s6136] ss:$2 sm:$0x1]
        %s6138 = scalar_lea.vmem [#allocation3], 145
        %v6139 = vld [vmem:[%s6138] ss:$2 sm:$0xff]
        %s6140 = scalar_lea.vmem [#allocation3], 161
        %v6141 = vld [vmem:[%s6140] ss:$2 sm:$0x1]
        %v6142 = vmax.f32 %v6135, %v6139
        %v6143 = vmax.f32 %v6137, %v6141
        %s6144 = scalar_lea.vmem [#allocation3], 162
        %v6145 = vld [vmem:[%s6144] ss:$2 sm:$0xff]
        %s6146 = scalar_lea.vmem [#allocation3], 178
        %v6147 = vld [vmem:[%s6146] ss:$2 sm:$0x1]
        %s6148 = scalar_lea.vmem [#allocation3], 163
        %v6149 = vld [vmem:[%s6148] ss:$2 sm:$0xff]
        %s6150 = scalar_lea.vmem [#allocation3], 179
        %v6151 = vld [vmem:[%s6150] ss:$2 sm:$0x1]
        %v6152 = vmax.f32 %v6145, %v6149
        %v6153 = vmax.f32 %v6147, %v6151
        %v6154 = vmax.f32 %v6142, %v6152
        %v6155 = vmax.f32 %v6143, %v6153
        %v6156 = vpack.c.bf16 %v6155, %v6154
        %v6158 = vunpack.c.l.b16 %v6156
        %v6159 = vunpack.c.h.b16 %v6156
        %v6160 = vpack.c.b16 %v6158, %v6158
        %v6161 = vpack.c.b16 %v6159, %v6159
        %vm6162 = vcmask 1041408
        %vm6163 = vcmask 1045508
        %vm6164 = vmor %vm6162, %vm6163
        %v6165 = vrot.slane %v6160, 6
        %v6166 = vrot.slane %v6165, 4
        %v6167 = vrot.slane %v6161, 6
        %v6168 = vsel %vm6164, %v6166, %v6167
        %vm6171 = vcmask 257026
        %6172 = vst.msk [vmem:[#allocation4 + $0x10] sm:$0xc] %vm6171, %v6165
        %vm6173 = vcmask 256000
        %vm6174 = vsmask.f32 2304
        %vm6175 = vmand %vm6173, %vm6174
        %v6176 = vld [vmem:[#allocation4 + $0x14] sm:$0x7]
        %v6177 = vsel %vm6175, %v6168, %v6176
        %6178 = vst [vmem:[#allocation4 + $0x14] sm:$0x7] %v6177
        %s6179 = scalar_lea.vmem [#allocation3], 180
        %v6180 = vld [vmem:[%s6179] ss:$2 sm:$0xff]
        %s6181 = scalar_lea.vmem [#allocation3], 196
        %v6182 = vld [vmem:[%s6181] ss:$2 sm:$0x1]
        %s6183 = scalar_lea.vmem [#allocation3], 181
        %v6184 = vld [vmem:[%s6183] ss:$2 sm:$0xff]
        %s6185 = scalar_lea.vmem [#allocation3], 197
        %v6186 = vld [vmem:[%s6185] ss:$2 sm:$0x1]
        %v6187 = vmax.f32 %v6180, %v6184
        %v6188 = vmax.f32 %v6182, %v6186
        %s6189 = scalar_lea.vmem [#allocation3], 198
        %v6190 = vld [vmem:[%s6189] ss:$2 sm:$0xff]
        %s6191 = scalar_lea.vmem [#allocation3], 214
        %v6192 = vld [vmem:[%s6191] ss:$2 sm:$0x1]
        %s6193 = scalar_lea.vmem [#allocation3], 199
        %v6194 = vld [vmem:[%s6193] ss:$2 sm:$0xff]
        %s6195 = scalar_lea.vmem [#allocation3], 215
        %v6196 = vld [vmem:[%s6195] ss:$2 sm:$0x1]
        %v6197 = vmax.f32 %v6190, %v6194
        %v6198 = vmax.f32 %v6192, %v6196
        %v6199 = vmax.f32 %v6187, %v6197
        %v6200 = vmax.f32 %v6188, %v6198
        %v6201 = vpack.c.bf16 %v6200, %v6199
        %v6203 = vunpack.c.l.b16 %v6201
        %v6204 = vunpack.c.h.b16 %v6201
        %v6205 = vpack.c.b16 %v6203, %v6203
        %v6206 = vpack.c.b16 %v6204, %v6204
        %vm6207 = vsmask.f32 6416
        %vm6208 = vmor %vm6174, %vm6207
        %v6210 = vshrl.u32 %v6205, 16
        %v6212 = vrot.slane %v6210, 5
        %v6213 = vshll.u32 %v6205, 16
        %v6215 = vrot.slane %v6213, 6
        %v6216 = vor.u32 %v6212, %v6215
        %v6217 = vrot.slane %v6216, 4
        %v6219 = vshll.u32 %v6206, 16
        %v6221 = vrot.slane %v6219, 6
        %v6222 = vsel %vm6208, %v6217, %v6221
        %vm6225 = vcmask 257026
        %vm6226 = vsmask.f32 7946
        %vm6227 = vmand %vm6225, %vm6226
        %v6228 = vld [vmem:[#allocation4 + $0x14] sm:$0xc]
        %v6229 = vsel %vm6227, %v6216, %v6228
        %6230 = vst [vmem:[#allocation4 + $0x14] sm:$0xc] %v6229
        %vm6231 = vcmask 256000
        %6232 = vst.msk [vmem:[#allocation4 + $0x18] sm:$0x7] %vm6231, %v6222
        %s6233 = scalar_lea.vmem [#allocation3], 216
        %v6234 = vld [vmem:[%s6233] ss:$2 sm:$0xff]
        %s6235 = scalar_lea.vmem [#allocation3], 232
        %v6236 = vld [vmem:[%s6235] ss:$2 sm:$0x1]
        %s6237 = scalar_lea.vmem [#allocation3], 217
        %v6238 = vld [vmem:[%s6237] ss:$2 sm:$0xff]
        %s6239 = scalar_lea.vmem [#allocation3], 233
        %v6240 = vld [vmem:[%s6239] ss:$2 sm:$0x1]
        %v6241 = vmax.f32 %v6234, %v6238
        %v6242 = vmax.f32 %v6236, %v6240
        %s6243 = scalar_lea.vmem [#allocation3], 234
        %v6244 = vld [vmem:[%s6243] ss:$2 sm:$0xff]
        %s6245 = scalar_lea.vmem [#allocation3], 250
        %v6246 = vld [vmem:[%s6245] ss:$2 sm:$0x1]
        %s6247 = scalar_lea.vmem [#allocation3], 235
        %v6248 = vld [vmem:[%s6247] ss:$2 sm:$0xff]
        %s6249 = scalar_lea.vmem [#allocation3], 251
        %v6250 = vld [vmem:[%s6249] ss:$2 sm:$0x1]
        %v6251 = vmax.f32 %v6244, %v6248
        %v6252 = vmax.f32 %v6246, %v6250
        %v6253 = vmax.f32 %v6241, %v6251
        %v6254 = vmax.f32 %v6242, %v6252
        %v6255 = vpack.c.bf16 %v6254, %v6253
        %v6257 = vunpack.c.l.b16 %v6255
        %v6258 = vunpack.c.h.b16 %v6255
        %v6259 = vpack.c.b16 %v6257, %v6257
        %v6260 = vpack.c.b16 %v6258, %v6258
        %vm6261 = vcmask 1042432
        %vm6262 = vcmask 1046532
        %vm6263 = vmor %vm6261, %vm6262
        %v6264 = vrot.slane %v6259, 5
        %v6265 = vrot.slane %v6264, 4
        %v6266 = vrot.slane %v6260, 5
        %v6267 = vsel %vm6263, %v6265, %v6266
        %vm6270 = vcmask 257027
        %6271 = vst.msk [vmem:[#allocation4 + $0x18] sm:$0x8] %vm6270, %v6264
        %vm6272 = vsmask.f32 3328
        %vm6273 = vmand %vm6028, %vm6272
        %v6274 = vld [vmem:[#allocation4 + $0x1c] sm:$0xf]
        %v6275 = vsel %vm6273, %v6267, %v6274
        %6276 = vst [vmem:[#allocation4 + $0x1c] sm:$0xf] %v6275
        %s6277 = scalar_lea.vmem [#allocation3], 252
        %v6278 = vld [vmem:[%s6277] ss:$2 sm:$0xff]
        %s6279 = scalar_lea.vmem [#allocation3], 268
        %v6280 = vld [vmem:[%s6279] ss:$2 sm:$0x1]
        %s6281 = scalar_lea.vmem [#allocation3], 253
        %v6282 = vld [vmem:[%s6281] ss:$2 sm:$0xff]
        %s6283 = scalar_lea.vmem [#allocation3], 269
        %v6284 = vld [vmem:[%s6283] ss:$2 sm:$0x1]
        %v6285 = vmax.f32 %v6278, %v6282
        %v6286 = vmax.f32 %v6280, %v6284
        %s6287 = scalar_lea.vmem [#allocation3], 270
        %v6288 = vld [vmem:[%s6287] ss:$2 sm:$0xff]
        %s6289 = scalar_lea.vmem [#allocation3], 286
        %v6290 = vld [vmem:[%s6289] ss:$2 sm:$0x1]
        %s6291 = scalar_lea.vmem [#allocation3], 271
        %v6292 = vld [vmem:[%s6291] ss:$2 sm:$0xff]
        %s6293 = scalar_lea.vmem [#allocation3], 287
        %v6294 = vld [vmem:[%s6293] ss:$2 sm:$0x1]
        %v6295 = vmax.f32 %v6288, %v6292
        %v6296 = vmax.f32 %v6290, %v6294
        %v6297 = vmax.f32 %v6285, %v6295
        %v6298 = vmax.f32 %v6286, %v6296
        %v6299 = vpack.c.bf16 %v6298, %v6297
        %v6301 = vunpack.c.l.b16 %v6299
        %v6302 = vunpack.c.h.b16 %v6299
        %v6303 = vpack.c.b16 %v6301, %v6301
        %v6304 = vpack.c.b16 %v6302, %v6302
        %vm6305 = vsmask.f32 7440
        %vm6306 = vmor %vm6272, %vm6305
        %v6308 = vshll.u32 %v6303, 16
        %v6310 = vrot.slane %v6308, 5
        %v6311 = vshrl.u32 %v6303, 16
        %v6313 = vrot.slane %v6311, 4
        %v6314 = vor.u32 %v6313, %v6310
        %v6315 = vrot.slane %v6314, 4
        %v6317 = vshll.u32 %v6304, 16
        %v6319 = vrot.slane %v6317, 5
        %v6320 = vsel %vm6306, %v6315, %v6319
        %vm6323 = vcmask 257027
        %vm6324 = vsmask.f32 7950
        %vm6325 = vmand %vm6323, %vm6324
        %v6326 = vld [vmem:[#allocation4 + $0x1c] sm:$0x8]
        %v6327 = vsel %vm6325, %v6310, %v6326
        %6328 = vst [vmem:[#allocation4 + $0x1c] sm:$0x8] %v6327
        %6329 = vst.msk [vmem:[#allocation4 + $0x20] sm:$0xf] %vm758, %v6320
        %v6330 = vld [vmem:[#allocation4] sm:$0xf]
        %v6331 = vld [vmem:[#allocation4 + $0x4] sm:$0xf]
        %v6332 = vld [vmem:[#allocation4 + $0x8] sm:$0xf]
        %v6333 = vld [vmem:[#allocation4 + $0xc] sm:$0xf]
        %v6334 = vld [vmem:[#allocation4 + $0x10] sm:$0xf]
        %v6335 = vld [vmem:[#allocation4 + $0x14] sm:$0xf]
        %v6336 = vld [vmem:[#allocation4 + $0x18] sm:$0x3]
        %v6337 = vld [vmem:[%s5] sm:$0xf]
        %v6338 = vld [vmem:[%s5 + $0x4] sm:$0xf]
        %v6339 = vld [vmem:[%s5 + $0x8] sm:$0xf]
        %v6340 = vld [vmem:[%s5 + $0xc] sm:$0xf]
        %v6341 = vld [vmem:[#allocation4 + $0x18] sm:$0x7]
        %s6342 = scalar_lea.vmem %s5, 16
        %v6343 = vld [vmem:[%s6342] sm:$0xf]
        %v6344 = vld [vmem:[%s6342 + $0x4] sm:$0xf]
        %v6345 = vld [vmem:[%s6342 + $0x8] sm:$0xf]
        %v6346 = vld [vmem:[%s6342 + $0xc] sm:$0xf]
        %v6354 = vunpack.c.l.b16 %v6330
        %v6355 = vunpack.c.l.b16 %v6331
        %v6356 = vunpack.c.l.b16 %v6332
        %v6357 = vunpack.c.l.b16 %v6333
        %v6358 = vunpack.c.l.b16 %v6334
        %v6359 = vunpack.c.l.b16 %v6335
        %v6360 = vunpack.c.l.b16 %v6341
        %v6361 = vpack.c.b16 %v6355, %v6354
        %v6362 = vpack.c.b16 %v6357, %v6356
        %v6363 = vpack.c.b16 %v6359, %v6358
        %v6364 = vpack.c.b16 %v6360, %v6360
        %v6366 = vshrl.u32 %v6361, 16
        %v6368 = vshll.u32 %v6361, 16
        %v6370 = vrot.slane %v6368, 1
        %v6371 = vor.u32 %v6366, %v6370
        %v6373 = vshll.u32 %v6362, 16
        %v6375 = vrot.slane %v6373, 1
        %v6376 = vsel %vm1338, %v6371, %v6375
        %v6377 = vshrl.u32 %v6362, 16
        %v6379 = vor.u32 %v6377, %v6375
        %v6381 = vshll.u32 %v6363, 16
        %v6383 = vrot.slane %v6381, 1
        %v6384 = vsel %vm1338, %v6379, %v6383
        %v6385 = vshrl.u32 %v6363, 16
        %v6387 = vor.u32 %v6385, %v6383
        %v6389 = vshll.u32 %v6364, 16
        %v6391 = vrot.slane %v6389, 1
        %v6392 = vsel %vm1338, %v6387, %v6391
        %v6393 = vshrl.u32 %v6364, 16
        %v6395 = vor.u32 %v6393, %v6391
        %v6400 = vunpack.c.l.b16 %v6343
        %v6401 = vunpack.c.l.b16 %v6344
        %v6402 = vunpack.c.l.b16 %v6345
        %v6403 = vunpack.c.l.b16 %v6346
        %v6404 = vpack.c.b16 %v6401, %v6400
        %v6405 = vpack.c.b16 %v6403, %v6402
        %v6409 = vsel %vm556, %v6376, 0
        %v6412 = vsel %vm556, %v6384, 0
        %v6415 = vsel %vm556, %v6392, 0
        %v6418 = vsel %vm556, %v6395, 0
        %6420 = vmatprep.subr.bf16.mxu0 0
        %6421 = vmatpush1.bf16.msra.mxu0 %v6404
        %6422 = vmatprep.subr.bf16.mxu0 0
        %6423 = vmatpush1.bf16.msra.mxu0 %v6405
        %6424 = vmatprep.subr.bf16.mxu0 0
        %6425 = vmatpush1.bf16.msra.mxu0 0
        %6426 = vmatprep.subr.bf16.mxu0 0
        %6427 = vmatpush1.bf16.msra.mxu0 0
        %6428 = vmatprep.subr.bf16.mxu0 0
        %6429 = vmatpush1.bf16.msra.mxu0 0
        %6430 = vmatprep.subr.bf16.mxu0 0
        %6431 = vmatpush1.bf16.msra.mxu0 0
        %6432 = vmatprep.subr.bf16.mxu0 0
        %6433 = vmatpush1.bf16.msra.mxu0 0
        %6434 = vmatprep.subr.bf16.mxu0 0
        %6435 = vmatpush1.bf16.msra.mxu0 0
        %6436 = vmatprep.subr.bf16.mxu0 0
        %6437 = vmatpush1.bf16.msra.mxu0 0
        %6438 = vmatprep.subr.bf16.mxu0 0
        %6439 = vmatpush1.bf16.msra.mxu0 0
        %6440 = vmatprep.subr.bf16.mxu0 0
        %6441 = vmatpush1.bf16.msra.mxu0 0
        %6442 = vmatprep.subr.bf16.mxu0 0
        %6443 = vmatpush1.bf16.msra.mxu0 0
        %6444 = vmatprep.subr.bf16.mxu0 0
        %6445 = vmatpush1.bf16.msra.mxu0 0
        %6446 = vmatprep.subr.bf16.mxu0 0
        %6447 = vmatpush1.bf16.msra.mxu0 0
        %6448 = vmatprep.subr.bf16.mxu0 0
        %6449 = vmatpush1.bf16.msra.mxu0 0
        %6450 = vmatprep.subr.bf16.mxu0 0
        %6451 = vmatpush1.bf16.msra.mxu0 0
        %6452 = vmatprep.mubr.bf16.mxu0 0
        %6453 = vmatmul.mubr.bf16.gmra.mrb[0].mxu0 %v6409
        %v6454 = vpop.f32.mrb[0].mxu0
        %v6455 = vadd.f32 0.0, %v6454
        %v6456 = vpop.f32.mrb[0].mxu0
        %v6457 = vpop.f32.mrb[0].mxu0
        %v6458 = vadd.f32 0.0, %v6457
        %v6459 = vpop.f32.mrb[0].mxu0
        %6460 = vmatprep.mubr.bf16.mxu0 0
        %6461 = vmatmul.mubr.bf16.gmra.mrb[0].mxu0 %v6412
        %v6462 = vpop.f32.mrb[0].mxu0
        %v6463 = vadd.f32 0.0, %v6462
        %v6464 = vpop.f32.mrb[0].mxu0
        %v6465 = vpop.f32.mrb[0].mxu0
        %v6466 = vadd.f32 0.0, %v6465
        %v6467 = vpop.f32.mrb[0].mxu0
        %6468 = vmatprep.mubr.bf16.mxu0 0
        %6469 = vmatmul.mubr.bf16.gmra.mrb[0].mxu0 %v6415
        %v6470 = vpop.f32.mrb[0].mxu0
        %v6471 = vadd.f32 0.0, %v6470
        %v6472 = vpop.f32.mrb[0].mxu0
        %v6473 = vpop.f32.mrb[0].mxu0
        %v6474 = vadd.f32 0.0, %v6473
        %v6475 = vpop.f32.mrb[0].mxu0
        %6476 = vmatprep.mubr.bf16.mxu0 0
        %6477 = vmatmul.mubr.bf16.gmra.mrb[0].mxu0 %v6418
        %v6478 = vpop.f32.mrb[0].mxu0
        %v6479 = vadd.f32 0.0, %v6478
        %v6480 = vpop.f32.mrb[0].mxu0
        %v6481 = vpop.f32.mrb[0].mxu0
        %v6482 = vpop.f32.mrb[0].mxu0
        %6483 = vdwg.mxu0
        %v6485 = vunpack.c.l.b16 %v6336
        %v6486 = vpack.c.b16 %v6485, %v6485
        %v6491 = vunpack.c.l.b16 %v6337
        %v6492 = vunpack.c.l.b16 %v6338
        %v6493 = vunpack.c.l.b16 %v6339
        %v6494 = vunpack.c.l.b16 %v6340
        %v6495 = vpack.c.b16 %v6492, %v6491
        %v6496 = vpack.c.b16 %v6494, %v6493
        %v6499 = vsel %vm556, %v6361, 0
        %v6501 = vsel %vm556, %v6362, 0
        %v6503 = vsel %vm556, %v6363, 0
        %v6506 = vsel %vm556, %v6486, 0
        %6508 = vmatprep.subr.bf16.mxu0 0
        %6509 = vmatpush1.bf16.msra.mxu0 %v6495
        %6510 = vmatprep.subr.bf16.mxu0 0
        %6511 = vmatpush1.bf16.msra.mxu0 %v6496
        %6512 = vmatprep.subr.bf16.mxu0 0
        %6513 = vmatpush1.bf16.msra.mxu0 0
        %6514 = vmatprep.subr.bf16.mxu0 0
        %6515 = vmatpush1.bf16.msra.mxu0 0
        %6516 = vmatprep.subr.bf16.mxu0 0
        %6517 = vmatpush1.bf16.msra.mxu0 0
        %6518 = vmatprep.subr.bf16.mxu0 0
        %6519 = vmatpush1.bf16.msra.mxu0 0
        %6520 = vmatprep.subr.bf16.mxu0 0
        %6521 = vmatpush1.bf16.msra.mxu0 0
        %6522 = vmatprep.subr.bf16.mxu0 0
        %6523 = vmatpush1.bf16.msra.mxu0 0
        %6524 = vmatprep.subr.bf16.mxu0 0
        %6525 = vmatpush1.bf16.msra.mxu0 0
        %6526 = vmatprep.subr.bf16.mxu0 0
        %6527 = vmatpush1.bf16.msra.mxu0 0
        %6528 = vmatprep.subr.bf16.mxu0 0
        %6529 = vmatpush1.bf16.msra.mxu0 0
        %6530 = vmatprep.subr.bf16.mxu0 0
        %6531 = vmatpush1.bf16.msra.mxu0 0
        %6532 = vmatprep.subr.bf16.mxu0 0
        %6533 = vmatpush1.bf16.msra.mxu0 0
        %6534 = vmatprep.subr.bf16.mxu0 0
        %6535 = vmatpush1.bf16.msra.mxu0 0
        %6536 = vmatprep.subr.bf16.mxu0 0
        %6537 = vmatpush1.bf16.msra.mxu0 0
        %6538 = vmatprep.subr.bf16.mxu0 0
        %6539 = vmatpush1.bf16.msra.mxu0 0
        %6540 = vmatprep.mubr.bf16.mxu0 0
        %6541 = vmatmul.mubr.bf16.gmra.mrb[0].mxu0 %v6499
        %v6542 = vpop.f32.mrb[0].mxu0
        %v6543 = vadd.f32 %v6455, %v6542
        %v6544 = vpop.f32.mrb[0].mxu0
        %v6545 = vpop.f32.mrb[0].mxu0
        %v6546 = vadd.f32 %v6458, %v6545
        %v6547 = vpop.f32.mrb[0].mxu0
        %6548 = vmatprep.mubr.bf16.mxu0 0
        %6549 = vmatmul.mubr.bf16.gmra.mrb[0].mxu0 %v6501
        %v6550 = vpop.f32.mrb[0].mxu0
        %v6551 = vadd.f32 %v6463, %v6550
        %v6552 = vpop.f32.mrb[0].mxu0
        %v6553 = vpop.f32.mrb[0].mxu0
        %v6554 = vadd.f32 %v6466, %v6553
        %v6555 = vpop.f32.mrb[0].mxu0
        %6556 = vmatprep.mubr.bf16.mxu0 0
        %6557 = vmatmul.mubr.bf16.gmra.mrb[0].mxu0 %v6503
        %v6558 = vpop.f32.mrb[0].mxu0
        %v6559 = vadd.f32 %v6471, %v6558
        %v6560 = vpop.f32.mrb[0].mxu0
        %v6561 = vpop.f32.mrb[0].mxu0
        %v6562 = vadd.f32 %v6474, %v6561
        %v6563 = vpop.f32.mrb[0].mxu0
        %6564 = vmatprep.mubr.bf16.mxu0 0
        %6565 = vmatmul.mubr.bf16.gmra.mrb[0].mxu0 %v6506
        %v6566 = vpop.f32.mrb[0].mxu0
        %v6567 = vadd.f32 %v6479, %v6566
        %v6568 = vpop.f32.mrb[0].mxu0
        %v6569 = vpop.f32.mrb[0].mxu0
        %v6570 = vpop.f32.mrb[0].mxu0
        %6571 = vdwg.mxu0
        %v6572 = vld [vmem:[#allocation4] sm:$0xe]
        %s6573 = scalar_lea.vmem %s5, 32
        %v6574 = vld [vmem:[%s6573] sm:$0xf]
        %v6575 = vld [vmem:[%s6573 + $0x4] sm:$0xf]
        %v6576 = vld [vmem:[%s6573 + $0x8] sm:$0xf]
        %v6577 = vld [vmem:[%s6573 + $0xc] sm:$0xf]
        %v6579 = vunpack.c.l.b16 %v6572
        %v6580 = vpack.c.b16 %v6355, %v6579
        %v6581 = vrot.slane %v6580, 1
        %v6582 = vrot.slane %v6362, 1
        %v6583 = vsel %vm1674, %v6581, %v6582
        %v6584 = vrot.slane %v6363, 1
        %v6585 = vsel %vm1674, %v6582, %v6584
        %v6586 = vrot.slane %v6364, 1
        %v6587 = vsel %vm1674, %v6584, %v6586
        %v6592 = vunpack.c.l.b16 %v6574
        %v6593 = vunpack.c.l.b16 %v6575
        %v6594 = vunpack.c.l.b16 %v6576
        %v6595 = vunpack.c.l.b16 %v6577
        %v6596 = vpack.c.b16 %v6593, %v6592
        %v6597 = vpack.c.b16 %v6595, %v6594
        %v6601 = vsel %vm556, %v6583, 0
        %v6604 = vsel %vm556, %v6585, 0
        %v6607 = vsel %vm556, %v6587, 0
        %v6610 = vsel %vm556, %v6586, 0
        %6612 = vmatprep.subr.bf16.mxu0 0
        %6613 = vmatpush1.bf16.msra.mxu0 %v6596
        %6614 = vmatprep.subr.bf16.mxu0 0
        %6615 = vmatpush1.bf16.msra.mxu0 %v6597
        %6616 = vmatprep.subr.bf16.mxu0 0
        %6617 = vmatpush1.bf16.msra.mxu0 0
        %6618 = vmatprep.subr.bf16.mxu0 0
        %6619 = vmatpush1.bf16.msra.mxu0 0
        %6620 = vmatprep.subr.bf16.mxu0 0
        %6621 = vmatpush1.bf16.msra.mxu0 0
        %6622 = vmatprep.subr.bf16.mxu0 0
        %6623 = vmatpush1.bf16.msra.mxu0 0
        %6624 = vmatprep.subr.bf16.mxu0 0
        %6625 = vmatpush1.bf16.msra.mxu0 0
        %6626 = vmatprep.subr.bf16.mxu0 0
        %6627 = vmatpush1.bf16.msra.mxu0 0
        %6628 = vmatprep.subr.bf16.mxu0 0
        %6629 = vmatpush1.bf16.msra.mxu0 0
        %6630 = vmatprep.subr.bf16.mxu0 0
        %6631 = vmatpush1.bf16.msra.mxu0 0
        %6632 = vmatprep.subr.bf16.mxu0 0
        %6633 = vmatpush1.bf16.msra.mxu0 0
        %6634 = vmatprep.subr.bf16.mxu0 0
        %6635 = vmatpush1.bf16.msra.mxu0 0
        %6636 = vmatprep.subr.bf16.mxu0 0
        %6637 = vmatpush1.bf16.msra.mxu0 0
        %6638 = vmatprep.subr.bf16.mxu0 0
        %6639 = vmatpush1.bf16.msra.mxu0 0
        %6640 = vmatprep.subr.bf16.mxu0 0
        %6641 = vmatpush1.bf16.msra.mxu0 0
        %6642 = vmatprep.subr.bf16.mxu0 0
        %6643 = vmatpush1.bf16.msra.mxu0 0
        %6644 = vmatprep.mubr.bf16.mxu0 0
        %6645 = vmatmul.mubr.bf16.gmra.mrb[0].mxu0 %v6601
        %v6646 = vpop.f32.mrb[0].mxu0
        %v6647 = vadd.f32 0.0, %v6646
        %v6648 = vpop.f32.mrb[0].mxu0
        %v6649 = vpop.f32.mrb[0].mxu0
        %v6650 = vadd.f32 0.0, %v6649
        %v6651 = vpop.f32.mrb[0].mxu0
        %6652 = vmatprep.mubr.bf16.mxu0 0
        %6653 = vmatmul.mubr.bf16.gmra.mrb[0].mxu0 %v6604
        %v6654 = vpop.f32.mrb[0].mxu0
        %v6655 = vadd.f32 0.0, %v6654
        %v6656 = vpop.f32.mrb[0].mxu0
        %v6657 = vpop.f32.mrb[0].mxu0
        %v6658 = vadd.f32 0.0, %v6657
        %v6659 = vpop.f32.mrb[0].mxu0
        %6660 = vmatprep.mubr.bf16.mxu0 0
        %6661 = vmatmul.mubr.bf16.gmra.mrb[0].mxu0 %v6607
        %v6662 = vpop.f32.mrb[0].mxu0
        %v6663 = vadd.f32 0.0, %v6662
        %v6664 = vpop.f32.mrb[0].mxu0
        %v6665 = vpop.f32.mrb[0].mxu0
        %v6666 = vadd.f32 0.0, %v6665
        %v6667 = vpop.f32.mrb[0].mxu0
        %6668 = vmatprep.mubr.bf16.mxu0 0
        %6669 = vmatmul.mubr.bf16.gmra.mrb[0].mxu0 %v6610
        %v6670 = vpop.f32.mrb[0].mxu0
        %v6671 = vadd.f32 0.0, %v6670
        %v6672 = vpop.f32.mrb[0].mxu0
        %v6673 = vpop.f32.mrb[0].mxu0
        %v6674 = vpop.f32.mrb[0].mxu0
        %6675 = vdwg.mxu0
        %v6676 = vadd.f32 %v6543, %v6647
        %v6677 = vadd.f32 %v6546, %v6650
        %v6678 = vadd.f32 %v6551, %v6655
        %v6679 = vadd.f32 %v6554, %v6658
        %v6680 = vadd.f32 %v6559, %v6663
        %v6681 = vadd.f32 %v6562, %v6666
        %v6682 = vadd.f32 %v6567, %v6671
        %v6683 = vld [vmem:[#allocation4 + $0x4] sm:$0xf]
        %v6684 = vld [vmem:[#allocation4 + $0x8] sm:$0xf]
        %v6685 = vld [vmem:[#allocation4 + $0xc] sm:$0xf]
        %v6686 = vld [vmem:[#allocation4 + $0x10] sm:$0xf]
        %v6687 = vld [vmem:[#allocation4 + $0x14] sm:$0xf]
        %v6688 = vld [vmem:[#allocation4 + $0x18] sm:$0xf]
        %v6689 = vld [vmem:[#allocation4 + $0x1c] sm:$0x7]
        %s6690 = scalar_lea.vmem %s5, 48
        %v6691 = vld [vmem:[%s6690] sm:$0xf]
        %v6692 = vld [vmem:[%s6690 + $0x4] sm:$0xf]
        %v6693 = vld [vmem:[%s6690 + $0x8] sm:$0xf]
        %v6694 = vld [vmem:[%s6690 + $0xc] sm:$0xf]
        %v6702 = vunpack.c.l.b16 %v6683
        %v6703 = vunpack.c.l.b16 %v6684
        %v6704 = vunpack.c.l.b16 %v6685
        %v6705 = vunpack.c.l.b16 %v6686
        %v6706 = vunpack.c.l.b16 %v6687
        %v6707 = vunpack.c.l.b16 %v6688
        %v6708 = vunpack.c.l.b16 %v6689
        %v6709 = vpack.c.b16 %v6703, %v6702
        %v6710 = vpack.c.b16 %v6705, %v6704
        %v6711 = vpack.c.b16 %v6707, %v6706
        %v6712 = vpack.c.b16 %v6708, %v6708
        %v6714 = vshrl.u32 %v6709, 16
        %v6716 = vshll.u32 %v6709, 16
        %v6718 = vrot.slane %v6716, 1
        %v6719 = vor.u32 %v6714, %v6718
        %v6721 = vshll.u32 %v6710, 16
        %v6723 = vrot.slane %v6721, 1
        %v6724 = vsel %vm1338, %v6719, %v6723
        %v6725 = vshrl.u32 %v6710, 16
        %v6727 = vor.u32 %v6725, %v6723
        %v6729 = vshll.u32 %v6711, 16
        %v6731 = vrot.slane %v6729, 1
        %v6732 = vsel %vm1338, %v6727, %v6731
        %v6733 = vshrl.u32 %v6711, 16
        %v6735 = vor.u32 %v6733, %v6731
        %v6737 = vshll.u32 %v6712, 16
        %v6739 = vrot.slane %v6737, 1
        %v6740 = vsel %vm1338, %v6735, %v6739
        %v6741 = vshrl.u32 %v6712, 16
        %v6743 = vor.u32 %v6741, %v6739
        %v6748 = vunpack.c.l.b16 %v6691
        %v6749 = vunpack.c.l.b16 %v6692
        %v6750 = vunpack.c.l.b16 %v6693
        %v6751 = vunpack.c.l.b16 %v6694
        %v6752 = vpack.c.b16 %v6749, %v6748
        %v6753 = vpack.c.b16 %v6751, %v6750
        %v6757 = vsel %vm556, %v6724, 0
        %v6760 = vsel %vm556, %v6732, 0
        %v6763 = vsel %vm556, %v6740, 0
        %v6766 = vsel %vm556, %v6743, 0
        %6768 = vmatprep.subr.bf16.mxu0 0
        %6769 = vmatpush1.bf16.msra.mxu0 %v6752
        %6770 = vmatprep.subr.bf16.mxu0 0
        %6771 = vmatpush1.bf16.msra.mxu0 %v6753
        %6772 = vmatprep.subr.bf16.mxu0 0
        %6773 = vmatpush1.bf16.msra.mxu0 0
        %6774 = vmatprep.subr.bf16.mxu0 0
        %6775 = vmatpush1.bf16.msra.mxu0 0
        %6776 = vmatprep.subr.bf16.mxu0 0
        %6777 = vmatpush1.bf16.msra.mxu0 0
        %6778 = vmatprep.subr.bf16.mxu0 0
        %6779 = vmatpush1.bf16.msra.mxu0 0
        %6780 = vmatprep.subr.bf16.mxu0 0
        %6781 = vmatpush1.bf16.msra.mxu0 0
        %6782 = vmatprep.subr.bf16.mxu0 0
        %6783 = vmatpush1.bf16.msra.mxu0 0
        %6784 = vmatprep.subr.bf16.mxu0 0
        %6785 = vmatpush1.bf16.msra.mxu0 0
        %6786 = vmatprep.subr.bf16.mxu0 0
        %6787 = vmatpush1.bf16.msra.mxu0 0
        %6788 = vmatprep.subr.bf16.mxu0 0
        %6789 = vmatpush1.bf16.msra.mxu0 0
        %6790 = vmatprep.subr.bf16.mxu0 0
        %6791 = vmatpush1.bf16.msra.mxu0 0
        %6792 = vmatprep.subr.bf16.mxu0 0
        %6793 = vmatpush1.bf16.msra.mxu0 0
        %6794 = vmatprep.subr.bf16.mxu0 0
        %6795 = vmatpush1.bf16.msra.mxu0 0
        %6796 = vmatprep.subr.bf16.mxu0 0
        %6797 = vmatpush1.bf16.msra.mxu0 0
        %6798 = vmatprep.subr.bf16.mxu0 0
        %6799 = vmatpush1.bf16.msra.mxu0 0
        %6800 = vmatprep.mubr.bf16.mxu0 0
        %6801 = vmatmul.mubr.bf16.gmra.mrb[0].mxu0 %v6757
        %v6802 = vpop.f32.mrb[0].mxu0
        %v6803 = vadd.f32 0.0, %v6802
        %v6804 = vpop.f32.mrb[0].mxu0
        %v6805 = vpop.f32.mrb[0].mxu0
        %v6806 = vadd.f32 0.0, %v6805
        %v6807 = vpop.f32.mrb[0].mxu0
        %6808 = vmatprep.mubr.bf16.mxu0 0
        %6809 = vmatmul.mubr.bf16.gmra.mrb[0].mxu0 %v6760
        %v6810 = vpop.f32.mrb[0].mxu0
        %v6811 = vadd.f32 0.0, %v6810
        %v6812 = vpop.f32.mrb[0].mxu0
        %v6813 = vpop.f32.mrb[0].mxu0
        %v6814 = vadd.f32 0.0, %v6813
        %v6815 = vpop.f32.mrb[0].mxu0
        %6816 = vmatprep.mubr.bf16.mxu0 0
        %6817 = vmatmul.mubr.bf16.gmra.mrb[0].mxu0 %v6763
        %v6818 = vpop.f32.mrb[0].mxu0
        %v6819 = vadd.f32 0.0, %v6818
        %v6820 = vpop.f32.mrb[0].mxu0
        %v6821 = vpop.f32.mrb[0].mxu0
        %v6822 = vadd.f32 0.0, %v6821
        %v6823 = vpop.f32.mrb[0].mxu0
        %6824 = vmatprep.mubr.bf16.mxu0 0
        %6825 = vmatmul.mubr.bf16.gmra.mrb[0].mxu0 %v6766
        %v6826 = vpop.f32.mrb[0].mxu0
        %v6827 = vadd.f32 0.0, %v6826
        %v6828 = vpop.f32.mrb[0].mxu0
        %v6829 = vpop.f32.mrb[0].mxu0
        %v6830 = vpop.f32.mrb[0].mxu0
        %6831 = vdwg.mxu0
        %v6832 = vadd.f32 %v6676, %v6803
        %v6833 = vadd.f32 %v6677, %v6806
        %v6834 = vadd.f32 %v6678, %v6811
        %v6835 = vadd.f32 %v6679, %v6814
        %v6836 = vadd.f32 %v6680, %v6819
        %v6837 = vadd.f32 %v6681, %v6822
        %v6838 = vadd.f32 %v6682, %v6827
        %v6839 = vld [vmem:[#allocation4 + $0x4] sm:$0xe]
        %s6840 = scalar_lea.vmem %s5, 64
        %v6841 = vld [vmem:[%s6840] sm:$0xf]
        %v6842 = vld [vmem:[%s6840 + $0x4] sm:$0xf]
        %v6843 = vld [vmem:[%s6840 + $0x8] sm:$0xf]
        %v6844 = vld [vmem:[%s6840 + $0xc] sm:$0xf]
        %v6846 = vunpack.c.l.b16 %v6839
        %v6847 = vpack.c.b16 %v6703, %v6846
        %v6848 = vrot.slane %v6847, 1
        %v6849 = vrot.slane %v6710, 1
        %v6850 = vsel %vm1674, %v6848, %v6849
        %v6851 = vrot.slane %v6711, 1
        %v6852 = vsel %vm1674, %v6849, %v6851
        %v6853 = vrot.slane %v6712, 1
        %v6854 = vsel %vm1674, %v6851, %v6853
        %v6859 = vunpack.c.l.b16 %v6841
        %v6860 = vunpack.c.l.b16 %v6842
        %v6861 = vunpack.c.l.b16 %v6843
        %v6862 = vunpack.c.l.b16 %v6844
        %v6863 = vpack.c.b16 %v6860, %v6859
        %v6864 = vpack.c.b16 %v6862, %v6861
        %v6868 = vsel %vm556, %v6850, 0
        %v6871 = vsel %vm556, %v6852, 0
        %v6874 = vsel %vm556, %v6854, 0
        %v6877 = vsel %vm556, %v6853, 0
        %6879 = vmatprep.subr.bf16.mxu0 0
        %6880 = vmatpush1.bf16.msra.mxu0 %v6863
        %6881 = vmatprep.subr.bf16.mxu0 0
        %6882 = vmatpush1.bf16.msra.mxu0 %v6864
        %6883 = vmatprep.subr.bf16.mxu0 0
        %6884 = vmatpush1.bf16.msra.mxu0 0
        %6885 = vmatprep.subr.bf16.mxu0 0
        %6886 = vmatpush1.bf16.msra.mxu0 0
        %6887 = vmatprep.subr.bf16.mxu0 0
        %6888 = vmatpush1.bf16.msra.mxu0 0
        %6889 = vmatprep.subr.bf16.mxu0 0
        %6890 = vmatpush1.bf16.msra.mxu0 0
        %6891 = vmatprep.subr.bf16.mxu0 0
        %6892 = vmatpush1.bf16.msra.mxu0 0
        %6893 = vmatprep.subr.bf16.mxu0 0
        %6894 = vmatpush1.bf16.msra.mxu0 0
        %6895 = vmatprep.subr.bf16.mxu0 0
        %6896 = vmatpush1.bf16.msra.mxu0 0
        %6897 = vmatprep.subr.bf16.mxu0 0
        %6898 = vmatpush1.bf16.msra.mxu0 0
        %6899 = vmatprep.subr.bf16.mxu0 0
        %6900 = vmatpush1.bf16.msra.mxu0 0
        %6901 = vmatprep.subr.bf16.mxu0 0
        %6902 = vmatpush1.bf16.msra.mxu0 0
        %6903 = vmatprep.subr.bf16.mxu0 0
        %6904 = vmatpush1.bf16.msra.mxu0 0
        %6905 = vmatprep.subr.bf16.mxu0 0
        %6906 = vmatpush1.bf16.msra.mxu0 0
        %6907 = vmatprep.subr.bf16.mxu0 0
        %6908 = vmatpush1.bf16.msra.mxu0 0
        %6909 = vmatprep.subr.bf16.mxu0 0
        %6910 = vmatpush1.bf16.msra.mxu0 0
        %6911 = vmatprep.mubr.bf16.mxu0 0
        %6912 = vmatmul.mubr.bf16.gmra.mrb[0].mxu0 %v6868
        %v6913 = vpop.f32.mrb[0].mxu0
        %v6914 = vadd.f32 0.0, %v6913
        %v6915 = vpop.f32.mrb[0].mxu0
        %v6916 = vpop.f32.mrb[0].mxu0
        %v6917 = vadd.f32 0.0, %v6916
        %v6918 = vpop.f32.mrb[0].mxu0
        %6919 = vmatprep.mubr.bf16.mxu0 0
        %6920 = vmatmul.mubr.bf16.gmra.mrb[0].mxu0 %v6871
        %v6921 = vpop.f32.mrb[0].mxu0
        %v6922 = vadd.f32 0.0, %v6921
        %v6923 = vpop.f32.mrb[0].mxu0
        %v6924 = vpop.f32.mrb[0].mxu0
        %v6925 = vadd.f32 0.0, %v6924
        %v6926 = vpop.f32.mrb[0].mxu0
        %6927 = vmatprep.mubr.bf16.mxu0 0
        %6928 = vmatmul.mubr.bf16.gmra.mrb[0].mxu0 %v6874
        %v6929 = vpop.f32.mrb[0].mxu0
        %v6930 = vadd.f32 0.0, %v6929
        %v6931 = vpop.f32.mrb[0].mxu0
        %v6932 = vpop.f32.mrb[0].mxu0
        %v6933 = vadd.f32 0.0, %v6932
        %v6934 = vpop.f32.mrb[0].mxu0
        %6935 = vmatprep.mubr.bf16.mxu0 0
        %6936 = vmatmul.mubr.bf16.gmra.mrb[0].mxu0 %v6877
        %v6937 = vpop.f32.mrb[0].mxu0
        %v6938 = vadd.f32 0.0, %v6937
        %v6939 = vpop.f32.mrb[0].mxu0
        %v6940 = vpop.f32.mrb[0].mxu0
        %v6941 = vpop.f32.mrb[0].mxu0
        %6942 = vdwg.mxu0
        %v6943 = vadd.f32 %v6832, %v6914
        %v6944 = vadd.f32 %v6833, %v6917
        %v6945 = vadd.f32 %v6834, %v6922
        %v6946 = vadd.f32 %v6835, %v6925
        %v6947 = vadd.f32 %v6836, %v6930
        %v6948 = vadd.f32 %v6837, %v6933
        %v6949 = vadd.f32 %v6838, %v6938
        %v6950 = vld [vmem:[#allocation4 + $0x1c] sm:$0xf]
        %s6951 = scalar_lea.vmem %s5, 80
        %v6952 = vld [vmem:[%s6951] sm:$0xf]
        %v6953 = vld [vmem:[%s6951 + $0x4] sm:$0xf]
        %v6954 = vld [vmem:[%s6951 + $0x8] sm:$0xf]
        %v6955 = vld [vmem:[%s6951 + $0xc] sm:$0xf]
        %v6957 = vunpack.c.l.b16 %v6950
        %v6958 = vpack.c.b16 %v6957, %v6957
        %v6960 = vshrl.u32 %v6847, 16
        %v6962 = vrot.slane %v6960, 1
        %v6963 = vshll.u32 %v6847, 16
        %v6965 = vrot.slane %v6963, 2
        %v6966 = vor.u32 %v6962, %v6965
        %v6967 = vrot.slane %v6725, 1
        %v6968 = vrot.slane %v6721, 2
        %v6969 = vor.u32 %v6967, %v6968
        %v6970 = vsel %vm2081, %v6966, %v6969
        %v6971 = vrot.slane %v6733, 1
        %v6972 = vrot.slane %v6729, 2
        %v6973 = vor.u32 %v6971, %v6972
        %v6974 = vsel %vm2081, %v6969, %v6973
        %v6976 = vshrl.u32 %v6958, 16
        %v6978 = vrot.slane %v6976, 1
        %v6979 = vshll.u32 %v6958, 16
        %v6981 = vrot.slane %v6979, 2
        %v6982 = vor.u32 %v6978, %v6981
        %v6983 = vsel %vm2081, %v6973, %v6982
        %v6988 = vunpack.c.l.b16 %v6952
        %v6989 = vunpack.c.l.b16 %v6953
        %v6990 = vunpack.c.l.b16 %v6954
        %v6991 = vunpack.c.l.b16 %v6955
        %v6992 = vpack.c.b16 %v6989, %v6988
        %v6993 = vpack.c.b16 %v6991, %v6990
        %v6997 = vsel %vm556, %v6970, 0
        %v7000 = vsel %vm556, %v6974, 0
        %v7003 = vsel %vm556, %v6983, 0
        %v7006 = vsel %vm556, %v6982, 0
        %7008 = vmatprep.subr.bf16.mxu0 0
        %7009 = vmatpush1.bf16.msra.mxu0 %v6992
        %7010 = vmatprep.subr.bf16.mxu0 0
        %7011 = vmatpush1.bf16.msra.mxu0 %v6993
        %7012 = vmatprep.subr.bf16.mxu0 0
        %7013 = vmatpush1.bf16.msra.mxu0 0
        %7014 = vmatprep.subr.bf16.mxu0 0
        %7015 = vmatpush1.bf16.msra.mxu0 0
        %7016 = vmatprep.subr.bf16.mxu0 0
        %7017 = vmatpush1.bf16.msra.mxu0 0
        %7018 = vmatprep.subr.bf16.mxu0 0
        %7019 = vmatpush1.bf16.msra.mxu0 0
        %7020 = vmatprep.subr.bf16.mxu0 0
        %7021 = vmatpush1.bf16.msra.mxu0 0
        %7022 = vmatprep.subr.bf16.mxu0 0
        %7023 = vmatpush1.bf16.msra.mxu0 0
        %7024 = vmatprep.subr.bf16.mxu0 0
        %7025 = vmatpush1.bf16.msra.mxu0 0
        %7026 = vmatprep.subr.bf16.mxu0 0
        %7027 = vmatpush1.bf16.msra.mxu0 0
        %7028 = vmatprep.subr.bf16.mxu0 0
        %7029 = vmatpush1.bf16.msra.mxu0 0
        %7030 = vmatprep.subr.bf16.mxu0 0
        %7031 = vmatpush1.bf16.msra.mxu0 0
        %7032 = vmatprep.subr.bf16.mxu0 0
        %7033 = vmatpush1.bf16.msra.mxu0 0
        %7034 = vmatprep.subr.bf16.mxu0 0
        %7035 = vmatpush1.bf16.msra.mxu0 0
        %7036 = vmatprep.subr.bf16.mxu0 0
        %7037 = vmatpush1.bf16.msra.mxu0 0
        %7038 = vmatprep.subr.bf16.mxu0 0
        %7039 = vmatpush1.bf16.msra.mxu0 0
        %7040 = vmatprep.mubr.bf16.mxu0 0
        %7041 = vmatmul.mubr.bf16.gmra.mrb[0].mxu0 %v6997
        %v7042 = vpop.f32.mrb[0].mxu0
        %v7043 = vadd.f32 0.0, %v7042
        %v7044 = vpop.f32.mrb[0].mxu0
        %v7045 = vpop.f32.mrb[0].mxu0
        %v7046 = vadd.f32 0.0, %v7045
        %v7047 = vpop.f32.mrb[0].mxu0
        %7048 = vmatprep.mubr.bf16.mxu0 0
        %7049 = vmatmul.mubr.bf16.gmra.mrb[0].mxu0 %v7000
        %v7050 = vpop.f32.mrb[0].mxu0
        %v7051 = vadd.f32 0.0, %v7050
        %v7052 = vpop.f32.mrb[0].mxu0
        %v7053 = vpop.f32.mrb[0].mxu0
        %v7054 = vadd.f32 0.0, %v7053
        %v7055 = vpop.f32.mrb[0].mxu0
        %7056 = vmatprep.mubr.bf16.mxu0 0
        %7057 = vmatmul.mubr.bf16.gmra.mrb[0].mxu0 %v7003
        %v7058 = vpop.f32.mrb[0].mxu0
        %v7059 = vadd.f32 0.0, %v7058
        %v7060 = vpop.f32.mrb[0].mxu0
        %v7061 = vpop.f32.mrb[0].mxu0
        %v7062 = vadd.f32 0.0, %v7061
        %v7063 = vpop.f32.mrb[0].mxu0
        %7064 = vmatprep.mubr.bf16.mxu0 0
        %7065 = vmatmul.mubr.bf16.gmra.mrb[0].mxu0 %v7006
        %v7066 = vpop.f32.mrb[0].mxu0
        %v7067 = vadd.f32 0.0, %v7066
        %v7068 = vpop.f32.mrb[0].mxu0
        %v7069 = vpop.f32.mrb[0].mxu0
        %v7070 = vpop.f32.mrb[0].mxu0
        %7071 = vdwg.mxu0
        %v7072 = vadd.f32 %v6943, %v7043
        %v7073 = vadd.f32 %v6944, %v7046
        %v7074 = vadd.f32 %v6945, %v7051
        %v7075 = vadd.f32 %v6946, %v7054
        %v7076 = vadd.f32 %v6947, %v7059
        %v7077 = vadd.f32 %v6948, %v7062
        %v7078 = vadd.f32 %v6949, %v7067
        %v7079 = vld [vmem:[#allocation4 + $0x8] sm:$0xe]
        %v7080 = vld [vmem:[#allocation4 + $0xc] sm:$0xf]
        %v7081 = vld [vmem:[#allocation4 + $0x10] sm:$0xf]
        %v7082 = vld [vmem:[#allocation4 + $0x14] sm:$0xf]
        %v7083 = vld [vmem:[#allocation4 + $0x18] sm:$0xf]
        %v7084 = vld [vmem:[#allocation4 + $0x1c] sm:$0xf]
        %v7085 = vld [vmem:[#allocation4 + $0x20] sm:$0x7]
        %s7086 = scalar_lea.vmem %s5, 96
        %v7087 = vld [vmem:[%s7086] sm:$0xf]
        %v7088 = vld [vmem:[%s7086 + $0x4] sm:$0xf]
        %v7089 = vld [vmem:[%s7086 + $0x8] sm:$0xf]
        %v7090 = vld [vmem:[%s7086 + $0xc] sm:$0xf]
        %v7098 = vunpack.c.l.b16 %v7079
        %v7099 = vunpack.c.l.b16 %v7080
        %v7100 = vunpack.c.l.b16 %v7081
        %v7101 = vunpack.c.l.b16 %v7082
        %v7102 = vunpack.c.l.b16 %v7083
        %v7103 = vunpack.c.l.b16 %v7084
        %v7104 = vunpack.c.l.b16 %v7085
        %v7105 = vpack.c.b16 %v7099, %v7098
        %v7106 = vpack.c.b16 %v7101, %v7100
        %v7107 = vpack.c.b16 %v7103, %v7102
        %v7108 = vpack.c.b16 %v7104, %v7104
        %v7109 = vrot.slane %v7105, 1
        %v7110 = vrot.slane %v7106, 1
        %v7111 = vsel %vm1674, %v7109, %v7110
        %v7112 = vrot.slane %v7107, 1
        %v7113 = vsel %vm1674, %v7110, %v7112
        %v7114 = vrot.slane %v7108, 1
        %v7115 = vsel %vm1674, %v7112, %v7114
        %v7120 = vunpack.c.l.b16 %v7087
        %v7121 = vunpack.c.l.b16 %v7088
        %v7122 = vunpack.c.l.b16 %v7089
        %v7123 = vunpack.c.l.b16 %v7090
        %v7124 = vpack.c.b16 %v7121, %v7120
        %v7125 = vpack.c.b16 %v7123, %v7122
        %v7129 = vsel %vm556, %v7111, 0
        %v7132 = vsel %vm556, %v7113, 0
        %v7135 = vsel %vm556, %v7115, 0
        %v7138 = vsel %vm556, %v7114, 0
        %7140 = vmatprep.subr.bf16.mxu0 0
        %7141 = vmatpush1.bf16.msra.mxu0 %v7124
        %7142 = vmatprep.subr.bf16.mxu0 0
        %7143 = vmatpush1.bf16.msra.mxu0 %v7125
        %7144 = vmatprep.subr.bf16.mxu0 0
        %7145 = vmatpush1.bf16.msra.mxu0 0
        %7146 = vmatprep.subr.bf16.mxu0 0
        %7147 = vmatpush1.bf16.msra.mxu0 0
        %7148 = vmatprep.subr.bf16.mxu0 0
        %7149 = vmatpush1.bf16.msra.mxu0 0
        %7150 = vmatprep.subr.bf16.mxu0 0
        %7151 = vmatpush1.bf16.msra.mxu0 0
        %7152 = vmatprep.subr.bf16.mxu0 0
        %7153 = vmatpush1.bf16.msra.mxu0 0
        %7154 = vmatprep.subr.bf16.mxu0 0
        %7155 = vmatpush1.bf16.msra.mxu0 0
        %7156 = vmatprep.subr.bf16.mxu0 0
        %7157 = vmatpush1.bf16.msra.mxu0 0
        %7158 = vmatprep.subr.bf16.mxu0 0
        %7159 = vmatpush1.bf16.msra.mxu0 0
        %7160 = vmatprep.subr.bf16.mxu0 0
        %7161 = vmatpush1.bf16.msra.mxu0 0
        %7162 = vmatprep.subr.bf16.mxu0 0
        %7163 = vmatpush1.bf16.msra.mxu0 0
        %7164 = vmatprep.subr.bf16.mxu0 0
        %7165 = vmatpush1.bf16.msra.mxu0 0
        %7166 = vmatprep.subr.bf16.mxu0 0
        %7167 = vmatpush1.bf16.msra.mxu0 0
        %7168 = vmatprep.subr.bf16.mxu0 0
        %7169 = vmatpush1.bf16.msra.mxu0 0
        %7170 = vmatprep.subr.bf16.mxu0 0
        %7171 = vmatpush1.bf16.msra.mxu0 0
        %7172 = vmatprep.mubr.bf16.mxu0 0
        %7173 = vmatmul.mubr.bf16.gmra.mrb[0].mxu0 %v7129
        %v7174 = vpop.f32.mrb[0].mxu0
        %v7175 = vadd.f32 0.0, %v7174
        %v7176 = vpop.f32.mrb[0].mxu0
        %v7177 = vpop.f32.mrb[0].mxu0
        %v7178 = vadd.f32 0.0, %v7177
        %v7179 = vpop.f32.mrb[0].mxu0
        %7180 = vmatprep.mubr.bf16.mxu0 0
        %7181 = vmatmul.mubr.bf16.gmra.mrb[0].mxu0 %v7132
        %v7182 = vpop.f32.mrb[0].mxu0
        %v7183 = vadd.f32 0.0, %v7182
        %v7184 = vpop.f32.mrb[0].mxu0
        %v7185 = vpop.f32.mrb[0].mxu0
        %v7186 = vadd.f32 0.0, %v7185
        %v7187 = vpop.f32.mrb[0].mxu0
        %7188 = vmatprep.mubr.bf16.mxu0 0
        %7189 = vmatmul.mubr.bf16.gmra.mrb[0].mxu0 %v7135
        %v7190 = vpop.f32.mrb[0].mxu0
        %v7191 = vadd.f32 0.0, %v7190
        %v7192 = vpop.f32.mrb[0].mxu0
        %v7193 = vpop.f32.mrb[0].mxu0
        %v7194 = vadd.f32 0.0, %v7193
        %v7195 = vpop.f32.mrb[0].mxu0
        %7196 = vmatprep.mubr.bf16.mxu0 0
        %7197 = vmatmul.mubr.bf16.gmra.mrb[0].mxu0 %v7138
        %v7198 = vpop.f32.mrb[0].mxu0
        %v7199 = vadd.f32 0.0, %v7198
        %v7200 = vpop.f32.mrb[0].mxu0
        %v7201 = vpop.f32.mrb[0].mxu0
        %v7202 = vpop.f32.mrb[0].mxu0
        %7203 = vdwg.mxu0
        %v7204 = vadd.f32 %v7072, %v7175
        %v7205 = vadd.f32 %v7073, %v7178
        %v7206 = vadd.f32 %v7074, %v7183
        %v7207 = vadd.f32 %v7075, %v7186
        %v7208 = vadd.f32 %v7076, %v7191
        %v7209 = vadd.f32 %v7077, %v7194
        %v7210 = vadd.f32 %v7078, %v7199
        %v7211 = vld [vmem:[#allocation4 + $0x20] sm:$0xf]
        %s7212 = scalar_lea.vmem %s5, 112
        %v7213 = vld [vmem:[%s7212] sm:$0xf]
        %v7214 = vld [vmem:[%s7212 + $0x4] sm:$0xf]
        %v7215 = vld [vmem:[%s7212 + $0x8] sm:$0xf]
        %v7216 = vld [vmem:[%s7212 + $0xc] sm:$0xf]
        %v7218 = vunpack.c.l.b16 %v7211
        %v7219 = vpack.c.b16 %v7218, %v7218
        %v7221 = vshrl.u32 %v7105, 16
        %v7223 = vrot.slane %v7221, 1
        %v7224 = vshll.u32 %v7105, 16
        %v7226 = vrot.slane %v7224, 2
        %v7227 = vor.u32 %v7223, %v7226
        %v7229 = vshrl.u32 %v7106, 16
        %v7231 = vrot.slane %v7229, 1
        %v7232 = vshll.u32 %v7106, 16
        %v7234 = vrot.slane %v7232, 2
        %v7235 = vor.u32 %v7231, %v7234
        %v7236 = vsel %vm2081, %v7227, %v7235
        %v7238 = vshrl.u32 %v7107, 16
        %v7240 = vrot.slane %v7238, 1
        %v7241 = vshll.u32 %v7107, 16
        %v7243 = vrot.slane %v7241, 2
        %v7244 = vor.u32 %v7240, %v7243
        %v7245 = vsel %vm2081, %v7235, %v7244
        %v7247 = vshrl.u32 %v7219, 16
        %v7249 = vrot.slane %v7247, 1
        %v7250 = vshll.u32 %v7219, 16
        %v7252 = vrot.slane %v7250, 2
        %v7253 = vor.u32 %v7249, %v7252
        %v7254 = vsel %vm2081, %v7244, %v7253
        %v7259 = vunpack.c.l.b16 %v7213
        %v7260 = vunpack.c.l.b16 %v7214
        %v7261 = vunpack.c.l.b16 %v7215
        %v7262 = vunpack.c.l.b16 %v7216
        %v7263 = vpack.c.b16 %v7260, %v7259
        %v7264 = vpack.c.b16 %v7262, %v7261
        %v7268 = vsel %vm556, %v7236, 0
        %v7271 = vsel %vm556, %v7245, 0
        %v7274 = vsel %vm556, %v7254, 0
        %v7277 = vsel %vm556, %v7253, 0
        %7279 = vmatprep.subr.bf16.mxu0 0
        %7280 = vmatpush1.bf16.msra.mxu0 %v7263
        %7281 = vmatprep.subr.bf16.mxu0 0
        %7282 = vmatpush1.bf16.msra.mxu0 %v7264
        %7283 = vmatprep.subr.bf16.mxu0 0
        %7284 = vmatpush1.bf16.msra.mxu0 0
        %7285 = vmatprep.subr.bf16.mxu0 0
        %7286 = vmatpush1.bf16.msra.mxu0 0
        %7287 = vmatprep.subr.bf16.mxu0 0
        %7288 = vmatpush1.bf16.msra.mxu0 0
        %7289 = vmatprep.subr.bf16.mxu0 0
        %7290 = vmatpush1.bf16.msra.mxu0 0
        %7291 = vmatprep.subr.bf16.mxu0 0
        %7292 = vmatpush1.bf16.msra.mxu0 0
        %7293 = vmatprep.subr.bf16.mxu0 0
        %7294 = vmatpush1.bf16.msra.mxu0 0
        %7295 = vmatprep.subr.bf16.mxu0 0
        %7296 = vmatpush1.bf16.msra.mxu0 0
        %7297 = vmatprep.subr.bf16.mxu0 0
        %7298 = vmatpush1.bf16.msra.mxu0 0
        %7299 = vmatprep.subr.bf16.mxu0 0
        %7300 = vmatpush1.bf16.msra.mxu0 0
        %7301 = vmatprep.subr.bf16.mxu0 0
        %7302 = vmatpush1.bf16.msra.mxu0 0
        %7303 = vmatprep.subr.bf16.mxu0 0
        %7304 = vmatpush1.bf16.msra.mxu0 0
        %7305 = vmatprep.subr.bf16.mxu0 0
        %7306 = vmatpush1.bf16.msra.mxu0 0
        %7307 = vmatprep.subr.bf16.mxu0 0
        %7308 = vmatpush1.bf16.msra.mxu0 0
        %7309 = vmatprep.subr.bf16.mxu0 0
        %7310 = vmatpush1.bf16.msra.mxu0 0
        %7311 = vmatprep.mubr.bf16.mxu0 0
        %7312 = vmatmul.mubr.bf16.gmra.mrb[0].mxu0 %v7268
        %v7313 = vpop.f32.mrb[0].mxu0
        %v7314 = vadd.f32 0.0, %v7313
        %v7315 = vpop.f32.mrb[0].mxu0
        %v7316 = vpop.f32.mrb[0].mxu0
        %v7317 = vadd.f32 0.0, %v7316
        %v7318 = vpop.f32.mrb[0].mxu0
        %7319 = vmatprep.mubr.bf16.mxu0 0
        %7320 = vmatmul.mubr.bf16.gmra.mrb[0].mxu0 %v7271
        %v7321 = vpop.f32.mrb[0].mxu0
        %v7322 = vadd.f32 0.0, %v7321
        %v7323 = vpop.f32.mrb[0].mxu0
        %v7324 = vpop.f32.mrb[0].mxu0
        %v7325 = vadd.f32 0.0, %v7324
        %v7326 = vpop.f32.mrb[0].mxu0
        %7327 = vmatprep.mubr.bf16.mxu0 0
        %7328 = vmatmul.mubr.bf16.gmra.mrb[0].mxu0 %v7274
        %v7329 = vpop.f32.mrb[0].mxu0
        %v7330 = vadd.f32 0.0, %v7329
        %v7331 = vpop.f32.mrb[0].mxu0
        %v7332 = vpop.f32.mrb[0].mxu0
        %v7333 = vadd.f32 0.0, %v7332
        %v7334 = vpop.f32.mrb[0].mxu0
        %7335 = vmatprep.mubr.bf16.mxu0 0
        %7336 = vmatmul.mubr.bf16.gmra.mrb[0].mxu0 %v7277
        %v7337 = vpop.f32.mrb[0].mxu0
        %v7338 = vadd.f32 0.0, %v7337
        %v7339 = vpop.f32.mrb[0].mxu0
        %v7340 = vpop.f32.mrb[0].mxu0
        %v7341 = vpop.f32.mrb[0].mxu0
        %7342 = vdwg.mxu0
        %v7343 = vadd.f32 %v7204, %v7314
        %v7344 = vadd.f32 %v7205, %v7317
        %v7345 = vadd.f32 %v7206, %v7322
        %v7346 = vadd.f32 %v7207, %v7325
        %v7347 = vadd.f32 %v7208, %v7330
        %v7348 = vadd.f32 %v7209, %v7333
        %v7349 = vadd.f32 %v7210, %v7338
        %v7350 = vld [vmem:[#allocation4 + $0x8] sm:$0xc]
        %s7351 = scalar_lea.vmem %s5, 128
        %v7352 = vld [vmem:[%s7351] sm:$0xf]
        %v7353 = vld [vmem:[%s7351 + $0x4] sm:$0xf]
        %v7354 = vld [vmem:[%s7351 + $0x8] sm:$0xf]
        %v7355 = vld [vmem:[%s7351 + $0xc] sm:$0xf]
        %v7357 = vunpack.c.l.b16 %v7350
        %v7358 = vpack.c.b16 %v7099, %v7357
        %v7359 = vrot.slane %v7358, 2
        %v7360 = vrot.slane %v7106, 2
        %v7361 = vsel %vm2320, %v7359, %v7360
        %v7362 = vrot.slane %v7107, 2
        %v7363 = vsel %vm2320, %v7360, %v7362
        %v7364 = vrot.slane %v7219, 2
        %v7365 = vsel %vm2320, %v7362, %v7364
        %v7370 = vunpack.c.l.b16 %v7352
        %v7371 = vunpack.c.l.b16 %v7353
        %v7372 = vunpack.c.l.b16 %v7354
        %v7373 = vunpack.c.l.b16 %v7355
        %v7374 = vpack.c.b16 %v7371, %v7370
        %v7375 = vpack.c.b16 %v7373, %v7372
        %v7379 = vsel %vm556, %v7361, 0
        %v7382 = vsel %vm556, %v7363, 0
        %v7385 = vsel %vm556, %v7365, 0
        %v7388 = vsel %vm556, %v7364, 0
        %7390 = vmatprep.subr.bf16.mxu0 0
        %7391 = vmatpush1.bf16.msra.mxu0 %v7374
        %7392 = vmatprep.subr.bf16.mxu0 0
        %7393 = vmatpush1.bf16.msra.mxu0 %v7375
        %7394 = vmatprep.subr.bf16.mxu0 0
        %7395 = vmatpush1.bf16.msra.mxu0 0
        %7396 = vmatprep.subr.bf16.mxu0 0
        %7397 = vmatpush1.bf16.msra.mxu0 0
        %7398 = vmatprep.subr.bf16.mxu0 0
        %7399 = vmatpush1.bf16.msra.mxu0 0
        %7400 = vmatprep.subr.bf16.mxu0 0
        %7401 = vmatpush1.bf16.msra.mxu0 0
        %7402 = vmatprep.subr.bf16.mxu0 0
        %7403 = vmatpush1.bf16.msra.mxu0 0
        %7404 = vmatprep.subr.bf16.mxu0 0
        %7405 = vmatpush1.bf16.msra.mxu0 0
        %7406 = vmatprep.subr.bf16.mxu0 0
        %7407 = vmatpush1.bf16.msra.mxu0 0
        %7408 = vmatprep.subr.bf16.mxu0 0
        %7409 = vmatpush1.bf16.msra.mxu0 0
        %7410 = vmatprep.subr.bf16.mxu0 0
        %7411 = vmatpush1.bf16.msra.mxu0 0
        %7412 = vmatprep.subr.bf16.mxu0 0
        %7413 = vmatpush1.bf16.msra.mxu0 0
        %7414 = vmatprep.subr.bf16.mxu0 0
        %7415 = vmatpush1.bf16.msra.mxu0 0
        %7416 = vmatprep.subr.bf16.mxu0 0
        %7417 = vmatpush1.bf16.msra.mxu0 0
        %7418 = vmatprep.subr.bf16.mxu0 0
        %7419 = vmatpush1.bf16.msra.mxu0 0
        %7420 = vmatprep.subr.bf16.mxu0 0
        %7421 = vmatpush1.bf16.msra.mxu0 0
        %7422 = vmatprep.mubr.bf16.mxu0 0
        %7423 = vmatmul.mubr.bf16.gmra.mrb[0].mxu0 %v7379
        %v7424 = vpop.f32.mrb[0].mxu0
        %v7425 = vadd.f32 0.0, %v7424
        %v7426 = vpop.f32.mrb[0].mxu0
        %v7427 = vpop.f32.mrb[0].mxu0
        %v7428 = vadd.f32 0.0, %v7427
        %v7429 = vpop.f32.mrb[0].mxu0
        %7430 = vmatprep.mubr.bf16.mxu0 0
        %7431 = vmatmul.mubr.bf16.gmra.mrb[0].mxu0 %v7382
        %v7432 = vpop.f32.mrb[0].mxu0
        %v7433 = vadd.f32 0.0, %v7432
        %v7434 = vpop.f32.mrb[0].mxu0
        %v7435 = vpop.f32.mrb[0].mxu0
        %v7436 = vadd.f32 0.0, %v7435
        %v7437 = vpop.f32.mrb[0].mxu0
        %7438 = vmatprep.mubr.bf16.mxu0 0
        %7439 = vmatmul.mubr.bf16.gmra.mrb[0].mxu0 %v7385
        %v7440 = vpop.f32.mrb[0].mxu0
        %v7441 = vadd.f32 0.0, %v7440
        %v7442 = vpop.f32.mrb[0].mxu0
        %v7443 = vpop.f32.mrb[0].mxu0
        %v7444 = vadd.f32 0.0, %v7443
        %v7445 = vpop.f32.mrb[0].mxu0
        %7446 = vmatprep.mubr.bf16.mxu0 0
        %7447 = vmatmul.mubr.bf16.gmra.mrb[0].mxu0 %v7388
        %v7448 = vpop.f32.mrb[0].mxu0
        %v7449 = vadd.f32 0.0, %v7448
        %v7450 = vpop.f32.mrb[0].mxu0
        %v7451 = vpop.f32.mrb[0].mxu0
        %v7452 = vpop.f32.mrb[0].mxu0
        %7453 = vdwg.mxu0
        %v7454 = vadd.f32 %v7343, %v7425
        %v7455 = vadd.f32 %v7344, %v7428
        %v7456 = vadd.f32 %v7345, %v7433
        %v7457 = vadd.f32 %v7346, %v7436
        %v7458 = vadd.f32 %v7347, %v7441
        %v7459 = vadd.f32 %v7348, %v7444
        %v7460 = vadd.f32 %v7349, %v7449
        %v7461 = vld [vmem:[%s6] sm:$0x1]
        %v7463 = vlaneseq
        %v7464 = vshrl.u32 %v7463, 7
        %v7465 = vsub.s32 0, %v7464
        %v7466 = vrot.slane %v7461, %v7465
        %v7468 = vadd.f32 %v7454, %v7466
        %v7469 = vadd.f32 %v7455, %v7466
        %v7470 = vadd.f32 %v7456, %v7466
        %v7471 = vadd.f32 %v7457, %v7466
        %v7472 = vadd.f32 %v7458, %v7466
        %v7473 = vadd.f32 %v7459, %v7466
        %v7474 = vadd.f32 %v7460, %v7466
        %v7475 = vmax.f32 %v7468, 0.0
        %v7476 = vmax.f32 %v7469, 0.0
        %v7477 = vmax.f32 %v7470, 0.0
        %v7478 = vmax.f32 %v7471, 0.0
        %v7479 = vmax.f32 %v7472, 0.0
        %v7480 = vmax.f32 %v7473, 0.0
        %v7481 = vmax.f32 %v7474, 0.0
        %v7482 = vpack.c.bf16 %v7476, %v7475
        %v7483 = vpack.c.bf16 %v7478, %v7477
        %v7484 = vpack.c.bf16 %v7480, %v7479
        %v7485 = vpack.c.bf16 %v7481, %v7481
        %v7490 = vunpack.c.l.b16 %v7482
        %v7491 = vunpack.c.h.b16 %v7482
        %v7492 = vunpack.c.l.b16 %v7483
        %v7493 = vunpack.c.h.b16 %v7483
        %v7494 = vunpack.c.l.b16 %v7484
        %v7495 = vunpack.c.h.b16 %v7484
        %v7496 = vunpack.c.l.b16 %v7485
        %v7497 = vpack.c.b16 %v7490, %v7490
        %v7498 = vpack.c.b16 %v7491, %v7491
        %v7499 = vpack.c.b16 %v7492, %v7492
        %v7500 = vpack.c.b16 %v7493, %v7493
        %v7501 = vpack.c.b16 %v7494, %v7494
        %v7502 = vpack.c.b16 %v7495, %v7495
        %v7503 = vpack.c.b16 %v7496, %v7496
        %vm7511 = vcmask 519168
        %7512 = vst.msk [vmem:[#allocation5] sm:$0xf] %vm7511, %v7497
        %7513 = vst.msk [vmem:[#allocation5 + $0x4] sm:$0xf] %vm7511, %v7498
        %7514 = vst.msk [vmem:[#allocation5 + $0x8] sm:$0xf] %vm7511, %v7499
        %7515 = vst.msk [vmem:[#allocation5 + $0xc] sm:$0xf] %vm7511, %v7500
        %7516 = vst.msk [vmem:[#allocation5 + $0x10] sm:$0xf] %vm7511, %v7501
        %7517 = vst.msk [vmem:[#allocation5 + $0x14] sm:$0xf] %vm7511, %v7502
        %vm7518 = vcmask 517120
        %7519 = vst.msk [vmem:[#allocation5 + $0x18] sm:$0x3] %vm7518, %v7503
        %vm7520 = vcmask 518146
        %7521 = vst.msk [vmem:[#allocation5 + $0x18] sm:$0x4] %vm7520, 0
        %v7522 = vld [vmem:[#allocation5] sm:$0xf]
        %v7523 = vld [vmem:[#allocation5 + $0x4] sm:$0xf]
        %v7524 = vld [vmem:[#allocation5 + $0x8] sm:$0xf]
        %v7525 = vld [vmem:[#allocation5 + $0xc] sm:$0xf]
        %v7526 = vld [vmem:[#allocation5 + $0x10] sm:$0x1]
        %v7527 = vld [vmem:[%s7] sm:$0xf]
        %v7528 = vld [vmem:[%s7 + $0x4] sm:$0xf]
        %v7529 = vld [vmem:[%s7 + $0x8] sm:$0xf]
        %v7530 = vld [vmem:[%s7 + $0xc] sm:$0xf]
        %v7531 = vld [vmem:[%s7 + $0x10] sm:$0xf]
        %v7532 = vld [vmem:[%s7 + $0x14] sm:$0xf]
        %v7533 = vld [vmem:[%s7 + $0x18] sm:$0xf]
        %v7534 = vld [vmem:[%s7 + $0x1c] sm:$0xf]
        %v7535 = vld [vmem:[#allocation5 + $0x10] sm:$0x3]
        %s7536 = scalar_lea.vmem %s7, 32
        %v7537 = vld [vmem:[%s7536] sm:$0xf]
        %v7538 = vld [vmem:[%s7536 + $0x4] sm:$0xf]
        %v7539 = vld [vmem:[%s7536 + $0x8] sm:$0xf]
        %v7540 = vld [vmem:[%s7536 + $0xc] sm:$0xf]
        %v7541 = vld [vmem:[%s7536 + $0x10] sm:$0xf]
        %v7542 = vld [vmem:[%s7536 + $0x14] sm:$0xf]
        %v7543 = vld [vmem:[%s7536 + $0x18] sm:$0xf]
        %v7544 = vld [vmem:[%s7536 + $0x1c] sm:$0xf]
        %v7550 = vunpack.c.l.b16 %v7522
        %v7551 = vunpack.c.l.b16 %v7523
        %v7552 = vunpack.c.l.b16 %v7524
        %v7553 = vunpack.c.l.b16 %v7525
        %v7554 = vunpack.c.l.b16 %v7535
        %v7555 = vpack.c.b16 %v7551, %v7550
        %v7556 = vpack.c.b16 %v7553, %v7552
        %v7557 = vpack.c.b16 %v7554, %v7554
        %v7559 = vshrl.u32 %v7555, 16
        %v7561 = vshll.u32 %v7555, 16
        %v7563 = vrot.slane %v7561, 1
        %v7564 = vor.u32 %v7559, %v7563
        %v7566 = vshll.u32 %v7556, 16
        %v7568 = vrot.slane %v7566, 1
        %v7569 = vsel %vm1338, %v7564, %v7568
        %v7570 = vshrl.u32 %v7556, 16
        %v7572 = vor.u32 %v7570, %v7568
        %v7574 = vshll.u32 %v7557, 16
        %v7576 = vrot.slane %v7574, 1
        %v7577 = vsel %vm1338, %v7572, %v7576
        %v7578 = vshrl.u32 %v7557, 16
        %v7580 = vor.u32 %v7578, %v7576
        %v7589 = vunpack.c.l.b16 %v7537
        %v7590 = vunpack.c.l.b16 %v7538
        %v7591 = vunpack.c.l.b16 %v7539
        %v7592 = vunpack.c.l.b16 %v7540
        %v7593 = vunpack.c.l.b16 %v7541
        %v7594 = vunpack.c.l.b16 %v7542
        %v7595 = vunpack.c.l.b16 %v7543
        %v7596 = vunpack.c.l.b16 %v7544
        %v7597 = vpack.c.b16 %v7590, %v7589
        %v7598 = vpack.c.b16 %v7592, %v7591
        %v7599 = vpack.c.b16 %v7594, %v7593
        %v7600 = vpack.c.b16 %v7596, %v7595
        %vm7605 = vcmask 523264
        %v7607 = vsel %vm7605, %v7569, 0
        %v7610 = vsel %vm7605, %v7577, 0
        %v7613 = vsel %vm7605, %v7580, 0
        %7615 = vmatprep.subr.bf16.mxu0 0
        %7616 = vmatpush1.bf16.msra.mxu0 %v7597
        %7617 = vmatprep.subr.bf16.mxu0 0
        %7618 = vmatpush1.bf16.msra.mxu0 %v7598
        %7619 = vmatprep.subr.bf16.mxu0 0
        %7620 = vmatpush1.bf16.msra.mxu0 %v7599
        %7621 = vmatprep.subr.bf16.mxu0 0
        %7622 = vmatpush1.bf16.msra.mxu0 %v7600
        %7623 = vmatprep.subr.bf16.mxu0 0
        %7624 = vmatpush1.bf16.msra.mxu0 0
        %7625 = vmatprep.subr.bf16.mxu0 0
        %7626 = vmatpush1.bf16.msra.mxu0 0
        %7627 = vmatprep.subr.bf16.mxu0 0
        %7628 = vmatpush1.bf16.msra.mxu0 0
        %7629 = vmatprep.subr.bf16.mxu0 0
        %7630 = vmatpush1.bf16.msra.mxu0 0
        %7631 = vmatprep.subr.bf16.mxu0 0
        %7632 = vmatpush1.bf16.msra.mxu0 0
        %7633 = vmatprep.subr.bf16.mxu0 0
        %7634 = vmatpush1.bf16.msra.mxu0 0
        %7635 = vmatprep.subr.bf16.mxu0 0
        %7636 = vmatpush1.bf16.msra.mxu0 0
        %7637 = vmatprep.subr.bf16.mxu0 0
        %7638 = vmatpush1.bf16.msra.mxu0 0
        %7639 = vmatprep.subr.bf16.mxu0 0
        %7640 = vmatpush1.bf16.msra.mxu0 0
        %7641 = vmatprep.subr.bf16.mxu0 0
        %7642 = vmatpush1.bf16.msra.mxu0 0
        %7643 = vmatprep.subr.bf16.mxu0 0
        %7644 = vmatpush1.bf16.msra.mxu0 0
        %7645 = vmatprep.subr.bf16.mxu0 0
        %7646 = vmatpush1.bf16.msra.mxu0 0
        %7647 = vmatprep.mubr.bf16.mxu0 0
        %7648 = vmatmul.mubr.bf16.gmra.mrb[0].mxu0 %v7607
        %v7649 = vpop.f32.mrb[0].mxu0
        %v7650 = vadd.f32 0.0, %v7649
        %v7651 = vpop.f32.mrb[0].mxu0
        %v7652 = vpop.f32.mrb[0].mxu0
        %v7653 = vadd.f32 0.0, %v7652
        %v7654 = vpop.f32.mrb[0].mxu0
        %7655 = vmatprep.mubr.bf16.mxu0 0
        %7656 = vmatmul.mubr.bf16.gmra.mrb[0].mxu0 %v7610
        %v7657 = vpop.f32.mrb[0].mxu0
        %v7658 = vadd.f32 0.0, %v7657
        %v7659 = vpop.f32.mrb[0].mxu0
        %v7660 = vpop.f32.mrb[0].mxu0
        %v7661 = vadd.f32 0.0, %v7660
        %v7662 = vpop.f32.mrb[0].mxu0
        %7663 = vmatprep.mubr.bf16.mxu0 0
        %7664 = vmatmul.mubr.bf16.gmra.mrb[0].mxu0 %v7613
        %v7665 = vpop.f32.mrb[0].mxu0
        %v7666 = vadd.f32 0.0, %v7665
        %v7667 = vpop.f32.mrb[0].mxu0
        %v7668 = vpop.f32.mrb[0].mxu0
        %v7669 = vpop.f32.mrb[0].mxu0
        %7670 = vdwg.mxu0
        %v7672 = vunpack.c.l.b16 %v7526
        %v7673 = vpack.c.b16 %v7672, %v7672
        %v7682 = vunpack.c.l.b16 %v7527
        %v7683 = vunpack.c.l.b16 %v7528
        %v7684 = vunpack.c.l.b16 %v7529
        %v7685 = vunpack.c.l.b16 %v7530
        %v7686 = vunpack.c.l.b16 %v7531
        %v7687 = vunpack.c.l.b16 %v7532
        %v7688 = vunpack.c.l.b16 %v7533
        %v7689 = vunpack.c.l.b16 %v7534
        %v7690 = vpack.c.b16 %v7683, %v7682
        %v7691 = vpack.c.b16 %v7685, %v7684
        %v7692 = vpack.c.b16 %v7687, %v7686
        %v7693 = vpack.c.b16 %v7689, %v7688
        %v7698 = vsel %vm7605, %v7555, 0
        %v7700 = vsel %vm7605, %v7556, 0
        %v7703 = vsel %vm7605, %v7673, 0
        %7705 = vmatprep.subr.bf16.mxu0 0
        %7706 = vmatpush1.bf16.msra.mxu0 %v7690
        %7707 = vmatprep.subr.bf16.mxu0 0
        %7708 = vmatpush1.bf16.msra.mxu0 %v7691
        %7709 = vmatprep.subr.bf16.mxu0 0
        %7710 = vmatpush1.bf16.msra.mxu0 %v7692
        %7711 = vmatprep.subr.bf16.mxu0 0
        %7712 = vmatpush1.bf16.msra.mxu0 %v7693
        %7713 = vmatprep.subr.bf16.mxu0 0
        %7714 = vmatpush1.bf16.msra.mxu0 0
        %7715 = vmatprep.subr.bf16.mxu0 0
        %7716 = vmatpush1.bf16.msra.mxu0 0
        %7717 = vmatprep.subr.bf16.mxu0 0
        %7718 = vmatpush1.bf16.msra.mxu0 0
        %7719 = vmatprep.subr.bf16.mxu0 0
        %7720 = vmatpush1.bf16.msra.mxu0 0
        %7721 = vmatprep.subr.bf16.mxu0 0
        %7722 = vmatpush1.bf16.msra.mxu0 0
        %7723 = vmatprep.subr.bf16.mxu0 0
        %7724 = vmatpush1.bf16.msra.mxu0 0
        %7725 = vmatprep.subr.bf16.mxu0 0
        %7726 = vmatpush1.bf16.msra.mxu0 0
        %7727 = vmatprep.subr.bf16.mxu0 0
        %7728 = vmatpush1.bf16.msra.mxu0 0
        %7729 = vmatprep.subr.bf16.mxu0 0
        %7730 = vmatpush1.bf16.msra.mxu0 0
        %7731 = vmatprep.subr.bf16.mxu0 0
        %7732 = vmatpush1.bf16.msra.mxu0 0
        %7733 = vmatprep.subr.bf16.mxu0 0
        %7734 = vmatpush1.bf16.msra.mxu0 0
        %7735 = vmatprep.subr.bf16.mxu0 0
        %7736 = vmatpush1.bf16.msra.mxu0 0
        %7737 = vmatprep.mubr.bf16.mxu0 0
        %7738 = vmatmul.mubr.bf16.gmra.mrb[0].mxu0 %v7698
        %v7739 = vpop.f32.mrb[0].mxu0
        %v7740 = vadd.f32 %v7650, %v7739
        %v7741 = vpop.f32.mrb[0].mxu0
        %v7742 = vpop.f32.mrb[0].mxu0
        %v7743 = vadd.f32 %v7653, %v7742
        %v7744 = vpop.f32.mrb[0].mxu0
        %7745 = vmatprep.mubr.bf16.mxu0 0
        %7746 = vmatmul.mubr.bf16.gmra.mrb[0].mxu0 %v7700
        %v7747 = vpop.f32.mrb[0].mxu0
        %v7748 = vadd.f32 %v7658, %v7747
        %v7749 = vpop.f32.mrb[0].mxu0
        %v7750 = vpop.f32.mrb[0].mxu0
        %v7751 = vadd.f32 %v7661, %v7750
        %v7752 = vpop.f32.mrb[0].mxu0
        %7753 = vmatprep.mubr.bf16.mxu0 0
        %7754 = vmatmul.mubr.bf16.gmra.mrb[0].mxu0 %v7703
        %v7755 = vpop.f32.mrb[0].mxu0
        %v7756 = vadd.f32 %v7666, %v7755
        %v7757 = vpop.f32.mrb[0].mxu0
        %v7758 = vpop.f32.mrb[0].mxu0
        %v7759 = vpop.f32.mrb[0].mxu0
        %7760 = vdwg.mxu0
        %v7761 = vld [vmem:[#allocation5] sm:$0xe]
        %s7762 = scalar_lea.vmem %s7, 64
        %v7763 = vld [vmem:[%s7762] sm:$0xf]
        %v7764 = vld [vmem:[%s7762 + $0x4] sm:$0xf]
        %v7765 = vld [vmem:[%s7762 + $0x8] sm:$0xf]
        %v7766 = vld [vmem:[%s7762 + $0xc] sm:$0xf]
        %v7767 = vld [vmem:[%s7762 + $0x10] sm:$0xf]
        %v7768 = vld [vmem:[%s7762 + $0x14] sm:$0xf]
        %v7769 = vld [vmem:[%s7762 + $0x18] sm:$0xf]
        %v7770 = vld [vmem:[%s7762 + $0x1c] sm:$0xf]
        %v7772 = vunpack.c.l.b16 %v7761
        %v7773 = vpack.c.b16 %v7551, %v7772
        %v7774 = vrot.slane %v7773, 1
        %v7775 = vrot.slane %v7556, 1
        %v7776 = vsel %vm1674, %v7774, %v7775
        %v7777 = vrot.slane %v7557, 1
        %v7778 = vsel %vm1674, %v7775, %v7777
        %v7787 = vunpack.c.l.b16 %v7763
        %v7788 = vunpack.c.l.b16 %v7764
        %v7789 = vunpack.c.l.b16 %v7765
        %v7790 = vunpack.c.l.b16 %v7766
        %v7791 = vunpack.c.l.b16 %v7767
        %v7792 = vunpack.c.l.b16 %v7768
        %v7793 = vunpack.c.l.b16 %v7769
        %v7794 = vunpack.c.l.b16 %v7770
        %v7795 = vpack.c.b16 %v7788, %v7787
        %v7796 = vpack.c.b16 %v7790, %v7789
        %v7797 = vpack.c.b16 %v7792, %v7791
        %v7798 = vpack.c.b16 %v7794, %v7793
        %v7804 = vsel %vm7605, %v7776, 0
        %v7807 = vsel %vm7605, %v7778, 0
        %v7810 = vsel %vm7605, %v7777, 0
        %7812 = vmatprep.subr.bf16.mxu0 0
        %7813 = vmatpush1.bf16.msra.mxu0 %v7795
        %7814 = vmatprep.subr.bf16.mxu0 0
        %7815 = vmatpush1.bf16.msra.mxu0 %v7796
        %7816 = vmatprep.subr.bf16.mxu0 0
        %7817 = vmatpush1.bf16.msra.mxu0 %v7797
        %7818 = vmatprep.subr.bf16.mxu0 0
        %7819 = vmatpush1.bf16.msra.mxu0 %v7798
        %7820 = vmatprep.subr.bf16.mxu0 0
        %7821 = vmatpush1.bf16.msra.mxu0 0
        %7822 = vmatprep.subr.bf16.mxu0 0
        %7823 = vmatpush1.bf16.msra.mxu0 0
        %7824 = vmatprep.subr.bf16.mxu0 0
        %7825 = vmatpush1.bf16.msra.mxu0 0
        %7826 = vmatprep.subr.bf16.mxu0 0
        %7827 = vmatpush1.bf16.msra.mxu0 0
        %7828 = vmatprep.subr.bf16.mxu0 0
        %7829 = vmatpush1.bf16.msra.mxu0 0
        %7830 = vmatprep.subr.bf16.mxu0 0
        %7831 = vmatpush1.bf16.msra.mxu0 0
        %7832 = vmatprep.subr.bf16.mxu0 0
        %7833 = vmatpush1.bf16.msra.mxu0 0
        %7834 = vmatprep.subr.bf16.mxu0 0
        %7835 = vmatpush1.bf16.msra.mxu0 0
        %7836 = vmatprep.subr.bf16.mxu0 0
        %7837 = vmatpush1.bf16.msra.mxu0 0
        %7838 = vmatprep.subr.bf16.mxu0 0
        %7839 = vmatpush1.bf16.msra.mxu0 0
        %7840 = vmatprep.subr.bf16.mxu0 0
        %7841 = vmatpush1.bf16.msra.mxu0 0
        %7842 = vmatprep.subr.bf16.mxu0 0
        %7843 = vmatpush1.bf16.msra.mxu0 0
        %7844 = vmatprep.mubr.bf16.mxu0 0
        %7845 = vmatmul.mubr.bf16.gmra.mrb[0].mxu0 %v7804
        %v7846 = vpop.f32.mrb[0].mxu0
        %v7847 = vadd.f32 0.0, %v7846
        %v7848 = vpop.f32.mrb[0].mxu0
        %v7849 = vpop.f32.mrb[0].mxu0
        %v7850 = vadd.f32 0.0, %v7849
        %v7851 = vpop.f32.mrb[0].mxu0
        %7852 = vmatprep.mubr.bf16.mxu0 0
        %7853 = vmatmul.mubr.bf16.gmra.mrb[0].mxu0 %v7807
        %v7854 = vpop.f32.mrb[0].mxu0
        %v7855 = vadd.f32 0.0, %v7854
        %v7856 = vpop.f32.mrb[0].mxu0
        %v7857 = vpop.f32.mrb[0].mxu0
        %v7858 = vadd.f32 0.0, %v7857
        %v7859 = vpop.f32.mrb[0].mxu0
        %7860 = vmatprep.mubr.bf16.mxu0 0
        %7861 = vmatmul.mubr.bf16.gmra.mrb[0].mxu0 %v7810
        %v7862 = vpop.f32.mrb[0].mxu0
        %v7863 = vadd.f32 0.0, %v7862
        %v7864 = vpop.f32.mrb[0].mxu0
        %v7865 = vpop.f32.mrb[0].mxu0
        %v7866 = vpop.f32.mrb[0].mxu0
        %7867 = vdwg.mxu0
        %v7868 = vadd.f32 %v7740, %v7847
        %v7869 = vadd.f32 %v7743, %v7850
        %v7870 = vadd.f32 %v7748, %v7855
        %v7871 = vadd.f32 %v7751, %v7858
        %v7872 = vadd.f32 %v7756, %v7863
        %v7873 = vld [vmem:[#allocation5 + $0x4] sm:$0xf]
        %v7874 = vld [vmem:[#allocation5 + $0x8] sm:$0xf]
        %v7875 = vld [vmem:[#allocation5 + $0xc] sm:$0xf]
        %v7876 = vld [vmem:[#allocation5 + $0x10] sm:$0xf]
        %v7877 = vld [vmem:[#allocation5 + $0x14] sm:$0x3]
        %s7878 = scalar_lea.vmem %s7, 96
        %v7879 = vld [vmem:[%s7878] sm:$0xf]
        %v7880 = vld [vmem:[%s7878 + $0x4] sm:$0xf]
        %v7881 = vld [vmem:[%s7878 + $0x8] sm:$0xf]
        %v7882 = vld [vmem:[%s7878 + $0xc] sm:$0xf]
        %v7883 = vld [vmem:[%s7878 + $0x10] sm:$0xf]
        %v7884 = vld [vmem:[%s7878 + $0x14] sm:$0xf]
        %v7885 = vld [vmem:[%s7878 + $0x18] sm:$0xf]
        %v7886 = vld [vmem:[%s7878 + $0x1c] sm:$0xf]
        %v7892 = vunpack.c.l.b16 %v7873
        %v7893 = vunpack.c.l.b16 %v7874
        %v7894 = vunpack.c.l.b16 %v7875
        %v7895 = vunpack.c.l.b16 %v7876
        %v7896 = vunpack.c.l.b16 %v7877
        %v7897 = vpack.c.b16 %v7893, %v7892
        %v7898 = vpack.c.b16 %v7895, %v7894
        %v7899 = vpack.c.b16 %v7896, %v7896
        %v7901 = vshrl.u32 %v7897, 16
        %v7903 = vshll.u32 %v7897, 16
        %v7905 = vrot.slane %v7903, 1
        %v7906 = vor.u32 %v7901, %v7905
        %v7908 = vshll.u32 %v7898, 16
        %v7910 = vrot.slane %v7908, 1
        %v7911 = vsel %vm1338, %v7906, %v7910
        %v7912 = vshrl.u32 %v7898, 16
        %v7914 = vor.u32 %v7912, %v7910
        %v7916 = vshll.u32 %v7899, 16
        %v7918 = vrot.slane %v7916, 1
        %v7919 = vsel %vm1338, %v7914, %v7918
        %v7920 = vshrl.u32 %v7899, 16
        %v7922 = vor.u32 %v7920, %v7918
        %v7931 = vunpack.c.l.b16 %v7879
        %v7932 = vunpack.c.l.b16 %v7880
        %v7933 = vunpack.c.l.b16 %v7881
        %v7934 = vunpack.c.l.b16 %v7882
        %v7935 = vunpack.c.l.b16 %v7883
        %v7936 = vunpack.c.l.b16 %v7884
        %v7937 = vunpack.c.l.b16 %v7885
        %v7938 = vunpack.c.l.b16 %v7886
        %v7939 = vpack.c.b16 %v7932, %v7931
        %v7940 = vpack.c.b16 %v7934, %v7933
        %v7941 = vpack.c.b16 %v7936, %v7935
        %v7942 = vpack.c.b16 %v7938, %v7937
        %v7948 = vsel %vm7605, %v7911, 0
        %v7951 = vsel %vm7605, %v7919, 0
        %v7954 = vsel %vm7605, %v7922, 0
        %7956 = vmatprep.subr.bf16.mxu0 0
        %7957 = vmatpush1.bf16.msra.mxu0 %v7939
        %7958 = vmatprep.subr.bf16.mxu0 0
        %7959 = vmatpush1.bf16.msra.mxu0 %v7940
        %7960 = vmatprep.subr.bf16.mxu0 0
        %7961 = vmatpush1.bf16.msra.mxu0 %v7941
        %7962 = vmatprep.subr.bf16.mxu0 0
        %7963 = vmatpush1.bf16.msra.mxu0 %v7942
        %7964 = vmatprep.subr.bf16.mxu0 0
        %7965 = vmatpush1.bf16.msra.mxu0 0
        %7966 = vmatprep.subr.bf16.mxu0 0
        %7967 = vmatpush1.bf16.msra.mxu0 0
        %7968 = vmatprep.subr.bf16.mxu0 0
        %7969 = vmatpush1.bf16.msra.mxu0 0
        %7970 = vmatprep.subr.bf16.mxu0 0
        %7971 = vmatpush1.bf16.msra.mxu0 0
        %7972 = vmatprep.subr.bf16.mxu0 0
        %7973 = vmatpush1.bf16.msra.mxu0 0
        %7974 = vmatprep.subr.bf16.mxu0 0
        %7975 = vmatpush1.bf16.msra.mxu0 0
        %7976 = vmatprep.subr.bf16.mxu0 0
        %7977 = vmatpush1.bf16.msra.mxu0 0
        %7978 = vmatprep.subr.bf16.mxu0 0
        %7979 = vmatpush1.bf16.msra.mxu0 0
        %7980 = vmatprep.subr.bf16.mxu0 0
        %7981 = vmatpush1.bf16.msra.mxu0 0
        %7982 = vmatprep.subr.bf16.mxu0 0
        %7983 = vmatpush1.bf16.msra.mxu0 0
        %7984 = vmatprep.subr.bf16.mxu0 0
        %7985 = vmatpush1.bf16.msra.mxu0 0
        %7986 = vmatprep.subr.bf16.mxu0 0
        %7987 = vmatpush1.bf16.msra.mxu0 0
        %7988 = vmatprep.mubr.bf16.mxu0 0
        %7989 = vmatmul.mubr.bf16.gmra.mrb[0].mxu0 %v7948
        %v7990 = vpop.f32.mrb[0].mxu0
        %v7991 = vadd.f32 0.0, %v7990
        %v7992 = vpop.f32.mrb[0].mxu0
        %v7993 = vpop.f32.mrb[0].mxu0
        %v7994 = vadd.f32 0.0, %v7993
        %v7995 = vpop.f32.mrb[0].mxu0
        %7996 = vmatprep.mubr.bf16.mxu0 0
        %7997 = vmatmul.mubr.bf16.gmra.mrb[0].mxu0 %v7951
        %v7998 = vpop.f32.mrb[0].mxu0
        %v7999 = vadd.f32 0.0, %v7998
        %v8000 = vpop.f32.mrb[0].mxu0
        %v8001 = vpop.f32.mrb[0].mxu0
        %v8002 = vadd.f32 0.0, %v8001
        %v8003 = vpop.f32.mrb[0].mxu0
        %8004 = vmatprep.mubr.bf16.mxu0 0
        %8005 = vmatmul.mubr.bf16.gmra.mrb[0].mxu0 %v7954
        %v8006 = vpop.f32.mrb[0].mxu0
        %v8007 = vadd.f32 0.0, %v8006
        %v8008 = vpop.f32.mrb[0].mxu0
        %v8009 = vpop.f32.mrb[0].mxu0
        %v8010 = vpop.f32.mrb[0].mxu0
        %8011 = vdwg.mxu0
        %v8012 = vadd.f32 %v7868, %v7991
        %v8013 = vadd.f32 %v7869, %v7994
        %v8014 = vadd.f32 %v7870, %v7999
        %v8015 = vadd.f32 %v7871, %v8002
        %v8016 = vadd.f32 %v7872, %v8007
        %v8017 = vld [vmem:[#allocation5 + $0x4] sm:$0xe]
        %s8018 = scalar_lea.vmem %s7, 128
        %v8019 = vld [vmem:[%s8018] sm:$0xf]
        %v8020 = vld [vmem:[%s8018 + $0x4] sm:$0xf]
        %v8021 = vld [vmem:[%s8018 + $0x8] sm:$0xf]
        %v8022 = vld [vmem:[%s8018 + $0xc] sm:$0xf]
        %v8023 = vld [vmem:[%s8018 + $0x10] sm:$0xf]
        %v8024 = vld [vmem:[%s8018 + $0x14] sm:$0xf]
        %v8025 = vld [vmem:[%s8018 + $0x18] sm:$0xf]
        %v8026 = vld [vmem:[%s8018 + $0x1c] sm:$0xf]
        %v8028 = vunpack.c.l.b16 %v8017
        %v8029 = vpack.c.b16 %v7893, %v8028
        %v8030 = vrot.slane %v8029, 1
        %v8031 = vrot.slane %v7898, 1
        %v8032 = vsel %vm1674, %v8030, %v8031
        %v8033 = vrot.slane %v7899, 1
        %v8034 = vsel %vm1674, %v8031, %v8033
        %v8043 = vunpack.c.l.b16 %v8019
        %v8044 = vunpack.c.l.b16 %v8020
        %v8045 = vunpack.c.l.b16 %v8021
        %v8046 = vunpack.c.l.b16 %v8022
        %v8047 = vunpack.c.l.b16 %v8023
        %v8048 = vunpack.c.l.b16 %v8024
        %v8049 = vunpack.c.l.b16 %v8025
        %v8050 = vunpack.c.l.b16 %v8026
        %v8051 = vpack.c.b16 %v8044, %v8043
        %v8052 = vpack.c.b16 %v8046, %v8045
        %v8053 = vpack.c.b16 %v8048, %v8047
        %v8054 = vpack.c.b16 %v8050, %v8049
        %v8060 = vsel %vm7605, %v8032, 0
        %v8063 = vsel %vm7605, %v8034, 0
        %v8066 = vsel %vm7605, %v8033, 0
        %8068 = vmatprep.subr.bf16.mxu0 0
        %8069 = vmatpush1.bf16.msra.mxu0 %v8051
        %8070 = vmatprep.subr.bf16.mxu0 0
        %8071 = vmatpush1.bf16.msra.mxu0 %v8052
        %8072 = vmatprep.subr.bf16.mxu0 0
        %8073 = vmatpush1.bf16.msra.mxu0 %v8053
        %8074 = vmatprep.subr.bf16.mxu0 0
        %8075 = vmatpush1.bf16.msra.mxu0 %v8054
        %8076 = vmatprep.subr.bf16.mxu0 0
        %8077 = vmatpush1.bf16.msra.mxu0 0
        %8078 = vmatprep.subr.bf16.mxu0 0
        %8079 = vmatpush1.bf16.msra.mxu0 0
        %8080 = vmatprep.subr.bf16.mxu0 0
        %8081 = vmatpush1.bf16.msra.mxu0 0
        %8082 = vmatprep.subr.bf16.mxu0 0
        %8083 = vmatpush1.bf16.msra.mxu0 0
        %8084 = vmatprep.subr.bf16.mxu0 0
        %8085 = vmatpush1.bf16.msra.mxu0 0
        %8086 = vmatprep.subr.bf16.mxu0 0
        %8087 = vmatpush1.bf16.msra.mxu0 0
        %8088 = vmatprep.subr.bf16.mxu0 0
        %8089 = vmatpush1.bf16.msra.mxu0 0
        %8090 = vmatprep.subr.bf16.mxu0 0
        %8091 = vmatpush1.bf16.msra.mxu0 0
        %8092 = vmatprep.subr.bf16.mxu0 0
        %8093 = vmatpush1.bf16.msra.mxu0 0
        %8094 = vmatprep.subr.bf16.mxu0 0
        %8095 = vmatpush1.bf16.msra.mxu0 0
        %8096 = vmatprep.subr.bf16.mxu0 0
        %8097 = vmatpush1.bf16.msra.mxu0 0
        %8098 = vmatprep.subr.bf16.mxu0 0
        %8099 = vmatpush1.bf16.msra.mxu0 0
        %8100 = vmatprep.mubr.bf16.mxu0 0
        %8101 = vmatmul.mubr.bf16.gmra.mrb[0].mxu0 %v8060
        %v8102 = vpop.f32.mrb[0].mxu0
        %v8103 = vadd.f32 0.0, %v8102
        %v8104 = vpop.f32.mrb[0].mxu0
        %v8105 = vpop.f32.mrb[0].mxu0
        %v8106 = vadd.f32 0.0, %v8105
        %v8107 = vpop.f32.mrb[0].mxu0
        %8108 = vmatprep.mubr.bf16.mxu0 0
        %8109 = vmatmul.mubr.bf16.gmra.mrb[0].mxu0 %v8063
        %v8110 = vpop.f32.mrb[0].mxu0
        %v8111 = vadd.f32 0.0, %v8110
        %v8112 = vpop.f32.mrb[0].mxu0
        %v8113 = vpop.f32.mrb[0].mxu0
        %v8114 = vadd.f32 0.0, %v8113
        %v8115 = vpop.f32.mrb[0].mxu0
        %8116 = vmatprep.mubr.bf16.mxu0 0
        %8117 = vmatmul.mubr.bf16.gmra.mrb[0].mxu0 %v8066
        %v8118 = vpop.f32.mrb[0].mxu0
        %v8119 = vadd.f32 0.0, %v8118
        %v8120 = vpop.f32.mrb[0].mxu0
        %v8121 = vpop.f32.mrb[0].mxu0
        %v8122 = vpop.f32.mrb[0].mxu0
        %8123 = vdwg.mxu0
        %v8124 = vadd.f32 %v8012, %v8103
        %v8125 = vadd.f32 %v8013, %v8106
        %v8126 = vadd.f32 %v8014, %v8111
        %v8127 = vadd.f32 %v8015, %v8114
        %v8128 = vadd.f32 %v8016, %v8119
        %v8129 = vld [vmem:[#allocation5 + $0x14] sm:$0x7]
        %s8130 = scalar_lea.vmem %s7, 160
        %v8131 = vld [vmem:[%s8130] sm:$0xf]
        %v8132 = vld [vmem:[%s8130 + $0x4] sm:$0xf]
        %v8133 = vld [vmem:[%s8130 + $0x8] sm:$0xf]
        %v8134 = vld [vmem:[%s8130 + $0xc] sm:$0xf]
        %v8135 = vld [vmem:[%s8130 + $0x10] sm:$0xf]
        %v8136 = vld [vmem:[%s8130 + $0x14] sm:$0xf]
        %v8137 = vld [vmem:[%s8130 + $0x18] sm:$0xf]
        %v8138 = vld [vmem:[%s8130 + $0x1c] sm:$0xf]
        %v8140 = vunpack.c.l.b16 %v8129
        %v8141 = vpack.c.b16 %v8140, %v8140
        %v8143 = vshrl.u32 %v8029, 16
        %v8145 = vrot.slane %v8143, 1
        %v8146 = vshll.u32 %v8029, 16
        %v8148 = vrot.slane %v8146, 2
        %v8149 = vor.u32 %v8145, %v8148
        %v8150 = vrot.slane %v7912, 1
        %v8151 = vrot.slane %v7908, 2
        %v8152 = vor.u32 %v8150, %v8151
        %v8153 = vsel %vm2081, %v8149, %v8152
        %v8155 = vshrl.u32 %v8141, 16
        %v8157 = vrot.slane %v8155, 1
        %v8158 = vshll.u32 %v8141, 16
        %v8160 = vrot.slane %v8158, 2
        %v8161 = vor.u32 %v8157, %v8160
        %v8162 = vsel %vm2081, %v8152, %v8161
        %v8171 = vunpack.c.l.b16 %v8131
        %v8172 = vunpack.c.l.b16 %v8132
        %v8173 = vunpack.c.l.b16 %v8133
        %v8174 = vunpack.c.l.b16 %v8134
        %v8175 = vunpack.c.l.b16 %v8135
        %v8176 = vunpack.c.l.b16 %v8136
        %v8177 = vunpack.c.l.b16 %v8137
        %v8178 = vunpack.c.l.b16 %v8138
        %v8179 = vpack.c.b16 %v8172, %v8171
        %v8180 = vpack.c.b16 %v8174, %v8173
        %v8181 = vpack.c.b16 %v8176, %v8175
        %v8182 = vpack.c.b16 %v8178, %v8177
        %v8188 = vsel %vm7605, %v8153, 0
        %v8191 = vsel %vm7605, %v8162, 0
        %v8194 = vsel %vm7605, %v8161, 0
        %8196 = vmatprep.subr.bf16.mxu0 0
        %8197 = vmatpush1.bf16.msra.mxu0 %v8179
        %8198 = vmatprep.subr.bf16.mxu0 0
        %8199 = vmatpush1.bf16.msra.mxu0 %v8180
        %8200 = vmatprep.subr.bf16.mxu0 0
        %8201 = vmatpush1.bf16.msra.mxu0 %v8181
        %8202 = vmatprep.subr.bf16.mxu0 0
        %8203 = vmatpush1.bf16.msra.mxu0 %v8182
        %8204 = vmatprep.subr.bf16.mxu0 0
        %8205 = vmatpush1.bf16.msra.mxu0 0
        %8206 = vmatprep.subr.bf16.mxu0 0
        %8207 = vmatpush1.bf16.msra.mxu0 0
        %8208 = vmatprep.subr.bf16.mxu0 0
        %8209 = vmatpush1.bf16.msra.mxu0 0
        %8210 = vmatprep.subr.bf16.mxu0 0
        %8211 = vmatpush1.bf16.msra.mxu0 0
        %8212 = vmatprep.subr.bf16.mxu0 0
        %8213 = vmatpush1.bf16.msra.mxu0 0
        %8214 = vmatprep.subr.bf16.mxu0 0
        %8215 = vmatpush1.bf16.msra.mxu0 0
        %8216 = vmatprep.subr.bf16.mxu0 0
        %8217 = vmatpush1.bf16.msra.mxu0 0
        %8218 = vmatprep.subr.bf16.mxu0 0
        %8219 = vmatpush1.bf16.msra.mxu0 0
        %8220 = vmatprep.subr.bf16.mxu0 0
        %8221 = vmatpush1.bf16.msra.mxu0 0
        %8222 = vmatprep.subr.bf16.mxu0 0
        %8223 = vmatpush1.bf16.msra.mxu0 0
        %8224 = vmatprep.subr.bf16.mxu0 0
        %8225 = vmatpush1.bf16.msra.mxu0 0
        %8226 = vmatprep.subr.bf16.mxu0 0
        %8227 = vmatpush1.bf16.msra.mxu0 0
        %8228 = vmatprep.mubr.bf16.mxu0 0
        %8229 = vmatmul.mubr.bf16.gmra.mrb[0].mxu0 %v8188
        %v8230 = vpop.f32.mrb[0].mxu0
        %v8231 = vadd.f32 0.0, %v8230
        %v8232 = vpop.f32.mrb[0].mxu0
        %v8233 = vpop.f32.mrb[0].mxu0
        %v8234 = vadd.f32 0.0, %v8233
        %v8235 = vpop.f32.mrb[0].mxu0
        %8236 = vmatprep.mubr.bf16.mxu0 0
        %8237 = vmatmul.mubr.bf16.gmra.mrb[0].mxu0 %v8191
        %v8238 = vpop.f32.mrb[0].mxu0
        %v8239 = vadd.f32 0.0, %v8238
        %v8240 = vpop.f32.mrb[0].mxu0
        %v8241 = vpop.f32.mrb[0].mxu0
        %v8242 = vadd.f32 0.0, %v8241
        %v8243 = vpop.f32.mrb[0].mxu0
        %8244 = vmatprep.mubr.bf16.mxu0 0
        %8245 = vmatmul.mubr.bf16.gmra.mrb[0].mxu0 %v8194
        %v8246 = vpop.f32.mrb[0].mxu0
        %v8247 = vadd.f32 0.0, %v8246
        %v8248 = vpop.f32.mrb[0].mxu0
        %v8249 = vpop.f32.mrb[0].mxu0
        %v8250 = vpop.f32.mrb[0].mxu0
        %8251 = vdwg.mxu0
        %v8252 = vadd.f32 %v8124, %v8231
        %v8253 = vadd.f32 %v8125, %v8234
        %v8254 = vadd.f32 %v8126, %v8239
        %v8255 = vadd.f32 %v8127, %v8242
        %v8256 = vadd.f32 %v8128, %v8247
        %v8257 = vld [vmem:[#allocation5 + $0x8] sm:$0xe]
        %v8258 = vld [vmem:[#allocation5 + $0xc] sm:$0xf]
        %v8259 = vld [vmem:[#allocation5 + $0x10] sm:$0xf]
        %v8260 = vld [vmem:[#allocation5 + $0x14] sm:$0xf]
        %v8261 = vld [vmem:[#allocation5 + $0x18] sm:$0x3]
        %s8262 = scalar_lea.vmem %s7, 192
        %v8263 = vld [vmem:[%s8262] sm:$0xf]
        %v8264 = vld [vmem:[%s8262 + $0x4] sm:$0xf]
        %v8265 = vld [vmem:[%s8262 + $0x8] sm:$0xf]
        %v8266 = vld [vmem:[%s8262 + $0xc] sm:$0xf]
        %v8267 = vld [vmem:[%s8262 + $0x10] sm:$0xf]
        %v8268 = vld [vmem:[%s8262 + $0x14] sm:$0xf]
        %v8269 = vld [vmem:[%s8262 + $0x18] sm:$0xf]
        %v8270 = vld [vmem:[%s8262 + $0x1c] sm:$0xf]
        %v8276 = vunpack.c.l.b16 %v8257
        %v8277 = vunpack.c.l.b16 %v8258
        %v8278 = vunpack.c.l.b16 %v8259
        %v8279 = vunpack.c.l.b16 %v8260
        %v8280 = vunpack.c.l.b16 %v8261
        %v8281 = vpack.c.b16 %v8277, %v8276
        %v8282 = vpack.c.b16 %v8279, %v8278
        %v8283 = vpack.c.b16 %v8280, %v8280
        %v8284 = vrot.slane %v8281, 1
        %v8285 = vrot.slane %v8282, 1
        %v8286 = vsel %vm1674, %v8284, %v8285
        %v8287 = vrot.slane %v8283, 1
        %v8288 = vsel %vm1674, %v8285, %v8287
        %v8297 = vunpack.c.l.b16 %v8263
        %v8298 = vunpack.c.l.b16 %v8264
        %v8299 = vunpack.c.l.b16 %v8265
        %v8300 = vunpack.c.l.b16 %v8266
        %v8301 = vunpack.c.l.b16 %v8267
        %v8302 = vunpack.c.l.b16 %v8268
        %v8303 = vunpack.c.l.b16 %v8269
        %v8304 = vunpack.c.l.b16 %v8270
        %v8305 = vpack.c.b16 %v8298, %v8297
        %v8306 = vpack.c.b16 %v8300, %v8299
        %v8307 = vpack.c.b16 %v8302, %v8301
        %v8308 = vpack.c.b16 %v8304, %v8303
        %v8314 = vsel %vm7605, %v8286, 0
        %v8317 = vsel %vm7605, %v8288, 0
        %v8320 = vsel %vm7605, %v8287, 0
        %8322 = vmatprep.subr.bf16.mxu0 0
        %8323 = vmatpush1.bf16.msra.mxu0 %v8305
        %8324 = vmatprep.subr.bf16.mxu0 0
        %8325 = vmatpush1.bf16.msra.mxu0 %v8306
        %8326 = vmatprep.subr.bf16.mxu0 0
        %8327 = vmatpush1.bf16.msra.mxu0 %v8307
        %8328 = vmatprep.subr.bf16.mxu0 0
        %8329 = vmatpush1.bf16.msra.mxu0 %v8308
        %8330 = vmatprep.subr.bf16.mxu0 0
        %8331 = vmatpush1.bf16.msra.mxu0 0
        %8332 = vmatprep.subr.bf16.mxu0 0
        %8333 = vmatpush1.bf16.msra.mxu0 0
        %8334 = vmatprep.subr.bf16.mxu0 0
        %8335 = vmatpush1.bf16.msra.mxu0 0
        %8336 = vmatprep.subr.bf16.mxu0 0
        %8337 = vmatpush1.bf16.msra.mxu0 0
        %8338 = vmatprep.subr.bf16.mxu0 0
        %8339 = vmatpush1.bf16.msra.mxu0 0
        %8340 = vmatprep.subr.bf16.mxu0 0
        %8341 = vmatpush1.bf16.msra.mxu0 0
        %8342 = vmatprep.subr.bf16.mxu0 0
        %8343 = vmatpush1.bf16.msra.mxu0 0
        %8344 = vmatprep.subr.bf16.mxu0 0
        %8345 = vmatpush1.bf16.msra.mxu0 0
        %8346 = vmatprep.subr.bf16.mxu0 0
        %8347 = vmatpush1.bf16.msra.mxu0 0
        %8348 = vmatprep.subr.bf16.mxu0 0
        %8349 = vmatpush1.bf16.msra.mxu0 0
        %8350 = vmatprep.subr.bf16.mxu0 0
        %8351 = vmatpush1.bf16.msra.mxu0 0
        %8352 = vmatprep.subr.bf16.mxu0 0
        %8353 = vmatpush1.bf16.msra.mxu0 0
        %8354 = vmatprep.mubr.bf16.mxu0 0
        %8355 = vmatmul.mubr.bf16.gmra.mrb[0].mxu0 %v8314
        %v8356 = vpop.f32.mrb[0].mxu0
        %v8357 = vadd.f32 0.0, %v8356
        %v8358 = vpop.f32.mrb[0].mxu0
        %v8359 = vpop.f32.mrb[0].mxu0
        %v8360 = vadd.f32 0.0, %v8359
        %v8361 = vpop.f32.mrb[0].mxu0
        %8362 = vmatprep.mubr.bf16.mxu0 0
        %8363 = vmatmul.mubr.bf16.gmra.mrb[0].mxu0 %v8317
        %v8364 = vpop.f32.mrb[0].mxu0
        %v8365 = vadd.f32 0.0, %v8364
        %v8366 = vpop.f32.mrb[0].mxu0
        %v8367 = vpop.f32.mrb[0].mxu0
        %v8368 = vadd.f32 0.0, %v8367
        %v8369 = vpop.f32.mrb[0].mxu0
        %8370 = vmatprep.mubr.bf16.mxu0 0
        %8371 = vmatmul.mubr.bf16.gmra.mrb[0].mxu0 %v8320
        %v8372 = vpop.f32.mrb[0].mxu0
        %v8373 = vadd.f32 0.0, %v8372
        %v8374 = vpop.f32.mrb[0].mxu0
        %v8375 = vpop.f32.mrb[0].mxu0
        %v8376 = vpop.f32.mrb[0].mxu0
        %8377 = vdwg.mxu0
        %v8378 = vadd.f32 %v8252, %v8357
        %v8379 = vadd.f32 %v8253, %v8360
        %v8380 = vadd.f32 %v8254, %v8365
        %v8381 = vadd.f32 %v8255, %v8368
        %v8382 = vadd.f32 %v8256, %v8373
        %v8383 = vld [vmem:[#allocation5 + $0x18] sm:$0x7]
        %s8384 = scalar_lea.vmem %s7, 224
        %v8385 = vld [vmem:[%s8384] sm:$0xf]
        %v8386 = vld [vmem:[%s8384 + $0x4] sm:$0xf]
        %v8387 = vld [vmem:[%s8384 + $0x8] sm:$0xf]
        %v8388 = vld [vmem:[%s8384 + $0xc] sm:$0xf]
        %v8389 = vld [vmem:[%s8384 + $0x10] sm:$0xf]
        %v8390 = vld [vmem:[%s8384 + $0x14] sm:$0xf]
        %v8391 = vld [vmem:[%s8384 + $0x18] sm:$0xf]
        %v8392 = vld [vmem:[%s8384 + $0x1c] sm:$0xf]
        %v8394 = vunpack.c.l.b16 %v8383
        %v8395 = vpack.c.b16 %v8394, %v8394
        %v8397 = vshrl.u32 %v8281, 16
        %v8399 = vrot.slane %v8397, 1
        %v8400 = vshll.u32 %v8281, 16
        %v8402 = vrot.slane %v8400, 2
        %v8403 = vor.u32 %v8399, %v8402
        %v8405 = vshrl.u32 %v8282, 16
        %v8407 = vrot.slane %v8405, 1
        %v8408 = vshll.u32 %v8282, 16
        %v8410 = vrot.slane %v8408, 2
        %v8411 = vor.u32 %v8407, %v8410
        %v8412 = vsel %vm2081, %v8403, %v8411
        %v8414 = vshrl.u32 %v8395, 16
        %v8416 = vrot.slane %v8414, 1
        %v8417 = vshll.u32 %v8395, 16
        %v8419 = vrot.slane %v8417, 2
        %v8420 = vor.u32 %v8416, %v8419
        %v8421 = vsel %vm2081, %v8411, %v8420
        %v8430 = vunpack.c.l.b16 %v8385
        %v8431 = vunpack.c.l.b16 %v8386
        %v8432 = vunpack.c.l.b16 %v8387
        %v8433 = vunpack.c.l.b16 %v8388
        %v8434 = vunpack.c.l.b16 %v8389
        %v8435 = vunpack.c.l.b16 %v8390
        %v8436 = vunpack.c.l.b16 %v8391
        %v8437 = vunpack.c.l.b16 %v8392
        %v8438 = vpack.c.b16 %v8431, %v8430
        %v8439 = vpack.c.b16 %v8433, %v8432
        %v8440 = vpack.c.b16 %v8435, %v8434
        %v8441 = vpack.c.b16 %v8437, %v8436
        %v8447 = vsel %vm7605, %v8412, 0
        %v8450 = vsel %vm7605, %v8421, 0
        %v8453 = vsel %vm7605, %v8420, 0
        %8455 = vmatprep.subr.bf16.mxu0 0
        %8456 = vmatpush1.bf16.msra.mxu0 %v8438
        %8457 = vmatprep.subr.bf16.mxu0 0
        %8458 = vmatpush1.bf16.msra.mxu0 %v8439
        %8459 = vmatprep.subr.bf16.mxu0 0
        %8460 = vmatpush1.bf16.msra.mxu0 %v8440
        %8461 = vmatprep.subr.bf16.mxu0 0
        %8462 = vmatpush1.bf16.msra.mxu0 %v8441
        %8463 = vmatprep.subr.bf16.mxu0 0
        %8464 = vmatpush1.bf16.msra.mxu0 0
        %8465 = vmatprep.subr.bf16.mxu0 0
        %8466 = vmatpush1.bf16.msra.mxu0 0
        %8467 = vmatprep.subr.bf16.mxu0 0
        %8468 = vmatpush1.bf16.msra.mxu0 0
        %8469 = vmatprep.subr.bf16.mxu0 0
        %8470 = vmatpush1.bf16.msra.mxu0 0
        %8471 = vmatprep.subr.bf16.mxu0 0
        %8472 = vmatpush1.bf16.msra.mxu0 0
        %8473 = vmatprep.subr.bf16.mxu0 0
        %8474 = vmatpush1.bf16.msra.mxu0 0
        %8475 = vmatprep.subr.bf16.mxu0 0
        %8476 = vmatpush1.bf16.msra.mxu0 0
        %8477 = vmatprep.subr.bf16.mxu0 0
        %8478 = vmatpush1.bf16.msra.mxu0 0
        %8479 = vmatprep.subr.bf16.mxu0 0
        %8480 = vmatpush1.bf16.msra.mxu0 0
        %8481 = vmatprep.subr.bf16.mxu0 0
        %8482 = vmatpush1.bf16.msra.mxu0 0
        %8483 = vmatprep.subr.bf16.mxu0 0
        %8484 = vmatpush1.bf16.msra.mxu0 0
        %8485 = vmatprep.subr.bf16.mxu0 0
        %8486 = vmatpush1.bf16.msra.mxu0 0
        %8487 = vmatprep.mubr.bf16.mxu0 0
        %8488 = vmatmul.mubr.bf16.gmra.mrb[0].mxu0 %v8447
        %v8489 = vpop.f32.mrb[0].mxu0
        %v8490 = vadd.f32 0.0, %v8489
        %v8491 = vpop.f32.mrb[0].mxu0
        %v8492 = vpop.f32.mrb[0].mxu0
        %v8493 = vadd.f32 0.0, %v8492
        %v8494 = vpop.f32.mrb[0].mxu0
        %8495 = vmatprep.mubr.bf16.mxu0 0
        %8496 = vmatmul.mubr.bf16.gmra.mrb[0].mxu0 %v8450
        %v8497 = vpop.f32.mrb[0].mxu0
        %v8498 = vadd.f32 0.0, %v8497
        %v8499 = vpop.f32.mrb[0].mxu0
        %v8500 = vpop.f32.mrb[0].mxu0
        %v8501 = vadd.f32 0.0, %v8500
        %v8502 = vpop.f32.mrb[0].mxu0
        %8503 = vmatprep.mubr.bf16.mxu0 0
        %8504 = vmatmul.mubr.bf16.gmra.mrb[0].mxu0 %v8453
        %v8505 = vpop.f32.mrb[0].mxu0
        %v8506 = vadd.f32 0.0, %v8505
        %v8507 = vpop.f32.mrb[0].mxu0
        %v8508 = vpop.f32.mrb[0].mxu0
        %v8509 = vpop.f32.mrb[0].mxu0
        %8510 = vdwg.mxu0
        %v8511 = vadd.f32 %v8378, %v8490
        %v8512 = vadd.f32 %v8379, %v8493
        %v8513 = vadd.f32 %v8380, %v8498
        %v8514 = vadd.f32 %v8381, %v8501
        %v8515 = vadd.f32 %v8382, %v8506
        %v8516 = vld [vmem:[#allocation5 + $0x8] sm:$0xc]
        %s8517 = scalar_lea.vmem %s7, 256
        %v8518 = vld [vmem:[%s8517] sm:$0xf]
        %v8519 = vld [vmem:[%s8517 + $0x4] sm:$0xf]
        %v8520 = vld [vmem:[%s8517 + $0x8] sm:$0xf]
        %v8521 = vld [vmem:[%s8517 + $0xc] sm:$0xf]
        %v8522 = vld [vmem:[%s8517 + $0x10] sm:$0xf]
        %v8523 = vld [vmem:[%s8517 + $0x14] sm:$0xf]
        %v8524 = vld [vmem:[%s8517 + $0x18] sm:$0xf]
        %v8525 = vld [vmem:[%s8517 + $0x1c] sm:$0xf]
        %v8527 = vunpack.c.l.b16 %v8516
        %v8528 = vpack.c.b16 %v8277, %v8527
        %v8529 = vrot.slane %v8528, 2
        %v8530 = vrot.slane %v8282, 2
        %v8531 = vsel %vm2320, %v8529, %v8530
        %v8532 = vrot.slane %v8395, 2
        %v8533 = vsel %vm2320, %v8530, %v8532
        %v8542 = vunpack.c.l.b16 %v8518
        %v8543 = vunpack.c.l.b16 %v8519
        %v8544 = vunpack.c.l.b16 %v8520
        %v8545 = vunpack.c.l.b16 %v8521
        %v8546 = vunpack.c.l.b16 %v8522
        %v8547 = vunpack.c.l.b16 %v8523
        %v8548 = vunpack.c.l.b16 %v8524
        %v8549 = vunpack.c.l.b16 %v8525
        %v8550 = vpack.c.b16 %v8543, %v8542
        %v8551 = vpack.c.b16 %v8545, %v8544
        %v8552 = vpack.c.b16 %v8547, %v8546
        %v8553 = vpack.c.b16 %v8549, %v8548
        %v8559 = vsel %vm7605, %v8531, 0
        %v8562 = vsel %vm7605, %v8533, 0
        %v8565 = vsel %vm7605, %v8532, 0
        %8567 = vmatprep.subr.bf16.mxu0 0
        %8568 = vmatpush1.bf16.msra.mxu0 %v8550
        %8569 = vmatprep.subr.bf16.mxu0 0
        %8570 = vmatpush1.bf16.msra.mxu0 %v8551
        %8571 = vmatprep.subr.bf16.mxu0 0
        %8572 = vmatpush1.bf16.msra.mxu0 %v8552
        %8573 = vmatprep.subr.bf16.mxu0 0
        %8574 = vmatpush1.bf16.msra.mxu0 %v8553
        %8575 = vmatprep.subr.bf16.mxu0 0
        %8576 = vmatpush1.bf16.msra.mxu0 0
        %8577 = vmatprep.subr.bf16.mxu0 0
        %8578 = vmatpush1.bf16.msra.mxu0 0
        %8579 = vmatprep.subr.bf16.mxu0 0
        %8580 = vmatpush1.bf16.msra.mxu0 0
        %8581 = vmatprep.subr.bf16.mxu0 0
        %8582 = vmatpush1.bf16.msra.mxu0 0
        %8583 = vmatprep.subr.bf16.mxu0 0
        %8584 = vmatpush1.bf16.msra.mxu0 0
        %8585 = vmatprep.subr.bf16.mxu0 0
        %8586 = vmatpush1.bf16.msra.mxu0 0
        %8587 = vmatprep.subr.bf16.mxu0 0
        %8588 = vmatpush1.bf16.msra.mxu0 0
        %8589 = vmatprep.subr.bf16.mxu0 0
        %8590 = vmatpush1.bf16.msra.mxu0 0
        %8591 = vmatprep.subr.bf16.mxu0 0
        %8592 = vmatpush1.bf16.msra.mxu0 0
        %8593 = vmatprep.subr.bf16.mxu0 0
        %8594 = vmatpush1.bf16.msra.mxu0 0
        %8595 = vmatprep.subr.bf16.mxu0 0
        %8596 = vmatpush1.bf16.msra.mxu0 0
        %8597 = vmatprep.subr.bf16.mxu0 0
        %8598 = vmatpush1.bf16.msra.mxu0 0
        %8599 = vmatprep.mubr.bf16.mxu0 0
        %8600 = vmatmul.mubr.bf16.gmra.mrb[0].mxu0 %v8559
        %v8601 = vpop.f32.mrb[0].mxu0
        %v8602 = vadd.f32 0.0, %v8601
        %v8603 = vpop.f32.mrb[0].mxu0
        %v8604 = vpop.f32.mrb[0].mxu0
        %v8605 = vadd.f32 0.0, %v8604
        %v8606 = vpop.f32.mrb[0].mxu0
        %8607 = vmatprep.mubr.bf16.mxu0 0
        %8608 = vmatmul.mubr.bf16.gmra.mrb[0].mxu0 %v8562
        %v8609 = vpop.f32.mrb[0].mxu0
        %v8610 = vadd.f32 0.0, %v8609
        %v8611 = vpop.f32.mrb[0].mxu0
        %v8612 = vpop.f32.mrb[0].mxu0
        %v8613 = vadd.f32 0.0, %v8612
        %v8614 = vpop.f32.mrb[0].mxu0
        %8615 = vmatprep.mubr.bf16.mxu0 0
        %8616 = vmatmul.mubr.bf16.gmra.mrb[0].mxu0 %v8565
        %v8617 = vpop.f32.mrb[0].mxu0
        %v8618 = vadd.f32 0.0, %v8617
        %v8619 = vpop.f32.mrb[0].mxu0
        %v8620 = vpop.f32.mrb[0].mxu0
        %v8621 = vpop.f32.mrb[0].mxu0
        %8622 = vdwg.mxu0
        %v8623 = vadd.f32 %v8511, %v8602
        %v8624 = vadd.f32 %v8512, %v8605
        %v8625 = vadd.f32 %v8513, %v8610
        %v8626 = vadd.f32 %v8514, %v8613
        %v8627 = vadd.f32 %v8515, %v8618
        %v8628 = vld [vmem:[%s8] sm:$0x1]
        %v8630 = vlaneseq
        %v8631 = vshrl.u32 %v8630, 7
        %v8632 = vsub.s32 0, %v8631
        %v8633 = vrot.slane %v8628, %v8632
        %v8635 = vadd.f32 %v8623, %v8633
        %v8636 = vadd.f32 %v8624, %v8633
        %v8637 = vadd.f32 %v8625, %v8633
        %v8638 = vadd.f32 %v8626, %v8633
        %v8639 = vadd.f32 %v8627, %v8633
        %v8640 = vmax.f32 %v8635, 0.0
        %v8641 = vmax.f32 %v8636, 0.0
        %v8642 = vmax.f32 %v8637, 0.0
        %v8643 = vmax.f32 %v8638, 0.0
        %v8644 = vmax.f32 %v8639, 0.0
        %8645 = vst.msk [vmem:[#allocation6] sm:$0xff] %vm7605, %v8640
        %8646 = vst.msk [vmem:[#allocation6 + $0x8] sm:$0xff] %vm7605, %v8641
        %8647 = vst.msk [vmem:[#allocation6 + $0x10] sm:$0xff] %vm7605, %v8642
        %8648 = vst.msk [vmem:[#allocation6 + $0x18] sm:$0xff] %vm7605, %v8643
        %8649 = vst.msk [vmem:[#allocation6 + $0x20] sm:$0x3] %vm7518, %v8644
        %8650 = vst.msk [vmem:[#allocation6 + $0x22] sm:$0x3] %vm7518, 0.0
        %v8651 = vld [vmem:[#allocation6] ss:$2 sm:$0xf]
        %s8652 = scalar_lea.vmem [#allocation6], 1
        %v8653 = vld [vmem:[%s8652] ss:$2 sm:$0xf]
        %v8654 = vmax.f32 %v8651, %v8653
        %s8655 = scalar_lea.vmem [#allocation6], 9
        %v8656 = vld [vmem:[%s8655] ss:$2 sm:$0xf]
        %s8657 = scalar_lea.vmem [#allocation6], 10
        %v8658 = vld [vmem:[%s8657] ss:$2 sm:$0xf]
        %v8659 = vmax.f32 %v8656, %v8658
        %v8660 = vmax.f32 %v8654, %v8659
        %v8661 = vpack.c.bf16 %v8660, %v8660
        %8662 = vst.msk [vmem:[#allocation7] sm:$0x3] %vm7518, %v8661
        %s8663 = scalar_lea.vmem [#allocation6], 18
        %v8664 = vld [vmem:[%s8663] ss:$2 sm:$0xf]
        %s8665 = scalar_lea.vmem [#allocation6], 19
        %v8666 = vld [vmem:[%s8665] ss:$2 sm:$0xf]
        %v8667 = vmax.f32 %v8664, %v8666
        %s8668 = scalar_lea.vmem [#allocation6], 27
        %v8669 = vld [vmem:[%s8668] ss:$2 sm:$0xf]
        %s8670 = scalar_lea.vmem [#allocation6], 28
        %v8671 = vld [vmem:[%s8670] ss:$2 sm:$0xf]
        %v8672 = vmax.f32 %v8669, %v8671
        %v8673 = vmax.f32 %v8667, %v8672
        %v8674 = vpack.c.bf16 %v8673, %v8673
        %v8676 = vunpack.c.l.b16 %v8674
        %v8677 = vpack.c.b16 %v8676, %v8676
        %v8678 = vrot.slane %v8677, 6
        %vm8680 = vcmask 519170
        %8681 = vst.msk [vmem:[#allocation7] sm:$0xc] %vm8680, %v8678
        %v8682 = vld [vmem:[#allocation7] sm:$0x1]
        %v8684 = vpack.i.b16 %v8682, %v8682
        %v8686 = vlaneseq
        %v8687 = vshrl.u32 %v8686, 7
        %v8688 = vsub.s32 0, %v8687
        %v8689 = vrot.slane %v8684, %v8688
        %v8690 = vld [vmem:[%s9] sm:$0xff]
        %v8691 = vld [vmem:[%s9 + $0x8] sm:$0xff]
        %v8692 = vld [vmem:[%s9 + $0x10] sm:$0xff]
        %v8693 = vld [vmem:[%s9 + $0x18] sm:$0xff]
        %v8694 = vld [vmem:[%s9 + $0x20] sm:$0xff]
        %v8695 = vld [vmem:[%s9 + $0x28] sm:$0xff]
        %v8696 = vld [vmem:[%s9 + $0x30] sm:$0xff]
        %v8697 = vld [vmem:[%s9 + $0x38] sm:$0xff]
        %v8698 = vld [vmem:[%s9 + $0x40] sm:$0xff]
        %v8699 = vld [vmem:[%s9 + $0x48] sm:$0xff]
        %v8700 = vld [vmem:[%s9 + $0x50] sm:$0xff]
        %v8701 = vld [vmem:[%s9 + $0x58] sm:$0xff]
        %v8702 = vld [vmem:[%s9 + $0x60] sm:$0xff]
        %v8703 = vld [vmem:[%s9 + $0x68] sm:$0xff]
        %v8704 = vld [vmem:[%s9 + $0x70] sm:$0xff]
        %v8705 = vld [vmem:[%s9 + $0x78] sm:$0xff]
        %v8706 = vshrl.u32 %v8682, 16
        %v8707 = vpack.i.b16 %v8706, %v8706
        %v8709 = vlaneseq
        %v8710 = vshrl.u32 %v8709, 7
        %v8711 = vsub.s32 0, %v8710
        %v8712 = vrot.slane %v8707, %v8711
        %s8713 = scalar_lea.vmem %s9, 128
        %v8714 = vld [vmem:[%s8713] sm:$0xff]
        %v8715 = vld [vmem:[%s8713 + $0x8] sm:$0xff]
        %v8716 = vld [vmem:[%s8713 + $0x10] sm:$0xff]
        %v8717 = vld [vmem:[%s8713 + $0x18] sm:$0xff]
        %v8718 = vld [vmem:[%s8713 + $0x20] sm:$0xff]
        %v8719 = vld [vmem:[%s8713 + $0x28] sm:$0xff]
        %v8720 = vld [vmem:[%s8713 + $0x30] sm:$0xff]
        %v8721 = vld [vmem:[%s8713 + $0x38] sm:$0xff]
        %v8722 = vld [vmem:[%s8713 + $0x40] sm:$0xff]
        %v8723 = vld [vmem:[%s8713 + $0x48] sm:$0xff]
        %v8724 = vld [vmem:[%s8713 + $0x50] sm:$0xff]
        %v8725 = vld [vmem:[%s8713 + $0x58] sm:$0xff]
        %v8726 = vld [vmem:[%s8713 + $0x60] sm:$0xff]
        %v8727 = vld [vmem:[%s8713 + $0x68] sm:$0xff]
        %v8728 = vld [vmem:[%s8713 + $0x70] sm:$0xff]
        %v8729 = vld [vmem:[%s8713 + $0x78] sm:$0xff]
        %v8746 = vunpack.c.l.b16 %v8714
        %v8747 = vunpack.c.h.b16 %v8714
        %v8748 = vunpack.c.l.b16 %v8715
        %v8749 = vunpack.c.h.b16 %v8715
        %v8750 = vunpack.c.l.b16 %v8716
        %v8751 = vunpack.c.h.b16 %v8716
        %v8752 = vunpack.c.l.b16 %v8717
        %v8753 = vunpack.c.h.b16 %v8717
        %v8754 = vunpack.c.l.b16 %v8718
        %v8755 = vunpack.c.h.b16 %v8718
        %v8756 = vunpack.c.l.b16 %v8719
        %v8757 = vunpack.c.h.b16 %v8719
        %v8758 = vunpack.c.l.b16 %v8720
        %v8759 = vunpack.c.h.b16 %v8720
        %v8760 = vunpack.c.l.b16 %v8721
        %v8761 = vunpack.c.h.b16 %v8721
        %v8762 = vunpack.c.l.b16 %v8722
        %v8763 = vunpack.c.h.b16 %v8722
        %v8764 = vunpack.c.l.b16 %v8723
        %v8765 = vunpack.c.h.b16 %v8723
        %v8766 = vunpack.c.l.b16 %v8724
        %v8767 = vunpack.c.h.b16 %v8724
        %v8768 = vunpack.c.l.b16 %v8725
        %v8769 = vunpack.c.h.b16 %v8725
        %v8770 = vunpack.c.l.b16 %v8726
        %v8771 = vunpack.c.h.b16 %v8726
        %v8772 = vunpack.c.l.b16 %v8727
        %v8773 = vunpack.c.h.b16 %v8727
        %v8774 = vunpack.c.l.b16 %v8728
        %v8775 = vunpack.c.h.b16 %v8728
        %v8776 = vunpack.c.l.b16 %v8729
        %v8777 = vunpack.c.h.b16 %v8729
        %v8778 = vpack.c.b16 %v8750, %v8746
        %v8779 = vpack.c.b16 %v8751, %v8747
        %v8780 = vpack.c.b16 %v8752, %v8748
        %v8781 = vpack.c.b16 %v8753, %v8749
        %v8782 = vpack.c.b16 %v8758, %v8754
        %v8783 = vpack.c.b16 %v8759, %v8755
        %v8784 = vpack.c.b16 %v8760, %v8756
        %v8785 = vpack.c.b16 %v8761, %v8757
        %v8786 = vpack.c.b16 %v8766, %v8762
        %v8787 = vpack.c.b16 %v8767, %v8763
        %v8788 = vpack.c.b16 %v8768, %v8764
        %v8789 = vpack.c.b16 %v8769, %v8765
        %v8790 = vpack.c.b16 %v8774, %v8770
        %v8791 = vpack.c.b16 %v8775, %v8771
        %v8792 = vpack.c.b16 %v8776, %v8772
        %v8793 = vpack.c.b16 %v8777, %v8773
        %v8811 = vsel %vm7605, %v8712, 0
        %8813 = vmatprep.subr.bf16.mxu0 %v8779
        %8814 = vmatpush1.bf16.msra.mxu0 %v8778
        %8815 = vmatprep.subr.bf16.mxu0 %v8783
        %8816 = vmatpush1.bf16.msra.mxu0 %v8782
        %8817 = vmatprep.subr.bf16.mxu0 %v8787
        %8818 = vmatpush1.bf16.msra.mxu0 %v8786
        %8819 = vmatprep.subr.bf16.mxu0 %v8791
        %8820 = vmatpush1.bf16.msra.mxu0 %v8790
        %8821 = vmatprep.subr.bf16.mxu0 0
        %8822 = vmatpush1.bf16.msra.mxu0 0
        %8823 = vmatprep.subr.bf16.mxu0 0
        %8824 = vmatpush1.bf16.msra.mxu0 0
        %8825 = vmatprep.subr.bf16.mxu0 0
        %8826 = vmatpush1.bf16.msra.mxu0 0
        %8827 = vmatprep.subr.bf16.mxu0 0
        %8828 = vmatpush1.bf16.msra.mxu0 0
        %8829 = vmatprep.subr.bf16.mxu0 0
        %8830 = vmatpush1.bf16.msra.mxu0 0
        %8831 = vmatprep.subr.bf16.mxu0 0
        %8832 = vmatpush1.bf16.msra.mxu0 0
        %8833 = vmatprep.subr.bf16.mxu0 0
        %8834 = vmatpush1.bf16.msra.mxu0 0
        %8835 = vmatprep.subr.bf16.mxu0 0
        %8836 = vmatpush1.bf16.msra.mxu0 0
        %8837 = vmatprep.subr.bf16.mxu0 0
        %8838 = vmatpush1.bf16.msra.mxu0 0
        %8839 = vmatprep.subr.bf16.mxu0 0
        %8840 = vmatpush1.bf16.msra.mxu0 0
        %8841 = vmatprep.subr.bf16.mxu0 0
        %8842 = vmatpush1.bf16.msra.mxu0 0
        %8843 = vmatprep.subr.bf16.mxu0 0
        %8844 = vmatpush1.bf16.msra.mxu0 0
        %8845 = vmatprep.mubr.bf16.mxu0 0
        %8846 = vmatmul.mubr.bf16.gmra.mrb[0].mxu0 %v8811
        %v8847 = vpop.f32.mrb[0].mxu0
        %v8848 = vadd.f32 0.0, %v8847
        %v8849 = vpop.f32.mrb[0].mxu0
        %v8850 = vadd.f32 0.0, %v8849
        %v8851 = vpop.f32.mrb[0].mxu0
        %v8852 = vpop.f32.mrb[0].mxu0
        %8853 = vdwg.mxu0
        %8854 = vmatprep.subr.bf16.mxu0 %v8781
        %8855 = vmatpush1.bf16.msra.mxu0 %v8780
        %8856 = vmatprep.subr.bf16.mxu0 %v8785
        %8857 = vmatpush1.bf16.msra.mxu0 %v8784
        %8858 = vmatprep.subr.bf16.mxu0 %v8789
        %8859 = vmatpush1.bf16.msra.mxu0 %v8788
        %8860 = vmatprep.subr.bf16.mxu0 %v8793
        %8861 = vmatpush1.bf16.msra.mxu0 %v8792
        %8862 = vmatprep.subr.bf16.mxu0 0
        %8863 = vmatpush1.bf16.msra.mxu0 0
        %8864 = vmatprep.subr.bf16.mxu0 0
        %8865 = vmatpush1.bf16.msra.mxu0 0
        %8866 = vmatprep.subr.bf16.mxu0 0
        %8867 = vmatpush1.bf16.msra.mxu0 0
        %8868 = vmatprep.subr.bf16.mxu0 0
        %8869 = vmatpush1.bf16.msra.mxu0 0
        %8870 = vmatprep.subr.bf16.mxu0 0
        %8871 = vmatpush1.bf16.msra.mxu0 0
        %8872 = vmatprep.subr.bf16.mxu0 0
        %8873 = vmatpush1.bf16.msra.mxu0 0
        %8874 = vmatprep.subr.bf16.mxu0 0
        %8875 = vmatpush1.bf16.msra.mxu0 0
        %8876 = vmatprep.subr.bf16.mxu0 0
        %8877 = vmatpush1.bf16.msra.mxu0 0
        %8878 = vmatprep.subr.bf16.mxu0 0
        %8879 = vmatpush1.bf16.msra.mxu0 0
        %8880 = vmatprep.subr.bf16.mxu0 0
        %8881 = vmatpush1.bf16.msra.mxu0 0
        %8882 = vmatprep.subr.bf16.mxu0 0
        %8883 = vmatpush1.bf16.msra.mxu0 0
        %8884 = vmatprep.subr.bf16.mxu0 0
        %8885 = vmatpush1.bf16.msra.mxu0 0
        %8886 = vmatprep.mubr.bf16.mxu0 0
        %8887 = vmatmul.mubr.bf16.gmra.mrb[0].mxu0 %v8811
        %v8888 = vpop.f32.mrb[0].mxu0
        %v8889 = vadd.f32 0.0, %v8888
        %v8890 = vpop.f32.mrb[0].mxu0
        %v8891 = vadd.f32 0.0, %v8890
        %v8892 = vpop.f32.mrb[0].mxu0
        %v8893 = vpop.f32.mrb[0].mxu0
        %8894 = vdwg.mxu0
        %v8911 = vunpack.c.l.b16 %v8690
        %v8912 = vunpack.c.h.b16 %v8690
        %v8913 = vunpack.c.l.b16 %v8691
        %v8914 = vunpack.c.h.b16 %v8691
        %v8915 = vunpack.c.l.b16 %v8692
        %v8916 = vunpack.c.h.b16 %v8692
        %v8917 = vunpack.c.l.b16 %v8693
        %v8918 = vunpack.c.h.b16 %v8693
        %v8919 = vunpack.c.l.b16 %v8694
        %v8920 = vunpack.c.h.b16 %v8694
        %v8921 = vunpack.c.l.b16 %v8695
        %v8922 = vunpack.c.h.b16 %v8695
        %v8923 = vunpack.c.l.b16 %v8696
        %v8924 = vunpack.c.h.b16 %v8696
        %v8925 = vunpack.c.l.b16 %v8697
        %v8926 = vunpack.c.h.b16 %v8697
        %v8927 = vunpack.c.l.b16 %v8698
        %v8928 = vunpack.c.h.b16 %v8698
        %v8929 = vunpack.c.l.b16 %v8699
        %v8930 = vunpack.c.h.b16 %v8699
        %v8931 = vunpack.c.l.b16 %v8700
        %v8932 = vunpack.c.h.b16 %v8700
        %v8933 = vunpack.c.l.b16 %v8701
        %v8934 = vunpack.c.h.b16 %v8701
        %v8935 = vunpack.c.l.b16 %v8702
        %v8936 = vunpack.c.h.b16 %v8702
        %v8937 = vunpack.c.l.b16 %v8703
        %v8938 = vunpack.c.h.b16 %v8703
        %v8939 = vunpack.c.l.b16 %v8704
        %v8940 = vunpack.c.h.b16 %v8704
        %v8941 = vunpack.c.l.b16 %v8705
        %v8942 = vunpack.c.h.b16 %v8705
        %v8943 = vpack.c.b16 %v8915, %v8911
        %v8944 = vpack.c.b16 %v8916, %v8912
        %v8945 = vpack.c.b16 %v8917, %v8913
        %v8946 = vpack.c.b16 %v8918, %v8914
        %v8947 = vpack.c.b16 %v8923, %v8919
        %v8948 = vpack.c.b16 %v8924, %v8920
        %v8949 = vpack.c.b16 %v8925, %v8921
        %v8950 = vpack.c.b16 %v8926, %v8922
        %v8951 = vpack.c.b16 %v8931, %v8927
        %v8952 = vpack.c.b16 %v8932, %v8928
        %v8953 = vpack.c.b16 %v8933, %v8929
        %v8954 = vpack.c.b16 %v8934, %v8930
        %v8955 = vpack.c.b16 %v8939, %v8935
        %v8956 = vpack.c.b16 %v8940, %v8936
        %v8957 = vpack.c.b16 %v8941, %v8937
        %v8958 = vpack.c.b16 %v8942, %v8938
        %v8976 = vsel %vm7605, %v8689, 0
        %8978 = vmatprep.subr.bf16.mxu0 %v8944
        %8979 = vmatpush1.bf16.msra.mxu0 %v8943
        %8980 = vmatprep.subr.bf16.mxu0 %v8948
        %8981 = vmatpush1.bf16.msra.mxu0 %v8947
        %8982 = vmatprep.subr.bf16.mxu0 %v8952
        %8983 = vmatpush1.bf16.msra.mxu0 %v8951
        %8984 = vmatprep.subr.bf16.mxu0 %v8956
        %8985 = vmatpush1.bf16.msra.mxu0 %v8955
        %8986 = vmatprep.subr.bf16.mxu0 0
        %8987 = vmatpush1.bf16.msra.mxu0 0
        %8988 = vmatprep.subr.bf16.mxu0 0
        %8989 = vmatpush1.bf16.msra.mxu0 0
        %8990 = vmatprep.subr.bf16.mxu0 0
        %8991 = vmatpush1.bf16.msra.mxu0 0
        %8992 = vmatprep.subr.bf16.mxu0 0
        %8993 = vmatpush1.bf16.msra.mxu0 0
        %8994 = vmatprep.subr.bf16.mxu0 0
        %8995 = vmatpush1.bf16.msra.mxu0 0
        %8996 = vmatprep.subr.bf16.mxu0 0
        %8997 = vmatpush1.bf16.msra.mxu0 0
        %8998 = vmatprep.subr.bf16.mxu0 0
        %8999 = vmatpush1.bf16.msra.mxu0 0
        %9000 = vmatprep.subr.bf16.mxu0 0
        %9001 = vmatpush1.bf16.msra.mxu0 0
        %9002 = vmatprep.subr.bf16.mxu0 0
        %9003 = vmatpush1.bf16.msra.mxu0 0
        %9004 = vmatprep.subr.bf16.mxu0 0
        %9005 = vmatpush1.bf16.msra.mxu0 0
        %9006 = vmatprep.subr.bf16.mxu0 0
        %9007 = vmatpush1.bf16.msra.mxu0 0
        %9008 = vmatprep.subr.bf16.mxu0 0
        %9009 = vmatpush1.bf16.msra.mxu0 0
        %9010 = vmatprep.mubr.bf16.mxu0 0
        %9011 = vmatmul.mubr.bf16.gmra.mrb[0].mxu0 %v8976
        %v9012 = vpop.f32.mrb[0].mxu0
        %v9013 = vadd.f32 %v8848, %v9012
        %v9014 = vpop.f32.mrb[0].mxu0
        %v9015 = vadd.f32 %v8850, %v9014
        %v9016 = vpop.f32.mrb[0].mxu0
        %v9017 = vpop.f32.mrb[0].mxu0
        %9018 = vdwg.mxu0
        %9019 = vmatprep.subr.bf16.mxu0 %v8946
        %9020 = vmatpush1.bf16.msra.mxu0 %v8945
        %9021 = vmatprep.subr.bf16.mxu0 %v8950
        %9022 = vmatpush1.bf16.msra.mxu0 %v8949
        %9023 = vmatprep.subr.bf16.mxu0 %v8954
        %9024 = vmatpush1.bf16.msra.mxu0 %v8953
        %9025 = vmatprep.subr.bf16.mxu0 %v8958
        %9026 = vmatpush1.bf16.msra.mxu0 %v8957
        %9027 = vmatprep.subr.bf16.mxu0 0
        %9028 = vmatpush1.bf16.msra.mxu0 0
        %9029 = vmatprep.subr.bf16.mxu0 0
        %9030 = vmatpush1.bf16.msra.mxu0 0
        %9031 = vmatprep.subr.bf16.mxu0 0
        %9032 = vmatpush1.bf16.msra.mxu0 0
        %9033 = vmatprep.subr.bf16.mxu0 0
        %9034 = vmatpush1.bf16.msra.mxu0 0
        %9035 = vmatprep.subr.bf16.mxu0 0
        %9036 = vmatpush1.bf16.msra.mxu0 0
        %9037 = vmatprep.subr.bf16.mxu0 0
        %9038 = vmatpush1.bf16.msra.mxu0 0
        %9039 = vmatprep.subr.bf16.mxu0 0
        %9040 = vmatpush1.bf16.msra.mxu0 0
        %9041 = vmatprep.subr.bf16.mxu0 0
        %9042 = vmatpush1.bf16.msra.mxu0 0
        %9043 = vmatprep.subr.bf16.mxu0 0
        %9044 = vmatpush1.bf16.msra.mxu0 0
        %9045 = vmatprep.subr.bf16.mxu0 0
        %9046 = vmatpush1.bf16.msra.mxu0 0
        %9047 = vmatprep.subr.bf16.mxu0 0
        %9048 = vmatpush1.bf16.msra.mxu0 0
        %9049 = vmatprep.subr.bf16.mxu0 0
        %9050 = vmatpush1.bf16.msra.mxu0 0
        %9051 = vmatprep.mubr.bf16.mxu0 0
        %9052 = vmatmul.mubr.bf16.gmra.mrb[0].mxu0 %v8976
        %v9053 = vpop.f32.mrb[0].mxu0
        %v9054 = vadd.f32 %v8889, %v9053
        %v9055 = vpop.f32.mrb[0].mxu0
        %v9056 = vadd.f32 %v8891, %v9055
        %v9057 = vpop.f32.mrb[0].mxu0
        %v9058 = vpop.f32.mrb[0].mxu0
        %9059 = vdwg.mxu0
        %v9060 = vld [vmem:[#allocation7] sm:$0x4]
        %v9062 = vpack.i.b16 %v9060, %v9060
        %v9064 = vlaneseq
        %v9065 = vshrl.u32 %v9064, 7
        %v9066 = vsub.s32 2, %v9065
        %v9067 = vrot.slane %v9062, %v9066
        %s9068 = scalar_lea.vmem %s9, 256
        %v9069 = vld [vmem:[%s9068] sm:$0xff]
        %v9070 = vld [vmem:[%s9068 + $0x8] sm:$0xff]
        %v9071 = vld [vmem:[%s9068 + $0x10] sm:$0xff]
        %v9072 = vld [vmem:[%s9068 + $0x18] sm:$0xff]
        %v9073 = vld [vmem:[%s9068 + $0x20] sm:$0xff]
        %v9074 = vld [vmem:[%s9068 + $0x28] sm:$0xff]
        %v9075 = vld [vmem:[%s9068 + $0x30] sm:$0xff]
        %v9076 = vld [vmem:[%s9068 + $0x38] sm:$0xff]
        %v9077 = vld [vmem:[%s9068 + $0x40] sm:$0xff]
        %v9078 = vld [vmem:[%s9068 + $0x48] sm:$0xff]
        %v9079 = vld [vmem:[%s9068 + $0x50] sm:$0xff]
        %v9080 = vld [vmem:[%s9068 + $0x58] sm:$0xff]
        %v9081 = vld [vmem:[%s9068 + $0x60] sm:$0xff]
        %v9082 = vld [vmem:[%s9068 + $0x68] sm:$0xff]
        %v9083 = vld [vmem:[%s9068 + $0x70] sm:$0xff]
        %v9084 = vld [vmem:[%s9068 + $0x78] sm:$0xff]
        %v9101 = vunpack.c.l.b16 %v9069
        %v9102 = vunpack.c.h.b16 %v9069
        %v9103 = vunpack.c.l.b16 %v9070
        %v9104 = vunpack.c.h.b16 %v9070
        %v9105 = vunpack.c.l.b16 %v9071
        %v9106 = vunpack.c.h.b16 %v9071
        %v9107 = vunpack.c.l.b16 %v9072
        %v9108 = vunpack.c.h.b16 %v9072
        %v9109 = vunpack.c.l.b16 %v9073
        %v9110 = vunpack.c.h.b16 %v9073
        %v9111 = vunpack.c.l.b16 %v9074
        %v9112 = vunpack.c.h.b16 %v9074
        %v9113 = vunpack.c.l.b16 %v9075
        %v9114 = vunpack.c.h.b16 %v9075
        %v9115 = vunpack.c.l.b16 %v9076
        %v9116 = vunpack.c.h.b16 %v9076
        %v9117 = vunpack.c.l.b16 %v9077
        %v9118 = vunpack.c.h.b16 %v9077
        %v9119 = vunpack.c.l.b16 %v9078
        %v9120 = vunpack.c.h.b16 %v9078
        %v9121 = vunpack.c.l.b16 %v9079
        %v9122 = vunpack.c.h.b16 %v9079
        %v9123 = vunpack.c.l.b16 %v9080
        %v9124 = vunpack.c.h.b16 %v9080
        %v9125 = vunpack.c.l.b16 %v9081
        %v9126 = vunpack.c.h.b16 %v9081
        %v9127 = vunpack.c.l.b16 %v9082
        %v9128 = vunpack.c.h.b16 %v9082
        %v9129 = vunpack.c.l.b16 %v9083
        %v9130 = vunpack.c.h.b16 %v9083
        %v9131 = vunpack.c.l.b16 %v9084
        %v9132 = vunpack.c.h.b16 %v9084
        %v9133 = vpack.c.b16 %v9105, %v9101
        %v9134 = vpack.c.b16 %v9106, %v9102
        %v9135 = vpack.c.b16 %v9107, %v9103
        %v9136 = vpack.c.b16 %v9108, %v9104
        %v9137 = vpack.c.b16 %v9113, %v9109
        %v9138 = vpack.c.b16 %v9114, %v9110
        %v9139 = vpack.c.b16 %v9115, %v9111
        %v9140 = vpack.c.b16 %v9116, %v9112
        %v9141 = vpack.c.b16 %v9121, %v9117
        %v9142 = vpack.c.b16 %v9122, %v9118
        %v9143 = vpack.c.b16 %v9123, %v9119
        %v9144 = vpack.c.b16 %v9124, %v9120
        %v9145 = vpack.c.b16 %v9129, %v9125
        %v9146 = vpack.c.b16 %v9130, %v9126
        %v9147 = vpack.c.b16 %v9131, %v9127
        %v9148 = vpack.c.b16 %v9132, %v9128
        %v9166 = vsel %vm7605, %v9067, 0
        %9168 = vmatprep.subr.bf16.mxu0 %v9134
        %9169 = vmatpush1.bf16.msra.mxu0 %v9133
        %9170 = vmatprep.subr.bf16.mxu0 %v9138
        %9171 = vmatpush1.bf16.msra.mxu0 %v9137
        %9172 = vmatprep.subr.bf16.mxu0 %v9142
        %9173 = vmatpush1.bf16.msra.mxu0 %v9141
        %9174 = vmatprep.subr.bf16.mxu0 %v9146
        %9175 = vmatpush1.bf16.msra.mxu0 %v9145
        %9176 = vmatprep.subr.bf16.mxu0 0
        %9177 = vmatpush1.bf16.msra.mxu0 0
        %9178 = vmatprep.subr.bf16.mxu0 0
        %9179 = vmatpush1.bf16.msra.mxu0 0
        %9180 = vmatprep.subr.bf16.mxu0 0
        %9181 = vmatpush1.bf16.msra.mxu0 0
        %9182 = vmatprep.subr.bf16.mxu0 0
        %9183 = vmatpush1.bf16.msra.mxu0 0
        %9184 = vmatprep.subr.bf16.mxu0 0
        %9185 = vmatpush1.bf16.msra.mxu0 0
        %9186 = vmatprep.subr.bf16.mxu0 0
        %9187 = vmatpush1.bf16.msra.mxu0 0
        %9188 = vmatprep.subr.bf16.mxu0 0
        %9189 = vmatpush1.bf16.msra.mxu0 0
        %9190 = vmatprep.subr.bf16.mxu0 0
        %9191 = vmatpush1.bf16.msra.mxu0 0
        %9192 = vmatprep.subr.bf16.mxu0 0
        %9193 = vmatpush1.bf16.msra.mxu0 0
        %9194 = vmatprep.subr.bf16.mxu0 0
        %9195 = vmatpush1.bf16.msra.mxu0 0
        %9196 = vmatprep.subr.bf16.mxu0 0
        %9197 = vmatpush1.bf16.msra.mxu0 0
        %9198 = vmatprep.subr.bf16.mxu0 0
        %9199 = vmatpush1.bf16.msra.mxu0 0
        %9200 = vmatprep.mubr.bf16.mxu0 0
        %9201 = vmatmul.mubr.bf16.gmra.mrb[0].mxu0 %v9166
        %v9202 = vpop.f32.mrb[0].mxu0
        %v9203 = vadd.f32 0.0, %v9202
        %v9204 = vpop.f32.mrb[0].mxu0
        %v9205 = vadd.f32 0.0, %v9204
        %v9206 = vpop.f32.mrb[0].mxu0
        %v9207 = vpop.f32.mrb[0].mxu0
        %9208 = vdwg.mxu0
        %9209 = vmatprep.subr.bf16.mxu0 %v9136
        %9210 = vmatpush1.bf16.msra.mxu0 %v9135
        %9211 = vmatprep.subr.bf16.mxu0 %v9140
        %9212 = vmatpush1.bf16.msra.mxu0 %v9139
        %9213 = vmatprep.subr.bf16.mxu0 %v9144
        %9214 = vmatpush1.bf16.msra.mxu0 %v9143
        %9215 = vmatprep.subr.bf16.mxu0 %v9148
        %9216 = vmatpush1.bf16.msra.mxu0 %v9147
        %9217 = vmatprep.subr.bf16.mxu0 0
        %9218 = vmatpush1.bf16.msra.mxu0 0
        %9219 = vmatprep.subr.bf16.mxu0 0
        %9220 = vmatpush1.bf16.msra.mxu0 0
        %9221 = vmatprep.subr.bf16.mxu0 0
        %9222 = vmatpush1.bf16.msra.mxu0 0
        %9223 = vmatprep.subr.bf16.mxu0 0
        %9224 = vmatpush1.bf16.msra.mxu0 0
        %9225 = vmatprep.subr.bf16.mxu0 0
        %9226 = vmatpush1.bf16.msra.mxu0 0
        %9227 = vmatprep.subr.bf16.mxu0 0
        %9228 = vmatpush1.bf16.msra.mxu0 0
        %9229 = vmatprep.subr.bf16.mxu0 0
        %9230 = vmatpush1.bf16.msra.mxu0 0
        %9231 = vmatprep.subr.bf16.mxu0 0
        %9232 = vmatpush1.bf16.msra.mxu0 0
        %9233 = vmatprep.subr.bf16.mxu0 0
        %9234 = vmatpush1.bf16.msra.mxu0 0
        %9235 = vmatprep.subr.bf16.mxu0 0
        %9236 = vmatpush1.bf16.msra.mxu0 0
        %9237 = vmatprep.subr.bf16.mxu0 0
        %9238 = vmatpush1.bf16.msra.mxu0 0
        %9239 = vmatprep.subr.bf16.mxu0 0
        %9240 = vmatpush1.bf16.msra.mxu0 0
        %9241 = vmatprep.mubr.bf16.mxu0 0
        %9242 = vmatmul.mubr.bf16.gmra.mrb[0].mxu0 %v9166
        %v9243 = vpop.f32.mrb[0].mxu0
        %v9244 = vadd.f32 0.0, %v9243
        %v9245 = vpop.f32.mrb[0].mxu0
        %v9246 = vadd.f32 0.0, %v9245
        %v9247 = vpop.f32.mrb[0].mxu0
        %v9248 = vpop.f32.mrb[0].mxu0
        %9249 = vdwg.mxu0
        %v9250 = vadd.f32 %v9013, %v9203
        %v9251 = vadd.f32 %v9015, %v9205
        %v9252 = vadd.f32 %v9054, %v9244
        %v9253 = vadd.f32 %v9056, %v9246
        %v9254 = vshrl.u32 %v9060, 16
        %v9255 = vpack.i.b16 %v9254, %v9254
        %v9257 = vlaneseq
        %v9258 = vshrl.u32 %v9257, 7
        %v9259 = vsub.s32 2, %v9258
        %v9260 = vrot.slane %v9255, %v9259
        %s9261 = scalar_lea.vmem %s9, 384
        %v9262 = vld [vmem:[%s9261] sm:$0xff]
        %v9263 = vld [vmem:[%s9261 + $0x8] sm:$0xff]
        %v9264 = vld [vmem:[%s9261 + $0x10] sm:$0xff]
        %v9265 = vld [vmem:[%s9261 + $0x18] sm:$0xff]
        %v9266 = vld [vmem:[%s9261 + $0x20] sm:$0xff]
        %v9267 = vld [vmem:[%s9261 + $0x28] sm:$0xff]
        %v9268 = vld [vmem:[%s9261 + $0x30] sm:$0xff]
        %v9269 = vld [vmem:[%s9261 + $0x38] sm:$0xff]
        %v9270 = vld [vmem:[%s9261 + $0x40] sm:$0xff]
        %v9271 = vld [vmem:[%s9261 + $0x48] sm:$0xff]
        %v9272 = vld [vmem:[%s9261 + $0x50] sm:$0xff]
        %v9273 = vld [vmem:[%s9261 + $0x58] sm:$0xff]
        %v9274 = vld [vmem:[%s9261 + $0x60] sm:$0xff]
        %v9275 = vld [vmem:[%s9261 + $0x68] sm:$0xff]
        %v9276 = vld [vmem:[%s9261 + $0x70] sm:$0xff]
        %v9277 = vld [vmem:[%s9261 + $0x78] sm:$0xff]
        %v9294 = vunpack.c.l.b16 %v9262
        %v9295 = vunpack.c.h.b16 %v9262
        %v9296 = vunpack.c.l.b16 %v9263
        %v9297 = vunpack.c.h.b16 %v9263
        %v9298 = vunpack.c.l.b16 %v9264
        %v9299 = vunpack.c.h.b16 %v9264
        %v9300 = vunpack.c.l.b16 %v9265
        %v9301 = vunpack.c.h.b16 %v9265
        %v9302 = vunpack.c.l.b16 %v9266
        %v9303 = vunpack.c.h.b16 %v9266
        %v9304 = vunpack.c.l.b16 %v9267
        %v9305 = vunpack.c.h.b16 %v9267
        %v9306 = vunpack.c.l.b16 %v9268
        %v9307 = vunpack.c.h.b16 %v9268
        %v9308 = vunpack.c.l.b16 %v9269
        %v9309 = vunpack.c.h.b16 %v9269
        %v9310 = vunpack.c.l.b16 %v9270
        %v9311 = vunpack.c.h.b16 %v9270
        %v9312 = vunpack.c.l.b16 %v9271
        %v9313 = vunpack.c.h.b16 %v9271
        %v9314 = vunpack.c.l.b16 %v9272
        %v9315 = vunpack.c.h.b16 %v9272
        %v9316 = vunpack.c.l.b16 %v9273
        %v9317 = vunpack.c.h.b16 %v9273
        %v9318 = vunpack.c.l.b16 %v9274
        %v9319 = vunpack.c.h.b16 %v9274
        %v9320 = vunpack.c.l.b16 %v9275
        %v9321 = vunpack.c.h.b16 %v9275
        %v9322 = vunpack.c.l.b16 %v9276
        %v9323 = vunpack.c.h.b16 %v9276
        %v9324 = vunpack.c.l.b16 %v9277
        %v9325 = vunpack.c.h.b16 %v9277
        %v9326 = vpack.c.b16 %v9298, %v9294
        %v9327 = vpack.c.b16 %v9299, %v9295
        %v9328 = vpack.c.b16 %v9300, %v9296
        %v9329 = vpack.c.b16 %v9301, %v9297
        %v9330 = vpack.c.b16 %v9306, %v9302
        %v9331 = vpack.c.b16 %v9307, %v9303
        %v9332 = vpack.c.b16 %v9308, %v9304
        %v9333 = vpack.c.b16 %v9309, %v9305
        %v9334 = vpack.c.b16 %v9314, %v9310
        %v9335 = vpack.c.b16 %v9315, %v9311
        %v9336 = vpack.c.b16 %v9316, %v9312
        %v9337 = vpack.c.b16 %v9317, %v9313
        %v9338 = vpack.c.b16 %v9322, %v9318
        %v9339 = vpack.c.b16 %v9323, %v9319
        %v9340 = vpack.c.b16 %v9324, %v9320
        %v9341 = vpack.c.b16 %v9325, %v9321
        %v9359 = vsel %vm7605, %v9260, 0
        %9361 = vmatprep.subr.bf16.mxu0 %v9327
        %9362 = vmatpush1.bf16.msra.mxu0 %v9326
        %9363 = vmatprep.subr.bf16.mxu0 %v9331
        %9364 = vmatpush1.bf16.msra.mxu0 %v9330
        %9365 = vmatprep.subr.bf16.mxu0 %v9335
        %9366 = vmatpush1.bf16.msra.mxu0 %v9334
        %9367 = vmatprep.subr.bf16.mxu0 %v9339
        %9368 = vmatpush1.bf16.msra.mxu0 %v9338
        %9369 = vmatprep.subr.bf16.mxu0 0
        %9370 = vmatpush1.bf16.msra.mxu0 0
        %9371 = vmatprep.subr.bf16.mxu0 0
        %9372 = vmatpush1.bf16.msra.mxu0 0
        %9373 = vmatprep.subr.bf16.mxu0 0
        %9374 = vmatpush1.bf16.msra.mxu0 0
        %9375 = vmatprep.subr.bf16.mxu0 0
        %9376 = vmatpush1.bf16.msra.mxu0 0
        %9377 = vmatprep.subr.bf16.mxu0 0
        %9378 = vmatpush1.bf16.msra.mxu0 0
        %9379 = vmatprep.subr.bf16.mxu0 0
        %9380 = vmatpush1.bf16.msra.mxu0 0
        %9381 = vmatprep.subr.bf16.mxu0 0
        %9382 = vmatpush1.bf16.msra.mxu0 0
        %9383 = vmatprep.subr.bf16.mxu0 0
        %9384 = vmatpush1.bf16.msra.mxu0 0
        %9385 = vmatprep.subr.bf16.mxu0 0
        %9386 = vmatpush1.bf16.msra.mxu0 0
        %9387 = vmatprep.subr.bf16.mxu0 0
        %9388 = vmatpush1.bf16.msra.mxu0 0
        %9389 = vmatprep.subr.bf16.mxu0 0
        %9390 = vmatpush1.bf16.msra.mxu0 0
        %9391 = vmatprep.subr.bf16.mxu0 0
        %9392 = vmatpush1.bf16.msra.mxu0 0
        %9393 = vmatprep.mubr.bf16.mxu0 0
        %9394 = vmatmul.mubr.bf16.gmra.mrb[0].mxu0 %v9359
        %v9395 = vpop.f32.mrb[0].mxu0
        %v9396 = vadd.f32 0.0, %v9395
        %v9397 = vpop.f32.mrb[0].mxu0
        %v9398 = vadd.f32 0.0, %v9397
        %v9399 = vpop.f32.mrb[0].mxu0
        %v9400 = vpop.f32.mrb[0].mxu0
        %9401 = vdwg.mxu0
        %9402 = vmatprep.subr.bf16.mxu0 %v9329
        %9403 = vmatpush1.bf16.msra.mxu0 %v9328
        %9404 = vmatprep.subr.bf16.mxu0 %v9333
        %9405 = vmatpush1.bf16.msra.mxu0 %v9332
        %9406 = vmatprep.subr.bf16.mxu0 %v9337
        %9407 = vmatpush1.bf16.msra.mxu0 %v9336
        %9408 = vmatprep.subr.bf16.mxu0 %v9341
        %9409 = vmatpush1.bf16.msra.mxu0 %v9340
        %9410 = vmatprep.subr.bf16.mxu0 0
        %9411 = vmatpush1.bf16.msra.mxu0 0
        %9412 = vmatprep.subr.bf16.mxu0 0
        %9413 = vmatpush1.bf16.msra.mxu0 0
        %9414 = vmatprep.subr.bf16.mxu0 0
        %9415 = vmatpush1.bf16.msra.mxu0 0
        %9416 = vmatprep.subr.bf16.mxu0 0
        %9417 = vmatpush1.bf16.msra.mxu0 0
        %9418 = vmatprep.subr.bf16.mxu0 0
        %9419 = vmatpush1.bf16.msra.mxu0 0
        %9420 = vmatprep.subr.bf16.mxu0 0
        %9421 = vmatpush1.bf16.msra.mxu0 0
        %9422 = vmatprep.subr.bf16.mxu0 0
        %9423 = vmatpush1.bf16.msra.mxu0 0
        %9424 = vmatprep.subr.bf16.mxu0 0
        %9425 = vmatpush1.bf16.msra.mxu0 0
        %9426 = vmatprep.subr.bf16.mxu0 0
        %9427 = vmatpush1.bf16.msra.mxu0 0
        %9428 = vmatprep.subr.bf16.mxu0 0
        %9429 = vmatpush1.bf16.msra.mxu0 0
        %9430 = vmatprep.subr.bf16.mxu0 0
        %9431 = vmatpush1.bf16.msra.mxu0 0
        %9432 = vmatprep.subr.bf16.mxu0 0
        %9433 = vmatpush1.bf16.msra.mxu0 0
        %9434 = vmatprep.mubr.bf16.mxu0 0
        %9435 = vmatmul.mubr.bf16.gmra.mrb[0].mxu0 %v9359
        %v9436 = vpop.f32.mrb[0].mxu0
        %v9437 = vadd.f32 0.0, %v9436
        %v9438 = vpop.f32.mrb[0].mxu0
        %v9439 = vadd.f32 0.0, %v9438
        %v9440 = vpop.f32.mrb[0].mxu0
        %v9441 = vpop.f32.mrb[0].mxu0
        %9442 = vdwg.mxu0
        %v9443 = vadd.f32 %v9250, %v9396
        %v9444 = vadd.f32 %v9251, %v9398
        %v9445 = vadd.f32 %v9252, %v9437
        %v9446 = vadd.f32 %v9253, %v9439
        %v9447 = vld [vmem:[%s10] sm:$0xf]
        %v9449 = vlaneseq
        %v9450 = vshrl.u32 %v9449, 7
        %v9451 = vsub.s32 0, %v9450
        %v9452 = vrot.slane %v9447, %v9451
        %v9453 = vlaneseq
        %v9454 = vshrl.u32 %v9453, 7
        %v9455 = vsub.s32 1, %v9454
        %v9456 = vrot.slane %v9447, %v9455
        %v9457 = vlaneseq
        %v9458 = vshrl.u32 %v9457, 7
        %v9459 = vsub.s32 2, %v9458
        %v9460 = vrot.slane %v9447, %v9459
        %v9461 = vlaneseq
        %v9462 = vshrl.u32 %v9461, 7
        %v9463 = vsub.s32 3, %v9462
        %v9464 = vrot.slane %v9447, %v9463
        %v9469 = vadd.f32 %v9443, %v9452
        %v9470 = vadd.f32 %v9444, %v9456
        %v9471 = vadd.f32 %v9445, %v9460
        %v9472 = vadd.f32 %v9446, %v9464
        %v9473 = vmax.f32 %v9469, 0.0
        %v9474 = vmax.f32 %v9470, 0.0
        %v9475 = vmax.f32 %v9471, 0.0
        %v9476 = vmax.f32 %v9472, 0.0
        %v9481 = vcombine.low %v9473, %v9474
        %v9482 = vcombine.low %v9475, %v9476
        %v9484 = vunpack.c.l.s4 1966171168
        %v9485 = vunpack.c.0.s8 %v9484
        %v9486 = vlaneseq
        %v9487 = vshrl.u32 %v9486, 7
        %v9488 = vsub.s32 %v9485, %v9487
        %v9489 = vrot.slane %v9481, %v9488
        %v9491 = vunpack.c.l.s4 1966171168
        %v9492 = vunpack.c.0.s8 %v9491
        %v9493 = vlaneseq
        %v9494 = vshrl.u32 %v9493, 7
        %v9495 = vsub.s32 %v9492, %v9494
        %v9496 = vrot.slane %v9482, %v9495
        %v9497 = vcombine.low %v9489, %v9496
        %v9499 = vunpack.c.l.s4 1966171168
        %v9500 = vunpack.c.0.s8 %v9499
        %v9501 = vlaneseq
        %v9502 = vshrl.u32 %v9501, 7
        %v9503 = vsub.s32 %v9500, %v9502
        %v9504 = vrot.slane %v9497, %v9503
        %v9506 = vlaneseq
        %vm9507 = vcmp.ge.s32.totalorder %v9506, 0
        %vm9508 = vcmp.lt.s32.totalorder %v9506, 512
        %vm9509 = vmand %vm9507, %vm9508
        %9510 = vst.msk [vmem:[%s475] sm:$0xf] %vm9509, %v9504
        %v9511 = vpack.c.bf16 %v9473, %v9473
        %v9512 = vpack.c.bf16 %v9474, %v9474
        %v9513 = vpack.c.bf16 %v9475, %v9475
        %v9514 = vpack.c.bf16 %v9476, %v9476
        %v9515 = vld [vmem:[%s11] sm:$0xf]
        %v9516 = vld [vmem:[%s11 + $0x4] sm:$0xf]
        %v9517 = vld [vmem:[%s11 + $0x8] sm:$0xf]
        %v9518 = vld [vmem:[%s11 + $0xc] sm:$0xf]
        %v9519 = vld [vmem:[%s11 + $0x10] sm:$0xf]
        %v9520 = vld [vmem:[%s11 + $0x14] sm:$0xf]
        %v9521 = vld [vmem:[%s11 + $0x18] sm:$0xf]
        %v9522 = vld [vmem:[%s11 + $0x1c] sm:$0xf]
        %v9523 = vld [vmem:[%s11 + $0x20] sm:$0xf]
        %v9524 = vld [vmem:[%s11 + $0x24] sm:$0xf]
        %v9525 = vld [vmem:[%s11 + $0x28] sm:$0xf]
        %v9526 = vld [vmem:[%s11 + $0x2c] sm:$0xf]
        %v9527 = vld [vmem:[%s11 + $0x30] sm:$0xf]
        %v9528 = vld [vmem:[%s11 + $0x34] sm:$0xf]
        %v9529 = vld [vmem:[%s11 + $0x38] sm:$0xf]
        %v9530 = vld [vmem:[%s11 + $0x3c] sm:$0xf]
        %v9531 = vld [vmem:[%s11 + $0x40] sm:$0xf]
        %v9532 = vld [vmem:[%s11 + $0x44] sm:$0xf]
        %v9533 = vld [vmem:[%s11 + $0x48] sm:$0xf]
        %v9534 = vld [vmem:[%s11 + $0x4c] sm:$0xf]
        %v9535 = vld [vmem:[%s11 + $0x50] sm:$0xf]
        %v9536 = vld [vmem:[%s11 + $0x54] sm:$0xf]
        %v9537 = vld [vmem:[%s11 + $0x58] sm:$0xf]
        %v9538 = vld [vmem:[%s11 + $0x5c] sm:$0xf]
        %v9539 = vld [vmem:[%s11 + $0x60] sm:$0xf]
        %v9540 = vld [vmem:[%s11 + $0x64] sm:$0xf]
        %v9541 = vld [vmem:[%s11 + $0x68] sm:$0xf]
        %v9542 = vld [vmem:[%s11 + $0x6c] sm:$0xf]
        %v9543 = vld [vmem:[%s11 + $0x70] sm:$0xf]
        %v9544 = vld [vmem:[%s11 + $0x74] sm:$0xf]
        %v9545 = vld [vmem:[%s11 + $0x78] sm:$0xf]
        %v9546 = vld [vmem:[%s11 + $0x7c] sm:$0xf]
        %v9547 = vld [vmem:[%s11 + $0x80] sm:$0xf]
        %v9548 = vld [vmem:[%s11 + $0x84] sm:$0xf]
        %v9549 = vld [vmem:[%s11 + $0x88] sm:$0xf]
        %v9550 = vld [vmem:[%s11 + $0x8c] sm:$0xf]
        %v9551 = vld [vmem:[%s11 + $0x90] sm:$0xf]
        %v9552 = vld [vmem:[%s11 + $0x94] sm:$0xf]
        %v9553 = vld [vmem:[%s11 + $0x98] sm:$0xf]
        %v9554 = vld [vmem:[%s11 + $0x9c] sm:$0xf]
        %v9555 = vld [vmem:[%s11 + $0xa0] sm:$0xf]
        %v9556 = vld [vmem:[%s11 + $0xa4] sm:$0xf]
        %v9557 = vld [vmem:[%s11 + $0xa8] sm:$0xf]
        %v9558 = vld [vmem:[%s11 + $0xac] sm:$0xf]
        %v9559 = vld [vmem:[%s11 + $0xb0] sm:$0xf]
        %v9560 = vld [vmem:[%s11 + $0xb4] sm:$0xf]
        %v9561 = vld [vmem:[%s11 + $0xb8] sm:$0xf]
        %v9562 = vld [vmem:[%s11 + $0xbc] sm:$0xf]
        %v9563 = vld [vmem:[%s11 + $0xc0] sm:$0xf]
        %v9564 = vld [vmem:[%s11 + $0xc4] sm:$0xf]
        %v9565 = vld [vmem:[%s11 + $0xc8] sm:$0xf]
        %v9566 = vld [vmem:[%s11 + $0xcc] sm:$0xf]
        %v9567 = vld [vmem:[%s11 + $0xd0] sm:$0xf]
        %v9568 = vld [vmem:[%s11 + $0xd4] sm:$0xf]
        %v9569 = vld [vmem:[%s11 + $0xd8] sm:$0xf]
        %v9570 = vld [vmem:[%s11 + $0xdc] sm:$0xf]
        %v9571 = vld [vmem:[%s11 + $0xe0] sm:$0xf]
        %v9572 = vld [vmem:[%s11 + $0xe4] sm:$0xf]
        %v9573 = vld [vmem:[%s11 + $0xe8] sm:$0xf]
        %v9574 = vld [vmem:[%s11 + $0xec] sm:$0xf]
        %v9575 = vld [vmem:[%s11 + $0xf0] sm:$0xf]
        %v9576 = vld [vmem:[%s11 + $0xf4] sm:$0xf]
        %v9577 = vld [vmem:[%s11 + $0xf8] sm:$0xf]
        %v9578 = vld [vmem:[%s11 + $0xfc] sm:$0xf]
        %v9579 = vld [vmem:[%s12] sm:$0x1]
        %v9581 = vlaneseq
        %v9582 = vshrl.u32 %v9581, 7
        %v9583 = vsub.s32 0, %v9582
        %v9584 = vrot.slane %v9579, %v9583
        %v9650 = vunpack.c.l.b16 %v9515
        %v9651 = vunpack.c.l.b16 %v9516
        %v9652 = vunpack.c.l.b16 %v9517
        %v9653 = vunpack.c.l.b16 %v9518
        %v9654 = vunpack.c.l.b16 %v9519
        %v9655 = vunpack.c.l.b16 %v9520
        %v9656 = vunpack.c.l.b16 %v9521
        %v9657 = vunpack.c.l.b16 %v9522
        %v9658 = vunpack.c.l.b16 %v9523
        %v9659 = vunpack.c.l.b16 %v9524
        %v9660 = vunpack.c.l.b16 %v9525
        %v9661 = vunpack.c.l.b16 %v9526
        %v9662 = vunpack.c.l.b16 %v9527
        %v9663 = vunpack.c.l.b16 %v9528
        %v9664 = vunpack.c.l.b16 %v9529
        %v9665 = vunpack.c.l.b16 %v9530
        %v9666 = vunpack.c.l.b16 %v9531
        %v9667 = vunpack.c.l.b16 %v9532
        %v9668 = vunpack.c.l.b16 %v9533
        %v9669 = vunpack.c.l.b16 %v9534
        %v9670 = vunpack.c.l.b16 %v9535
        %v9671 = vunpack.c.l.b16 %v9536
        %v9672 = vunpack.c.l.b16 %v9537
        %v9673 = vunpack.c.l.b16 %v9538
        %v9674 = vunpack.c.l.b16 %v9539
        %v9675 = vunpack.c.l.b16 %v9540
        %v9676 = vunpack.c.l.b16 %v9541
        %v9677 = vunpack.c.l.b16 %v9542
        %v9678 = vunpack.c.l.b16 %v9543
        %v9679 = vunpack.c.l.b16 %v9544
        %v9680 = vunpack.c.l.b16 %v9545
        %v9681 = vunpack.c.l.b16 %v9546
        %v9682 = vunpack.c.l.b16 %v9547
        %v9683 = vunpack.c.l.b16 %v9548
        %v9684 = vunpack.c.l.b16 %v9549
        %v9685 = vunpack.c.l.b16 %v9550
        %v9686 = vunpack.c.l.b16 %v9551
        %v9687 = vunpack.c.l.b16 %v9552
        %v9688 = vunpack.c.l.b16 %v9553
        %v9689 = vunpack.c.l.b16 %v9554
        %v9690 = vunpack.c.l.b16 %v9555
        %v9691 = vunpack.c.l.b16 %v9556
        %v9692 = vunpack.c.l.b16 %v9557
        %v9693 = vunpack.c.l.b16 %v9558
        %v9694 = vunpack.c.l.b16 %v9559
        %v9695 = vunpack.c.l.b16 %v9560
        %v9696 = vunpack.c.l.b16 %v9561
        %v9697 = vunpack.c.l.b16 %v9562
        %v9698 = vunpack.c.l.b16 %v9563
        %v9699 = vunpack.c.l.b16 %v9564
        %v9700 = vunpack.c.l.b16 %v9565
        %v9701 = vunpack.c.l.b16 %v9566
        %v9702 = vunpack.c.l.b16 %v9567
        %v9703 = vunpack.c.l.b16 %v9568
        %v9704 = vunpack.c.l.b16 %v9569
        %v9705 = vunpack.c.l.b16 %v9570
        %v9706 = vunpack.c.l.b16 %v9571
        %v9707 = vunpack.c.l.b16 %v9572
        %v9708 = vunpack.c.l.b16 %v9573
        %v9709 = vunpack.c.l.b16 %v9574
        %v9710 = vunpack.c.l.b16 %v9575
        %v9711 = vunpack.c.l.b16 %v9576
        %v9712 = vunpack.c.l.b16 %v9577
        %v9713 = vunpack.c.l.b16 %v9578
        %v9714 = vpack.c.b16 %v9651, %v9650
        %v9715 = vpack.c.b16 %v9653, %v9652
        %v9716 = vpack.c.b16 %v9655, %v9654
        %v9717 = vpack.c.b16 %v9657, %v9656
        %v9718 = vpack.c.b16 %v9659, %v9658
        %v9719 = vpack.c.b16 %v9661, %v9660
        %v9720 = vpack.c.b16 %v9663, %v9662
        %v9721 = vpack.c.b16 %v9665, %v9664
        %v9722 = vpack.c.b16 %v9667, %v9666
        %v9723 = vpack.c.b16 %v9669, %v9668
        %v9724 = vpack.c.b16 %v9671, %v9670
        %v9725 = vpack.c.b16 %v9673, %v9672
        %v9726 = vpack.c.b16 %v9675, %v9674
        %v9727 = vpack.c.b16 %v9677, %v9676
        %v9728 = vpack.c.b16 %v9679, %v9678
        %v9729 = vpack.c.b16 %v9681, %v9680
        %v9730 = vpack.c.b16 %v9683, %v9682
        %v9731 = vpack.c.b16 %v9685, %v9684
        %v9732 = vpack.c.b16 %v9687, %v9686
        %v9733 = vpack.c.b16 %v9689, %v9688
        %v9734 = vpack.c.b16 %v9691, %v9690
        %v9735 = vpack.c.b16 %v9693, %v9692
        %v9736 = vpack.c.b16 %v9695, %v9694
        %v9737 = vpack.c.b16 %v9697, %v9696
        %v9738 = vpack.c.b16 %v9699, %v9698
        %v9739 = vpack.c.b16 %v9701, %v9700
        %v9740 = vpack.c.b16 %v9703, %v9702
        %v9741 = vpack.c.b16 %v9705, %v9704
        %v9742 = vpack.c.b16 %v9707, %v9706
        %v9743 = vpack.c.b16 %v9709, %v9708
        %v9744 = vpack.c.b16 %v9711, %v9710
        %v9745 = vpack.c.b16 %v9713, %v9712
        %9778 = vmatprep.subr.bf16.mxu0 0
        %9779 = vmatpush1.bf16.msra.mxu0 %v9714
        %9780 = vmatprep.subr.bf16.mxu0 0
        %9781 = vmatpush1.bf16.msra.mxu0 %v9715
        %9782 = vmatprep.subr.bf16.mxu0 0
        %9783 = vmatpush1.bf16.msra.mxu0 %v9716
        %9784 = vmatprep.subr.bf16.mxu0 0
        %9785 = vmatpush1.bf16.msra.mxu0 %v9717
        %9786 = vmatprep.subr.bf16.mxu0 0
        %9787 = vmatpush1.bf16.msra.mxu0 %v9718
        %9788 = vmatprep.subr.bf16.mxu0 0
        %9789 = vmatpush1.bf16.msra.mxu0 %v9719
        %9790 = vmatprep.subr.bf16.mxu0 0
        %9791 = vmatpush1.bf16.msra.mxu0 %v9720
        %9792 = vmatprep.subr.bf16.mxu0 0
        %9793 = vmatpush1.bf16.msra.mxu0 %v9721
        %9794 = vmatprep.subr.bf16.mxu0 0
        %9795 = vmatpush1.bf16.msra.mxu0 %v9722
        %9796 = vmatprep.subr.bf16.mxu0 0
        %9797 = vmatpush1.bf16.msra.mxu0 %v9723
        %9798 = vmatprep.subr.bf16.mxu0 0
        %9799 = vmatpush1.bf16.msra.mxu0 %v9724
        %9800 = vmatprep.subr.bf16.mxu0 0
        %9801 = vmatpush1.bf16.msra.mxu0 %v9725
        %9802 = vmatprep.subr.bf16.mxu0 0
        %9803 = vmatpush1.bf16.msra.mxu0 %v9726
        %9804 = vmatprep.subr.bf16.mxu0 0
        %9805 = vmatpush1.bf16.msra.mxu0 %v9727
        %9806 = vmatprep.subr.bf16.mxu0 0
        %9807 = vmatpush1.bf16.msra.mxu0 %v9728
        %9808 = vmatprep.subr.bf16.mxu0 0
        %9809 = vmatpush1.bf16.msra.mxu0 %v9729
        %9810 = vmatprep.mubr.bf16.mxu0 %v9512
        %9811 = vmatmul.mubr.bf16.gmra.mrb[0].mxu0 %v9511
        %v9812 = vpop.f32.mrb[0].mxu0
        %v9813 = vadd.f32 %v9584, %v9812
        %v9814 = vpop.f32.mrb[0].mxu0
        %v9815 = vpop.f32.mrb[0].mxu0
        %v9816 = vpop.f32.mrb[0].mxu0
        %9817 = vdwg.mxu0
        %9818 = vmatprep.subr.bf16.mxu0 0
        %9819 = vmatpush1.bf16.msra.mxu0 %v9730
        %9820 = vmatprep.subr.bf16.mxu0 0
        %9821 = vmatpush1.bf16.msra.mxu0 %v9731
        %9822 = vmatprep.subr.bf16.mxu0 0
        %9823 = vmatpush1.bf16.msra.mxu0 %v9732
        %9824 = vmatprep.subr.bf16.mxu0 0
        %9825 = vmatpush1.bf16.msra.mxu0 %v9733
        %9826 = vmatprep.subr.bf16.mxu0 0
        %9827 = vmatpush1.bf16.msra.mxu0 %v9734
        %9828 = vmatprep.subr.bf16.mxu0 0
        %9829 = vmatpush1.bf16.msra.mxu0 %v9735
        %9830 = vmatprep.subr.bf16.mxu0 0
        %9831 = vmatpush1.bf16.msra.mxu0 %v9736
        %9832 = vmatprep.subr.bf16.mxu0 0
        %9833 = vmatpush1.bf16.msra.mxu0 %v9737
        %9834 = vmatprep.subr.bf16.mxu0 0
        %9835 = vmatpush1.bf16.msra.mxu0 %v9738
        %9836 = vmatprep.subr.bf16.mxu0 0
        %9837 = vmatpush1.bf16.msra.mxu0 %v9739
        %9838 = vmatprep.subr.bf16.mxu0 0
        %9839 = vmatpush1.bf16.msra.mxu0 %v9740
        %9840 = vmatprep.subr.bf16.mxu0 0
        %9841 = vmatpush1.bf16.msra.mxu0 %v9741
        %9842 = vmatprep.subr.bf16.mxu0 0
        %9843 = vmatpush1.bf16.msra.mxu0 %v9742
        %9844 = vmatprep.subr.bf16.mxu0 0
        %9845 = vmatpush1.bf16.msra.mxu0 %v9743
        %9846 = vmatprep.subr.bf16.mxu0 0
        %9847 = vmatpush1.bf16.msra.mxu0 %v9744
        %9848 = vmatprep.subr.bf16.mxu0 0
        %9849 = vmatpush1.bf16.msra.mxu0 %v9745
        %9850 = vmatprep.mubr.bf16.mxu0 %v9514
        %9851 = vmatmul.mubr.bf16.gmra.mrb[0].mxu0 %v9513
        %v9852 = vpop.f32.mrb[0].mxu0
        %v9853 = vadd.f32 %v9813, %v9852
        %v9854 = vpop.f32.mrb[0].mxu0
        %v9855 = vpop.f32.mrb[0].mxu0
        %v9856 = vpop.f32.mrb[0].mxu0
        %9857 = vdwg.mxu0
        %9858 = vst [vmem:[%s460] sm:$0x1] %v9853
        %s9859 = sand.u32 %s315, 1
        %s9860 = scalar_lea.sflag [#allocation9], %s9859
        %s9861 = sand.u32 %s315, 1
        %s9862 = scalar_lea.vmem [#allocation8], %s9861
        %p9863 = scmp.lt.s32.totalorder %s29, 1
        %s9864 = scalar_select %p9863, %s29, 1
        %s9865 = smul.addr %s9864, 4
        %s9866 = scalar_lea.vmem %s14, %s9865
        // Predicated region
        $region73: #{cnn_forward.1} parent=71 // pred_check
          %p9867 = pneg %p325
        $region74: #{cnn_forward.1} parent=71 // pred_check_branch
          %9869 = sbr.rel (%p9867) target = $region76
        $region75: #{cnn_forward.1} parent=71 // pred_region
          %s9871 = ssub.s32 16, 16
          %9872 = vsyncadd %s9860, %s9871
          %s9873 = smul.addr %s29, 16
          %s9874 = scalar_lea.hbm %s13, %s9873
          %s9876 = sshll.u32 %s9862, 4
          %s9877 = int_to_ptr.vmem [resolvable:$true] %s9876
          %9879 = dma.vmem_to_hbm [thread:$0]  %s9877, 16, %s9874, %s9860
        $region76: #{cnn_forward.1} parent=71 // pred_fallthru
          _
        // Predicated region
        $region77: #{cnn_forward.1} parent=71 // pred_check
          %p9880 = pneg %p351
        $region78: #{cnn_forward.1} parent=71 // pred_check_branch
          %9882 = sbr.rel (%p9880) target = $region80
        $region79: #{cnn_forward.1} parent=71 // pred_region
          _
        $region80: #{cnn_forward.1} parent=71 // pred_fallthru
          _
      $region72: #{cnn_forward.1} parent=5 // pred_fallthru
        _
      %p9883 = scmp.le.s32.totalorder 2, %s24
      // Predicated region
      $region81: #{cnn_forward.1} parent=5 // pred_check
        %p9884 = pneg %p9883
      $region82: #{cnn_forward.1} parent=5 // pred_check_branch
        %9886 = sbr.rel (%p9884) target = $region84
      $region83: #{cnn_forward.1} parent=5 // pred_region
        %s9887 = ssub.s32 %s24, 2
        // Predicated region
        $region85: #{cnn_forward.1} parent=83 // pred_check
          %p9888 = pneg %p331
        $region86: #{cnn_forward.1} parent=83 // pred_check_branch
          %9890 = sbr.rel (%p9888) target = $region88
        $region87: #{cnn_forward.1} parent=83 // pred_region
          %s9891 = sand.u32 %s316, 1
          %s9892 = scalar_lea.sflag [#allocation9], %s9891
          %s9893 = sand.u32 %s316, 1
          %s9894 = scalar_lea.vmem [#allocation8], %s9893
          %9895 = dma.done %s9892, 16
        $region88: #{cnn_forward.1} parent=83 // pred_fallthru
          _
        // Predicated region
        $region89: #{cnn_forward.1} parent=83 // pred_check
          %p9896 = pneg %p357
        $region90: #{cnn_forward.1} parent=83 // pred_check_branch
          %9898 = sbr.rel (%p9896) target = $region92
        $region91: #{cnn_forward.1} parent=83 // pred_region
          %p9899 = scmp.lt.s32.totalorder %s30, 1
          %s9900 = scalar_select %p9899, %s30, 1
          %s9901 = smul.addr %s9900, 4
          %s9902 = scalar_lea.vmem %s14, %s9901
        $region92: #{cnn_forward.1} parent=83 // pred_fallthru
          _
      $region84: #{cnn_forward.1} parent=5 // pred_fallthru
        _
    $region6: #{cnn_forward.1} parent=1 // loop_footer
      %s28 = sadd.s32 1, %s24
    $region7: #{cnn_forward.1} parent=1 // loop_footer_branch
      %23 = sbr.rel target = $region3
    $region8: #{cnn_forward.1} parent=1 // loop_exit
      _
    %9903 = vsyncpa [#allocation9], 1
    %s9904 = scalar_lea.sflag [#allocation9], 1
    %9905 = vsyncpa %s9904, 1

</llo_original>
